<compile_context>
chip_gen: v5e
topology: v5e:2x2
jax: 0.10.0
libtpu: 0.0.40
codegen_flags: <defaults>
</compile_context>

<pallas_src>
import functools

import numpy as np
import jax
import jax.numpy as jnp
from jax.experimental import pallas as pl
from jax.experimental.pallas import tpu as pltpu


def round_(filt):
    return round(filt / 3)


# ---------------------------------------------------------------------------
# The single fused kernel.
# Activation layout inside the kernel: "CM" = (channels, N*H*W) so every conv
# is  out[Cout, M] = W[Cout, K] @ act[K, M]  with M lane-dense.
# ---------------------------------------------------------------------------
def _make_network_kernel(block_has_skip, batch, classes, m):
    ntaps = 9        # 3x3 convs, pad=round_(3)=1, stride 1 -> same spatial size
    skip_tap = 8     # tap (i=2, j=2) == x[:, :, 1:, 1:] zero-padded right/bottom

    def kernel(*refs):
        it = iter(refs)
        p0_ref, w0_ref, b0_ref, s_ref = next(it), next(it), next(it), next(it)
        blk_refs = []
        for has_skip in block_has_skip:
            d = dict(w1=next(it), b1=next(it), w2=next(it), b2=next(it))
            if has_skip:
                d.update(wsk1=next(it), wsk2=next(it), bsk=next(it))
            blk_refs.append(d)
        gbig_ref, bfc_ref = next(it), next(it)
        o_ref = next(it)

        f32, bf16 = jnp.float32, jnp.bfloat16
        taps = [s_ref[t] for t in range(ntaps)]          # (m, m) bf16 each

        def conv3x3(x_bf16, w_ref, b_ref):
            rows = w_ref.shape[1]
            acc = jnp.zeros((rows, m), f32)
            for t in range(ntaps):
                # S_t is an exact 0/1 selection, so shifting first keeps the
                # per-tap weight matmul accumulating in f32 with no extra
                # rounding (same precision as a single im2col matmul).
                sh = jnp.dot(x_bf16, taps[t],
                             preferred_element_type=f32).astype(bf16)
                acc = acc + jnp.dot(w_ref[t], sh, preferred_element_type=f32)
            return acc + b_ref[...]                       # folded-BN bias

        # Conv_0 + BN_0 (scale folded into w0 rows at pack time).
        x = jnp.dot(w0_ref[...], p0_ref[...],
                    preferred_element_type=f32) + b0_ref[...]

        # Residual groups / BasicBlocks.
        for has_skip, d in zip(block_has_skip, blk_refs):
            xr = jnp.maximum(x, 0.0)                      # ReLU_1 (all branches)
            xrb = xr.astype(bf16)
            # Conv_1 of every branch (rows concatenated) + BN_1 + ReLU_2.
            y1 = jnp.maximum(conv3x3(xrb, d['w1'], d['b1']), 0.0)
            # Conv_2 + BN_2 of every branch, branches concatenated along K,
            # BN_2 scale folded into rows, biases summed -> branch sum is free.
            out = conv3x3(y1.astype(bf16), d['w2'], d['b2'])
            if has_skip:
                # s1: relu(x) -> 1x1 conv ; s2: shifted/padded x -> 1x1 conv;
                # skip-BN scale folded into the (zero-padded to cout rows)
                # weight blocks, single bias.
                xsb = jnp.dot(x.astype(bf16), taps[skip_tap],
                              preferred_element_type=f32).astype(bf16)
                skip = (jnp.dot(d['wsk1'][...], xrb, preferred_element_type=f32)
                        + jnp.dot(d['wsk2'][...], xsb,
                                  preferred_element_type=f32)
                        + d['bsk'][...])
                x = out + skip
            else:
                x = out + x                               # identity skip

        # ReLU_0 + AvgPool2d(8,1) + flatten + fc.  Pooling/flatten are folded
        # into gbig: gbig[n*HW+s, c*(N*classes) + n*classes + k] holds the
        # effective fc weight for channel c / sample n; the diagonal (row c vs
        # column-block c) extraction below performs the channel contraction.
        xr = jnp.maximum(x, 0.0)
        full = jnp.dot(xr, gbig_ref[...], preferred_element_type=f32)
        nk = batch * classes
        logits = bfc_ref[...]                             # (1, N*classes) bias
        for c in range(xr.shape[0]):
            logits = logits + full[c:c + 1, c * nk:(c + 1) * nk]
        o_ref[...] = logits

    return kernel


# ---------------------------------------------------------------------------
# JAX glue: im2col of the raw input for Conv_0 only (fused by XLA under jit).
# ---------------------------------------------------------------------------
def _im2col_cm(x, k, pad):
    """x: (C, N, H, W) -> patches (k*k*C, N*Ho*Wo) for a stride-1 conv."""
    C, N, H, W = x.shape
    xp = jnp.pad(x, ((0, 0), (0, 0), (pad, pad), (pad, pad)))
    Ho = H + 2 * pad - k + 1
    Wo = W + 2 * pad - k + 1
    taps = [xp[:, :, i:i + Ho, j:j + Wo] for i in range(k) for j in range(k)]
    p = jnp.concatenate(taps, axis=0)                     # (k*k*C, N, Ho, Wo)
    return p.reshape(k * k * C, N * Ho * Wo), Ho, Wo


@jax.jit
def network_fwd(packed, x_nchw):
    x = jnp.transpose(x_nchw.astype(jnp.float32), (1, 0, 2, 3))  # (C,N,H,W)
    batch = x.shape[1]
    p0, ho, wo = _im2col_cm(x, 7, 1)                # Conv_0: 7x7, stride 1, pad 1
    m = batch * ho * wo
    classes = packed['bfc'].shape[1] // batch
    assert packed['S'].shape[-1] == m, (
        "packed params were built for a different batch / spatial size")

    block_has_skip = tuple('wsk1' in bp for bp in packed['blocks'])
    kernel = _make_network_kernel(block_has_skip, batch, classes, m)

    inputs = [p0.astype(jnp.bfloat16), packed['w0'], packed['b0'], packed['S']]
    for bp in packed['blocks']:
        inputs += [bp['w1'], bp['b1'], bp['w2'], bp['b2']]
        if 'wsk1' in bp:
            inputs += [bp['wsk1'], bp['wsk2'], bp['bsk']]
    inputs += [packed['gbig'], packed['bfc']]

    # Advisory cost estimate (dominated by the shift matmuls).
    flops = 2 * packed['w0'].shape[0] * packed['w0'].shape[1] * m
    for bp in packed['blocks']:
        for wkey in ('w1', 'w2'):
            _, r, c = bp[wkey].shape
            flops += 9 * 2 * (c * m * m + r * c * m)
        if 'wsk1' in bp:
            cout, cin = bp['wsk1'].shape
            flops += 2 * (cin * m * m + 2 * cout * cin * m)
    cf = packed['gbig'].shape[1] // (batch * classes)
    flops += 2 * cf * m * packed['gbig'].shape[1]
    bytes_accessed = sum(int(np.prod(a.shape)) * a.dtype.itemsize
                         for a in inputs) + 4 * batch * classes

    logits = pl.pallas_call(
        kernel,
        out_shape=jax.ShapeDtypeStruct((1, batch * classes), jnp.float32),
        compiler_params=pltpu.CompilerParams(
            vmem_limit_bytes=32 * 1024 * 1024),
        cost_estimate=pl.CostEstimate(flops=int(flops), transcendentals=0,
                                      bytes_accessed=int(bytes_accessed)),
    )(*inputs)
    return logits.reshape(batch, classes)


# ---------------------------------------------------------------------------
# Deterministic parameter construction (mirrors Network.__init__ shapes).
# ---------------------------------------------------------------------------
def _bn_fold(gamma, beta, mean, var, eps=1e-5):
    scale = gamma * jax.lax.rsqrt(var + eps)
    return scale, beta - mean * scale


def _init_conv(key, kh, kw, cin, cout):
    fan_in = kh * kw * cin
    return jax.random.normal(key, (kh, kw, cin, cout), jnp.float32) / jnp.sqrt(
        float(fan_in))


def _init_bn(key, c):
    k1, k2 = jax.random.split(key)
    gamma = 1.0 + 0.1 * jax.random.normal(k1, (c,), jnp.float32)
    beta = 0.1 * jax.random.normal(k2, (c,), jnp.float32)
    return _bn_fold(gamma, beta, jnp.zeros((c,), jnp.float32),
                    jnp.ones((c,), jnp.float32))


def _wmat(w):
    """(kh, kw, cin, cout) -> (cout, kh*kw*cin)."""
    kh, kw, cin, cout = w.shape
    return w.reshape(kh * kw * cin, cout).T


def build_network(key, config, input_dim=(3, 16, 16), classes=10):
    # NOTE: the PyTorch default input_dim=(1,32,32) is inconsistent with
    # Conv_0 (in_channels=3); channels must be 3, as used here.
    M = config['M']
    fs = 3
    keys = iter(jax.random.split(key, 256))

    params = {}
    c0 = config['out_channel0']
    params['conv0'] = _init_conv(next(keys), 7, 7, 3, c0)
    params['bn0'] = _init_bn(next(keys), c0)

    def make_branch(cin, cout):
        return dict(w1=_init_conv(next(keys), fs, fs, cin, cout),
                    bn1=_init_bn(next(keys), cout),
                    w2=_init_conv(next(keys), fs, fs, cout, cout),
                    bn2=_init_bn(next(keys), cout))

    def make_skip(cin, cout):
        h1 = cout // 2
        h2 = cout // 2 if cout % 2 == 0 else cout // 2 + 1
        return dict(w1=_init_conv(next(keys), 1, 1, cin, h1),
                    w2=_init_conv(next(keys), 1, 1, cin, h2),
                    bn=_init_bn(next(keys), cout))

    def make_block(cin, cout, nbranches):
        return dict(branches=[make_branch(cin, cout) for _ in range(nbranches)],
                    skip=make_skip(cin, cout) if cin != cout else None)

    def make_group(cin, cout, nblocks, nbranches):
        blocks = [make_block(cin, cout, nbranches)]
        for _ in range(2, nblocks + 1):
            blocks.append(make_block(cout, cout, nbranches))
        return blocks

    groups = []
    fm_in = int(round(c0 // config['widenfact1']))
    groups.append(make_group(c0, fm_in, config['R1'], config['B1']))
    fm_out = fm_in
    for m in range(2, M + 1):
        fm_out = int(round(fm_in // config['widenfact%d' % m]))
        groups.append(make_group(fm_in, fm_out, config['R%d' % m],
                                 config['B%d' % m]))
        fm_in = fm_out
    params['groups'] = groups

    _, h, w = input_dim
    h_pool = (h + 2 - 7 + 1) - 8 + 1
    w_pool = (w + 2 - 7 + 1) - 8 + 1
    fc_len = fm_out * h_pool * w_pool
    params['fc_w'] = 0.1 * jax.random.normal(next(keys), (fc_len, classes),
                                             jnp.float32)
    params['fc_b'] = 0.1 * jax.random.normal(next(keys), (classes,),
                                             jnp.float32)
    return params


def _shift_matrices(batch, ho, wo, k, pad):
    """0/1 selection matrices: (X @ S[t])[c, n*HW + h*wo + w] =
       X[c, n*HW + (h+i-pad)*wo + (w+j-pad)] when in range, else 0."""
    m = batch * ho * wo
    s = np.zeros((k * k, m, m), np.float32)
    for i in range(k):
        for j in range(k):
            t = i * k + j
            for hh in range(ho):
                hi = hh + i - pad
                if hi < 0 or hi >= ho:
                    continue
                for ww in range(wo):
                    wi = ww + j - pad
                    if wi < 0 or wi >= wo:
                        continue
                    for nn in range(batch):
                        base = nn * ho * wo
                        s[t, base + hi * wo + wi, base + hh * wo + ww] = 1.0
    return s


def pack_params(params, batch, input_dim=(3, 16, 16), classes=10):
    """One-time eager packing into the fused-kernel layouts (BN folded)."""
    _, H, W = input_dim
    ho = H + 2 - 7 + 1                       # after Conv_0 (k=7, pad=1, stride 1)
    wo = W + 2 - 7 + 1
    m = batch * ho * wo
    fs, pad = 3, round_(3)

    packed = {}
    s0, b0 = params['bn0']
    packed['w0'] = (s0[:, None] * _wmat(params['conv0'])).astype(jnp.bfloat16)
    packed['b0'] = b0.reshape(-1, 1).astype(jnp.float32)
    packed['S'] = jnp.asarray(_shift_matrices(batch, ho, wo, fs, pad),
                              jnp.bfloat16)

    blocks = []
    for group in params['groups']:
        for block in group:
            branches = block['branches']
            nb = len(branches)
            cout = branches[0]['w1'].shape[-1]
            cin = branches[0]['w1'].shape[-2]
            w1_taps, w2_taps = [], []
            for i in range(fs):
                for j in range(fs):
                    # Conv_1: branches concatenated along rows, BN_1 folded.
                    w1_taps.append(jnp.concatenate(
                        [bp['bn1'][0][:, None] * bp['w1'][i, j].T
                         for bp in branches], axis=0))       # (nb*cout, cin)
                    # Conv_2: branches concatenated along K, BN_2 folded.
                    w2_taps.append(jnp.concatenate(
                        [bp['bn2'][0][:, None] * bp['w2'][i, j].T
                         for bp in branches], axis=1))       # (cout, nb*cout)
            pb = dict(
                w1=jnp.stack(w1_taps).astype(jnp.bfloat16),
                b1=jnp.concatenate([bp['bn1'][1] for bp in branches]
                                   ).reshape(nb * cout, 1).astype(jnp.float32),
                w2=jnp.stack(w2_taps).astype(jnp.bfloat16),
                b2=sum(bp['bn2'][1] for bp in branches
                       ).reshape(cout, 1).astype(jnp.float32))
            if block['skip'] is not None:
                sp = block['skip']
                ssk, bsk = sp['bn']
                w1m = _wmat(sp['w1'])                         # (h1, cin)
                w2m = _wmat(sp['w2'])                         # (h2, cin)
                h1 = w1m.shape[0]
                wsk1 = jnp.zeros((cout, cin), jnp.float32
                                 ).at[:h1].set(ssk[:h1, None] * w1m)
                wsk2 = jnp.zeros((cout, cin), jnp.float32
                                 ).at[h1:].set(ssk[h1:, None] * w2m)
                pb.update(wsk1=wsk1.astype(jnp.bfloat16),
                          wsk2=wsk2.astype(jnp.bfloat16),
                          bsk=bsk.reshape(cout, 1).astype(jnp.float32))
            blocks.append(pb)
    packed['blocks'] = blocks

    # Fold AvgPool2d(8, stride=1) + NCHW flatten into the fc weight.
    pool = 8
    po_h, po_w = ho - pool + 1, wo - pool + 1
    fc_w = np.asarray(params['fc_w'])                         # (cf*po_h*po_w, classes)
    fc_b = np.asarray(params['fc_b'])
    cf = fc_w.shape[0] // (po_h * po_w)
    fcw = fc_w.reshape(cf, po_h, po_w, classes)
    g2 = np.zeros((cf, ho, wo, classes), np.float32)
    for hh in range(ho):
        for ww in range(wo):
            ph0, ph1 = max(0, hh - pool + 1), min(po_h - 1, hh)
            pw0, pw1 = max(0, ww - pool + 1), min(po_w - 1, ww)
            if ph0 <= ph1 and pw0 <= pw1:
                g2[:, hh, ww, :] = fcw[:, ph0:ph1 + 1, pw0:pw1 + 1, :].sum(
                    axis=(1, 2)) / float(pool * pool)
    nk = batch * classes
    hw = ho * wo
    gbig = np.zeros((m, cf * nk), np.float32)
    for nn in range(batch):
        for c in range(cf):
            gbig[nn * hw:(nn + 1) * hw,
                 c * nk + nn * classes:c * nk + (nn + 1) * classes] = \
                g2[c].reshape(hw, classes)
    packed['gbig'] = jnp.asarray(gbig)
    packed['bfc'] = jnp.asarray(np.tile(fc_b, batch).reshape(1, nk),
                                dtype=jnp.float32)
    return packed


# ---------------------------------------------------------------------------
if __name__ == "__main__":
    config = {
        'M': 2,
        'R1': 1, 'R2': 1, 'R3': 1, 'R4': 1, 'R5': 1,
        'widenfact1': 1.0, 'widenfact2': 0.5, 'widenfact3': 0.5,
        'widenfact4': 0.5, 'widenfact5': 0.5,
        'B1': 1, 'B2': 2, 'B3': 1, 'B4': 1, 'B5': 1,
        'convblock1': 1, 'convblock2': 1, 'convblock3': 1,
        'convblock4': 1, 'convblock5': 1,
        'out_channel0': 8,
    }
    key = jax.random.PRNGKey(0)
    kp, kx = jax.random.split(key)
    params = build_network(kp, config, input_dim=(3, 16, 16), classes=10)
    packed = pack_params(params, batch=2, input_dim=(3, 16, 16), classes=10)
    x = jax.random.normal(kx, (2, 3, 16, 16), jnp.float32)   # NCHW like PyTorch
    out = network_fwd(packed, x)
    out = jax.block_until_ready(out)
    assert out.shape == (2, 10)
    assert bool(jnp.all(jnp.isfinite(out)))
    print("KERNEL_OK")
</pallas_src>

<mosaic_0001>
module attributes {stable_mosaic.version = 11 : i64} {
  func.func @kernel(%arg0: memref<147x288xbf16, #tpu.memory_space<vmem>>, %arg1: memref<8x147xbf16, #tpu.memory_space<vmem>>, %arg2: memref<8x1xf32, #tpu.memory_space<vmem>>, %arg3: memref<9x288x288xbf16, #tpu.memory_space<vmem>>, %arg4: memref<9x8x8xbf16, #tpu.memory_space<vmem>>, %arg5: memref<8x1xf32, #tpu.memory_space<vmem>>, %arg6: memref<9x8x8xbf16, #tpu.memory_space<vmem>>, %arg7: memref<8x1xf32, #tpu.memory_space<vmem>>, %arg8: memref<9x32x8xbf16, #tpu.memory_space<vmem>>, %arg9: memref<32x1xf32, #tpu.memory_space<vmem>>, %arg10: memref<9x16x32xbf16, #tpu.memory_space<vmem>>, %arg11: memref<16x1xf32, #tpu.memory_space<vmem>>, %arg12: memref<16x8xbf16, #tpu.memory_space<vmem>>, %arg13: memref<16x8xbf16, #tpu.memory_space<vmem>>, %arg14: memref<16x1xf32, #tpu.memory_space<vmem>>, %arg15: memref<288x320xf32, #tpu.memory_space<vmem>>, %arg16: memref<1x20xf32, #tpu.memory_space<vmem>>, %arg17: memref<1x20xf32, #tpu.memory_space<vmem>>) attributes {dimension_semantics = [], scalar_prefetch = 0 : i64, scratch_operands = 0 : i64, tpu.core_type = #tpu.core_type<tc>} {
    %c0 = arith.constant 0 : index
    %c0_0 = arith.constant 0 : index
    %c0_1 = arith.constant 0 : index
    %0 = vector.load %arg3[%c0, %c0_0, %c0_1] : memref<9x288x288xbf16, #tpu.memory_space<vmem>>, vector<1x288x288xbf16>
    %1 = vector.shape_cast %0 : vector<1x288x288xbf16> to vector<288x288xbf16>
    %c1 = arith.constant 1 : index
    %c0_2 = arith.constant 0 : index
    %c0_3 = arith.constant 0 : index
    %2 = vector.load %arg3[%c1, %c0_2, %c0_3] : memref<9x288x288xbf16, #tpu.memory_space<vmem>>, vector<1x288x288xbf16>
    %3 = vector.shape_cast %2 : vector<1x288x288xbf16> to vector<288x288xbf16>
    %c2 = arith.constant 2 : index
    %c0_4 = arith.constant 0 : index
    %c0_5 = arith.constant 0 : index
    %4 = vector.load %arg3[%c2, %c0_4, %c0_5] : memref<9x288x288xbf16, #tpu.memory_space<vmem>>, vector<1x288x288xbf16>
    %5 = vector.shape_cast %4 : vector<1x288x288xbf16> to vector<288x288xbf16>
    %c3 = arith.constant 3 : index
    %c0_6 = arith.constant 0 : index
    %c0_7 = arith.constant 0 : index
    %6 = vector.load %arg3[%c3, %c0_6, %c0_7] : memref<9x288x288xbf16, #tpu.memory_space<vmem>>, vector<1x288x288xbf16>
    %7 = vector.shape_cast %6 : vector<1x288x288xbf16> to vector<288x288xbf16>
    %c4 = arith.constant 4 : index
    %c0_8 = arith.constant 0 : index
    %c0_9 = arith.constant 0 : index
    %8 = vector.load %arg3[%c4, %c0_8, %c0_9] : memref<9x288x288xbf16, #tpu.memory_space<vmem>>, vector<1x288x288xbf16>
    %9 = vector.shape_cast %8 : vector<1x288x288xbf16> to vector<288x288xbf16>
    %c5 = arith.constant 5 : index
    %c0_10 = arith.constant 0 : index
    %c0_11 = arith.constant 0 : index
    %10 = vector.load %arg3[%c5, %c0_10, %c0_11] : memref<9x288x288xbf16, #tpu.memory_space<vmem>>, vector<1x288x288xbf16>
    %11 = vector.shape_cast %10 : vector<1x288x288xbf16> to vector<288x288xbf16>
    %c6 = arith.constant 6 : index
    %c0_12 = arith.constant 0 : index
    %c0_13 = arith.constant 0 : index
    %12 = vector.load %arg3[%c6, %c0_12, %c0_13] : memref<9x288x288xbf16, #tpu.memory_space<vmem>>, vector<1x288x288xbf16>
    %13 = vector.shape_cast %12 : vector<1x288x288xbf16> to vector<288x288xbf16>
    %c7 = arith.constant 7 : index
    %c0_14 = arith.constant 0 : index
    %c0_15 = arith.constant 0 : index
    %14 = vector.load %arg3[%c7, %c0_14, %c0_15] : memref<9x288x288xbf16, #tpu.memory_space<vmem>>, vector<1x288x288xbf16>
    %15 = vector.shape_cast %14 : vector<1x288x288xbf16> to vector<288x288xbf16>
    %c8 = arith.constant 8 : index
    %c0_16 = arith.constant 0 : index
    %c0_17 = arith.constant 0 : index
    %16 = vector.load %arg3[%c8, %c0_16, %c0_17] : memref<9x288x288xbf16, #tpu.memory_space<vmem>>, vector<1x288x288xbf16>
    %17 = vector.shape_cast %16 : vector<1x288x288xbf16> to vector<288x288xbf16>
    %c0_18 = arith.constant 0 : index
    %c0_19 = arith.constant 0 : index
    %18 = vector.load %arg1[%c0_18, %c0_19] : memref<8x147xbf16, #tpu.memory_space<vmem>>, vector<8x147xbf16>
    %c0_20 = arith.constant 0 : index
    %c0_21 = arith.constant 0 : index
    %19 = vector.load %arg0[%c0_20, %c0_21] : memref<147x288xbf16, #tpu.memory_space<vmem>>, vector<147x288xbf16>
    %cst = arith.constant dense<0.000000e+00> : vector<8x288xf32>
    %20 = tpu.matmul %18, %19, %cst {dimension_numbers = #tpu.dot_dimension_numbers<[1], [0], [0], [1], [0, 0, 1, 1], [], []>} : vector<8x147xbf16>, vector<147x288xbf16>, vector<8x288xf32> -> vector<8x288xf32>
    %c0_22 = arith.constant 0 : index
    %c0_23 = arith.constant 0 : index
    %21 = vector.load %arg2[%c0_22, %c0_23] : memref<8x1xf32, #tpu.memory_space<vmem>>, vector<8x1xf32>
    %22 = vector.broadcast %21 : vector<8x1xf32> to vector<8x288xf32>
    %23 = arith.addf %20, %22 : vector<8x288xf32>
    %cst_24 = arith.constant 0.000000e+00 : f32
    %24 = vector.broadcast %cst_24 : f32 to vector<8x288xf32>
    %25 = arith.maximumf %23, %24 : vector<8x288xf32>
    %26 = arith.truncf %25 : vector<8x288xf32> to vector<8x288xbf16>
    %cst_25 = arith.constant 0.000000e+00 : f32
    %27 = vector.broadcast %cst_25 : f32 to vector<8x288xf32>
    %cst_26 = arith.constant dense<0.000000e+00> : vector<8x288xf32>
    %28 = tpu.matmul %26, %1, %cst_26 {dimension_numbers = #tpu.dot_dimension_numbers<[1], [0], [0], [1], [0, 0, 1, 1], [], []>} : vector<8x288xbf16>, vector<288x288xbf16>, vector<8x288xf32> -> vector<8x288xf32>
    %29 = arith.truncf %28 : vector<8x288xf32> to vector<8x288xbf16>
    %c0_27 = arith.constant 0 : index
    %c0_28 = arith.constant 0 : index
    %c0_29 = arith.constant 0 : index
    %30 = vector.load %arg4[%c0_27, %c0_28, %c0_29] : memref<9x8x8xbf16, #tpu.memory_space<vmem>>, vector<1x8x8xbf16>
    %31 = vector.shape_cast %30 : vector<1x8x8xbf16> to vector<8x8xbf16>
    %cst_30 = arith.constant dense<0.000000e+00> : vector<8x288xf32>
    %32 = tpu.matmul %31, %29, %cst_30 {dimension_numbers = #tpu.dot_dimension_numbers<[1], [0], [0], [1], [0, 0, 1, 1], [], []>} : vector<8x8xbf16>, vector<8x288xbf16>, vector<8x288xf32> -> vector<8x288xf32>
    %33 = arith.addf %27, %32 : vector<8x288xf32>
    %cst_31 = arith.constant dense<0.000000e+00> : vector<8x288xf32>
    %34 = tpu.matmul %26, %3, %cst_31 {dimension_numbers = #tpu.dot_dimension_numbers<[1], [0], [0], [1], [0, 0, 1, 1], [], []>} : vector<8x288xbf16>, vector<288x288xbf16>, vector<8x288xf32> -> vector<8x288xf32>
    %35 = arith.truncf %34 : vector<8x288xf32> to vector<8x288xbf16>
    %c1_32 = arith.constant 1 : index
    %c0_33 = arith.constant 0 : index
    %c0_34 = arith.constant 0 : index
    %36 = vector.load %arg4[%c1_32, %c0_33, %c0_34] : memref<9x8x8xbf16, #tpu.memory_space<vmem>>, vector<1x8x8xbf16>
    %37 = vector.shape_cast %36 : vector<1x8x8xbf16> to vector<8x8xbf16>
    %cst_35 = arith.constant dense<0.000000e+00> : vector<8x288xf32>
    %38 = tpu.matmul %37, %35, %cst_35 {dimension_numbers = #tpu.dot_dimension_numbers<[1], [0], [0], [1], [0, 0, 1, 1], [], []>} : vector<8x8xbf16>, vector<8x288xbf16>, vector<8x288xf32> -> vector<8x288xf32>
    %39 = arith.addf %33, %38 : vector<8x288xf32>
    %cst_36 = arith.constant dense<0.000000e+00> : vector<8x288xf32>
    %40 = tpu.matmul %26, %5, %cst_36 {dimension_numbers = #tpu.dot_dimension_numbers<[1], [0], [0], [1], [0, 0, 1, 1], [], []>} : vector<8x288xbf16>, vector<288x288xbf16>, vector<8x288xf32> -> vector<8x288xf32>
    %41 = arith.truncf %40 : vector<8x288xf32> to vector<8x288xbf16>
    %c2_37 = arith.constant 2 : index
    %c0_38 = arith.constant 0 : index
    %c0_39 = arith.constant 0 : index
    %42 = vector.load %arg4[%c2_37, %c0_38, %c0_39] : memref<9x8x8xbf16, #tpu.memory_space<vmem>>, vector<1x8x8xbf16>
    %43 = vector.shape_cast %42 : vector<1x8x8xbf16> to vector<8x8xbf16>
    %cst_40 = arith.constant dense<0.000000e+00> : vector<8x288xf32>
    %44 = tpu.matmul %43, %41, %cst_40 {dimension_numbers = #tpu.dot_dimension_numbers<[1], [0], [0], [1], [0, 0, 1, 1], [], []>} : vector<8x8xbf16>, vector<8x288xbf16>, vector<8x288xf32> -> vector<8x288xf32>
    %45 = arith.addf %39, %44 : vector<8x288xf32>
    %cst_41 = arith.constant dense<0.000000e+00> : vector<8x288xf32>
    %46 = tpu.matmul %26, %7, %cst_41 {dimension_numbers = #tpu.dot_dimension_numbers<[1], [0], [0], [1], [0, 0, 1, 1], [], []>} : vector<8x288xbf16>, vector<288x288xbf16>, vector<8x288xf32> -> vector<8x288xf32>
    %47 = arith.truncf %46 : vector<8x288xf32> to vector<8x288xbf16>
    %c3_42 = arith.constant 3 : index
    %c0_43 = arith.constant 0 : index
    %c0_44 = arith.constant 0 : index
    %48 = vector.load %arg4[%c3_42, %c0_43, %c0_44] : memref<9x8x8xbf16, #tpu.memory_space<vmem>>, vector<1x8x8xbf16>
    %49 = vector.shape_cast %48 : vector<1x8x8xbf16> to vector<8x8xbf16>
    %cst_45 = arith.constant dense<0.000000e+00> : vector<8x288xf32>
    %50 = tpu.matmul %49, %47, %cst_45 {dimension_numbers = #tpu.dot_dimension_numbers<[1], [0], [0], [1], [0, 0, 1, 1], [], []>} : vector<8x8xbf16>, vector<8x288xbf16>, vector<8x288xf32> -> vector<8x288xf32>
    %51 = arith.addf %45, %50 : vector<8x288xf32>
    %cst_46 = arith.constant dense<0.000000e+00> : vector<8x288xf32>
    %52 = tpu.matmul %26, %9, %cst_46 {dimension_numbers = #tpu.dot_dimension_numbers<[1], [0], [0], [1], [0, 0, 1, 1], [], []>} : vector<8x288xbf16>, vector<288x288xbf16>, vector<8x288xf32> -> vector<8x288xf32>
    %53 = arith.truncf %52 : vector<8x288xf32> to vector<8x288xbf16>
    %c4_47 = arith.constant 4 : index
    %c0_48 = arith.constant 0 : index
    %c0_49 = arith.constant 0 : index
    %54 = vector.load %arg4[%c4_47, %c0_48, %c0_49] : memref<9x8x8xbf16, #tpu.memory_space<vmem>>, vector<1x8x8xbf16>
    %55 = vector.shape_cast %54 : vector<1x8x8xbf16> to vector<8x8xbf16>
    %cst_50 = arith.constant dense<0.000000e+00> : vector<8x288xf32>
    %56 = tpu.matmul %55, %53, %cst_50 {dimension_numbers = #tpu.dot_dimension_numbers<[1], [0], [0], [1], [0, 0, 1, 1], [], []>} : vector<8x8xbf16>, vector<8x288xbf16>, vector<8x288xf32> -> vector<8x288xf32>
    %57 = arith.addf %51, %56 : vector<8x288xf32>
    %cst_51 = arith.constant dense<0.000000e+00> : vector<8x288xf32>
    %58 = tpu.matmul %26, %11, %cst_51 {dimension_numbers = #tpu.dot_dimension_numbers<[1], [0], [0], [1], [0, 0, 1, 1], [], []>} : vector<8x288xbf16>, vector<288x288xbf16>, vector<8x288xf32> -> vector<8x288xf32>
    %59 = arith.truncf %58 : vector<8x288xf32> to vector<8x288xbf16>
    %c5_52 = arith.constant 5 : index
    %c0_53 = arith.constant 0 : index
    %c0_54 = arith.constant 0 : index
    %60 = vector.load %arg4[%c5_52, %c0_53, %c0_54] : memref<9x8x8xbf16, #tpu.memory_space<vmem>>, vector<1x8x8xbf16>
    %61 = vector.shape_cast %60 : vector<1x8x8xbf16> to vector<8x8xbf16>
    %cst_55 = arith.constant dense<0.000000e+00> : vector<8x288xf32>
    %62 = tpu.matmul %61, %59, %cst_55 {dimension_numbers = #tpu.dot_dimension_numbers<[1], [0], [0], [1], [0, 0, 1, 1], [], []>} : vector<8x8xbf16>, vector<8x288xbf16>, vector<8x288xf32> -> vector<8x288xf32>
    %63 = arith.addf %57, %62 : vector<8x288xf32>
    %cst_56 = arith.constant dense<0.000000e+00> : vector<8x288xf32>
    %64 = tpu.matmul %26, %13, %cst_56 {dimension_numbers = #tpu.dot_dimension_numbers<[1], [0], [0], [1], [0, 0, 1, 1], [], []>} : vector<8x288xbf16>, vector<288x288xbf16>, vector<8x288xf32> -> vector<8x288xf32>
    %65 = arith.truncf %64 : vector<8x288xf32> to vector<8x288xbf16>
    %c6_57 = arith.constant 6 : index
    %c0_58 = arith.constant 0 : index
    %c0_59 = arith.constant 0 : index
    %66 = vector.load %arg4[%c6_57, %c0_58, %c0_59] : memref<9x8x8xbf16, #tpu.memory_space<vmem>>, vector<1x8x8xbf16>
    %67 = vector.shape_cast %66 : vector<1x8x8xbf16> to vector<8x8xbf16>
    %cst_60 = arith.constant dense<0.000000e+00> : vector<8x288xf32>
    %68 = tpu.matmul %67, %65, %cst_60 {dimension_numbers = #tpu.dot_dimension_numbers<[1], [0], [0], [1], [0, 0, 1, 1], [], []>} : vector<8x8xbf16>, vector<8x288xbf16>, vector<8x288xf32> -> vector<8x288xf32>
    %69 = arith.addf %63, %68 : vector<8x288xf32>
    %cst_61 = arith.constant dense<0.000000e+00> : vector<8x288xf32>
    %70 = tpu.matmul %26, %15, %cst_61 {dimension_numbers = #tpu.dot_dimension_numbers<[1], [0], [0], [1], [0, 0, 1, 1], [], []>} : vector<8x288xbf16>, vector<288x288xbf16>, vector<8x288xf32> -> vector<8x288xf32>
    %71 = arith.truncf %70 : vector<8x288xf32> to vector<8x288xbf16>
    %c7_62 = arith.constant 7 : index
    %c0_63 = arith.constant 0 : index
    %c0_64 = arith.constant 0 : index
    %72 = vector.load %arg4[%c7_62, %c0_63, %c0_64] : memref<9x8x8xbf16, #tpu.memory_space<vmem>>, vector<1x8x8xbf16>
    %73 = vector.shape_cast %72 : vector<1x8x8xbf16> to vector<8x8xbf16>
    %cst_65 = arith.constant dense<0.000000e+00> : vector<8x288xf32>
    %74 = tpu.matmul %73, %71, %cst_65 {dimension_numbers = #tpu.dot_dimension_numbers<[1], [0], [0], [1], [0, 0, 1, 1], [], []>} : vector<8x8xbf16>, vector<8x288xbf16>, vector<8x288xf32> -> vector<8x288xf32>
    %75 = arith.addf %69, %74 : vector<8x288xf32>
    %cst_66 = arith.constant dense<0.000000e+00> : vector<8x288xf32>
    %76 = tpu.matmul %26, %17, %cst_66 {dimension_numbers = #tpu.dot_dimension_numbers<[1], [0], [0], [1], [0, 0, 1, 1], [], []>} : vector<8x288xbf16>, vector<288x288xbf16>, vector<8x288xf32> -> vector<8x288xf32>
    %77 = arith.truncf %76 : vector<8x288xf32> to vector<8x288xbf16>
    %c8_67 = arith.constant 8 : index
    %c0_68 = arith.constant 0 : index
    %c0_69 = arith.constant 0 : index
    %78 = vector.load %arg4[%c8_67, %c0_68, %c0_69] : memref<9x8x8xbf16, #tpu.memory_space<vmem>>, vector<1x8x8xbf16>
    %79 = vector.shape_cast %78 : vector<1x8x8xbf16> to vector<8x8xbf16>
    %cst_70 = arith.constant dense<0.000000e+00> : vector<8x288xf32>
    %80 = tpu.matmul %79, %77, %cst_70 {dimension_numbers = #tpu.dot_dimension_numbers<[1], [0], [0], [1], [0, 0, 1, 1], [], []>} : vector<8x8xbf16>, vector<8x288xbf16>, vector<8x288xf32> -> vector<8x288xf32>
    %81 = arith.addf %75, %80 : vector<8x288xf32>
    %c0_71 = arith.constant 0 : index
    %c0_72 = arith.constant 0 : index
    %82 = vector.load %arg5[%c0_71, %c0_72] : memref<8x1xf32, #tpu.memory_space<vmem>>, vector<8x1xf32>
    %83 = vector.broadcast %82 : vector<8x1xf32> to vector<8x288xf32>
    %84 = arith.addf %81, %83 : vector<8x288xf32>
    %cst_73 = arith.constant 0.000000e+00 : f32
    %85 = vector.broadcast %cst_73 : f32 to vector<8x288xf32>
    %86 = arith.maximumf %84, %85 : vector<8x288xf32>
    %87 = arith.truncf %86 : vector<8x288xf32> to vector<8x288xbf16>
    %cst_74 = arith.constant 0.000000e+00 : f32
    %88 = vector.broadcast %cst_74 : f32 to vector<8x288xf32>
    %cst_75 = arith.constant dense<0.000000e+00> : vector<8x288xf32>
    %89 = tpu.matmul %87, %1, %cst_75 {dimension_numbers = #tpu.dot_dimension_numbers<[1], [0], [0], [1], [0, 0, 1, 1], [], []>} : vector<8x288xbf16>, vector<288x288xbf16>, vector<8x288xf32> -> vector<8x288xf32>
    %90 = arith.truncf %89 : vector<8x288xf32> to vector<8x288xbf16>
    %c0_76 = arith.constant 0 : index
    %c0_77 = arith.constant 0 : index
    %c0_78 = arith.constant 0 : index
    %91 = vector.load %arg6[%c0_76, %c0_77, %c0_78] : memref<9x8x8xbf16, #tpu.memory_space<vmem>>, vector<1x8x8xbf16>
    %92 = vector.shape_cast %91 : vector<1x8x8xbf16> to vector<8x8xbf16>
    %cst_79 = arith.constant dense<0.000000e+00> : vector<8x288xf32>
    %93 = tpu.matmul %92, %90, %cst_79 {dimension_numbers = #tpu.dot_dimension_numbers<[1], [0], [0], [1], [0, 0, 1, 1], [], []>} : vector<8x8xbf16>, vector<8x288xbf16>, vector<8x288xf32> -> vector<8x288xf32>
    %94 = arith.addf %88, %93 : vector<8x288xf32>
    %cst_80 = arith.constant dense<0.000000e+00> : vector<8x288xf32>
    %95 = tpu.matmul %87, %3, %cst_80 {dimension_numbers = #tpu.dot_dimension_numbers<[1], [0], [0], [1], [0, 0, 1, 1], [], []>} : vector<8x288xbf16>, vector<288x288xbf16>, vector<8x288xf32> -> vector<8x288xf32>
    %96 = arith.truncf %95 : vector<8x288xf32> to vector<8x288xbf16>
    %c1_81 = arith.constant 1 : index
    %c0_82 = arith.constant 0 : index
    %c0_83 = arith.constant 0 : index
    %97 = vector.load %arg6[%c1_81, %c0_82, %c0_83] : memref<9x8x8xbf16, #tpu.memory_space<vmem>>, vector<1x8x8xbf16>
    %98 = vector.shape_cast %97 : vector<1x8x8xbf16> to vector<8x8xbf16>
    %cst_84 = arith.constant dense<0.000000e+00> : vector<8x288xf32>
    %99 = tpu.matmul %98, %96, %cst_84 {dimension_numbers = #tpu.dot_dimension_numbers<[1], [0], [0], [1], [0, 0, 1, 1], [], []>} : vector<8x8xbf16>, vector<8x288xbf16>, vector<8x288xf32> -> vector<8x288xf32>
    %100 = arith.addf %94, %99 : vector<8x288xf32>
    %cst_85 = arith.constant dense<0.000000e+00> : vector<8x288xf32>
    %101 = tpu.matmul %87, %5, %cst_85 {dimension_numbers = #tpu.dot_dimension_numbers<[1], [0], [0], [1], [0, 0, 1, 1], [], []>} : vector<8x288xbf16>, vector<288x288xbf16>, vector<8x288xf32> -> vector<8x288xf32>
    %102 = arith.truncf %101 : vector<8x288xf32> to vector<8x288xbf16>
    %c2_86 = arith.constant 2 : index
    %c0_87 = arith.constant 0 : index
    %c0_88 = arith.constant 0 : index
    %103 = vector.load %arg6[%c2_86, %c0_87, %c0_88] : memref<9x8x8xbf16, #tpu.memory_space<vmem>>, vector<1x8x8xbf16>
    %104 = vector.shape_cast %103 : vector<1x8x8xbf16> to vector<8x8xbf16>
    %cst_89 = arith.constant dense<0.000000e+00> : vector<8x288xf32>
    %105 = tpu.matmul %104, %102, %cst_89 {dimension_numbers = #tpu.dot_dimension_numbers<[1], [0], [0], [1], [0, 0, 1, 1], [], []>} : vector<8x8xbf16>, vector<8x288xbf16>, vector<8x288xf32> -> vector<8x288xf32>
    %106 = arith.addf %100, %105 : vector<8x288xf32>
    %cst_90 = arith.constant dense<0.000000e+00> : vector<8x288xf32>
    %107 = tpu.matmul %87, %7, %cst_90 {dimension_numbers = #tpu.dot_dimension_numbers<[1], [0], [0], [1], [0, 0, 1, 1], [], []>} : vector<8x288xbf16>, vector<288x288xbf16>, vector<8x288xf32> -> vector<8x288xf32>
    %108 = arith.truncf %107 : vector<8x288xf32> to vector<8x288xbf16>
    %c3_91 = arith.constant 3 : index
    %c0_92 = arith.constant 0 : index
    %c0_93 = arith.constant 0 : index
    %109 = vector.load %arg6[%c3_91, %c0_92, %c0_93] : memref<9x8x8xbf16, #tpu.memory_space<vmem>>, vector<1x8x8xbf16>
    %110 = vector.shape_cast %109 : vector<1x8x8xbf16> to vector<8x8xbf16>
    %cst_94 = arith.constant dense<0.000000e+00> : vector<8x288xf32>
    %111 = tpu.matmul %110, %108, %cst_94 {dimension_numbers = #tpu.dot_dimension_numbers<[1], [0], [0], [1], [0, 0, 1, 1], [], []>} : vector<8x8xbf16>, vector<8x288xbf16>, vector<8x288xf32> -> vector<8x288xf32>
    %112 = arith.addf %106, %111 : vector<8x288xf32>
    %cst_95 = arith.constant dense<0.000000e+00> : vector<8x288xf32>
    %113 = tpu.matmul %87, %9, %cst_95 {dimension_numbers = #tpu.dot_dimension_numbers<[1], [0], [0], [1], [0, 0, 1, 1], [], []>} : vector<8x288xbf16>, vector<288x288xbf16>, vector<8x288xf32> -> vector<8x288xf32>
    %114 = arith.truncf %113 : vector<8x288xf32> to vector<8x288xbf16>
    %c4_96 = arith.constant 4 : index
    %c0_97 = arith.constant 0 : index
    %c0_98 = arith.constant 0 : index
    %115 = vector.load %arg6[%c4_96, %c0_97, %c0_98] : memref<9x8x8xbf16, #tpu.memory_space<vmem>>, vector<1x8x8xbf16>
    %116 = vector.shape_cast %115 : vector<1x8x8xbf16> to vector<8x8xbf16>
    %cst_99 = arith.constant dense<0.000000e+00> : vector<8x288xf32>
    %117 = tpu.matmul %116, %114, %cst_99 {dimension_numbers = #tpu.dot_dimension_numbers<[1], [0], [0], [1], [0, 0, 1, 1], [], []>} : vector<8x8xbf16>, vector<8x288xbf16>, vector<8x288xf32> -> vector<8x288xf32>
    %118 = arith.addf %112, %117 : vector<8x288xf32>
    %cst_100 = arith.constant dense<0.000000e+00> : vector<8x288xf32>
    %119 = tpu.matmul %87, %11, %cst_100 {dimension_numbers = #tpu.dot_dimension_numbers<[1], [0], [0], [1], [0, 0, 1, 1], [], []>} : vector<8x288xbf16>, vector<288x288xbf16>, vector<8x288xf32> -> vector<8x288xf32>
    %120 = arith.truncf %119 : vector<8x288xf32> to vector<8x288xbf16>
    %c5_101 = arith.constant 5 : index
    %c0_102 = arith.constant 0 : index
    %c0_103 = arith.constant 0 : index
    %121 = vector.load %arg6[%c5_101, %c0_102, %c0_103] : memref<9x8x8xbf16, #tpu.memory_space<vmem>>, vector<1x8x8xbf16>
    %122 = vector.shape_cast %121 : vector<1x8x8xbf16> to vector<8x8xbf16>
    %cst_104 = arith.constant dense<0.000000e+00> : vector<8x288xf32>
    %123 = tpu.matmul %122, %120, %cst_104 {dimension_numbers = #tpu.dot_dimension_numbers<[1], [0], [0], [1], [0, 0, 1, 1], [], []>} : vector<8x8xbf16>, vector<8x288xbf16>, vector<8x288xf32> -> vector<8x288xf32>
    %124 = arith.addf %118, %123 : vector<8x288xf32>
    %cst_105 = arith.constant dense<0.000000e+00> : vector<8x288xf32>
    %125 = tpu.matmul %87, %13, %cst_105 {dimension_numbers = #tpu.dot_dimension_numbers<[1], [0], [0], [1], [0, 0, 1, 1], [], []>} : vector<8x288xbf16>, vector<288x288xbf16>, vector<8x288xf32> -> vector<8x288xf32>
    %126 = arith.truncf %125 : vector<8x288xf32> to vector<8x288xbf16>
    %c6_106 = arith.constant 6 : index
    %c0_107 = arith.constant 0 : index
    %c0_108 = arith.constant 0 : index
    %127 = vector.load %arg6[%c6_106, %c0_107, %c0_108] : memref<9x8x8xbf16, #tpu.memory_space<vmem>>, vector<1x8x8xbf16>
    %128 = vector.shape_cast %127 : vector<1x8x8xbf16> to vector<8x8xbf16>
    %cst_109 = arith.constant dense<0.000000e+00> : vector<8x288xf32>
    %129 = tpu.matmul %128, %126, %cst_109 {dimension_numbers = #tpu.dot_dimension_numbers<[1], [0], [0], [1], [0, 0, 1, 1], [], []>} : vector<8x8xbf16>, vector<8x288xbf16>, vector<8x288xf32> -> vector<8x288xf32>
    %130 = arith.addf %124, %129 : vector<8x288xf32>
    %cst_110 = arith.constant dense<0.000000e+00> : vector<8x288xf32>
    %131 = tpu.matmul %87, %15, %cst_110 {dimension_numbers = #tpu.dot_dimension_numbers<[1], [0], [0], [1], [0, 0, 1, 1], [], []>} : vector<8x288xbf16>, vector<288x288xbf16>, vector<8x288xf32> -> vector<8x288xf32>
    %132 = arith.truncf %131 : vector<8x288xf32> to vector<8x288xbf16>
    %c7_111 = arith.constant 7 : index
    %c0_112 = arith.constant 0 : index
    %c0_113 = arith.constant 0 : index
    %133 = vector.load %arg6[%c7_111, %c0_112, %c0_113] : memref<9x8x8xbf16, #tpu.memory_space<vmem>>, vector<1x8x8xbf16>
    %134 = vector.shape_cast %133 : vector<1x8x8xbf16> to vector<8x8xbf16>
    %cst_114 = arith.constant dense<0.000000e+00> : vector<8x288xf32>
    %135 = tpu.matmul %134, %132, %cst_114 {dimension_numbers = #tpu.dot_dimension_numbers<[1], [0], [0], [1], [0, 0, 1, 1], [], []>} : vector<8x8xbf16>, vector<8x288xbf16>, vector<8x288xf32> -> vector<8x288xf32>
    %136 = arith.addf %130, %135 : vector<8x288xf32>
    %cst_115 = arith.constant dense<0.000000e+00> : vector<8x288xf32>
    %137 = tpu.matmul %87, %17, %cst_115 {dimension_numbers = #tpu.dot_dimension_numbers<[1], [0], [0], [1], [0, 0, 1, 1], [], []>} : vector<8x288xbf16>, vector<288x288xbf16>, vector<8x288xf32> -> vector<8x288xf32>
    %138 = arith.truncf %137 : vector<8x288xf32> to vector<8x288xbf16>
    %c8_116 = arith.constant 8 : index
    %c0_117 = arith.constant 0 : index
    %c0_118 = arith.constant 0 : index
    %139 = vector.load %arg6[%c8_116, %c0_117, %c0_118] : memref<9x8x8xbf16, #tpu.memory_space<vmem>>, vector<1x8x8xbf16>
    %140 = vector.shape_cast %139 : vector<1x8x8xbf16> to vector<8x8xbf16>
    %cst_119 = arith.constant dense<0.000000e+00> : vector<8x288xf32>
    %141 = tpu.matmul %140, %138, %cst_119 {dimension_numbers = #tpu.dot_dimension_numbers<[1], [0], [0], [1], [0, 0, 1, 1], [], []>} : vector<8x8xbf16>, vector<8x288xbf16>, vector<8x288xf32> -> vector<8x288xf32>
    %142 = arith.addf %136, %141 : vector<8x288xf32>
    %c0_120 = arith.constant 0 : index
    %c0_121 = arith.constant 0 : index
    %143 = vector.load %arg7[%c0_120, %c0_121] : memref<8x1xf32, #tpu.memory_space<vmem>>, vector<8x1xf32>
    %144 = vector.broadcast %143 : vector<8x1xf32> to vector<8x288xf32>
    %145 = arith.addf %142, %144 : vector<8x288xf32>
    %146 = arith.addf %145, %23 : vector<8x288xf32>
    %cst_122 = arith.constant 0.000000e+00 : f32
    %147 = vector.broadcast %cst_122 : f32 to vector<8x288xf32>
    %148 = arith.maximumf %146, %147 : vector<8x288xf32>
    %149 = arith.truncf %148 : vector<8x288xf32> to vector<8x288xbf16>
    %cst_123 = arith.constant 0.000000e+00 : f32
    %150 = vector.broadcast %cst_123 : f32 to vector<32x288xf32>
    %cst_124 = arith.constant dense<0.000000e+00> : vector<8x288xf32>
    %151 = tpu.matmul %149, %1, %cst_124 {dimension_numbers = #tpu.dot_dimension_numbers<[1], [0], [0], [1], [0, 0, 1, 1], [], []>} : vector<8x288xbf16>, vector<288x288xbf16>, vector<8x288xf32> -> vector<8x288xf32>
    %152 = arith.truncf %151 : vector<8x288xf32> to vector<8x288xbf16>
    %c0_125 = arith.constant 0 : index
    %c0_126 = arith.constant 0 : index
    %c0_127 = arith.constant 0 : index
    %153 = vector.load %arg8[%c0_125, %c0_126, %c0_127] : memref<9x32x8xbf16, #tpu.memory_space<vmem>>, vector<1x32x8xbf16>
    %154 = vector.shape_cast %153 : vector<1x32x8xbf16> to vector<32x8xbf16>
    %cst_128 = arith.constant dense<0.000000e+00> : vector<32x288xf32>
    %155 = tpu.matmul %154, %152, %cst_128 {dimension_numbers = #tpu.dot_dimension_numbers<[1], [0], [0], [1], [0, 0, 1, 1], [], []>} : vector<32x8xbf16>, vector<8x288xbf16>, vector<32x288xf32> -> vector<32x288xf32>
    %156 = arith.addf %150, %155 : vector<32x288xf32>
    %cst_129 = arith.constant dense<0.000000e+00> : vector<8x288xf32>
    %157 = tpu.matmul %149, %3, %cst_129 {dimension_numbers = #tpu.dot_dimension_numbers<[1], [0], [0], [1], [0, 0, 1, 1], [], []>} : vector<8x288xbf16>, vector<288x288xbf16>, vector<8x288xf32> -> vector<8x288xf32>
    %158 = arith.truncf %157 : vector<8x288xf32> to vector<8x288xbf16>
    %c1_130 = arith.constant 1 : index
    %c0_131 = arith.constant 0 : index
    %c0_132 = arith.constant 0 : index
    %159 = vector.load %arg8[%c1_130, %c0_131, %c0_132] : memref<9x32x8xbf16, #tpu.memory_space<vmem>>, vector<1x32x8xbf16>
    %160 = vector.shape_cast %159 : vector<1x32x8xbf16> to vector<32x8xbf16>
    %cst_133 = arith.constant dense<0.000000e+00> : vector<32x288xf32>
    %161 = tpu.matmul %160, %158, %cst_133 {dimension_numbers = #tpu.dot_dimension_numbers<[1], [0], [0], [1], [0, 0, 1, 1], [], []>} : vector<32x8xbf16>, vector<8x288xbf16>, vector<32x288xf32> -> vector<32x288xf32>
    %162 = arith.addf %156, %161 : vector<32x288xf32>
    %cst_134 = arith.constant dense<0.000000e+00> : vector<8x288xf32>
    %163 = tpu.matmul %149, %5, %cst_134 {dimension_numbers = #tpu.dot_dimension_numbers<[1], [0], [0], [1], [0, 0, 1, 1], [], []>} : vector<8x288xbf16>, vector<288x288xbf16>, vector<8x288xf32> -> vector<8x288xf32>
    %164 = arith.truncf %163 : vector<8x288xf32> to vector<8x288xbf16>
    %c2_135 = arith.constant 2 : index
    %c0_136 = arith.constant 0 : index
    %c0_137 = arith.constant 0 : index
    %165 = vector.load %arg8[%c2_135, %c0_136, %c0_137] : memref<9x32x8xbf16, #tpu.memory_space<vmem>>, vector<1x32x8xbf16>
    %166 = vector.shape_cast %165 : vector<1x32x8xbf16> to vector<32x8xbf16>
    %cst_138 = arith.constant dense<0.000000e+00> : vector<32x288xf32>
    %167 = tpu.matmul %166, %164, %cst_138 {dimension_numbers = #tpu.dot_dimension_numbers<[1], [0], [0], [1], [0, 0, 1, 1], [], []>} : vector<32x8xbf16>, vector<8x288xbf16>, vector<32x288xf32> -> vector<32x288xf32>
    %168 = arith.addf %162, %167 : vector<32x288xf32>
    %cst_139 = arith.constant dense<0.000000e+00> : vector<8x288xf32>
    %169 = tpu.matmul %149, %7, %cst_139 {dimension_numbers = #tpu.dot_dimension_numbers<[1], [0], [0], [1], [0, 0, 1, 1], [], []>} : vector<8x288xbf16>, vector<288x288xbf16>, vector<8x288xf32> -> vector<8x288xf32>
    %170 = arith.truncf %169 : vector<8x288xf32> to vector<8x288xbf16>
    %c3_140 = arith.constant 3 : index
    %c0_141 = arith.constant 0 : index
    %c0_142 = arith.constant 0 : index
    %171 = vector.load %arg8[%c3_140, %c0_141, %c0_142] : memref<9x32x8xbf16, #tpu.memory_space<vmem>>, vector<1x32x8xbf16>
    %172 = vector.shape_cast %171 : vector<1x32x8xbf16> to vector<32x8xbf16>
    %cst_143 = arith.constant dense<0.000000e+00> : vector<32x288xf32>
    %173 = tpu.matmul %172, %170, %cst_143 {dimension_numbers = #tpu.dot_dimension_numbers<[1], [0], [0], [1], [0, 0, 1, 1], [], []>} : vector<32x8xbf16>, vector<8x288xbf16>, vector<32x288xf32> -> vector<32x288xf32>
    %174 = arith.addf %168, %173 : vector<32x288xf32>
    %cst_144 = arith.constant dense<0.000000e+00> : vector<8x288xf32>
    %175 = tpu.matmul %149, %9, %cst_144 {dimension_numbers = #tpu.dot_dimension_numbers<[1], [0], [0], [1], [0, 0, 1, 1], [], []>} : vector<8x288xbf16>, vector<288x288xbf16>, vector<8x288xf32> -> vector<8x288xf32>
    %176 = arith.truncf %175 : vector<8x288xf32> to vector<8x288xbf16>
    %c4_145 = arith.constant 4 : index
    %c0_146 = arith.constant 0 : index
    %c0_147 = arith.constant 0 : index
    %177 = vector.load %arg8[%c4_145, %c0_146, %c0_147] : memref<9x32x8xbf16, #tpu.memory_space<vmem>>, vector<1x32x8xbf16>
    %178 = vector.shape_cast %177 : vector<1x32x8xbf16> to vector<32x8xbf16>
    %cst_148 = arith.constant dense<0.000000e+00> : vector<32x288xf32>
    %179 = tpu.matmul %178, %176, %cst_148 {dimension_numbers = #tpu.dot_dimension_numbers<[1], [0], [0], [1], [0, 0, 1, 1], [], []>} : vector<32x8xbf16>, vector<8x288xbf16>, vector<32x288xf32> -> vector<32x288xf32>
    %180 = arith.addf %174, %179 : vector<32x288xf32>
    %cst_149 = arith.constant dense<0.000000e+00> : vector<8x288xf32>
    %181 = tpu.matmul %149, %11, %cst_149 {dimension_numbers = #tpu.dot_dimension_numbers<[1], [0], [0], [1], [0, 0, 1, 1], [], []>} : vector<8x288xbf16>, vector<288x288xbf16>, vector<8x288xf32> -> vector<8x288xf32>
    %182 = arith.truncf %181 : vector<8x288xf32> to vector<8x288xbf16>
    %c5_150 = arith.constant 5 : index
    %c0_151 = arith.constant 0 : index
    %c0_152 = arith.constant 0 : index
    %183 = vector.load %arg8[%c5_150, %c0_151, %c0_152] : memref<9x32x8xbf16, #tpu.memory_space<vmem>>, vector<1x32x8xbf16>
    %184 = vector.shape_cast %183 : vector<1x32x8xbf16> to vector<32x8xbf16>
    %cst_153 = arith.constant dense<0.000000e+00> : vector<32x288xf32>
    %185 = tpu.matmul %184, %182, %cst_153 {dimension_numbers = #tpu.dot_dimension_numbers<[1], [0], [0], [1], [0, 0, 1, 1], [], []>} : vector<32x8xbf16>, vector<8x288xbf16>, vector<32x288xf32> -> vector<32x288xf32>
    %186 = arith.addf %180, %185 : vector<32x288xf32>
    %cst_154 = arith.constant dense<0.000000e+00> : vector<8x288xf32>
    %187 = tpu.matmul %149, %13, %cst_154 {dimension_numbers = #tpu.dot_dimension_numbers<[1], [0], [0], [1], [0, 0, 1, 1], [], []>} : vector<8x288xbf16>, vector<288x288xbf16>, vector<8x288xf32> -> vector<8x288xf32>
    %188 = arith.truncf %187 : vector<8x288xf32> to vector<8x288xbf16>
    %c6_155 = arith.constant 6 : index
    %c0_156 = arith.constant 0 : index
    %c0_157 = arith.constant 0 : index
    %189 = vector.load %arg8[%c6_155, %c0_156, %c0_157] : memref<9x32x8xbf16, #tpu.memory_space<vmem>>, vector<1x32x8xbf16>
    %190 = vector.shape_cast %189 : vector<1x32x8xbf16> to vector<32x8xbf16>
    %cst_158 = arith.constant dense<0.000000e+00> : vector<32x288xf32>
    %191 = tpu.matmul %190, %188, %cst_158 {dimension_numbers = #tpu.dot_dimension_numbers<[1], [0], [0], [1], [0, 0, 1, 1], [], []>} : vector<32x8xbf16>, vector<8x288xbf16>, vector<32x288xf32> -> vector<32x288xf32>
    %192 = arith.addf %186, %191 : vector<32x288xf32>
    %cst_159 = arith.constant dense<0.000000e+00> : vector<8x288xf32>
    %193 = tpu.matmul %149, %15, %cst_159 {dimension_numbers = #tpu.dot_dimension_numbers<[1], [0], [0], [1], [0, 0, 1, 1], [], []>} : vector<8x288xbf16>, vector<288x288xbf16>, vector<8x288xf32> -> vector<8x288xf32>
    %194 = arith.truncf %193 : vector<8x288xf32> to vector<8x288xbf16>
    %c7_160 = arith.constant 7 : index
    %c0_161 = arith.constant 0 : index
    %c0_162 = arith.constant 0 : index
    %195 = vector.load %arg8[%c7_160, %c0_161, %c0_162] : memref<9x32x8xbf16, #tpu.memory_space<vmem>>, vector<1x32x8xbf16>
    %196 = vector.shape_cast %195 : vector<1x32x8xbf16> to vector<32x8xbf16>
    %cst_163 = arith.constant dense<0.000000e+00> : vector<32x288xf32>
    %197 = tpu.matmul %196, %194, %cst_163 {dimension_numbers = #tpu.dot_dimension_numbers<[1], [0], [0], [1], [0, 0, 1, 1], [], []>} : vector<32x8xbf16>, vector<8x288xbf16>, vector<32x288xf32> -> vector<32x288xf32>
    %198 = arith.addf %192, %197 : vector<32x288xf32>
    %cst_164 = arith.constant dense<0.000000e+00> : vector<8x288xf32>
    %199 = tpu.matmul %149, %17, %cst_164 {dimension_numbers = #tpu.dot_dimension_numbers<[1], [0], [0], [1], [0, 0, 1, 1], [], []>} : vector<8x288xbf16>, vector<288x288xbf16>, vector<8x288xf32> -> vector<8x288xf32>
    %200 = arith.truncf %199 : vector<8x288xf32> to vector<8x288xbf16>
    %c8_165 = arith.constant 8 : index
    %c0_166 = arith.constant 0 : index
    %c0_167 = arith.constant 0 : index
    %201 = vector.load %arg8[%c8_165, %c0_166, %c0_167] : memref<9x32x8xbf16, #tpu.memory_space<vmem>>, vector<1x32x8xbf16>
    %202 = vector.shape_cast %201 : vector<1x32x8xbf16> to vector<32x8xbf16>
    %cst_168 = arith.constant dense<0.000000e+00> : vector<32x288xf32>
    %203 = tpu.matmul %202, %200, %cst_168 {dimension_numbers = #tpu.dot_dimension_numbers<[1], [0], [0], [1], [0, 0, 1, 1], [], []>} : vector<32x8xbf16>, vector<8x288xbf16>, vector<32x288xf32> -> vector<32x288xf32>
    %204 = arith.addf %198, %203 : vector<32x288xf32>
    %c0_169 = arith.constant 0 : index
    %c0_170 = arith.constant 0 : index
    %205 = vector.load %arg9[%c0_169, %c0_170] : memref<32x1xf32, #tpu.memory_space<vmem>>, vector<32x1xf32>
    %206 = vector.broadcast %205 : vector<32x1xf32> to vector<32x288xf32>
    %207 = arith.addf %204, %206 : vector<32x288xf32>
    %cst_171 = arith.constant 0.000000e+00 : f32
    %208 = vector.broadcast %cst_171 : f32 to vector<32x288xf32>
    %209 = arith.maximumf %207, %208 : vector<32x288xf32>
    %210 = arith.truncf %209 : vector<32x288xf32> to vector<32x288xbf16>
    %cst_172 = arith.constant 0.000000e+00 : f32
    %211 = vector.broadcast %cst_172 : f32 to vector<16x288xf32>
    %cst_173 = arith.constant dense<0.000000e+00> : vector<32x288xf32>
    %212 = tpu.matmul %210, %1, %cst_173 {dimension_numbers = #tpu.dot_dimension_numbers<[1], [0], [0], [1], [0, 0, 1, 1], [], []>} : vector<32x288xbf16>, vector<288x288xbf16>, vector<32x288xf32> -> vector<32x288xf32>
    %213 = arith.truncf %212 : vector<32x288xf32> to vector<32x288xbf16>
    %c0_174 = arith.constant 0 : index
    %c0_175 = arith.constant 0 : index
    %c0_176 = arith.constant 0 : index
    %214 = vector.load %arg10[%c0_174, %c0_175, %c0_176] : memref<9x16x32xbf16, #tpu.memory_space<vmem>>, vector<1x16x32xbf16>
    %215 = vector.shape_cast %214 : vector<1x16x32xbf16> to vector<16x32xbf16>
    %cst_177 = arith.constant dense<0.000000e+00> : vector<16x288xf32>
    %216 = tpu.matmul %215, %213, %cst_177 {dimension_numbers = #tpu.dot_dimension_numbers<[1], [0], [0], [1], [0, 0, 1, 1], [], []>} : vector<16x32xbf16>, vector<32x288xbf16>, vector<16x288xf32> -> vector<16x288xf32>
    %217 = arith.addf %211, %216 : vector<16x288xf32>
    %cst_178 = arith.constant dense<0.000000e+00> : vector<32x288xf32>
    %218 = tpu.matmul %210, %3, %cst_178 {dimension_numbers = #tpu.dot_dimension_numbers<[1], [0], [0], [1], [0, 0, 1, 1], [], []>} : vector<32x288xbf16>, vector<288x288xbf16>, vector<32x288xf32> -> vector<32x288xf32>
    %219 = arith.truncf %218 : vector<32x288xf32> to vector<32x288xbf16>
    %c1_179 = arith.constant 1 : index
    %c0_180 = arith.constant 0 : index
    %c0_181 = arith.constant 0 : index
    %220 = vector.load %arg10[%c1_179, %c0_180, %c0_181] : memref<9x16x32xbf16, #tpu.memory_space<vmem>>, vector<1x16x32xbf16>
    %221 = vector.shape_cast %220 : vector<1x16x32xbf16> to vector<16x32xbf16>
    %cst_182 = arith.constant dense<0.000000e+00> : vector<16x288xf32>
    %222 = tpu.matmul %221, %219, %cst_182 {dimension_numbers = #tpu.dot_dimension_numbers<[1], [0], [0], [1], [0, 0, 1, 1], [], []>} : vector<16x32xbf16>, vector<32x288xbf16>, vector<16x288xf32> -> vector<16x288xf32>
    %223 = arith.addf %217, %222 : vector<16x288xf32>
    %cst_183 = arith.constant dense<0.000000e+00> : vector<32x288xf32>
    %224 = tpu.matmul %210, %5, %cst_183 {dimension_numbers = #tpu.dot_dimension_numbers<[1], [0], [0], [1], [0, 0, 1, 1], [], []>} : vector<32x288xbf16>, vector<288x288xbf16>, vector<32x288xf32> -> vector<32x288xf32>
    %225 = arith.truncf %224 : vector<32x288xf32> to vector<32x288xbf16>
    %c2_184 = arith.constant 2 : index
    %c0_185 = arith.constant 0 : index
    %c0_186 = arith.constant 0 : index
    %226 = vector.load %arg10[%c2_184, %c0_185, %c0_186] : memref<9x16x32xbf16, #tpu.memory_space<vmem>>, vector<1x16x32xbf16>
    %227 = vector.shape_cast %226 : vector<1x16x32xbf16> to vector<16x32xbf16>
    %cst_187 = arith.constant dense<0.000000e+00> : vector<16x288xf32>
    %228 = tpu.matmul %227, %225, %cst_187 {dimension_numbers = #tpu.dot_dimension_numbers<[1], [0], [0], [1], [0, 0, 1, 1], [], []>} : vector<16x32xbf16>, vector<32x288xbf16>, vector<16x288xf32> -> vector<16x288xf32>
    %229 = arith.addf %223, %228 : vector<16x288xf32>
    %cst_188 = arith.constant dense<0.000000e+00> : vector<32x288xf32>
    %230 = tpu.matmul %210, %7, %cst_188 {dimension_numbers = #tpu.dot_dimension_numbers<[1], [0], [0], [1], [0, 0, 1, 1], [], []>} : vector<32x288xbf16>, vector<288x288xbf16>, vector<32x288xf32> -> vector<32x288xf32>
    %231 = arith.truncf %230 : vector<32x288xf32> to vector<32x288xbf16>
    %c3_189 = arith.constant 3 : index
    %c0_190 = arith.constant 0 : index
    %c0_191 = arith.constant 0 : index
    %232 = vector.load %arg10[%c3_189, %c0_190, %c0_191] : memref<9x16x32xbf16, #tpu.memory_space<vmem>>, vector<1x16x32xbf16>
    %233 = vector.shape_cast %232 : vector<1x16x32xbf16> to vector<16x32xbf16>
    %cst_192 = arith.constant dense<0.000000e+00> : vector<16x288xf32>
    %234 = tpu.matmul %233, %231, %cst_192 {dimension_numbers = #tpu.dot_dimension_numbers<[1], [0], [0], [1], [0, 0, 1, 1], [], []>} : vector<16x32xbf16>, vector<32x288xbf16>, vector<16x288xf32> -> vector<16x288xf32>
    %235 = arith.addf %229, %234 : vector<16x288xf32>
    %cst_193 = arith.constant dense<0.000000e+00> : vector<32x288xf32>
    %236 = tpu.matmul %210, %9, %cst_193 {dimension_numbers = #tpu.dot_dimension_numbers<[1], [0], [0], [1], [0, 0, 1, 1], [], []>} : vector<32x288xbf16>, vector<288x288xbf16>, vector<32x288xf32> -> vector<32x288xf32>
    %237 = arith.truncf %236 : vector<32x288xf32> to vector<32x288xbf16>
    %c4_194 = arith.constant 4 : index
    %c0_195 = arith.constant 0 : index
    %c0_196 = arith.constant 0 : index
    %238 = vector.load %arg10[%c4_194, %c0_195, %c0_196] : memref<9x16x32xbf16, #tpu.memory_space<vmem>>, vector<1x16x32xbf16>
    %239 = vector.shape_cast %238 : vector<1x16x32xbf16> to vector<16x32xbf16>
    %cst_197 = arith.constant dense<0.000000e+00> : vector<16x288xf32>
    %240 = tpu.matmul %239, %237, %cst_197 {dimension_numbers = #tpu.dot_dimension_numbers<[1], [0], [0], [1], [0, 0, 1, 1], [], []>} : vector<16x32xbf16>, vector<32x288xbf16>, vector<16x288xf32> -> vector<16x288xf32>
    %241 = arith.addf %235, %240 : vector<16x288xf32>
    %cst_198 = arith.constant dense<0.000000e+00> : vector<32x288xf32>
    %242 = tpu.matmul %210, %11, %cst_198 {dimension_numbers = #tpu.dot_dimension_numbers<[1], [0], [0], [1], [0, 0, 1, 1], [], []>} : vector<32x288xbf16>, vector<288x288xbf16>, vector<32x288xf32> -> vector<32x288xf32>
    %243 = arith.truncf %242 : vector<32x288xf32> to vector<32x288xbf16>
    %c5_199 = arith.constant 5 : index
    %c0_200 = arith.constant 0 : index
    %c0_201 = arith.constant 0 : index
    %244 = vector.load %arg10[%c5_199, %c0_200, %c0_201] : memref<9x16x32xbf16, #tpu.memory_space<vmem>>, vector<1x16x32xbf16>
    %245 = vector.shape_cast %244 : vector<1x16x32xbf16> to vector<16x32xbf16>
    %cst_202 = arith.constant dense<0.000000e+00> : vector<16x288xf32>
    %246 = tpu.matmul %245, %243, %cst_202 {dimension_numbers = #tpu.dot_dimension_numbers<[1], [0], [0], [1], [0, 0, 1, 1], [], []>} : vector<16x32xbf16>, vector<32x288xbf16>, vector<16x288xf32> -> vector<16x288xf32>
    %247 = arith.addf %241, %246 : vector<16x288xf32>
    %cst_203 = arith.constant dense<0.000000e+00> : vector<32x288xf32>
    %248 = tpu.matmul %210, %13, %cst_203 {dimension_numbers = #tpu.dot_dimension_numbers<[1], [0], [0], [1], [0, 0, 1, 1], [], []>} : vector<32x288xbf16>, vector<288x288xbf16>, vector<32x288xf32> -> vector<32x288xf32>
    %249 = arith.truncf %248 : vector<32x288xf32> to vector<32x288xbf16>
    %c6_204 = arith.constant 6 : index
    %c0_205 = arith.constant 0 : index
    %c0_206 = arith.constant 0 : index
    %250 = vector.load %arg10[%c6_204, %c0_205, %c0_206] : memref<9x16x32xbf16, #tpu.memory_space<vmem>>, vector<1x16x32xbf16>
    %251 = vector.shape_cast %250 : vector<1x16x32xbf16> to vector<16x32xbf16>
    %cst_207 = arith.constant dense<0.000000e+00> : vector<16x288xf32>
    %252 = tpu.matmul %251, %249, %cst_207 {dimension_numbers = #tpu.dot_dimension_numbers<[1], [0], [0], [1], [0, 0, 1, 1], [], []>} : vector<16x32xbf16>, vector<32x288xbf16>, vector<16x288xf32> -> vector<16x288xf32>
    %253 = arith.addf %247, %252 : vector<16x288xf32>
    %cst_208 = arith.constant dense<0.000000e+00> : vector<32x288xf32>
    %254 = tpu.matmul %210, %15, %cst_208 {dimension_numbers = #tpu.dot_dimension_numbers<[1], [0], [0], [1], [0, 0, 1, 1], [], []>} : vector<32x288xbf16>, vector<288x288xbf16>, vector<32x288xf32> -> vector<32x288xf32>
    %255 = arith.truncf %254 : vector<32x288xf32> to vector<32x288xbf16>
    %c7_209 = arith.constant 7 : index
    %c0_210 = arith.constant 0 : index
    %c0_211 = arith.constant 0 : index
    %256 = vector.load %arg10[%c7_209, %c0_210, %c0_211] : memref<9x16x32xbf16, #tpu.memory_space<vmem>>, vector<1x16x32xbf16>
    %257 = vector.shape_cast %256 : vector<1x16x32xbf16> to vector<16x32xbf16>
    %cst_212 = arith.constant dense<0.000000e+00> : vector<16x288xf32>
    %258 = tpu.matmul %257, %255, %cst_212 {dimension_numbers = #tpu.dot_dimension_numbers<[1], [0], [0], [1], [0, 0, 1, 1], [], []>} : vector<16x32xbf16>, vector<32x288xbf16>, vector<16x288xf32> -> vector<16x288xf32>
    %259 = arith.addf %253, %258 : vector<16x288xf32>
    %cst_213 = arith.constant dense<0.000000e+00> : vector<32x288xf32>
    %260 = tpu.matmul %210, %17, %cst_213 {dimension_numbers = #tpu.dot_dimension_numbers<[1], [0], [0], [1], [0, 0, 1, 1], [], []>} : vector<32x288xbf16>, vector<288x288xbf16>, vector<32x288xf32> -> vector<32x288xf32>
    %261 = arith.truncf %260 : vector<32x288xf32> to vector<32x288xbf16>
    %c8_214 = arith.constant 8 : index
    %c0_215 = arith.constant 0 : index
    %c0_216 = arith.constant 0 : index
    %262 = vector.load %arg10[%c8_214, %c0_215, %c0_216] : memref<9x16x32xbf16, #tpu.memory_space<vmem>>, vector<1x16x32xbf16>
    %263 = vector.shape_cast %262 : vector<1x16x32xbf16> to vector<16x32xbf16>
    %cst_217 = arith.constant dense<0.000000e+00> : vector<16x288xf32>
    %264 = tpu.matmul %263, %261, %cst_217 {dimension_numbers = #tpu.dot_dimension_numbers<[1], [0], [0], [1], [0, 0, 1, 1], [], []>} : vector<16x32xbf16>, vector<32x288xbf16>, vector<16x288xf32> -> vector<16x288xf32>
    %265 = arith.addf %259, %264 : vector<16x288xf32>
    %c0_218 = arith.constant 0 : index
    %c0_219 = arith.constant 0 : index
    %266 = vector.load %arg11[%c0_218, %c0_219] : memref<16x1xf32, #tpu.memory_space<vmem>>, vector<16x1xf32>
    %267 = vector.broadcast %266 : vector<16x1xf32> to vector<16x288xf32>
    %268 = arith.addf %265, %267 : vector<16x288xf32>
    %269 = arith.truncf %146 : vector<8x288xf32> to vector<8x288xbf16>
    %cst_220 = arith.constant dense<0.000000e+00> : vector<8x288xf32>
    %270 = tpu.matmul %269, %17, %cst_220 {dimension_numbers = #tpu.dot_dimension_numbers<[1], [0], [0], [1], [0, 0, 1, 1], [], []>} : vector<8x288xbf16>, vector<288x288xbf16>, vector<8x288xf32> -> vector<8x288xf32>
    %271 = arith.truncf %270 : vector<8x288xf32> to vector<8x288xbf16>
    %c0_221 = arith.constant 0 : index
    %c0_222 = arith.constant 0 : index
    %272 = vector.load %arg12[%c0_221, %c0_222] : memref<16x8xbf16, #tpu.memory_space<vmem>>, vector<16x8xbf16>
    %cst_223 = arith.constant dense<0.000000e+00> : vector<16x288xf32>
    %273 = tpu.matmul %272, %149, %cst_223 {dimension_numbers = #tpu.dot_dimension_numbers<[1], [0], [0], [1], [0, 0, 1, 1], [], []>} : vector<16x8xbf16>, vector<8x288xbf16>, vector<16x288xf32> -> vector<16x288xf32>
    %c0_224 = arith.constant 0 : index
    %c0_225 = arith.constant 0 : index
    %274 = vector.load %arg13[%c0_224, %c0_225] : memref<16x8xbf16, #tpu.memory_space<vmem>>, vector<16x8xbf16>
    %cst_226 = arith.constant dense<0.000000e+00> : vector<16x288xf32>
    %275 = tpu.matmul %274, %271, %cst_226 {dimension_numbers = #tpu.dot_dimension_numbers<[1], [0], [0], [1], [0, 0, 1, 1], [], []>} : vector<16x8xbf16>, vector<8x288xbf16>, vector<16x288xf32> -> vector<16x288xf32>
    %276 = arith.addf %273, %275 : vector<16x288xf32>
    %c0_227 = arith.constant 0 : index
    %c0_228 = arith.constant 0 : index
    %277 = vector.load %arg14[%c0_227, %c0_228] : memref<16x1xf32, #tpu.memory_space<vmem>>, vector<16x1xf32>
    %278 = vector.broadcast %277 : vector<16x1xf32> to vector<16x288xf32>
    %279 = arith.addf %276, %278 : vector<16x288xf32>
    %280 = arith.addf %268, %279 : vector<16x288xf32>
    %cst_229 = arith.constant 0.000000e+00 : f32
    %281 = vector.broadcast %cst_229 : f32 to vector<16x288xf32>
    %282 = arith.maximumf %280, %281 : vector<16x288xf32>
    %c0_230 = arith.constant 0 : index
    %c0_231 = arith.constant 0 : index
    %283 = vector.load %arg15[%c0_230, %c0_231] : memref<288x320xf32, #tpu.memory_space<vmem>>, vector<288x320xf32>
    %cst_232 = arith.constant dense<0.000000e+00> : vector<16x320xf32>
    %284 = tpu.matmul %282, %283, %cst_232 {dimension_numbers = #tpu.dot_dimension_numbers<[1], [0], [0], [1], [0, 0, 1, 1], [], []>} : vector<16x288xf32>, vector<288x320xf32>, vector<16x320xf32> -> vector<16x320xf32>
    %c0_233 = arith.constant 0 : index
    %c0_234 = arith.constant 0 : index
    %285 = vector.load %arg16[%c0_233, %c0_234] : memref<1x20xf32, #tpu.memory_space<vmem>>, vector<1x20xf32>
    %286 = vector.extract_strided_slice %284 {offsets = [0, 0], sizes = [1, 20], strides = [1, 1]} : vector<16x320xf32> to vector<1x20xf32>
    %287 = arith.addf %285, %286 : vector<1x20xf32>
    %288 = vector.extract_strided_slice %284 {offsets = [1, 20], sizes = [1, 20], strides = [1, 1]} : vector<16x320xf32> to vector<1x20xf32>
    %289 = arith.addf %287, %288 : vector<1x20xf32>
    %290 = vector.extract_strided_slice %284 {offsets = [2, 40], sizes = [1, 20], strides = [1, 1]} : vector<16x320xf32> to vector<1x20xf32>
    %291 = arith.addf %289, %290 : vector<1x20xf32>
    %292 = vector.extract_strided_slice %284 {offsets = [3, 60], sizes = [1, 20], strides = [1, 1]} : vector<16x320xf32> to vector<1x20xf32>
    %293 = arith.addf %291, %292 : vector<1x20xf32>
    %294 = vector.extract_strided_slice %284 {offsets = [4, 80], sizes = [1, 20], strides = [1, 1]} : vector<16x320xf32> to vector<1x20xf32>
    %295 = arith.addf %293, %294 : vector<1x20xf32>
    %296 = vector.extract_strided_slice %284 {offsets = [5, 100], sizes = [1, 20], strides = [1, 1]} : vector<16x320xf32> to vector<1x20xf32>
    %297 = arith.addf %295, %296 : vector<1x20xf32>
    %298 = vector.extract_strided_slice %284 {offsets = [6, 120], sizes = [1, 20], strides = [1, 1]} : vector<16x320xf32> to vector<1x20xf32>
    %299 = arith.addf %297, %298 : vector<1x20xf32>
    %300 = vector.extract_strided_slice %284 {offsets = [7, 140], sizes = [1, 20], strides = [1, 1]} : vector<16x320xf32> to vector<1x20xf32>
    %301 = arith.addf %299, %300 : vector<1x20xf32>
    %302 = vector.extract_strided_slice %284 {offsets = [8, 160], sizes = [1, 20], strides = [1, 1]} : vector<16x320xf32> to vector<1x20xf32>
    %303 = arith.addf %301, %302 : vector<1x20xf32>
    %304 = vector.extract_strided_slice %284 {offsets = [9, 180], sizes = [1, 20], strides = [1, 1]} : vector<16x320xf32> to vector<1x20xf32>
    %305 = arith.addf %303, %304 : vector<1x20xf32>
    %306 = vector.extract_strided_slice %284 {offsets = [10, 200], sizes = [1, 20], strides = [1, 1]} : vector<16x320xf32> to vector<1x20xf32>
    %307 = arith.addf %305, %306 : vector<1x20xf32>
    %308 = vector.extract_strided_slice %284 {offsets = [11, 220], sizes = [1, 20], strides = [1, 1]} : vector<16x320xf32> to vector<1x20xf32>
    %309 = arith.addf %307, %308 : vector<1x20xf32>
    %310 = vector.extract_strided_slice %284 {offsets = [12, 240], sizes = [1, 20], strides = [1, 1]} : vector<16x320xf32> to vector<1x20xf32>
    %311 = arith.addf %309, %310 : vector<1x20xf32>
    %312 = vector.extract_strided_slice %284 {offsets = [13, 260], sizes = [1, 20], strides = [1, 1]} : vector<16x320xf32> to vector<1x20xf32>
    %313 = arith.addf %311, %312 : vector<1x20xf32>
    %314 = vector.extract_strided_slice %284 {offsets = [14, 280], sizes = [1, 20], strides = [1, 1]} : vector<16x320xf32> to vector<1x20xf32>
    %315 = arith.addf %313, %314 : vector<1x20xf32>
    %316 = vector.extract_strided_slice %284 {offsets = [15, 300], sizes = [1, 20], strides = [1, 1]} : vector<16x320xf32> to vector<1x20xf32>
    %317 = arith.addf %315, %316 : vector<1x20xf32>
    %c0_235 = arith.constant 0 : index
    %c0_236 = arith.constant 0 : index
    %318 = vector.load %arg17[%c0_235, %c0_236] : memref<1x20xf32, #tpu.memory_space<vmem>>, vector<1x20xf32>
    tpu.vector_store %arg17[%c0_235, %c0_236], %317 {strides = array<i32>} : memref<1x20xf32, #tpu.memory_space<vmem>>, vector<1x20xf32>,
    return
  }
}

</mosaic_0001>

<llo_original>
// kernel: network_fwd.1
$region0: #{network_fwd.1}
  #allocation0 [shape = 'u32[]', space=smem, size = 0x4, offset = 0x4, fixed_abs, tag = 'smem constant byte address 0x4 - core index']
  #allocation1 [shape = 'u32[72,128]{1,0:T(1,128)}', space=vmem, size = 0x9000, scoped, tag = 'internal scratch']
  %s0 = inlined_call_operand.vmem [shape: bf16[147,288], index: 0, kind: input, shape index: {}]
  %s1 = inlined_call_operand.vmem [shape: bf16[8,147], index: 1, kind: input, shape index: {}]
  %s2 = inlined_call_operand.vmem [shape: f32[8,1], index: 2, kind: input, shape index: {}]
  %s3 = inlined_call_operand.vmem [shape: bf16[9,288,288], index: 3, kind: input, shape index: {}]
  %s4 = inlined_call_operand.vmem [shape: bf16[9,8,8], index: 4, kind: input, shape index: {}]
  %s5 = inlined_call_operand.vmem [shape: f32[8,1], index: 5, kind: input, shape index: {}]
  %s6 = inlined_call_operand.vmem [shape: bf16[9,8,8], index: 6, kind: input, shape index: {}]
  %s7 = inlined_call_operand.vmem [shape: f32[8,1], index: 7, kind: input, shape index: {}]
  %s8 = inlined_call_operand.vmem [shape: bf16[9,32,8], index: 8, kind: input, shape index: {}]
  %s9 = inlined_call_operand.vmem [shape: f32[32,1], index: 9, kind: input, shape index: {}]
  %s10 = inlined_call_operand.vmem [shape: bf16[9,16,32], index: 10, kind: input, shape index: {}]
  %s11 = inlined_call_operand.vmem [shape: f32[16,1], index: 11, kind: input, shape index: {}]
  %s12 = inlined_call_operand.vmem [shape: bf16[16,8], index: 12, kind: input, shape index: {}]
  %s13 = inlined_call_operand.vmem [shape: bf16[16,8], index: 13, kind: input, shape index: {}]
  %s14 = inlined_call_operand.vmem [shape: f32[16,1], index: 14, kind: input, shape index: {}]
  %s15 = inlined_call_operand.vmem [shape: f32[288,320], index: 15, kind: input, shape index: {}]
  %s16 = inlined_call_operand.vmem [shape: f32[1,20], index: 16, kind: input, shape index: {}]
  %s17 = inlined_call_operand.vmem [shape: f32[1,20], index: 17, kind: output, shape index: {}]
  %s18 = sld [smem:[#allocation0]]
  $region78: #{network_fwd.1} parent=0
    _
  %s20 = ssub.s32 1, %s18
  %s21 = scalar_select 0, %s20, %s18
  // Predicated region
  $region2: #{network_fwd.1} parent=0 // pred_check
    _
  $region3: #{network_fwd.1} parent=0 // pred_check_branch
    %23 = sbr.rel (0) target = $region5
  $region4: #{network_fwd.1} parent=0 // pred_region
    _
  $region5: #{network_fwd.1} parent=0 // pred_fallthru
    _
  // Predicated region
  $region6: #{network_fwd.1} parent=0 // pred_check
    _
  $region7: #{network_fwd.1} parent=0 // pred_check_branch
    %25 = sbr.rel (0) target = $region9
  $region8: #{network_fwd.1} parent=0 // pred_region
    _
  $region9: #{network_fwd.1} parent=0 // pred_fallthru
    _
  // Predicated region
  $region10: #{network_fwd.1} parent=0 // pred_check
    _
  $region11: #{network_fwd.1} parent=0 // pred_check_branch
    %27 = sbr.rel (0) target = $region13
  $region12: #{network_fwd.1} parent=0 // pred_region
    _
  $region13: #{network_fwd.1} parent=0 // pred_fallthru
    _
  // Predicated region
  $region14: #{network_fwd.1} parent=0 // pred_check
    _
  $region15: #{network_fwd.1} parent=0 // pred_check_branch
    %29 = sbr.rel (0) target = $region17
  $region16: #{network_fwd.1} parent=0 // pred_region
    _
  $region17: #{network_fwd.1} parent=0 // pred_fallthru
    _
  // Predicated region
  $region18: #{network_fwd.1} parent=0 // pred_check
    _
  $region19: #{network_fwd.1} parent=0 // pred_check_branch
    %31 = sbr.rel (0) target = $region21
  $region20: #{network_fwd.1} parent=0 // pred_region
    _
  $region21: #{network_fwd.1} parent=0 // pred_fallthru
    _
  // Predicated region
  $region22: #{network_fwd.1} parent=0 // pred_check
    _
  $region23: #{network_fwd.1} parent=0 // pred_check_branch
    %33 = sbr.rel (0) target = $region25
  $region24: #{network_fwd.1} parent=0 // pred_region
    _
  $region25: #{network_fwd.1} parent=0 // pred_fallthru
    _
  // Predicated region
  $region26: #{network_fwd.1} parent=0 // pred_check
    _
  $region27: #{network_fwd.1} parent=0 // pred_check_branch
    %35 = sbr.rel (0) target = $region29
  $region28: #{network_fwd.1} parent=0 // pred_region
    _
  $region29: #{network_fwd.1} parent=0 // pred_fallthru
    _
  // Predicated region
  $region30: #{network_fwd.1} parent=0 // pred_check
    _
  $region31: #{network_fwd.1} parent=0 // pred_check_branch
    %37 = sbr.rel (0) target = $region33
  $region32: #{network_fwd.1} parent=0 // pred_region
    _
  $region33: #{network_fwd.1} parent=0 // pred_fallthru
    _
  // Predicated region
  $region34: #{network_fwd.1} parent=0 // pred_check
    _
  $region35: #{network_fwd.1} parent=0 // pred_check_branch
    %39 = sbr.rel (0) target = $region37
  $region36: #{network_fwd.1} parent=0 // pred_region
    _
  $region37: #{network_fwd.1} parent=0 // pred_fallthru
    _
  // Predicated region
  $region38: #{network_fwd.1} parent=0 // pred_check
    _
  $region39: #{network_fwd.1} parent=0 // pred_check_branch
    %41 = sbr.rel (0) target = $region41
  $region40: #{network_fwd.1} parent=0 // pred_region
    _
  $region41: #{network_fwd.1} parent=0 // pred_fallthru
    _
  // Predicated region
  $region42: #{network_fwd.1} parent=0 // pred_check
    _
  $region43: #{network_fwd.1} parent=0 // pred_check_branch
    %43 = sbr.rel (0) target = $region45
  $region44: #{network_fwd.1} parent=0 // pred_region
    _
  $region45: #{network_fwd.1} parent=0 // pred_fallthru
    _
  // Predicated region
  $region46: #{network_fwd.1} parent=0 // pred_check
    _
  $region47: #{network_fwd.1} parent=0 // pred_check_branch
    %45 = sbr.rel (0) target = $region49
  $region48: #{network_fwd.1} parent=0 // pred_region
    _
  $region49: #{network_fwd.1} parent=0 // pred_fallthru
    _
  // Predicated region
  $region50: #{network_fwd.1} parent=0 // pred_check
    _
  $region51: #{network_fwd.1} parent=0 // pred_check_branch
    %47 = sbr.rel (0) target = $region53
  $region52: #{network_fwd.1} parent=0 // pred_region
    _
  $region53: #{network_fwd.1} parent=0 // pred_fallthru
    _
  // Predicated region
  $region54: #{network_fwd.1} parent=0 // pred_check
    _
  $region55: #{network_fwd.1} parent=0 // pred_check_branch
    %49 = sbr.rel (0) target = $region57
  $region56: #{network_fwd.1} parent=0 // pred_region
    _
  $region57: #{network_fwd.1} parent=0 // pred_fallthru
    _
  // Predicated region
  $region58: #{network_fwd.1} parent=0 // pred_check
    _
  $region59: #{network_fwd.1} parent=0 // pred_check_branch
    %51 = sbr.rel (0) target = $region61
  $region60: #{network_fwd.1} parent=0 // pred_region
    _
  $region61: #{network_fwd.1} parent=0 // pred_fallthru
    _
  // Predicated region
  $region62: #{network_fwd.1} parent=0 // pred_check
    _
  $region63: #{network_fwd.1} parent=0 // pred_check_branch
    %53 = sbr.rel (0) target = $region65
  $region64: #{network_fwd.1} parent=0 // pred_region
    _
  $region65: #{network_fwd.1} parent=0 // pred_fallthru
    _
  // Predicated region
  $region66: #{network_fwd.1} parent=0 // pred_check
    _
  $region67: #{network_fwd.1} parent=0 // pred_check_branch
    %55 = sbr.rel (0) target = $region69
  $region68: #{network_fwd.1} parent=0 // pred_region
    _
  $region69: #{network_fwd.1} parent=0 // pred_fallthru
    _
  %v57 = vld [vmem:[%s3] sm:$0xff]
  %v58 = vld [vmem:[%s3 + $0x8] sm:$0xf]
  %v59 = vld [vmem:[%s3 + $0xc] sm:$0xff]
  %v60 = vld [vmem:[%s3 + $0x14] sm:$0xf]
  %v61 = vld [vmem:[%s3 + $0x18] sm:$0xff]
  %v62 = vld [vmem:[%s3 + $0x20] sm:$0xf]
  %v63 = vld [vmem:[%s3 + $0x24] sm:$0xff]
  %v64 = vld [vmem:[%s3 + $0x2c] sm:$0xf]
  %v65 = vld [vmem:[%s3 + $0x30] sm:$0xff]
  %v66 = vld [vmem:[%s3 + $0x38] sm:$0xf]
  %v67 = vld [vmem:[%s3 + $0x3c] sm:$0xff]
  %v68 = vld [vmem:[%s3 + $0x44] sm:$0xf]
  %v69 = vld [vmem:[%s3 + $0x48] sm:$0xff]
  %v70 = vld [vmem:[%s3 + $0x50] sm:$0xf]
  %v71 = vld [vmem:[%s3 + $0x54] sm:$0xff]
  %v72 = vld [vmem:[%s3 + $0x5c] sm:$0xf]
  %v73 = vld [vmem:[%s3 + $0x60] sm:$0xff]
  %v74 = vld [vmem:[%s3 + $0x68] sm:$0xf]
  %v75 = vld [vmem:[%s3 + $0x6c] sm:$0xff]
  %v76 = vld [vmem:[%s3 + $0x74] sm:$0xf]
  %v77 = vld [vmem:[%s3 + $0x78] sm:$0xff]
  %v78 = vld [vmem:[%s3 + $0x80] sm:$0xf]
  %v79 = vld [vmem:[%s3 + $0x84] sm:$0xff]
  %v80 = vld [vmem:[%s3 + $0x8c] sm:$0xf]
  %v81 = vld [vmem:[%s3 + $0x90] sm:$0xff]
  %v82 = vld [vmem:[%s3 + $0x98] sm:$0xf]
  %v83 = vld [vmem:[%s3 + $0x9c] sm:$0xff]
  %v84 = vld [vmem:[%s3 + $0xa4] sm:$0xf]
  %v85 = vld [vmem:[%s3 + $0xa8] sm:$0xff]
  %v86 = vld [vmem:[%s3 + $0xb0] sm:$0xf]
  %v87 = vld [vmem:[%s3 + $0xb4] sm:$0xff]
  %v88 = vld [vmem:[%s3 + $0xbc] sm:$0xf]
  %v89 = vld [vmem:[%s3 + $0xc0] sm:$0xff]
  %v90 = vld [vmem:[%s3 + $0xc8] sm:$0xf]
  %v91 = vld [vmem:[%s3 + $0xcc] sm:$0xff]
  %v92 = vld [vmem:[%s3 + $0xd4] sm:$0xf]
  %v93 = vld [vmem:[%s3 + $0xd8] sm:$0xff]
  %v94 = vld [vmem:[%s3 + $0xe0] sm:$0xf]
  %v95 = vld [vmem:[%s3 + $0xe4] sm:$0xff]
  %v96 = vld [vmem:[%s3 + $0xec] sm:$0xf]
  %v97 = vld [vmem:[%s3 + $0xf0] sm:$0xff]
  %v98 = vld [vmem:[%s3 + $0xf8] sm:$0xf]
  %v99 = vld [vmem:[%s3 + $0xfc] sm:$0xff]
  %v100 = vld [vmem:[%s3 + $0x104] sm:$0xf]
  %v101 = vld [vmem:[%s3 + $0x108] sm:$0xff]
  %v102 = vld [vmem:[%s3 + $0x110] sm:$0xf]
  %v103 = vld [vmem:[%s3 + $0x114] sm:$0xff]
  %v104 = vld [vmem:[%s3 + $0x11c] sm:$0xf]
  %v105 = vld [vmem:[%s3 + $0x120] sm:$0xff]
  %v106 = vld [vmem:[%s3 + $0x128] sm:$0xf]
  %v107 = vld [vmem:[%s3 + $0x12c] sm:$0xff]
  %v108 = vld [vmem:[%s3 + $0x134] sm:$0xf]
  %v109 = vld [vmem:[%s3 + $0x138] sm:$0xff]
  %v110 = vld [vmem:[%s3 + $0x140] sm:$0xf]
  %v111 = vld [vmem:[%s3 + $0x144] sm:$0xff]
  %v112 = vld [vmem:[%s3 + $0x14c] sm:$0xf]
  %v113 = vld [vmem:[%s3 + $0x150] sm:$0xff]
  %v114 = vld [vmem:[%s3 + $0x158] sm:$0xf]
  %v115 = vld [vmem:[%s3 + $0x15c] sm:$0xff]
  %v116 = vld [vmem:[%s3 + $0x164] sm:$0xf]
  %v117 = vld [vmem:[%s3 + $0x168] sm:$0xff]
  %v118 = vld [vmem:[%s3 + $0x170] sm:$0xf]
  %v119 = vld [vmem:[%s3 + $0x174] sm:$0xff]
  %v120 = vld [vmem:[%s3 + $0x17c] sm:$0xf]
  %v121 = vld [vmem:[%s3 + $0x180] sm:$0xff]
  %v122 = vld [vmem:[%s3 + $0x188] sm:$0xf]
  %v123 = vld [vmem:[%s3 + $0x18c] sm:$0xff]
  %v124 = vld [vmem:[%s3 + $0x194] sm:$0xf]
  %v125 = vld [vmem:[%s3 + $0x198] sm:$0xff]
  %v126 = vld [vmem:[%s3 + $0x1a0] sm:$0xf]
  %v127 = vld [vmem:[%s3 + $0x1a4] sm:$0xff]
  %v128 = vld [vmem:[%s3 + $0x1ac] sm:$0xf]
  %s129 = scalar_lea.vmem %s3, 432
  %v130 = vld [vmem:[%s129] sm:$0xff]
  %v131 = vld [vmem:[%s129 + $0x8] sm:$0xf]
  %v132 = vld [vmem:[%s129 + $0xc] sm:$0xff]
  %v133 = vld [vmem:[%s129 + $0x14] sm:$0xf]
  %v134 = vld [vmem:[%s129 + $0x18] sm:$0xff]
  %v135 = vld [vmem:[%s129 + $0x20] sm:$0xf]
  %v136 = vld [vmem:[%s129 + $0x24] sm:$0xff]
  %v137 = vld [vmem:[%s129 + $0x2c] sm:$0xf]
  %v138 = vld [vmem:[%s129 + $0x30] sm:$0xff]
  %v139 = vld [vmem:[%s129 + $0x38] sm:$0xf]
  %v140 = vld [vmem:[%s129 + $0x3c] sm:$0xff]
  %v141 = vld [vmem:[%s129 + $0x44] sm:$0xf]
  %v142 = vld [vmem:[%s129 + $0x48] sm:$0xff]
  %v143 = vld [vmem:[%s129 + $0x50] sm:$0xf]
  %v144 = vld [vmem:[%s129 + $0x54] sm:$0xff]
  %v145 = vld [vmem:[%s129 + $0x5c] sm:$0xf]
  %v146 = vld [vmem:[%s129 + $0x60] sm:$0xff]
  %v147 = vld [vmem:[%s129 + $0x68] sm:$0xf]
  %v148 = vld [vmem:[%s129 + $0x6c] sm:$0xff]
  %v149 = vld [vmem:[%s129 + $0x74] sm:$0xf]
  %v150 = vld [vmem:[%s129 + $0x78] sm:$0xff]
  %v151 = vld [vmem:[%s129 + $0x80] sm:$0xf]
  %v152 = vld [vmem:[%s129 + $0x84] sm:$0xff]
  %v153 = vld [vmem:[%s129 + $0x8c] sm:$0xf]
  %v154 = vld [vmem:[%s129 + $0x90] sm:$0xff]
  %v155 = vld [vmem:[%s129 + $0x98] sm:$0xf]
  %v156 = vld [vmem:[%s129 + $0x9c] sm:$0xff]
  %v157 = vld [vmem:[%s129 + $0xa4] sm:$0xf]
  %v158 = vld [vmem:[%s129 + $0xa8] sm:$0xff]
  %v159 = vld [vmem:[%s129 + $0xb0] sm:$0xf]
  %v160 = vld [vmem:[%s129 + $0xb4] sm:$0xff]
  %v161 = vld [vmem:[%s129 + $0xbc] sm:$0xf]
  %v162 = vld [vmem:[%s129 + $0xc0] sm:$0xff]
  %v163 = vld [vmem:[%s129 + $0xc8] sm:$0xf]
  %v164 = vld [vmem:[%s129 + $0xcc] sm:$0xff]
  %v165 = vld [vmem:[%s129 + $0xd4] sm:$0xf]
  %v166 = vld [vmem:[%s129 + $0xd8] sm:$0xff]
  %v167 = vld [vmem:[%s129 + $0xe0] sm:$0xf]
  %v168 = vld [vmem:[%s129 + $0xe4] sm:$0xff]
  %v169 = vld [vmem:[%s129 + $0xec] sm:$0xf]
  %v170 = vld [vmem:[%s129 + $0xf0] sm:$0xff]
  %v171 = vld [vmem:[%s129 + $0xf8] sm:$0xf]
  %v172 = vld [vmem:[%s129 + $0xfc] sm:$0xff]
  %v173 = vld [vmem:[%s129 + $0x104] sm:$0xf]
  %v174 = vld [vmem:[%s129 + $0x108] sm:$0xff]
  %v175 = vld [vmem:[%s129 + $0x110] sm:$0xf]
  %v176 = vld [vmem:[%s129 + $0x114] sm:$0xff]
  %v177 = vld [vmem:[%s129 + $0x11c] sm:$0xf]
  %v178 = vld [vmem:[%s129 + $0x120] sm:$0xff]
  %v179 = vld [vmem:[%s129 + $0x128] sm:$0xf]
  %v180 = vld [vmem:[%s129 + $0x12c] sm:$0xff]
  %v181 = vld [vmem:[%s129 + $0x134] sm:$0xf]
  %v182 = vld [vmem:[%s129 + $0x138] sm:$0xff]
  %v183 = vld [vmem:[%s129 + $0x140] sm:$0xf]
  %v184 = vld [vmem:[%s129 + $0x144] sm:$0xff]
  %v185 = vld [vmem:[%s129 + $0x14c] sm:$0xf]
  %v186 = vld [vmem:[%s129 + $0x150] sm:$0xff]
  %v187 = vld [vmem:[%s129 + $0x158] sm:$0xf]
  %v188 = vld [vmem:[%s129 + $0x15c] sm:$0xff]
  %v189 = vld [vmem:[%s129 + $0x164] sm:$0xf]
  %v190 = vld [vmem:[%s129 + $0x168] sm:$0xff]
  %v191 = vld [vmem:[%s129 + $0x170] sm:$0xf]
  %v192 = vld [vmem:[%s129 + $0x174] sm:$0xff]
  %v193 = vld [vmem:[%s129 + $0x17c] sm:$0xf]
  %v194 = vld [vmem:[%s129 + $0x180] sm:$0xff]
  %v195 = vld [vmem:[%s129 + $0x188] sm:$0xf]
  %v196 = vld [vmem:[%s129 + $0x18c] sm:$0xff]
  %v197 = vld [vmem:[%s129 + $0x194] sm:$0xf]
  %v198 = vld [vmem:[%s129 + $0x198] sm:$0xff]
  %v199 = vld [vmem:[%s129 + $0x1a0] sm:$0xf]
  %v200 = vld [vmem:[%s129 + $0x1a4] sm:$0xff]
  %v201 = vld [vmem:[%s129 + $0x1ac] sm:$0xf]
  %s202 = scalar_lea.vmem %s3, 864
  %v203 = vld [vmem:[%s202] sm:$0xff]
  %v204 = vld [vmem:[%s202 + $0x8] sm:$0xf]
  %v205 = vld [vmem:[%s202 + $0xc] sm:$0xff]
  %v206 = vld [vmem:[%s202 + $0x14] sm:$0xf]
  %v207 = vld [vmem:[%s202 + $0x18] sm:$0xff]
  %v208 = vld [vmem:[%s202 + $0x20] sm:$0xf]
  %v209 = vld [vmem:[%s202 + $0x24] sm:$0xff]
  %v210 = vld [vmem:[%s202 + $0x2c] sm:$0xf]
  %v211 = vld [vmem:[%s202 + $0x30] sm:$0xff]
  %v212 = vld [vmem:[%s202 + $0x38] sm:$0xf]
  %v213 = vld [vmem:[%s202 + $0x3c] sm:$0xff]
  %v214 = vld [vmem:[%s202 + $0x44] sm:$0xf]
  %v215 = vld [vmem:[%s202 + $0x48] sm:$0xff]
  %v216 = vld [vmem:[%s202 + $0x50] sm:$0xf]
  %v217 = vld [vmem:[%s202 + $0x54] sm:$0xff]
  %v218 = vld [vmem:[%s202 + $0x5c] sm:$0xf]
  %v219 = vld [vmem:[%s202 + $0x60] sm:$0xff]
  %v220 = vld [vmem:[%s202 + $0x68] sm:$0xf]
  %v221 = vld [vmem:[%s202 + $0x6c] sm:$0xff]
  %v222 = vld [vmem:[%s202 + $0x74] sm:$0xf]
  %v223 = vld [vmem:[%s202 + $0x78] sm:$0xff]
  %v224 = vld [vmem:[%s202 + $0x80] sm:$0xf]
  %v225 = vld [vmem:[%s202 + $0x84] sm:$0xff]
  %v226 = vld [vmem:[%s202 + $0x8c] sm:$0xf]
  %v227 = vld [vmem:[%s202 + $0x90] sm:$0xff]
  %v228 = vld [vmem:[%s202 + $0x98] sm:$0xf]
  %v229 = vld [vmem:[%s202 + $0x9c] sm:$0xff]
  %v230 = vld [vmem:[%s202 + $0xa4] sm:$0xf]
  %v231 = vld [vmem:[%s202 + $0xa8] sm:$0xff]
  %v232 = vld [vmem:[%s202 + $0xb0] sm:$0xf]
  %v233 = vld [vmem:[%s202 + $0xb4] sm:$0xff]
  %v234 = vld [vmem:[%s202 + $0xbc] sm:$0xf]
  %v235 = vld [vmem:[%s202 + $0xc0] sm:$0xff]
  %v236 = vld [vmem:[%s202 + $0xc8] sm:$0xf]
  %v237 = vld [vmem:[%s202 + $0xcc] sm:$0xff]
  %v238 = vld [vmem:[%s202 + $0xd4] sm:$0xf]
  %v239 = vld [vmem:[%s202 + $0xd8] sm:$0xff]
  %v240 = vld [vmem:[%s202 + $0xe0] sm:$0xf]
  %v241 = vld [vmem:[%s202 + $0xe4] sm:$0xff]
  %v242 = vld [vmem:[%s202 + $0xec] sm:$0xf]
  %v243 = vld [vmem:[%s202 + $0xf0] sm:$0xff]
  %v244 = vld [vmem:[%s202 + $0xf8] sm:$0xf]
  %v245 = vld [vmem:[%s202 + $0xfc] sm:$0xff]
  %v246 = vld [vmem:[%s202 + $0x104] sm:$0xf]
  %v247 = vld [vmem:[%s202 + $0x108] sm:$0xff]
  %v248 = vld [vmem:[%s202 + $0x110] sm:$0xf]
  %v249 = vld [vmem:[%s202 + $0x114] sm:$0xff]
  %v250 = vld [vmem:[%s202 + $0x11c] sm:$0xf]
  %v251 = vld [vmem:[%s202 + $0x120] sm:$0xff]
  %v252 = vld [vmem:[%s202 + $0x128] sm:$0xf]
  %v253 = vld [vmem:[%s202 + $0x12c] sm:$0xff]
  %v254 = vld [vmem:[%s202 + $0x134] sm:$0xf]
  %v255 = vld [vmem:[%s202 + $0x138] sm:$0xff]
  %v256 = vld [vmem:[%s202 + $0x140] sm:$0xf]
  %v257 = vld [vmem:[%s202 + $0x144] sm:$0xff]
  %v258 = vld [vmem:[%s202 + $0x14c] sm:$0xf]
  %v259 = vld [vmem:[%s202 + $0x150] sm:$0xff]
  %v260 = vld [vmem:[%s202 + $0x158] sm:$0xf]
  %v261 = vld [vmem:[%s202 + $0x15c] sm:$0xff]
  %v262 = vld [vmem:[%s202 + $0x164] sm:$0xf]
  %v263 = vld [vmem:[%s202 + $0x168] sm:$0xff]
  %v264 = vld [vmem:[%s202 + $0x170] sm:$0xf]
  %v265 = vld [vmem:[%s202 + $0x174] sm:$0xff]
  %v266 = vld [vmem:[%s202 + $0x17c] sm:$0xf]
  %v267 = vld [vmem:[%s202 + $0x180] sm:$0xff]
  %v268 = vld [vmem:[%s202 + $0x188] sm:$0xf]
  %v269 = vld [vmem:[%s202 + $0x18c] sm:$0xff]
  %v270 = vld [vmem:[%s202 + $0x194] sm:$0xf]
  %v271 = vld [vmem:[%s202 + $0x198] sm:$0xff]
  %v272 = vld [vmem:[%s202 + $0x1a0] sm:$0xf]
  %v273 = vld [vmem:[%s202 + $0x1a4] sm:$0xff]
  %v274 = vld [vmem:[%s202 + $0x1ac] sm:$0xf]
  %s275 = scalar_lea.vmem %s3, 1296
  %v276 = vld [vmem:[%s275] sm:$0xff]
  %v277 = vld [vmem:[%s275 + $0x8] sm:$0xf]
  %v278 = vld [vmem:[%s275 + $0xc] sm:$0xff]
  %v279 = vld [vmem:[%s275 + $0x14] sm:$0xf]
  %v280 = vld [vmem:[%s275 + $0x18] sm:$0xff]
  %v281 = vld [vmem:[%s275 + $0x20] sm:$0xf]
  %v282 = vld [vmem:[%s275 + $0x24] sm:$0xff]
  %v283 = vld [vmem:[%s275 + $0x2c] sm:$0xf]
  %v284 = vld [vmem:[%s275 + $0x30] sm:$0xff]
  %v285 = vld [vmem:[%s275 + $0x38] sm:$0xf]
  %v286 = vld [vmem:[%s275 + $0x3c] sm:$0xff]
  %v287 = vld [vmem:[%s275 + $0x44] sm:$0xf]
  %v288 = vld [vmem:[%s275 + $0x48] sm:$0xff]
  %v289 = vld [vmem:[%s275 + $0x50] sm:$0xf]
  %v290 = vld [vmem:[%s275 + $0x54] sm:$0xff]
  %v291 = vld [vmem:[%s275 + $0x5c] sm:$0xf]
  %v292 = vld [vmem:[%s275 + $0x60] sm:$0xff]
  %v293 = vld [vmem:[%s275 + $0x68] sm:$0xf]
  %v294 = vld [vmem:[%s275 + $0x6c] sm:$0xff]
  %v295 = vld [vmem:[%s275 + $0x74] sm:$0xf]
  %v296 = vld [vmem:[%s275 + $0x78] sm:$0xff]
  %v297 = vld [vmem:[%s275 + $0x80] sm:$0xf]
  %v298 = vld [vmem:[%s275 + $0x84] sm:$0xff]
  %v299 = vld [vmem:[%s275 + $0x8c] sm:$0xf]
  %v300 = vld [vmem:[%s275 + $0x90] sm:$0xff]
  %v301 = vld [vmem:[%s275 + $0x98] sm:$0xf]
  %v302 = vld [vmem:[%s275 + $0x9c] sm:$0xff]
  %v303 = vld [vmem:[%s275 + $0xa4] sm:$0xf]
  %v304 = vld [vmem:[%s275 + $0xa8] sm:$0xff]
  %v305 = vld [vmem:[%s275 + $0xb0] sm:$0xf]
  %v306 = vld [vmem:[%s275 + $0xb4] sm:$0xff]
  %v307 = vld [vmem:[%s275 + $0xbc] sm:$0xf]
  %v308 = vld [vmem:[%s275 + $0xc0] sm:$0xff]
  %v309 = vld [vmem:[%s275 + $0xc8] sm:$0xf]
  %v310 = vld [vmem:[%s275 + $0xcc] sm:$0xff]
  %v311 = vld [vmem:[%s275 + $0xd4] sm:$0xf]
  %v312 = vld [vmem:[%s275 + $0xd8] sm:$0xff]
  %v313 = vld [vmem:[%s275 + $0xe0] sm:$0xf]
  %v314 = vld [vmem:[%s275 + $0xe4] sm:$0xff]
  %v315 = vld [vmem:[%s275 + $0xec] sm:$0xf]
  %v316 = vld [vmem:[%s275 + $0xf0] sm:$0xff]
  %v317 = vld [vmem:[%s275 + $0xf8] sm:$0xf]
  %v318 = vld [vmem:[%s275 + $0xfc] sm:$0xff]
  %v319 = vld [vmem:[%s275 + $0x104] sm:$0xf]
  %v320 = vld [vmem:[%s275 + $0x108] sm:$0xff]
  %v321 = vld [vmem:[%s275 + $0x110] sm:$0xf]
  %v322 = vld [vmem:[%s275 + $0x114] sm:$0xff]
  %v323 = vld [vmem:[%s275 + $0x11c] sm:$0xf]
  %v324 = vld [vmem:[%s275 + $0x120] sm:$0xff]
  %v325 = vld [vmem:[%s275 + $0x128] sm:$0xf]
  %v326 = vld [vmem:[%s275 + $0x12c] sm:$0xff]
  %v327 = vld [vmem:[%s275 + $0x134] sm:$0xf]
  %v328 = vld [vmem:[%s275 + $0x138] sm:$0xff]
  %v329 = vld [vmem:[%s275 + $0x140] sm:$0xf]
  %v330 = vld [vmem:[%s275 + $0x144] sm:$0xff]
  %v331 = vld [vmem:[%s275 + $0x14c] sm:$0xf]
  %v332 = vld [vmem:[%s275 + $0x150] sm:$0xff]
  %v333 = vld [vmem:[%s275 + $0x158] sm:$0xf]
  %v334 = vld [vmem:[%s275 + $0x15c] sm:$0xff]
  %v335 = vld [vmem:[%s275 + $0x164] sm:$0xf]
  %v336 = vld [vmem:[%s275 + $0x168] sm:$0xff]
  %v337 = vld [vmem:[%s275 + $0x170] sm:$0xf]
  %v338 = vld [vmem:[%s275 + $0x174] sm:$0xff]
  %v339 = vld [vmem:[%s275 + $0x17c] sm:$0xf]
  %v340 = vld [vmem:[%s275 + $0x180] sm:$0xff]
  %v341 = vld [vmem:[%s275 + $0x188] sm:$0xf]
  %v342 = vld [vmem:[%s275 + $0x18c] sm:$0xff]
  %v343 = vld [vmem:[%s275 + $0x194] sm:$0xf]
  %v344 = vld [vmem:[%s275 + $0x198] sm:$0xff]
  %v345 = vld [vmem:[%s275 + $0x1a0] sm:$0xf]
  %v346 = vld [vmem:[%s275 + $0x1a4] sm:$0xff]
  %v347 = vld [vmem:[%s275 + $0x1ac] sm:$0xf]
  %s348 = scalar_lea.vmem %s3, 1728
  %v349 = vld [vmem:[%s348] sm:$0xff]
  %v350 = vld [vmem:[%s348 + $0x8] sm:$0xf]
  %v351 = vld [vmem:[%s348 + $0xc] sm:$0xff]
  %v352 = vld [vmem:[%s348 + $0x14] sm:$0xf]
  %v353 = vld [vmem:[%s348 + $0x18] sm:$0xff]
  %v354 = vld [vmem:[%s348 + $0x20] sm:$0xf]
  %v355 = vld [vmem:[%s348 + $0x24] sm:$0xff]
  %v356 = vld [vmem:[%s348 + $0x2c] sm:$0xf]
  %v357 = vld [vmem:[%s348 + $0x30] sm:$0xff]
  %v358 = vld [vmem:[%s348 + $0x38] sm:$0xf]
  %v359 = vld [vmem:[%s348 + $0x3c] sm:$0xff]
  %v360 = vld [vmem:[%s348 + $0x44] sm:$0xf]
  %v361 = vld [vmem:[%s348 + $0x48] sm:$0xff]
  %v362 = vld [vmem:[%s348 + $0x50] sm:$0xf]
  %v363 = vld [vmem:[%s348 + $0x54] sm:$0xff]
  %v364 = vld [vmem:[%s348 + $0x5c] sm:$0xf]
  %v365 = vld [vmem:[%s348 + $0x60] sm:$0xff]
  %v366 = vld [vmem:[%s348 + $0x68] sm:$0xf]
  %v367 = vld [vmem:[%s348 + $0x6c] sm:$0xff]
  %v368 = vld [vmem:[%s348 + $0x74] sm:$0xf]
  %v369 = vld [vmem:[%s348 + $0x78] sm:$0xff]
  %v370 = vld [vmem:[%s348 + $0x80] sm:$0xf]
  %v371 = vld [vmem:[%s348 + $0x84] sm:$0xff]
  %v372 = vld [vmem:[%s348 + $0x8c] sm:$0xf]
  %v373 = vld [vmem:[%s348 + $0x90] sm:$0xff]
  %v374 = vld [vmem:[%s348 + $0x98] sm:$0xf]
  %v375 = vld [vmem:[%s348 + $0x9c] sm:$0xff]
  %v376 = vld [vmem:[%s348 + $0xa4] sm:$0xf]
  %v377 = vld [vmem:[%s348 + $0xa8] sm:$0xff]
  %v378 = vld [vmem:[%s348 + $0xb0] sm:$0xf]
  %v379 = vld [vmem:[%s348 + $0xb4] sm:$0xff]
  %v380 = vld [vmem:[%s348 + $0xbc] sm:$0xf]
  %v381 = vld [vmem:[%s348 + $0xc0] sm:$0xff]
  %v382 = vld [vmem:[%s348 + $0xc8] sm:$0xf]
  %v383 = vld [vmem:[%s348 + $0xcc] sm:$0xff]
  %v384 = vld [vmem:[%s348 + $0xd4] sm:$0xf]
  %v385 = vld [vmem:[%s348 + $0xd8] sm:$0xff]
  %v386 = vld [vmem:[%s348 + $0xe0] sm:$0xf]
  %v387 = vld [vmem:[%s348 + $0xe4] sm:$0xff]
  %v388 = vld [vmem:[%s348 + $0xec] sm:$0xf]
  %v389 = vld [vmem:[%s348 + $0xf0] sm:$0xff]
  %v390 = vld [vmem:[%s348 + $0xf8] sm:$0xf]
  %v391 = vld [vmem:[%s348 + $0xfc] sm:$0xff]
  %v392 = vld [vmem:[%s348 + $0x104] sm:$0xf]
  %v393 = vld [vmem:[%s348 + $0x108] sm:$0xff]
  %v394 = vld [vmem:[%s348 + $0x110] sm:$0xf]
  %v395 = vld [vmem:[%s348 + $0x114] sm:$0xff]
  %v396 = vld [vmem:[%s348 + $0x11c] sm:$0xf]
  %v397 = vld [vmem:[%s348 + $0x120] sm:$0xff]
  %v398 = vld [vmem:[%s348 + $0x128] sm:$0xf]
  %v399 = vld [vmem:[%s348 + $0x12c] sm:$0xff]
  %v400 = vld [vmem:[%s348 + $0x134] sm:$0xf]
  %v401 = vld [vmem:[%s348 + $0x138] sm:$0xff]
  %v402 = vld [vmem:[%s348 + $0x140] sm:$0xf]
  %v403 = vld [vmem:[%s348 + $0x144] sm:$0xff]
  %v404 = vld [vmem:[%s348 + $0x14c] sm:$0xf]
  %v405 = vld [vmem:[%s348 + $0x150] sm:$0xff]
  %v406 = vld [vmem:[%s348 + $0x158] sm:$0xf]
  %v407 = vld [vmem:[%s348 + $0x15c] sm:$0xff]
  %v408 = vld [vmem:[%s348 + $0x164] sm:$0xf]
  %v409 = vld [vmem:[%s348 + $0x168] sm:$0xff]
  %v410 = vld [vmem:[%s348 + $0x170] sm:$0xf]
  %v411 = vld [vmem:[%s348 + $0x174] sm:$0xff]
  %v412 = vld [vmem:[%s348 + $0x17c] sm:$0xf]
  %v413 = vld [vmem:[%s348 + $0x180] sm:$0xff]
  %v414 = vld [vmem:[%s348 + $0x188] sm:$0xf]
  %v415 = vld [vmem:[%s348 + $0x18c] sm:$0xff]
  %v416 = vld [vmem:[%s348 + $0x194] sm:$0xf]
  %v417 = vld [vmem:[%s348 + $0x198] sm:$0xff]
  %v418 = vld [vmem:[%s348 + $0x1a0] sm:$0xf]
  %v419 = vld [vmem:[%s348 + $0x1a4] sm:$0xff]
  %v420 = vld [vmem:[%s348 + $0x1ac] sm:$0xf]
  %s421 = scalar_lea.vmem %s3, 2160
  %v422 = vld [vmem:[%s421] sm:$0xff]
  %v423 = vld [vmem:[%s421 + $0x8] sm:$0xf]
  %v424 = vld [vmem:[%s421 + $0xc] sm:$0xff]
  %v425 = vld [vmem:[%s421 + $0x14] sm:$0xf]
  %v426 = vld [vmem:[%s421 + $0x18] sm:$0xff]
  %v427 = vld [vmem:[%s421 + $0x20] sm:$0xf]
  %v428 = vld [vmem:[%s421 + $0x24] sm:$0xff]
  %v429 = vld [vmem:[%s421 + $0x2c] sm:$0xf]
  %v430 = vld [vmem:[%s421 + $0x30] sm:$0xff]
  %v431 = vld [vmem:[%s421 + $0x38] sm:$0xf]
  %v432 = vld [vmem:[%s421 + $0x3c] sm:$0xff]
  %v433 = vld [vmem:[%s421 + $0x44] sm:$0xf]
  %v434 = vld [vmem:[%s421 + $0x48] sm:$0xff]
  %v435 = vld [vmem:[%s421 + $0x50] sm:$0xf]
  %v436 = vld [vmem:[%s421 + $0x54] sm:$0xff]
  %v437 = vld [vmem:[%s421 + $0x5c] sm:$0xf]
  %v438 = vld [vmem:[%s421 + $0x60] sm:$0xff]
  %v439 = vld [vmem:[%s421 + $0x68] sm:$0xf]
  %v440 = vld [vmem:[%s421 + $0x6c] sm:$0xff]
  %v441 = vld [vmem:[%s421 + $0x74] sm:$0xf]
  %v442 = vld [vmem:[%s421 + $0x78] sm:$0xff]
  %v443 = vld [vmem:[%s421 + $0x80] sm:$0xf]
  %v444 = vld [vmem:[%s421 + $0x84] sm:$0xff]
  %v445 = vld [vmem:[%s421 + $0x8c] sm:$0xf]
  %v446 = vld [vmem:[%s421 + $0x90] sm:$0xff]
  %v447 = vld [vmem:[%s421 + $0x98] sm:$0xf]
  %v448 = vld [vmem:[%s421 + $0x9c] sm:$0xff]
  %v449 = vld [vmem:[%s421 + $0xa4] sm:$0xf]
  %v450 = vld [vmem:[%s421 + $0xa8] sm:$0xff]
  %v451 = vld [vmem:[%s421 + $0xb0] sm:$0xf]
  %v452 = vld [vmem:[%s421 + $0xb4] sm:$0xff]
  %v453 = vld [vmem:[%s421 + $0xbc] sm:$0xf]
  %v454 = vld [vmem:[%s421 + $0xc0] sm:$0xff]
  %v455 = vld [vmem:[%s421 + $0xc8] sm:$0xf]
  %v456 = vld [vmem:[%s421 + $0xcc] sm:$0xff]
  %v457 = vld [vmem:[%s421 + $0xd4] sm:$0xf]
  %v458 = vld [vmem:[%s421 + $0xd8] sm:$0xff]
  %v459 = vld [vmem:[%s421 + $0xe0] sm:$0xf]
  %v460 = vld [vmem:[%s421 + $0xe4] sm:$0xff]
  %v461 = vld [vmem:[%s421 + $0xec] sm:$0xf]
  %v462 = vld [vmem:[%s421 + $0xf0] sm:$0xff]
  %v463 = vld [vmem:[%s421 + $0xf8] sm:$0xf]
  %v464 = vld [vmem:[%s421 + $0xfc] sm:$0xff]
  %v465 = vld [vmem:[%s421 + $0x104] sm:$0xf]
  %v466 = vld [vmem:[%s421 + $0x108] sm:$0xff]
  %v467 = vld [vmem:[%s421 + $0x110] sm:$0xf]
  %v468 = vld [vmem:[%s421 + $0x114] sm:$0xff]
  %v469 = vld [vmem:[%s421 + $0x11c] sm:$0xf]
  %v470 = vld [vmem:[%s421 + $0x120] sm:$0xff]
  %v471 = vld [vmem:[%s421 + $0x128] sm:$0xf]
  %v472 = vld [vmem:[%s421 + $0x12c] sm:$0xff]
  %v473 = vld [vmem:[%s421 + $0x134] sm:$0xf]
  %v474 = vld [vmem:[%s421 + $0x138] sm:$0xff]
  %v475 = vld [vmem:[%s421 + $0x140] sm:$0xf]
  %v476 = vld [vmem:[%s421 + $0x144] sm:$0xff]
  %v477 = vld [vmem:[%s421 + $0x14c] sm:$0xf]
  %v478 = vld [vmem:[%s421 + $0x150] sm:$0xff]
  %v479 = vld [vmem:[%s421 + $0x158] sm:$0xf]
  %v480 = vld [vmem:[%s421 + $0x15c] sm:$0xff]
  %v481 = vld [vmem:[%s421 + $0x164] sm:$0xf]
  %v482 = vld [vmem:[%s421 + $0x168] sm:$0xff]
  %v483 = vld [vmem:[%s421 + $0x170] sm:$0xf]
  %v484 = vld [vmem:[%s421 + $0x174] sm:$0xff]
  %v485 = vld [vmem:[%s421 + $0x17c] sm:$0xf]
  %v486 = vld [vmem:[%s421 + $0x180] sm:$0xff]
  %v487 = vld [vmem:[%s421 + $0x188] sm:$0xf]
  %v488 = vld [vmem:[%s421 + $0x18c] sm:$0xff]
  %v489 = vld [vmem:[%s421 + $0x194] sm:$0xf]
  %v490 = vld [vmem:[%s421 + $0x198] sm:$0xff]
  %v491 = vld [vmem:[%s421 + $0x1a0] sm:$0xf]
  %v492 = vld [vmem:[%s421 + $0x1a4] sm:$0xff]
  %v493 = vld [vmem:[%s421 + $0x1ac] sm:$0xf]
  %s494 = scalar_lea.vmem %s3, 2592
  %v495 = vld [vmem:[%s494] sm:$0xff]
  %v496 = vld [vmem:[%s494 + $0x8] sm:$0xf]
  %v497 = vld [vmem:[%s494 + $0xc] sm:$0xff]
  %v498 = vld [vmem:[%s494 + $0x14] sm:$0xf]
  %v499 = vld [vmem:[%s494 + $0x18] sm:$0xff]
  %v500 = vld [vmem:[%s494 + $0x20] sm:$0xf]
  %v501 = vld [vmem:[%s494 + $0x24] sm:$0xff]
  %v502 = vld [vmem:[%s494 + $0x2c] sm:$0xf]
  %v503 = vld [vmem:[%s494 + $0x30] sm:$0xff]
  %v504 = vld [vmem:[%s494 + $0x38] sm:$0xf]
  %v505 = vld [vmem:[%s494 + $0x3c] sm:$0xff]
  %v506 = vld [vmem:[%s494 + $0x44] sm:$0xf]
  %v507 = vld [vmem:[%s494 + $0x48] sm:$0xff]
  %v508 = vld [vmem:[%s494 + $0x50] sm:$0xf]
  %v509 = vld [vmem:[%s494 + $0x54] sm:$0xff]
  %v510 = vld [vmem:[%s494 + $0x5c] sm:$0xf]
  %v511 = vld [vmem:[%s494 + $0x60] sm:$0xff]
  %v512 = vld [vmem:[%s494 + $0x68] sm:$0xf]
  %v513 = vld [vmem:[%s494 + $0x6c] sm:$0xff]
  %v514 = vld [vmem:[%s494 + $0x74] sm:$0xf]
  %v515 = vld [vmem:[%s494 + $0x78] sm:$0xff]
  %v516 = vld [vmem:[%s494 + $0x80] sm:$0xf]
  %v517 = vld [vmem:[%s494 + $0x84] sm:$0xff]
  %v518 = vld [vmem:[%s494 + $0x8c] sm:$0xf]
  %v519 = vld [vmem:[%s494 + $0x90] sm:$0xff]
  %v520 = vld [vmem:[%s494 + $0x98] sm:$0xf]
  %v521 = vld [vmem:[%s494 + $0x9c] sm:$0xff]
  %v522 = vld [vmem:[%s494 + $0xa4] sm:$0xf]
  %v523 = vld [vmem:[%s494 + $0xa8] sm:$0xff]
  %v524 = vld [vmem:[%s494 + $0xb0] sm:$0xf]
  %v525 = vld [vmem:[%s494 + $0xb4] sm:$0xff]
  %v526 = vld [vmem:[%s494 + $0xbc] sm:$0xf]
  %v527 = vld [vmem:[%s494 + $0xc0] sm:$0xff]
  %v528 = vld [vmem:[%s494 + $0xc8] sm:$0xf]
  %v529 = vld [vmem:[%s494 + $0xcc] sm:$0xff]
  %v530 = vld [vmem:[%s494 + $0xd4] sm:$0xf]
  %v531 = vld [vmem:[%s494 + $0xd8] sm:$0xff]
  %v532 = vld [vmem:[%s494 + $0xe0] sm:$0xf]
  %v533 = vld [vmem:[%s494 + $0xe4] sm:$0xff]
  %v534 = vld [vmem:[%s494 + $0xec] sm:$0xf]
  %v535 = vld [vmem:[%s494 + $0xf0] sm:$0xff]
  %v536 = vld [vmem:[%s494 + $0xf8] sm:$0xf]
  %v537 = vld [vmem:[%s494 + $0xfc] sm:$0xff]
  %v538 = vld [vmem:[%s494 + $0x104] sm:$0xf]
  %v539 = vld [vmem:[%s494 + $0x108] sm:$0xff]
  %v540 = vld [vmem:[%s494 + $0x110] sm:$0xf]
  %v541 = vld [vmem:[%s494 + $0x114] sm:$0xff]
  %v542 = vld [vmem:[%s494 + $0x11c] sm:$0xf]
  %v543 = vld [vmem:[%s494 + $0x120] sm:$0xff]
  %v544 = vld [vmem:[%s494 + $0x128] sm:$0xf]
  %v545 = vld [vmem:[%s494 + $0x12c] sm:$0xff]
  %v546 = vld [vmem:[%s494 + $0x134] sm:$0xf]
  %v547 = vld [vmem:[%s494 + $0x138] sm:$0xff]
  %v548 = vld [vmem:[%s494 + $0x140] sm:$0xf]
  %v549 = vld [vmem:[%s494 + $0x144] sm:$0xff]
  %v550 = vld [vmem:[%s494 + $0x14c] sm:$0xf]
  %v551 = vld [vmem:[%s494 + $0x150] sm:$0xff]
  %v552 = vld [vmem:[%s494 + $0x158] sm:$0xf]
  %v553 = vld [vmem:[%s494 + $0x15c] sm:$0xff]
  %v554 = vld [vmem:[%s494 + $0x164] sm:$0xf]
  %v555 = vld [vmem:[%s494 + $0x168] sm:$0xff]
  %v556 = vld [vmem:[%s494 + $0x170] sm:$0xf]
  %v557 = vld [vmem:[%s494 + $0x174] sm:$0xff]
  %v558 = vld [vmem:[%s494 + $0x17c] sm:$0xf]
  %v559 = vld [vmem:[%s494 + $0x180] sm:$0xff]
  %v560 = vld [vmem:[%s494 + $0x188] sm:$0xf]
  %v561 = vld [vmem:[%s494 + $0x18c] sm:$0xff]
  %v562 = vld [vmem:[%s494 + $0x194] sm:$0xf]
  %v563 = vld [vmem:[%s494 + $0x198] sm:$0xff]
  %v564 = vld [vmem:[%s494 + $0x1a0] sm:$0xf]
  %v565 = vld [vmem:[%s494 + $0x1a4] sm:$0xff]
  %v566 = vld [vmem:[%s494 + $0x1ac] sm:$0xf]
  %s567 = scalar_lea.vmem %s3, 3024
  %v568 = vld [vmem:[%s567] sm:$0xff]
  %v569 = vld [vmem:[%s567 + $0x8] sm:$0xf]
  %v570 = vld [vmem:[%s567 + $0xc] sm:$0xff]
  %v571 = vld [vmem:[%s567 + $0x14] sm:$0xf]
  %v572 = vld [vmem:[%s567 + $0x18] sm:$0xff]
  %v573 = vld [vmem:[%s567 + $0x20] sm:$0xf]
  %v574 = vld [vmem:[%s567 + $0x24] sm:$0xff]
  %v575 = vld [vmem:[%s567 + $0x2c] sm:$0xf]
  %v576 = vld [vmem:[%s567 + $0x30] sm:$0xff]
  %v577 = vld [vmem:[%s567 + $0x38] sm:$0xf]
  %v578 = vld [vmem:[%s567 + $0x3c] sm:$0xff]
  %v579 = vld [vmem:[%s567 + $0x44] sm:$0xf]
  %v580 = vld [vmem:[%s567 + $0x48] sm:$0xff]
  %v581 = vld [vmem:[%s567 + $0x50] sm:$0xf]
  %v582 = vld [vmem:[%s567 + $0x54] sm:$0xff]
  %v583 = vld [vmem:[%s567 + $0x5c] sm:$0xf]
  %v584 = vld [vmem:[%s567 + $0x60] sm:$0xff]
  %v585 = vld [vmem:[%s567 + $0x68] sm:$0xf]
  %v586 = vld [vmem:[%s567 + $0x6c] sm:$0xff]
  %v587 = vld [vmem:[%s567 + $0x74] sm:$0xf]
  %v588 = vld [vmem:[%s567 + $0x78] sm:$0xff]
  %v589 = vld [vmem:[%s567 + $0x80] sm:$0xf]
  %v590 = vld [vmem:[%s567 + $0x84] sm:$0xff]
  %v591 = vld [vmem:[%s567 + $0x8c] sm:$0xf]
  %v592 = vld [vmem:[%s567 + $0x90] sm:$0xff]
  %v593 = vld [vmem:[%s567 + $0x98] sm:$0xf]
  %v594 = vld [vmem:[%s567 + $0x9c] sm:$0xff]
  %v595 = vld [vmem:[%s567 + $0xa4] sm:$0xf]
  %v596 = vld [vmem:[%s567 + $0xa8] sm:$0xff]
  %v597 = vld [vmem:[%s567 + $0xb0] sm:$0xf]
  %v598 = vld [vmem:[%s567 + $0xb4] sm:$0xff]
  %v599 = vld [vmem:[%s567 + $0xbc] sm:$0xf]
  %v600 = vld [vmem:[%s567 + $0xc0] sm:$0xff]
  %v601 = vld [vmem:[%s567 + $0xc8] sm:$0xf]
  %v602 = vld [vmem:[%s567 + $0xcc] sm:$0xff]
  %v603 = vld [vmem:[%s567 + $0xd4] sm:$0xf]
  %v604 = vld [vmem:[%s567 + $0xd8] sm:$0xff]
  %v605 = vld [vmem:[%s567 + $0xe0] sm:$0xf]
  %v606 = vld [vmem:[%s567 + $0xe4] sm:$0xff]
  %v607 = vld [vmem:[%s567 + $0xec] sm:$0xf]
  %v608 = vld [vmem:[%s567 + $0xf0] sm:$0xff]
  %v609 = vld [vmem:[%s567 + $0xf8] sm:$0xf]
  %v610 = vld [vmem:[%s567 + $0xfc] sm:$0xff]
  %v611 = vld [vmem:[%s567 + $0x104] sm:$0xf]
  %v612 = vld [vmem:[%s567 + $0x108] sm:$0xff]
  %v613 = vld [vmem:[%s567 + $0x110] sm:$0xf]
  %v614 = vld [vmem:[%s567 + $0x114] sm:$0xff]
  %v615 = vld [vmem:[%s567 + $0x11c] sm:$0xf]
  %v616 = vld [vmem:[%s567 + $0x120] sm:$0xff]
  %v617 = vld [vmem:[%s567 + $0x128] sm:$0xf]
  %v618 = vld [vmem:[%s567 + $0x12c] sm:$0xff]
  %v619 = vld [vmem:[%s567 + $0x134] sm:$0xf]
  %v620 = vld [vmem:[%s567 + $0x138] sm:$0xff]
  %v621 = vld [vmem:[%s567 + $0x140] sm:$0xf]
  %v622 = vld [vmem:[%s567 + $0x144] sm:$0xff]
  %v623 = vld [vmem:[%s567 + $0x14c] sm:$0xf]
  %v624 = vld [vmem:[%s567 + $0x150] sm:$0xff]
  %v625 = vld [vmem:[%s567 + $0x158] sm:$0xf]
  %v626 = vld [vmem:[%s567 + $0x15c] sm:$0xff]
  %v627 = vld [vmem:[%s567 + $0x164] sm:$0xf]
  %v628 = vld [vmem:[%s567 + $0x168] sm:$0xff]
  %v629 = vld [vmem:[%s567 + $0x170] sm:$0xf]
  %v630 = vld [vmem:[%s567 + $0x174] sm:$0xff]
  %v631 = vld [vmem:[%s567 + $0x17c] sm:$0xf]
  %v632 = vld [vmem:[%s567 + $0x180] sm:$0xff]
  %v633 = vld [vmem:[%s567 + $0x188] sm:$0xf]
  %v634 = vld [vmem:[%s567 + $0x18c] sm:$0xff]
  %v635 = vld [vmem:[%s567 + $0x194] sm:$0xf]
  %v636 = vld [vmem:[%s567 + $0x198] sm:$0xff]
  %v637 = vld [vmem:[%s567 + $0x1a0] sm:$0xf]
  %v638 = vld [vmem:[%s567 + $0x1a4] sm:$0xff]
  %v639 = vld [vmem:[%s567 + $0x1ac] sm:$0xf]
  %s640 = scalar_lea.vmem %s3, 3456
  %v641 = vld [vmem:[%s640] sm:$0xff]
  %v642 = vld [vmem:[%s640 + $0x8] sm:$0xf]
  %v643 = vld [vmem:[%s640 + $0xc] sm:$0xff]
  %v644 = vld [vmem:[%s640 + $0x14] sm:$0xf]
  %v645 = vld [vmem:[%s640 + $0x18] sm:$0xff]
  %v646 = vld [vmem:[%s640 + $0x20] sm:$0xf]
  %v647 = vld [vmem:[%s640 + $0x24] sm:$0xff]
  %v648 = vld [vmem:[%s640 + $0x2c] sm:$0xf]
  %v649 = vld [vmem:[%s640 + $0x30] sm:$0xff]
  %v650 = vld [vmem:[%s640 + $0x38] sm:$0xf]
  %v651 = vld [vmem:[%s640 + $0x3c] sm:$0xff]
  %v652 = vld [vmem:[%s640 + $0x44] sm:$0xf]
  %v653 = vld [vmem:[%s640 + $0x48] sm:$0xff]
  %v654 = vld [vmem:[%s640 + $0x50] sm:$0xf]
  %v655 = vld [vmem:[%s640 + $0x54] sm:$0xff]
  %v656 = vld [vmem:[%s640 + $0x5c] sm:$0xf]
  %v657 = vld [vmem:[%s640 + $0x60] sm:$0xff]
  %v658 = vld [vmem:[%s640 + $0x68] sm:$0xf]
  %v659 = vld [vmem:[%s640 + $0x6c] sm:$0xff]
  %v660 = vld [vmem:[%s640 + $0x74] sm:$0xf]
  %v661 = vld [vmem:[%s640 + $0x78] sm:$0xff]
  %v662 = vld [vmem:[%s640 + $0x80] sm:$0xf]
  %v663 = vld [vmem:[%s640 + $0x84] sm:$0xff]
  %v664 = vld [vmem:[%s640 + $0x8c] sm:$0xf]
  %v665 = vld [vmem:[%s640 + $0x90] sm:$0xff]
  %v666 = vld [vmem:[%s640 + $0x98] sm:$0xf]
  %v667 = vld [vmem:[%s640 + $0x9c] sm:$0xff]
  %v668 = vld [vmem:[%s640 + $0xa4] sm:$0xf]
  %v669 = vld [vmem:[%s640 + $0xa8] sm:$0xff]
  %v670 = vld [vmem:[%s640 + $0xb0] sm:$0xf]
  %v671 = vld [vmem:[%s640 + $0xb4] sm:$0xff]
  %v672 = vld [vmem:[%s640 + $0xbc] sm:$0xf]
  %v673 = vld [vmem:[%s640 + $0xc0] sm:$0xff]
  %v674 = vld [vmem:[%s640 + $0xc8] sm:$0xf]
  %v675 = vld [vmem:[%s640 + $0xcc] sm:$0xff]
  %v676 = vld [vmem:[%s640 + $0xd4] sm:$0xf]
  %v677 = vld [vmem:[%s640 + $0xd8] sm:$0xff]
  %v678 = vld [vmem:[%s640 + $0xe0] sm:$0xf]
  %v679 = vld [vmem:[%s640 + $0xe4] sm:$0xff]
  %v680 = vld [vmem:[%s640 + $0xec] sm:$0xf]
  %v681 = vld [vmem:[%s640 + $0xf0] sm:$0xff]
  %v682 = vld [vmem:[%s640 + $0xf8] sm:$0xf]
  %v683 = vld [vmem:[%s640 + $0xfc] sm:$0xff]
  %v684 = vld [vmem:[%s640 + $0x104] sm:$0xf]
  %v685 = vld [vmem:[%s640 + $0x108] sm:$0xff]
  %v686 = vld [vmem:[%s640 + $0x110] sm:$0xf]
  %v687 = vld [vmem:[%s640 + $0x114] sm:$0xff]
  %v688 = vld [vmem:[%s640 + $0x11c] sm:$0xf]
  %v689 = vld [vmem:[%s640 + $0x120] sm:$0xff]
  %v690 = vld [vmem:[%s640 + $0x128] sm:$0xf]
  %v691 = vld [vmem:[%s640 + $0x12c] sm:$0xff]
  %v692 = vld [vmem:[%s640 + $0x134] sm:$0xf]
  %v693 = vld [vmem:[%s640 + $0x138] sm:$0xff]
  %v694 = vld [vmem:[%s640 + $0x140] sm:$0xf]
  %v695 = vld [vmem:[%s640 + $0x144] sm:$0xff]
  %v696 = vld [vmem:[%s640 + $0x14c] sm:$0xf]
  %v697 = vld [vmem:[%s640 + $0x150] sm:$0xff]
  %v698 = vld [vmem:[%s640 + $0x158] sm:$0xf]
  %v699 = vld [vmem:[%s640 + $0x15c] sm:$0xff]
  %v700 = vld [vmem:[%s640 + $0x164] sm:$0xf]
  %v701 = vld [vmem:[%s640 + $0x168] sm:$0xff]
  %v702 = vld [vmem:[%s640 + $0x170] sm:$0xf]
  %v703 = vld [vmem:[%s640 + $0x174] sm:$0xff]
  %v704 = vld [vmem:[%s640 + $0x17c] sm:$0xf]
  %v705 = vld [vmem:[%s640 + $0x180] sm:$0xff]
  %v706 = vld [vmem:[%s640 + $0x188] sm:$0xf]
  %v707 = vld [vmem:[%s640 + $0x18c] sm:$0xff]
  %v708 = vld [vmem:[%s640 + $0x194] sm:$0xf]
  %v709 = vld [vmem:[%s640 + $0x198] sm:$0xff]
  %v710 = vld [vmem:[%s640 + $0x1a0] sm:$0xf]
  %v711 = vld [vmem:[%s640 + $0x1a4] sm:$0xff]
  %v712 = vld [vmem:[%s640 + $0x1ac] sm:$0xf]
  %v713 = vld [vmem:[%s1] sm:$0xff]
  %v714 = vld [vmem:[%s0] sm:$0xff]
  %v715 = vld [vmem:[%s0 + $0x8] sm:$0xf]
  %v716 = vld [vmem:[%s0 + $0xc] sm:$0xff]
  %v717 = vld [vmem:[%s0 + $0x14] sm:$0xf]
  %v718 = vld [vmem:[%s0 + $0x18] sm:$0xff]
  %v719 = vld [vmem:[%s0 + $0x20] sm:$0xf]
  %v720 = vld [vmem:[%s0 + $0x24] sm:$0xff]
  %v721 = vld [vmem:[%s0 + $0x2c] sm:$0xf]
  %v722 = vld [vmem:[%s0 + $0x30] sm:$0xff]
  %v723 = vld [vmem:[%s0 + $0x38] sm:$0xf]
  %v724 = vld [vmem:[%s0 + $0x3c] sm:$0xff]
  %v725 = vld [vmem:[%s0 + $0x44] sm:$0xf]
  %v726 = vld [vmem:[%s0 + $0x48] sm:$0xff]
  %v727 = vld [vmem:[%s0 + $0x50] sm:$0xf]
  %v728 = vld [vmem:[%s0 + $0x54] sm:$0xff]
  %v729 = vld [vmem:[%s0 + $0x5c] sm:$0xf]
  %v730 = vld [vmem:[%s0 + $0x60] sm:$0xff]
  %v731 = vld [vmem:[%s0 + $0x68] sm:$0xf]
  %v732 = vld [vmem:[%s0 + $0x6c] sm:$0xff]
  %v733 = vld [vmem:[%s0 + $0x74] sm:$0xf]
  %v734 = vld [vmem:[%s0 + $0x78] sm:$0xff]
  %v735 = vld [vmem:[%s0 + $0x80] sm:$0xf]
  %v736 = vld [vmem:[%s0 + $0x84] sm:$0xff]
  %v737 = vld [vmem:[%s0 + $0x8c] sm:$0xf]
  %v738 = vld [vmem:[%s0 + $0x90] sm:$0xff]
  %v739 = vld [vmem:[%s0 + $0x98] sm:$0xf]
  %v740 = vld [vmem:[%s0 + $0x9c] sm:$0xff]
  %v741 = vld [vmem:[%s0 + $0xa4] sm:$0xf]
  %v742 = vld [vmem:[%s0 + $0xa8] sm:$0xff]
  %v743 = vld [vmem:[%s0 + $0xb0] sm:$0xf]
  %v744 = vld [vmem:[%s0 + $0xb4] sm:$0xff]
  %v745 = vld [vmem:[%s0 + $0xbc] sm:$0xf]
  %v746 = vld [vmem:[%s0 + $0xc0] sm:$0xff]
  %v747 = vld [vmem:[%s0 + $0xc8] sm:$0xf]
  %v748 = vld [vmem:[%s0 + $0xcc] sm:$0xff]
  %v749 = vld [vmem:[%s0 + $0xd4] sm:$0xf]
  %v750 = vld [vmem:[%s0 + $0xd8] sm:$0x33]
  %v751 = vld [vmem:[%s0 + $0xe0] sm:$0x3]
  %v752 = vld [vmem:[%s2] sm:$0xff]
  %754 = vset.pattern.permute.xlu0 0
  %755 = vperm.xlu0 %754, %v752
  %v756 = vpop.permute.xlu0 %755
  %v759 = vunpack.c.l.b16 %v713
  %v760 = vunpack.c.h.b16 %v713
  %v761 = vpack.c.b16 %v759, %v759
  %v762 = vpack.c.b16 %v760, %v760
  %v802 = vunpack.c.l.b16 %v714
  %v803 = vunpack.c.h.b16 %v714
  %v804 = vunpack.c.l.b16 %v715
  %v805 = vunpack.c.l.b16 %v716
  %v806 = vunpack.c.h.b16 %v716
  %v807 = vunpack.c.l.b16 %v717
  %v808 = vunpack.c.l.b16 %v718
  %v809 = vunpack.c.h.b16 %v718
  %v810 = vunpack.c.l.b16 %v719
  %v811 = vunpack.c.l.b16 %v720
  %v812 = vunpack.c.h.b16 %v720
  %v813 = vunpack.c.l.b16 %v721
  %v814 = vunpack.c.l.b16 %v722
  %v815 = vunpack.c.h.b16 %v722
  %v816 = vunpack.c.l.b16 %v723
  %v817 = vunpack.c.l.b16 %v724
  %v818 = vunpack.c.h.b16 %v724
  %v819 = vunpack.c.l.b16 %v725
  %v820 = vunpack.c.l.b16 %v726
  %v821 = vunpack.c.h.b16 %v726
  %v822 = vunpack.c.l.b16 %v727
  %v823 = vunpack.c.l.b16 %v728
  %v824 = vunpack.c.h.b16 %v728
  %v825 = vunpack.c.l.b16 %v729
  %v826 = vunpack.c.l.b16 %v730
  %v827 = vunpack.c.h.b16 %v730
  %v828 = vunpack.c.l.b16 %v731
  %v829 = vunpack.c.l.b16 %v732
  %v830 = vunpack.c.h.b16 %v732
  %v831 = vunpack.c.l.b16 %v733
  %v832 = vunpack.c.l.b16 %v734
  %v833 = vunpack.c.h.b16 %v734
  %v834 = vunpack.c.l.b16 %v735
  %v835 = vunpack.c.l.b16 %v736
  %v836 = vunpack.c.h.b16 %v736
  %v837 = vunpack.c.l.b16 %v737
  %v838 = vunpack.c.l.b16 %v738
  %v839 = vunpack.c.h.b16 %v738
  %v840 = vunpack.c.l.b16 %v739
  %v841 = vunpack.c.l.b16 %v740
  %v842 = vunpack.c.h.b16 %v740
  %v843 = vunpack.c.l.b16 %v741
  %v844 = vunpack.c.l.b16 %v742
  %v845 = vunpack.c.h.b16 %v742
  %v846 = vunpack.c.l.b16 %v743
  %v847 = vunpack.c.l.b16 %v744
  %v848 = vunpack.c.h.b16 %v744
  %v849 = vunpack.c.l.b16 %v745
  %v850 = vunpack.c.l.b16 %v746
  %v851 = vunpack.c.h.b16 %v746
  %v852 = vunpack.c.l.b16 %v747
  %v853 = vunpack.c.l.b16 %v748
  %v854 = vunpack.c.h.b16 %v748
  %v855 = vunpack.c.l.b16 %v749
  %v856 = vunpack.c.l.b16 %v750
  %v857 = vunpack.c.h.b16 %v750
  %v858 = vunpack.c.l.b16 %v751
  %v859 = vpack.c.b16 %v805, %v802
  %v860 = vpack.c.b16 %v806, %v803
  %v861 = vpack.c.b16 %v807, %v804
  %v862 = vpack.c.b16 %v811, %v808
  %v863 = vpack.c.b16 %v812, %v809
  %v864 = vpack.c.b16 %v813, %v810
  %v865 = vpack.c.b16 %v817, %v814
  %v866 = vpack.c.b16 %v818, %v815
  %v867 = vpack.c.b16 %v819, %v816
  %v868 = vpack.c.b16 %v823, %v820
  %v869 = vpack.c.b16 %v824, %v821
  %v870 = vpack.c.b16 %v825, %v822
  %v871 = vpack.c.b16 %v829, %v826
  %v872 = vpack.c.b16 %v830, %v827
  %v873 = vpack.c.b16 %v831, %v828
  %v874 = vpack.c.b16 %v835, %v832
  %v875 = vpack.c.b16 %v836, %v833
  %v876 = vpack.c.b16 %v837, %v834
  %v877 = vpack.c.b16 %v841, %v838
  %v878 = vpack.c.b16 %v842, %v839
  %v879 = vpack.c.b16 %v843, %v840
  %v880 = vpack.c.b16 %v847, %v844
  %v881 = vpack.c.b16 %v848, %v845
  %v882 = vpack.c.b16 %v849, %v846
  %v883 = vpack.c.b16 %v853, %v850
  %v884 = vpack.c.b16 %v854, %v851
  %v885 = vpack.c.b16 %v855, %v852
  %v886 = vpack.c.b16 %v856, %v856
  %v887 = vpack.c.b16 %v857, %v857
  %v888 = vpack.c.b16 %v858, %v858
  %vm916 = vcmask 154624
  %v918 = vsel %vm916, %v762, 0
  %vm920 = vcmask 1040384
  %vm921 = vcmask 1041408
  %v922 = vsel %vm920, 4294967295, 65535
  %v923 = vsel %vm921, %v922, 0
  %v925 = vand.u32 %v886, %v923
  %v928 = vand.u32 %v887, %v923
  %v931 = vand.u32 %v888, %v923
  %933 = vmatpush.bf16.msra.mxu0 %v880
  %934 = vmatpush.bf16.msra.mxu0 %v877
  %935 = vmatpush.bf16.msra.mxu0 %v874
  %936 = vmatpush.bf16.msra.mxu0 %v871
  %937 = vmatpush.bf16.msra.mxu0 %v868
  %938 = vmatpush.bf16.msra.mxu0 %v865
  %939 = vmatpush.bf16.msra.mxu0 %v862
  %940 = vmatpush.bf16.msra.mxu0 %v859
  %941 = vmatmul.bf16.gmra.mxu0 %v761
  %v942 = vpop.f32.mrf.mxu0
  %v943 = vadd.f32 %v756, %v942
  %v944 = vpop.f32.mrf.mxu0
  %945 = vdwg.mxu0
  %946 = vmatpush.bf16.msra.mxu0 0
  %947 = vmatpush.bf16.msra.mxu0 0
  %948 = vmatpush.bf16.msra.mxu0 0
  %949 = vmatpush.bf16.msra.mxu0 0
  %950 = vmatpush.bf16.msra.mxu0 0
  %951 = vmatpush.bf16.msra.mxu0 0
  %952 = vmatpush.bf16.msra.mxu0 %v925
  %953 = vmatpush.bf16.msra.mxu0 %v883
  %954 = vmatmul.bf16.gmra.mxu0 %v918
  %v955 = vpop.f32.mrf.mxu0
  %v956 = vadd.f32 %v943, %v955
  %v957 = vpop.f32.mrf.mxu0
  %958 = vdwg.mxu0
  %959 = vmatpush.bf16.msra.mxu0 %v881
  %960 = vmatpush.bf16.msra.mxu0 %v878
  %961 = vmatpush.bf16.msra.mxu0 %v875
  %962 = vmatpush.bf16.msra.mxu0 %v872
  %963 = vmatpush.bf16.msra.mxu0 %v869
  %964 = vmatpush.bf16.msra.mxu0 %v866
  %965 = vmatpush.bf16.msra.mxu0 %v863
  %966 = vmatpush.bf16.msra.mxu0 %v860
  %967 = vmatmul.bf16.gmra.mxu0 %v761
  %v968 = vpop.f32.mrf.mxu0
  %v969 = vadd.f32 %v756, %v968
  %v970 = vpop.f32.mrf.mxu0
  %971 = vdwg.mxu0
  %972 = vmatpush.bf16.msra.mxu0 0
  %973 = vmatpush.bf16.msra.mxu0 0
  %974 = vmatpush.bf16.msra.mxu0 0
  %975 = vmatpush.bf16.msra.mxu0 0
  %976 = vmatpush.bf16.msra.mxu0 0
  %977 = vmatpush.bf16.msra.mxu0 0
  %978 = vmatpush.bf16.msra.mxu0 %v928
  %979 = vmatpush.bf16.msra.mxu0 %v884
  %980 = vmatmul.bf16.gmra.mxu0 %v918
  %v981 = vpop.f32.mrf.mxu0
  %v982 = vadd.f32 %v969, %v981
  %v983 = vpop.f32.mrf.mxu0
  %984 = vdwg.mxu0
  %985 = vmatpush.bf16.msra.mxu0 %v882
  %986 = vmatpush.bf16.msra.mxu0 %v879
  %987 = vmatpush.bf16.msra.mxu0 %v876
  %988 = vmatpush.bf16.msra.mxu0 %v873
  %989 = vmatpush.bf16.msra.mxu0 %v870
  %990 = vmatpush.bf16.msra.mxu0 %v867
  %991 = vmatpush.bf16.msra.mxu0 %v864
  %992 = vmatpush.bf16.msra.mxu0 %v861
  %993 = vmatmul.bf16.gmra.mxu0 %v761
  %v994 = vpop.f32.mrf.mxu0
  %v995 = vadd.f32 %v756, %v994
  %v996 = vpop.f32.mrf.mxu0
  %997 = vdwg.mxu0
  %998 = vmatpush.bf16.msra.mxu0 0
  %999 = vmatpush.bf16.msra.mxu0 0
  %1000 = vmatpush.bf16.msra.mxu0 0
  %1001 = vmatpush.bf16.msra.mxu0 0
  %1002 = vmatpush.bf16.msra.mxu0 0
  %1003 = vmatpush.bf16.msra.mxu0 0
  %1004 = vmatpush.bf16.msra.mxu0 %v931
  %1005 = vmatpush.bf16.msra.mxu0 %v885
  %1006 = vmatmul.bf16.gmra.mxu0 %v918
  %v1007 = vpop.f32.mrf.mxu0
  %v1008 = vadd.f32 %v995, %v1007
  %v1009 = vpop.f32.mrf.mxu0
  %1010 = vdwg.mxu0
  %v1011 = vmax.f32 %v956, 0.0
  %v1012 = vmax.f32 %v982, 0.0
  %v1013 = vmax.f32 %v1008, 0.0
  %v1014 = vpack.c.bf16 %v1011, %v1011
  %v1015 = vpack.c.bf16 %v1012, %v1012
  %v1016 = vpack.c.bf16 %v1013, %v1013
  %v1089 = vunpack.c.l.b16 %v57
  %v1090 = vunpack.c.h.b16 %v57
  %v1091 = vunpack.c.l.b16 %v58
  %v1092 = vunpack.c.l.b16 %v59
  %v1093 = vunpack.c.h.b16 %v59
  %v1094 = vunpack.c.l.b16 %v60
  %v1095 = vunpack.c.l.b16 %v61
  %v1096 = vunpack.c.h.b16 %v61
  %v1097 = vunpack.c.l.b16 %v62
  %v1098 = vunpack.c.l.b16 %v63
  %v1099 = vunpack.c.h.b16 %v63
  %v1100 = vunpack.c.l.b16 %v64
  %v1101 = vunpack.c.l.b16 %v65
  %v1102 = vunpack.c.h.b16 %v65
  %v1103 = vunpack.c.l.b16 %v66
  %v1104 = vunpack.c.l.b16 %v67
  %v1105 = vunpack.c.h.b16 %v67
  %v1106 = vunpack.c.l.b16 %v68
  %v1107 = vunpack.c.l.b16 %v69
  %v1108 = vunpack.c.h.b16 %v69
  %v1109 = vunpack.c.l.b16 %v70
  %v1110 = vunpack.c.l.b16 %v71
  %v1111 = vunpack.c.h.b16 %v71
  %v1112 = vunpack.c.l.b16 %v72
  %v1113 = vunpack.c.l.b16 %v73
  %v1114 = vunpack.c.h.b16 %v73
  %v1115 = vunpack.c.l.b16 %v74
  %v1116 = vunpack.c.l.b16 %v75
  %v1117 = vunpack.c.h.b16 %v75
  %v1118 = vunpack.c.l.b16 %v76
  %v1119 = vunpack.c.l.b16 %v77
  %v1120 = vunpack.c.h.b16 %v77
  %v1121 = vunpack.c.l.b16 %v78
  %v1122 = vunpack.c.l.b16 %v79
  %v1123 = vunpack.c.h.b16 %v79
  %v1124 = vunpack.c.l.b16 %v80
  %v1125 = vunpack.c.l.b16 %v81
  %v1126 = vunpack.c.h.b16 %v81
  %v1127 = vunpack.c.l.b16 %v82
  %v1128 = vunpack.c.l.b16 %v83
  %v1129 = vunpack.c.h.b16 %v83
  %v1130 = vunpack.c.l.b16 %v84
  %v1131 = vunpack.c.l.b16 %v85
  %v1132 = vunpack.c.h.b16 %v85
  %v1133 = vunpack.c.l.b16 %v86
  %v1134 = vunpack.c.l.b16 %v87
  %v1135 = vunpack.c.h.b16 %v87
  %v1136 = vunpack.c.l.b16 %v88
  %v1137 = vunpack.c.l.b16 %v89
  %v1138 = vunpack.c.h.b16 %v89
  %v1139 = vunpack.c.l.b16 %v90
  %v1140 = vunpack.c.l.b16 %v91
  %v1141 = vunpack.c.h.b16 %v91
  %v1142 = vunpack.c.l.b16 %v92
  %v1143 = vunpack.c.l.b16 %v93
  %v1144 = vunpack.c.h.b16 %v93
  %v1145 = vunpack.c.l.b16 %v94
  %v1146 = vunpack.c.l.b16 %v95
  %v1147 = vunpack.c.h.b16 %v95
  %v1148 = vunpack.c.l.b16 %v96
  %v1149 = vunpack.c.l.b16 %v97
  %v1150 = vunpack.c.h.b16 %v97
  %v1151 = vunpack.c.l.b16 %v98
  %v1152 = vunpack.c.l.b16 %v99
  %v1153 = vunpack.c.h.b16 %v99
  %v1154 = vunpack.c.l.b16 %v100
  %v1155 = vunpack.c.l.b16 %v101
  %v1156 = vunpack.c.h.b16 %v101
  %v1157 = vunpack.c.l.b16 %v102
  %v1158 = vunpack.c.l.b16 %v103
  %v1159 = vunpack.c.h.b16 %v103
  %v1160 = vunpack.c.l.b16 %v104
  %v1161 = vunpack.c.l.b16 %v105
  %v1162 = vunpack.c.h.b16 %v105
  %v1163 = vunpack.c.l.b16 %v106
  %v1164 = vunpack.c.l.b16 %v107
  %v1165 = vunpack.c.h.b16 %v107
  %v1166 = vunpack.c.l.b16 %v108
  %v1167 = vunpack.c.l.b16 %v109
  %v1168 = vunpack.c.h.b16 %v109
  %v1169 = vunpack.c.l.b16 %v110
  %v1170 = vunpack.c.l.b16 %v111
  %v1171 = vunpack.c.h.b16 %v111
  %v1172 = vunpack.c.l.b16 %v112
  %v1173 = vunpack.c.l.b16 %v113
  %v1174 = vunpack.c.h.b16 %v113
  %v1175 = vunpack.c.l.b16 %v114
  %v1176 = vunpack.c.l.b16 %v115
  %v1177 = vunpack.c.h.b16 %v115
  %v1178 = vunpack.c.l.b16 %v116
  %v1179 = vunpack.c.l.b16 %v117
  %v1180 = vunpack.c.h.b16 %v117
  %v1181 = vunpack.c.l.b16 %v118
  %v1182 = vunpack.c.l.b16 %v119
  %v1183 = vunpack.c.h.b16 %v119
  %v1184 = vunpack.c.l.b16 %v120
  %v1185 = vunpack.c.l.b16 %v121
  %v1186 = vunpack.c.h.b16 %v121
  %v1187 = vunpack.c.l.b16 %v122
  %v1188 = vunpack.c.l.b16 %v123
  %v1189 = vunpack.c.h.b16 %v123
  %v1190 = vunpack.c.l.b16 %v124
  %v1191 = vunpack.c.l.b16 %v125
  %v1192 = vunpack.c.h.b16 %v125
  %v1193 = vunpack.c.l.b16 %v126
  %v1194 = vunpack.c.l.b16 %v127
  %v1195 = vunpack.c.h.b16 %v127
  %v1196 = vunpack.c.l.b16 %v128
  %v1197 = vpack.c.b16 %v1092, %v1089
  %v1198 = vpack.c.b16 %v1093, %v1090
  %v1199 = vpack.c.b16 %v1094, %v1091
  %v1200 = vpack.c.b16 %v1098, %v1095
  %v1201 = vpack.c.b16 %v1099, %v1096
  %v1202 = vpack.c.b16 %v1100, %v1097
  %v1203 = vpack.c.b16 %v1104, %v1101
  %v1204 = vpack.c.b16 %v1105, %v1102
  %v1205 = vpack.c.b16 %v1106, %v1103
  %v1206 = vpack.c.b16 %v1110, %v1107
  %v1207 = vpack.c.b16 %v1111, %v1108
  %v1208 = vpack.c.b16 %v1112, %v1109
  %v1209 = vpack.c.b16 %v1116, %v1113
  %v1210 = vpack.c.b16 %v1117, %v1114
  %v1211 = vpack.c.b16 %v1118, %v1115
  %v1212 = vpack.c.b16 %v1122, %v1119
  %v1213 = vpack.c.b16 %v1123, %v1120
  %v1214 = vpack.c.b16 %v1124, %v1121
  %v1215 = vpack.c.b16 %v1128, %v1125
  %v1216 = vpack.c.b16 %v1129, %v1126
  %v1217 = vpack.c.b16 %v1130, %v1127
  %v1218 = vpack.c.b16 %v1134, %v1131
  %v1219 = vpack.c.b16 %v1135, %v1132
  %v1220 = vpack.c.b16 %v1136, %v1133
  %v1221 = vpack.c.b16 %v1140, %v1137
  %v1222 = vpack.c.b16 %v1141, %v1138
  %v1223 = vpack.c.b16 %v1142, %v1139
  %v1224 = vpack.c.b16 %v1146, %v1143
  %v1225 = vpack.c.b16 %v1147, %v1144
  %v1226 = vpack.c.b16 %v1148, %v1145
  %v1227 = vpack.c.b16 %v1152, %v1149
  %v1228 = vpack.c.b16 %v1153, %v1150
  %v1229 = vpack.c.b16 %v1154, %v1151
  %v1230 = vpack.c.b16 %v1158, %v1155
  %v1231 = vpack.c.b16 %v1159, %v1156
  %v1232 = vpack.c.b16 %v1160, %v1157
  %v1233 = vpack.c.b16 %v1164, %v1161
  %v1234 = vpack.c.b16 %v1165, %v1162
  %v1235 = vpack.c.b16 %v1166, %v1163
  %v1236 = vpack.c.b16 %v1170, %v1167
  %v1237 = vpack.c.b16 %v1171, %v1168
  %v1238 = vpack.c.b16 %v1172, %v1169
  %v1239 = vpack.c.b16 %v1176, %v1173
  %v1240 = vpack.c.b16 %v1177, %v1174
  %v1241 = vpack.c.b16 %v1178, %v1175
  %v1242 = vpack.c.b16 %v1182, %v1179
  %v1243 = vpack.c.b16 %v1183, %v1180
  %v1244 = vpack.c.b16 %v1184, %v1181
  %v1245 = vpack.c.b16 %v1188, %v1185
  %v1246 = vpack.c.b16 %v1189, %v1186
  %v1247 = vpack.c.b16 %v1190, %v1187
  %v1248 = vpack.c.b16 %v1194, %v1191
  %v1249 = vpack.c.b16 %v1195, %v1192
  %v1250 = vpack.c.b16 %v1196, %v1193
  %vm1305 = vcmask 261120
  %v1307 = vsel %vm1305, %v1016, 0
  %1309 = vmatpush.bf16.msra.mxu0 %v1218
  %1310 = vmatpush.bf16.msra.mxu0 %v1215
  %1311 = vmatpush.bf16.msra.mxu0 %v1212
  %1312 = vmatpush.bf16.msra.mxu0 %v1209
  %1313 = vmatpush.bf16.msra.mxu0 %v1206
  %1314 = vmatpush.bf16.msra.mxu0 %v1203
  %1315 = vmatpush.bf16.msra.mxu0 %v1200
  %1316 = vmatpush.bf16.msra.mxu0 %v1197
  %1317 = vmatmul.bf16.gmra.mxu0 %v1014
  %v1318 = vpop.f32.mrf.mxu0
  %v1319 = vadd.f32 0.0, %v1318
  %v1320 = vpop.f32.mrf.mxu0
  %1321 = vdwg.mxu0
  %1322 = vmatpush.bf16.msra.mxu0 %v1242
  %1323 = vmatpush.bf16.msra.mxu0 %v1239
  %1324 = vmatpush.bf16.msra.mxu0 %v1236
  %1325 = vmatpush.bf16.msra.mxu0 %v1233
  %1326 = vmatpush.bf16.msra.mxu0 %v1230
  %1327 = vmatpush.bf16.msra.mxu0 %v1227
  %1328 = vmatpush.bf16.msra.mxu0 %v1224
  %1329 = vmatpush.bf16.msra.mxu0 %v1221
  %1330 = vmatmul.bf16.gmra.mxu0 %v1015
  %v1331 = vpop.f32.mrf.mxu0
  %v1332 = vadd.f32 %v1319, %v1331
  %v1333 = vpop.f32.mrf.mxu0
  %1334 = vdwg.mxu0
  %1335 = vmatpush.bf16.msra.mxu0 0
  %1336 = vmatpush.bf16.msra.mxu0 0
  %1337 = vmatpush.bf16.msra.mxu0 0
  %1338 = vmatpush.bf16.msra.mxu0 0
  %1339 = vmatpush.bf16.msra.mxu0 0
  %1340 = vmatpush.bf16.msra.mxu0 0
  %1341 = vmatpush.bf16.msra.mxu0 %v1248
  %1342 = vmatpush.bf16.msra.mxu0 %v1245
  %1343 = vmatmul.bf16.gmra.mxu0 %v1307
  %v1344 = vpop.f32.mrf.mxu0
  %v1345 = vadd.f32 %v1332, %v1344
  %v1346 = vpop.f32.mrf.mxu0
  %1347 = vdwg.mxu0
  %1348 = vmatpush.bf16.msra.mxu0 %v1219
  %1349 = vmatpush.bf16.msra.mxu0 %v1216
  %1350 = vmatpush.bf16.msra.mxu0 %v1213
  %1351 = vmatpush.bf16.msra.mxu0 %v1210
  %1352 = vmatpush.bf16.msra.mxu0 %v1207
  %1353 = vmatpush.bf16.msra.mxu0 %v1204
  %1354 = vmatpush.bf16.msra.mxu0 %v1201
  %1355 = vmatpush.bf16.msra.mxu0 %v1198
  %1356 = vmatmul.bf16.gmra.mxu0 %v1014
  %v1357 = vpop.f32.mrf.mxu0
  %v1358 = vadd.f32 0.0, %v1357
  %v1359 = vpop.f32.mrf.mxu0
  %1360 = vdwg.mxu0
  %1361 = vmatpush.bf16.msra.mxu0 %v1243
  %1362 = vmatpush.bf16.msra.mxu0 %v1240
  %1363 = vmatpush.bf16.msra.mxu0 %v1237
  %1364 = vmatpush.bf16.msra.mxu0 %v1234
  %1365 = vmatpush.bf16.msra.mxu0 %v1231
  %1366 = vmatpush.bf16.msra.mxu0 %v1228
  %1367 = vmatpush.bf16.msra.mxu0 %v1225
  %1368 = vmatpush.bf16.msra.mxu0 %v1222
  %1369 = vmatmul.bf16.gmra.mxu0 %v1015
  %v1370 = vpop.f32.mrf.mxu0
  %v1371 = vadd.f32 %v1358, %v1370
  %v1372 = vpop.f32.mrf.mxu0
  %1373 = vdwg.mxu0
  %1374 = vmatpush.bf16.msra.mxu0 0
  %1375 = vmatpush.bf16.msra.mxu0 0
  %1376 = vmatpush.bf16.msra.mxu0 0
  %1377 = vmatpush.bf16.msra.mxu0 0
  %1378 = vmatpush.bf16.msra.mxu0 0
  %1379 = vmatpush.bf16.msra.mxu0 0
  %1380 = vmatpush.bf16.msra.mxu0 %v1249
  %1381 = vmatpush.bf16.msra.mxu0 %v1246
  %1382 = vmatmul.bf16.gmra.mxu0 %v1307
  %v1383 = vpop.f32.mrf.mxu0
  %v1384 = vadd.f32 %v1371, %v1383
  %v1385 = vpop.f32.mrf.mxu0
  %1386 = vdwg.mxu0
  %1387 = vmatpush.bf16.msra.mxu0 %v1220
  %1388 = vmatpush.bf16.msra.mxu0 %v1217
  %1389 = vmatpush.bf16.msra.mxu0 %v1214
  %1390 = vmatpush.bf16.msra.mxu0 %v1211
  %1391 = vmatpush.bf16.msra.mxu0 %v1208
  %1392 = vmatpush.bf16.msra.mxu0 %v1205
  %1393 = vmatpush.bf16.msra.mxu0 %v1202
  %1394 = vmatpush.bf16.msra.mxu0 %v1199
  %1395 = vmatmul.bf16.gmra.mxu0 %v1014
  %v1396 = vpop.f32.mrf.mxu0
  %v1397 = vadd.f32 0.0, %v1396
  %v1398 = vpop.f32.mrf.mxu0
  %1399 = vdwg.mxu0
  %1400 = vmatpush.bf16.msra.mxu0 %v1244
  %1401 = vmatpush.bf16.msra.mxu0 %v1241
  %1402 = vmatpush.bf16.msra.mxu0 %v1238
  %1403 = vmatpush.bf16.msra.mxu0 %v1235
  %1404 = vmatpush.bf16.msra.mxu0 %v1232
  %1405 = vmatpush.bf16.msra.mxu0 %v1229
  %1406 = vmatpush.bf16.msra.mxu0 %v1226
  %1407 = vmatpush.bf16.msra.mxu0 %v1223
  %1408 = vmatmul.bf16.gmra.mxu0 %v1015
  %v1409 = vpop.f32.mrf.mxu0
  %v1410 = vadd.f32 %v1397, %v1409
  %v1411 = vpop.f32.mrf.mxu0
  %1412 = vdwg.mxu0
  %1413 = vmatpush.bf16.msra.mxu0 0
  %1414 = vmatpush.bf16.msra.mxu0 0
  %1415 = vmatpush.bf16.msra.mxu0 0
  %1416 = vmatpush.bf16.msra.mxu0 0
  %1417 = vmatpush.bf16.msra.mxu0 0
  %1418 = vmatpush.bf16.msra.mxu0 0
  %1419 = vmatpush.bf16.msra.mxu0 %v1250
  %1420 = vmatpush.bf16.msra.mxu0 %v1247
  %1421 = vmatmul.bf16.gmra.mxu0 %v1307
  %v1422 = vpop.f32.mrf.mxu0
  %v1423 = vadd.f32 %v1410, %v1422
  %v1424 = vpop.f32.mrf.mxu0
  %1425 = vdwg.mxu0
  %v1426 = vpack.c.bf16 %v1345, %v1345
  %v1427 = vpack.c.bf16 %v1384, %v1384
  %v1428 = vpack.c.bf16 %v1423, %v1423
  %v1429 = vld [vmem:[%s4] sm:$0xf]
  %v1502 = vunpack.c.l.b16 %v130
  %v1503 = vunpack.c.h.b16 %v130
  %v1504 = vunpack.c.l.b16 %v131
  %v1505 = vunpack.c.l.b16 %v132
  %v1506 = vunpack.c.h.b16 %v132
  %v1507 = vunpack.c.l.b16 %v133
  %v1508 = vunpack.c.l.b16 %v134
  %v1509 = vunpack.c.h.b16 %v134
  %v1510 = vunpack.c.l.b16 %v135
  %v1511 = vunpack.c.l.b16 %v136
  %v1512 = vunpack.c.h.b16 %v136
  %v1513 = vunpack.c.l.b16 %v137
  %v1514 = vunpack.c.l.b16 %v138
  %v1515 = vunpack.c.h.b16 %v138
  %v1516 = vunpack.c.l.b16 %v139
  %v1517 = vunpack.c.l.b16 %v140
  %v1518 = vunpack.c.h.b16 %v140
  %v1519 = vunpack.c.l.b16 %v141
  %v1520 = vunpack.c.l.b16 %v142
  %v1521 = vunpack.c.h.b16 %v142
  %v1522 = vunpack.c.l.b16 %v143
  %v1523 = vunpack.c.l.b16 %v144
  %v1524 = vunpack.c.h.b16 %v144
  %v1525 = vunpack.c.l.b16 %v145
  %v1526 = vunpack.c.l.b16 %v146
  %v1527 = vunpack.c.h.b16 %v146
  %v1528 = vunpack.c.l.b16 %v147
  %v1529 = vunpack.c.l.b16 %v148
  %v1530 = vunpack.c.h.b16 %v148
  %v1531 = vunpack.c.l.b16 %v149
  %v1532 = vunpack.c.l.b16 %v150
  %v1533 = vunpack.c.h.b16 %v150
  %v1534 = vunpack.c.l.b16 %v151
  %v1535 = vunpack.c.l.b16 %v152
  %v1536 = vunpack.c.h.b16 %v152
  %v1537 = vunpack.c.l.b16 %v153
  %v1538 = vunpack.c.l.b16 %v154
  %v1539 = vunpack.c.h.b16 %v154
  %v1540 = vunpack.c.l.b16 %v155
  %v1541 = vunpack.c.l.b16 %v156
  %v1542 = vunpack.c.h.b16 %v156
  %v1543 = vunpack.c.l.b16 %v157
  %v1544 = vunpack.c.l.b16 %v158
  %v1545 = vunpack.c.h.b16 %v158
  %v1546 = vunpack.c.l.b16 %v159
  %v1547 = vunpack.c.l.b16 %v160
  %v1548 = vunpack.c.h.b16 %v160
  %v1549 = vunpack.c.l.b16 %v161
  %v1550 = vunpack.c.l.b16 %v162
  %v1551 = vunpack.c.h.b16 %v162
  %v1552 = vunpack.c.l.b16 %v163
  %v1553 = vunpack.c.l.b16 %v164
  %v1554 = vunpack.c.h.b16 %v164
  %v1555 = vunpack.c.l.b16 %v165
  %v1556 = vunpack.c.l.b16 %v166
  %v1557 = vunpack.c.h.b16 %v166
  %v1558 = vunpack.c.l.b16 %v167
  %v1559 = vunpack.c.l.b16 %v168
  %v1560 = vunpack.c.h.b16 %v168
  %v1561 = vunpack.c.l.b16 %v169
  %v1562 = vunpack.c.l.b16 %v170
  %v1563 = vunpack.c.h.b16 %v170
  %v1564 = vunpack.c.l.b16 %v171
  %v1565 = vunpack.c.l.b16 %v172
  %v1566 = vunpack.c.h.b16 %v172
  %v1567 = vunpack.c.l.b16 %v173
  %v1568 = vunpack.c.l.b16 %v174
  %v1569 = vunpack.c.h.b16 %v174
  %v1570 = vunpack.c.l.b16 %v175
  %v1571 = vunpack.c.l.b16 %v176
  %v1572 = vunpack.c.h.b16 %v176
  %v1573 = vunpack.c.l.b16 %v177
  %v1574 = vunpack.c.l.b16 %v178
  %v1575 = vunpack.c.h.b16 %v178
  %v1576 = vunpack.c.l.b16 %v179
  %v1577 = vunpack.c.l.b16 %v180
  %v1578 = vunpack.c.h.b16 %v180
  %v1579 = vunpack.c.l.b16 %v181
  %v1580 = vunpack.c.l.b16 %v182
  %v1581 = vunpack.c.h.b16 %v182
  %v1582 = vunpack.c.l.b16 %v183
  %v1583 = vunpack.c.l.b16 %v184
  %v1584 = vunpack.c.h.b16 %v184
  %v1585 = vunpack.c.l.b16 %v185
  %v1586 = vunpack.c.l.b16 %v186
  %v1587 = vunpack.c.h.b16 %v186
  %v1588 = vunpack.c.l.b16 %v187
  %v1589 = vunpack.c.l.b16 %v188
  %v1590 = vunpack.c.h.b16 %v188
  %v1591 = vunpack.c.l.b16 %v189
  %v1592 = vunpack.c.l.b16 %v190
  %v1593 = vunpack.c.h.b16 %v190
  %v1594 = vunpack.c.l.b16 %v191
  %v1595 = vunpack.c.l.b16 %v192
  %v1596 = vunpack.c.h.b16 %v192
  %v1597 = vunpack.c.l.b16 %v193
  %v1598 = vunpack.c.l.b16 %v194
  %v1599 = vunpack.c.h.b16 %v194
  %v1600 = vunpack.c.l.b16 %v195
  %v1601 = vunpack.c.l.b16 %v196
  %v1602 = vunpack.c.h.b16 %v196
  %v1603 = vunpack.c.l.b16 %v197
  %v1604 = vunpack.c.l.b16 %v198
  %v1605 = vunpack.c.h.b16 %v198
  %v1606 = vunpack.c.l.b16 %v199
  %v1607 = vunpack.c.l.b16 %v200
  %v1608 = vunpack.c.h.b16 %v200
  %v1609 = vunpack.c.l.b16 %v201
  %v1610 = vpack.c.b16 %v1505, %v1502
  %v1611 = vpack.c.b16 %v1506, %v1503
  %v1612 = vpack.c.b16 %v1507, %v1504
  %v1613 = vpack.c.b16 %v1511, %v1508
  %v1614 = vpack.c.b16 %v1512, %v1509
  %v1615 = vpack.c.b16 %v1513, %v1510
  %v1616 = vpack.c.b16 %v1517, %v1514
  %v1617 = vpack.c.b16 %v1518, %v1515
  %v1618 = vpack.c.b16 %v1519, %v1516
  %v1619 = vpack.c.b16 %v1523, %v1520
  %v1620 = vpack.c.b16 %v1524, %v1521
  %v1621 = vpack.c.b16 %v1525, %v1522
  %v1622 = vpack.c.b16 %v1529, %v1526
  %v1623 = vpack.c.b16 %v1530, %v1527
  %v1624 = vpack.c.b16 %v1531, %v1528
  %v1625 = vpack.c.b16 %v1535, %v1532
  %v1626 = vpack.c.b16 %v1536, %v1533
  %v1627 = vpack.c.b16 %v1537, %v1534
  %v1628 = vpack.c.b16 %v1541, %v1538
  %v1629 = vpack.c.b16 %v1542, %v1539
  %v1630 = vpack.c.b16 %v1543, %v1540
  %v1631 = vpack.c.b16 %v1547, %v1544
  %v1632 = vpack.c.b16 %v1548, %v1545
  %v1633 = vpack.c.b16 %v1549, %v1546
  %v1634 = vpack.c.b16 %v1553, %v1550
  %v1635 = vpack.c.b16 %v1554, %v1551
  %v1636 = vpack.c.b16 %v1555, %v1552
  %v1637 = vpack.c.b16 %v1559, %v1556
  %v1638 = vpack.c.b16 %v1560, %v1557
  %v1639 = vpack.c.b16 %v1561, %v1558
  %v1640 = vpack.c.b16 %v1565, %v1562
  %v1641 = vpack.c.b16 %v1566, %v1563
  %v1642 = vpack.c.b16 %v1567, %v1564
  %v1643 = vpack.c.b16 %v1571, %v1568
  %v1644 = vpack.c.b16 %v1572, %v1569
  %v1645 = vpack.c.b16 %v1573, %v1570
  %v1646 = vpack.c.b16 %v1577, %v1574
  %v1647 = vpack.c.b16 %v1578, %v1575
  %v1648 = vpack.c.b16 %v1579, %v1576
  %v1649 = vpack.c.b16 %v1583, %v1580
  %v1650 = vpack.c.b16 %v1584, %v1581
  %v1651 = vpack.c.b16 %v1585, %v1582
  %v1652 = vpack.c.b16 %v1589, %v1586
  %v1653 = vpack.c.b16 %v1590, %v1587
  %v1654 = vpack.c.b16 %v1591, %v1588
  %v1655 = vpack.c.b16 %v1595, %v1592
  %v1656 = vpack.c.b16 %v1596, %v1593
  %v1657 = vpack.c.b16 %v1597, %v1594
  %v1658 = vpack.c.b16 %v1601, %v1598
  %v1659 = vpack.c.b16 %v1602, %v1599
  %v1660 = vpack.c.b16 %v1603, %v1600
  %v1661 = vpack.c.b16 %v1607, %v1604
  %v1662 = vpack.c.b16 %v1608, %v1605
  %v1663 = vpack.c.b16 %v1609, %v1606
  %1718 = vmatpush.bf16.msra.mxu0 %v1631
  %1719 = vmatpush.bf16.msra.mxu0 %v1628
  %1720 = vmatpush.bf16.msra.mxu0 %v1625
  %1721 = vmatpush.bf16.msra.mxu0 %v1622
  %1722 = vmatpush.bf16.msra.mxu0 %v1619
  %1723 = vmatpush.bf16.msra.mxu0 %v1616
  %1724 = vmatpush.bf16.msra.mxu0 %v1613
  %1725 = vmatpush.bf16.msra.mxu0 %v1610
  %1726 = vmatmul.bf16.gmra.mxu0 %v1014
  %v1727 = vpop.f32.mrf.mxu0
  %v1728 = vadd.f32 0.0, %v1727
  %v1729 = vpop.f32.mrf.mxu0
  %1730 = vdwg.mxu0
  %1731 = vmatpush.bf16.msra.mxu0 %v1655
  %1732 = vmatpush.bf16.msra.mxu0 %v1652
  %1733 = vmatpush.bf16.msra.mxu0 %v1649
  %1734 = vmatpush.bf16.msra.mxu0 %v1646
  %1735 = vmatpush.bf16.msra.mxu0 %v1643
  %1736 = vmatpush.bf16.msra.mxu0 %v1640
  %1737 = vmatpush.bf16.msra.mxu0 %v1637
  %1738 = vmatpush.bf16.msra.mxu0 %v1634
  %1739 = vmatmul.bf16.gmra.mxu0 %v1015
  %v1740 = vpop.f32.mrf.mxu0
  %v1741 = vadd.f32 %v1728, %v1740
  %v1742 = vpop.f32.mrf.mxu0
  %1743 = vdwg.mxu0
  %1744 = vmatpush.bf16.msra.mxu0 0
  %1745 = vmatpush.bf16.msra.mxu0 0
  %1746 = vmatpush.bf16.msra.mxu0 0
  %1747 = vmatpush.bf16.msra.mxu0 0
  %1748 = vmatpush.bf16.msra.mxu0 0
  %1749 = vmatpush.bf16.msra.mxu0 0
  %1750 = vmatpush.bf16.msra.mxu0 %v1661
  %1751 = vmatpush.bf16.msra.mxu0 %v1658
  %1752 = vmatmul.bf16.gmra.mxu0 %v1307
  %v1753 = vpop.f32.mrf.mxu0
  %v1754 = vadd.f32 %v1741, %v1753
  %v1755 = vpop.f32.mrf.mxu0
  %1756 = vdwg.mxu0
  %1757 = vmatpush.bf16.msra.mxu0 %v1632
  %1758 = vmatpush.bf16.msra.mxu0 %v1629
  %1759 = vmatpush.bf16.msra.mxu0 %v1626
  %1760 = vmatpush.bf16.msra.mxu0 %v1623
  %1761 = vmatpush.bf16.msra.mxu0 %v1620
  %1762 = vmatpush.bf16.msra.mxu0 %v1617
  %1763 = vmatpush.bf16.msra.mxu0 %v1614
  %1764 = vmatpush.bf16.msra.mxu0 %v1611
  %1765 = vmatmul.bf16.gmra.mxu0 %v1014
  %v1766 = vpop.f32.mrf.mxu0
  %v1767 = vadd.f32 0.0, %v1766
  %v1768 = vpop.f32.mrf.mxu0
  %1769 = vdwg.mxu0
  %1770 = vmatpush.bf16.msra.mxu0 %v1656
  %1771 = vmatpush.bf16.msra.mxu0 %v1653
  %1772 = vmatpush.bf16.msra.mxu0 %v1650
  %1773 = vmatpush.bf16.msra.mxu0 %v1647
  %1774 = vmatpush.bf16.msra.mxu0 %v1644
  %1775 = vmatpush.bf16.msra.mxu0 %v1641
  %1776 = vmatpush.bf16.msra.mxu0 %v1638
  %1777 = vmatpush.bf16.msra.mxu0 %v1635
  %1778 = vmatmul.bf16.gmra.mxu0 %v1015
  %v1779 = vpop.f32.mrf.mxu0
  %v1780 = vadd.f32 %v1767, %v1779
  %v1781 = vpop.f32.mrf.mxu0
  %1782 = vdwg.mxu0
  %1783 = vmatpush.bf16.msra.mxu0 0
  %1784 = vmatpush.bf16.msra.mxu0 0
  %1785 = vmatpush.bf16.msra.mxu0 0
  %1786 = vmatpush.bf16.msra.mxu0 0
  %1787 = vmatpush.bf16.msra.mxu0 0
  %1788 = vmatpush.bf16.msra.mxu0 0
  %1789 = vmatpush.bf16.msra.mxu0 %v1662
  %1790 = vmatpush.bf16.msra.mxu0 %v1659
  %1791 = vmatmul.bf16.gmra.mxu0 %v1307
  %v1792 = vpop.f32.mrf.mxu0
  %v1793 = vadd.f32 %v1780, %v1792
  %v1794 = vpop.f32.mrf.mxu0
  %1795 = vdwg.mxu0
  %1796 = vmatpush.bf16.msra.mxu0 %v1633
  %1797 = vmatpush.bf16.msra.mxu0 %v1630
  %1798 = vmatpush.bf16.msra.mxu0 %v1627
  %1799 = vmatpush.bf16.msra.mxu0 %v1624
  %1800 = vmatpush.bf16.msra.mxu0 %v1621
  %1801 = vmatpush.bf16.msra.mxu0 %v1618
  %1802 = vmatpush.bf16.msra.mxu0 %v1615
  %1803 = vmatpush.bf16.msra.mxu0 %v1612
  %1804 = vmatmul.bf16.gmra.mxu0 %v1014
  %v1805 = vpop.f32.mrf.mxu0
  %v1806 = vadd.f32 0.0, %v1805
  %v1807 = vpop.f32.mrf.mxu0
  %1808 = vdwg.mxu0
  %1809 = vmatpush.bf16.msra.mxu0 %v1657
  %1810 = vmatpush.bf16.msra.mxu0 %v1654
  %1811 = vmatpush.bf16.msra.mxu0 %v1651
  %1812 = vmatpush.bf16.msra.mxu0 %v1648
  %1813 = vmatpush.bf16.msra.mxu0 %v1645
  %1814 = vmatpush.bf16.msra.mxu0 %v1642
  %1815 = vmatpush.bf16.msra.mxu0 %v1639
  %1816 = vmatpush.bf16.msra.mxu0 %v1636
  %1817 = vmatmul.bf16.gmra.mxu0 %v1015
  %v1818 = vpop.f32.mrf.mxu0
  %v1819 = vadd.f32 %v1806, %v1818
  %v1820 = vpop.f32.mrf.mxu0
  %1821 = vdwg.mxu0
  %1822 = vmatpush.bf16.msra.mxu0 0
  %1823 = vmatpush.bf16.msra.mxu0 0
  %1824 = vmatpush.bf16.msra.mxu0 0
  %1825 = vmatpush.bf16.msra.mxu0 0
  %1826 = vmatpush.bf16.msra.mxu0 0
  %1827 = vmatpush.bf16.msra.mxu0 0
  %1828 = vmatpush.bf16.msra.mxu0 %v1663
  %1829 = vmatpush.bf16.msra.mxu0 %v1660
  %1830 = vmatmul.bf16.gmra.mxu0 %v1307
  %v1831 = vpop.f32.mrf.mxu0
  %v1832 = vadd.f32 %v1819, %v1831
  %v1833 = vpop.f32.mrf.mxu0
  %1834 = vdwg.mxu0
  %v1835 = vpack.c.bf16 %v1754, %v1754
  %v1836 = vpack.c.bf16 %v1793, %v1793
  %v1837 = vpack.c.bf16 %v1832, %v1832
  %s1838 = scalar_lea.vmem %s4, 4
  %v1839 = vld [vmem:[%s1838] sm:$0xf]
  %vm1840 = vcmask 64512
  %v1842 = vsel %vm1840, %v1839, 0
  %vm1844 = vcmask 1043456
  %v1846 = vsel %vm1844, %v1835, 0
  %v1849 = vsel %vm1844, %v1836, 0
  %v1852 = vsel %vm1844, %v1837, 0
  %1854 = vmatpush.bf16.msra.mxu0 0
  %1855 = vmatpush.bf16.msra.mxu0 0
  %1856 = vmatpush.bf16.msra.mxu0 0
  %1857 = vmatpush.bf16.msra.mxu0 0
  %1858 = vmatpush.bf16.msra.mxu0 0
  %1859 = vmatpush.bf16.msra.mxu0 0
  %1860 = vmatpush.bf16.msra.mxu0 0
  %1861 = vmatpush.bf16.msra.mxu0 %v1846
  %1862 = vmatmul.bf16.gmra.mxu0 %v1842
  %v1863 = vpop.f32.mrf.mxu0
  %v1864 = vadd.f32 0.0, %v1863
  %v1865 = vpop.f32.mrf.mxu0
  %1866 = vdwg.mxu0
  %1867 = vmatpush.bf16.msra.mxu0 0
  %1868 = vmatpush.bf16.msra.mxu0 0
  %1869 = vmatpush.bf16.msra.mxu0 0
  %1870 = vmatpush.bf16.msra.mxu0 0
  %1871 = vmatpush.bf16.msra.mxu0 0
  %1872 = vmatpush.bf16.msra.mxu0 0
  %1873 = vmatpush.bf16.msra.mxu0 0
  %1874 = vmatpush.bf16.msra.mxu0 %v1849
  %1875 = vmatmul.bf16.gmra.mxu0 %v1842
  %v1876 = vpop.f32.mrf.mxu0
  %v1877 = vadd.f32 0.0, %v1876
  %v1878 = vpop.f32.mrf.mxu0
  %1879 = vdwg.mxu0
  %1880 = vmatpush.bf16.msra.mxu0 0
  %1881 = vmatpush.bf16.msra.mxu0 0
  %1882 = vmatpush.bf16.msra.mxu0 0
  %1883 = vmatpush.bf16.msra.mxu0 0
  %1884 = vmatpush.bf16.msra.mxu0 0
  %1885 = vmatpush.bf16.msra.mxu0 0
  %1886 = vmatpush.bf16.msra.mxu0 0
  %1887 = vmatpush.bf16.msra.mxu0 %v1852
  %1888 = vmatmul.bf16.gmra.mxu0 %v1842
  %v1889 = vpop.f32.mrf.mxu0
  %v1890 = vadd.f32 0.0, %v1889
  %v1891 = vpop.f32.mrf.mxu0
  %1892 = vdwg.mxu0
  %v1894 = vsel %vm1840, %v1429, 0
  %v1897 = vsel %vm1844, %v1426, 0
  %v1900 = vsel %vm1844, %v1427, 0
  %v1903 = vsel %vm1844, %v1428, 0
  %1905 = vmatpush.bf16.msra.mxu0 0
  %1906 = vmatpush.bf16.msra.mxu0 0
  %1907 = vmatpush.bf16.msra.mxu0 0
  %1908 = vmatpush.bf16.msra.mxu0 0
  %1909 = vmatpush.bf16.msra.mxu0 0
  %1910 = vmatpush.bf16.msra.mxu0 0
  %1911 = vmatpush.bf16.msra.mxu0 0
  %1912 = vmatpush.bf16.msra.mxu0 %v1897
  %1913 = vmatmul.bf16.gmra.mxu0 %v1894
  %v1914 = vpop.f32.mrf.mxu0
  %v1915 = vadd.f32 %v1864, %v1914
  %v1916 = vpop.f32.mrf.mxu0
  %1917 = vdwg.mxu0
  %1918 = vmatpush.bf16.msra.mxu0 0
  %1919 = vmatpush.bf16.msra.mxu0 0
  %1920 = vmatpush.bf16.msra.mxu0 0
  %1921 = vmatpush.bf16.msra.mxu0 0
  %1922 = vmatpush.bf16.msra.mxu0 0
  %1923 = vmatpush.bf16.msra.mxu0 0
  %1924 = vmatpush.bf16.msra.mxu0 0
  %1925 = vmatpush.bf16.msra.mxu0 %v1900
  %1926 = vmatmul.bf16.gmra.mxu0 %v1894
  %v1927 = vpop.f32.mrf.mxu0
  %v1928 = vadd.f32 %v1877, %v1927
  %v1929 = vpop.f32.mrf.mxu0
  %1930 = vdwg.mxu0
  %1931 = vmatpush.bf16.msra.mxu0 0
  %1932 = vmatpush.bf16.msra.mxu0 0
  %1933 = vmatpush.bf16.msra.mxu0 0
  %1934 = vmatpush.bf16.msra.mxu0 0
  %1935 = vmatpush.bf16.msra.mxu0 0
  %1936 = vmatpush.bf16.msra.mxu0 0
  %1937 = vmatpush.bf16.msra.mxu0 0
  %1938 = vmatpush.bf16.msra.mxu0 %v1903
  %1939 = vmatmul.bf16.gmra.mxu0 %v1894
  %v1940 = vpop.f32.mrf.mxu0
  %v1941 = vadd.f32 %v1890, %v1940
  %v1942 = vpop.f32.mrf.mxu0
  %1943 = vdwg.mxu0
  %v2016 = vunpack.c.l.b16 %v203
  %v2017 = vunpack.c.h.b16 %v203
  %v2018 = vunpack.c.l.b16 %v204
  %v2019 = vunpack.c.l.b16 %v205
  %v2020 = vunpack.c.h.b16 %v205
  %v2021 = vunpack.c.l.b16 %v206
  %v2022 = vunpack.c.l.b16 %v207
  %v2023 = vunpack.c.h.b16 %v207
  %v2024 = vunpack.c.l.b16 %v208
  %v2025 = vunpack.c.l.b16 %v209
  %v2026 = vunpack.c.h.b16 %v209
  %v2027 = vunpack.c.l.b16 %v210
  %v2028 = vunpack.c.l.b16 %v211
  %v2029 = vunpack.c.h.b16 %v211
  %v2030 = vunpack.c.l.b16 %v212
  %v2031 = vunpack.c.l.b16 %v213
  %v2032 = vunpack.c.h.b16 %v213
  %v2033 = vunpack.c.l.b16 %v214
  %v2034 = vunpack.c.l.b16 %v215
  %v2035 = vunpack.c.h.b16 %v215
  %v2036 = vunpack.c.l.b16 %v216
  %v2037 = vunpack.c.l.b16 %v217
  %v2038 = vunpack.c.h.b16 %v217
  %v2039 = vunpack.c.l.b16 %v218
  %v2040 = vunpack.c.l.b16 %v219
  %v2041 = vunpack.c.h.b16 %v219
  %v2042 = vunpack.c.l.b16 %v220
  %v2043 = vunpack.c.l.b16 %v221
  %v2044 = vunpack.c.h.b16 %v221
  %v2045 = vunpack.c.l.b16 %v222
  %v2046 = vunpack.c.l.b16 %v223
  %v2047 = vunpack.c.h.b16 %v223
  %v2048 = vunpack.c.l.b16 %v224
  %v2049 = vunpack.c.l.b16 %v225
  %v2050 = vunpack.c.h.b16 %v225
  %v2051 = vunpack.c.l.b16 %v226
  %v2052 = vunpack.c.l.b16 %v227
  %v2053 = vunpack.c.h.b16 %v227
  %v2054 = vunpack.c.l.b16 %v228
  %v2055 = vunpack.c.l.b16 %v229
  %v2056 = vunpack.c.h.b16 %v229
  %v2057 = vunpack.c.l.b16 %v230
  %v2058 = vunpack.c.l.b16 %v231
  %v2059 = vunpack.c.h.b16 %v231
  %v2060 = vunpack.c.l.b16 %v232
  %v2061 = vunpack.c.l.b16 %v233
  %v2062 = vunpack.c.h.b16 %v233
  %v2063 = vunpack.c.l.b16 %v234
  %v2064 = vunpack.c.l.b16 %v235
  %v2065 = vunpack.c.h.b16 %v235
  %v2066 = vunpack.c.l.b16 %v236
  %v2067 = vunpack.c.l.b16 %v237
  %v2068 = vunpack.c.h.b16 %v237
  %v2069 = vunpack.c.l.b16 %v238
  %v2070 = vunpack.c.l.b16 %v239
  %v2071 = vunpack.c.h.b16 %v239
  %v2072 = vunpack.c.l.b16 %v240
  %v2073 = vunpack.c.l.b16 %v241
  %v2074 = vunpack.c.h.b16 %v241
  %v2075 = vunpack.c.l.b16 %v242
  %v2076 = vunpack.c.l.b16 %v243
  %v2077 = vunpack.c.h.b16 %v243
  %v2078 = vunpack.c.l.b16 %v244
  %v2079 = vunpack.c.l.b16 %v245
  %v2080 = vunpack.c.h.b16 %v245
  %v2081 = vunpack.c.l.b16 %v246
  %v2082 = vunpack.c.l.b16 %v247
  %v2083 = vunpack.c.h.b16 %v247
  %v2084 = vunpack.c.l.b16 %v248
  %v2085 = vunpack.c.l.b16 %v249
  %v2086 = vunpack.c.h.b16 %v249
  %v2087 = vunpack.c.l.b16 %v250
  %v2088 = vunpack.c.l.b16 %v251
  %v2089 = vunpack.c.h.b16 %v251
  %v2090 = vunpack.c.l.b16 %v252
  %v2091 = vunpack.c.l.b16 %v253
  %v2092 = vunpack.c.h.b16 %v253
  %v2093 = vunpack.c.l.b16 %v254
  %v2094 = vunpack.c.l.b16 %v255
  %v2095 = vunpack.c.h.b16 %v255
  %v2096 = vunpack.c.l.b16 %v256
  %v2097 = vunpack.c.l.b16 %v257
  %v2098 = vunpack.c.h.b16 %v257
  %v2099 = vunpack.c.l.b16 %v258
  %v2100 = vunpack.c.l.b16 %v259
  %v2101 = vunpack.c.h.b16 %v259
  %v2102 = vunpack.c.l.b16 %v260
  %v2103 = vunpack.c.l.b16 %v261
  %v2104 = vunpack.c.h.b16 %v261
  %v2105 = vunpack.c.l.b16 %v262
  %v2106 = vunpack.c.l.b16 %v263
  %v2107 = vunpack.c.h.b16 %v263
  %v2108 = vunpack.c.l.b16 %v264
  %v2109 = vunpack.c.l.b16 %v265
  %v2110 = vunpack.c.h.b16 %v265
  %v2111 = vunpack.c.l.b16 %v266
  %v2112 = vunpack.c.l.b16 %v267
  %v2113 = vunpack.c.h.b16 %v267
  %v2114 = vunpack.c.l.b16 %v268
  %v2115 = vunpack.c.l.b16 %v269
  %v2116 = vunpack.c.h.b16 %v269
  %v2117 = vunpack.c.l.b16 %v270
  %v2118 = vunpack.c.l.b16 %v271
  %v2119 = vunpack.c.h.b16 %v271
  %v2120 = vunpack.c.l.b16 %v272
  %v2121 = vunpack.c.l.b16 %v273
  %v2122 = vunpack.c.h.b16 %v273
  %v2123 = vunpack.c.l.b16 %v274
  %v2124 = vpack.c.b16 %v2019, %v2016
  %v2125 = vpack.c.b16 %v2020, %v2017
  %v2126 = vpack.c.b16 %v2021, %v2018
  %v2127 = vpack.c.b16 %v2025, %v2022
  %v2128 = vpack.c.b16 %v2026, %v2023
  %v2129 = vpack.c.b16 %v2027, %v2024
  %v2130 = vpack.c.b16 %v2031, %v2028
  %v2131 = vpack.c.b16 %v2032, %v2029
  %v2132 = vpack.c.b16 %v2033, %v2030
  %v2133 = vpack.c.b16 %v2037, %v2034
  %v2134 = vpack.c.b16 %v2038, %v2035
  %v2135 = vpack.c.b16 %v2039, %v2036
  %v2136 = vpack.c.b16 %v2043, %v2040
  %v2137 = vpack.c.b16 %v2044, %v2041
  %v2138 = vpack.c.b16 %v2045, %v2042
  %v2139 = vpack.c.b16 %v2049, %v2046
  %v2140 = vpack.c.b16 %v2050, %v2047
  %v2141 = vpack.c.b16 %v2051, %v2048
  %v2142 = vpack.c.b16 %v2055, %v2052
  %v2143 = vpack.c.b16 %v2056, %v2053
  %v2144 = vpack.c.b16 %v2057, %v2054
  %v2145 = vpack.c.b16 %v2061, %v2058
  %v2146 = vpack.c.b16 %v2062, %v2059
  %v2147 = vpack.c.b16 %v2063, %v2060
  %v2148 = vpack.c.b16 %v2067, %v2064
  %v2149 = vpack.c.b16 %v2068, %v2065
  %v2150 = vpack.c.b16 %v2069, %v2066
  %v2151 = vpack.c.b16 %v2073, %v2070
  %v2152 = vpack.c.b16 %v2074, %v2071
  %v2153 = vpack.c.b16 %v2075, %v2072
  %v2154 = vpack.c.b16 %v2079, %v2076
  %v2155 = vpack.c.b16 %v2080, %v2077
  %v2156 = vpack.c.b16 %v2081, %v2078
  %v2157 = vpack.c.b16 %v2085, %v2082
  %v2158 = vpack.c.b16 %v2086, %v2083
  %v2159 = vpack.c.b16 %v2087, %v2084
  %v2160 = vpack.c.b16 %v2091, %v2088
  %v2161 = vpack.c.b16 %v2092, %v2089
  %v2162 = vpack.c.b16 %v2093, %v2090
  %v2163 = vpack.c.b16 %v2097, %v2094
  %v2164 = vpack.c.b16 %v2098, %v2095
  %v2165 = vpack.c.b16 %v2099, %v2096
  %v2166 = vpack.c.b16 %v2103, %v2100
  %v2167 = vpack.c.b16 %v2104, %v2101
  %v2168 = vpack.c.b16 %v2105, %v2102
  %v2169 = vpack.c.b16 %v2109, %v2106
  %v2170 = vpack.c.b16 %v2110, %v2107
  %v2171 = vpack.c.b16 %v2111, %v2108
  %v2172 = vpack.c.b16 %v2115, %v2112
  %v2173 = vpack.c.b16 %v2116, %v2113
  %v2174 = vpack.c.b16 %v2117, %v2114
  %v2175 = vpack.c.b16 %v2121, %v2118
  %v2176 = vpack.c.b16 %v2122, %v2119
  %v2177 = vpack.c.b16 %v2123, %v2120
  %2232 = vmatpush.bf16.msra.mxu0 %v2145
  %2233 = vmatpush.bf16.msra.mxu0 %v2142
  %2234 = vmatpush.bf16.msra.mxu0 %v2139
  %2235 = vmatpush.bf16.msra.mxu0 %v2136
  %2236 = vmatpush.bf16.msra.mxu0 %v2133
  %2237 = vmatpush.bf16.msra.mxu0 %v2130
  %2238 = vmatpush.bf16.msra.mxu0 %v2127
  %2239 = vmatpush.bf16.msra.mxu0 %v2124
  %2240 = vmatmul.bf16.gmra.mxu0 %v1014
  %v2241 = vpop.f32.mrf.mxu0
  %v2242 = vadd.f32 0.0, %v2241
  %v2243 = vpop.f32.mrf.mxu0
  %2244 = vdwg.mxu0
  %2245 = vmatpush.bf16.msra.mxu0 %v2169
  %2246 = vmatpush.bf16.msra.mxu0 %v2166
  %2247 = vmatpush.bf16.msra.mxu0 %v2163
  %2248 = vmatpush.bf16.msra.mxu0 %v2160
  %2249 = vmatpush.bf16.msra.mxu0 %v2157
  %2250 = vmatpush.bf16.msra.mxu0 %v2154
  %2251 = vmatpush.bf16.msra.mxu0 %v2151
  %2252 = vmatpush.bf16.msra.mxu0 %v2148
  %2253 = vmatmul.bf16.gmra.mxu0 %v1015
  %v2254 = vpop.f32.mrf.mxu0
  %v2255 = vadd.f32 %v2242, %v2254
  %v2256 = vpop.f32.mrf.mxu0
  %2257 = vdwg.mxu0
  %2258 = vmatpush.bf16.msra.mxu0 0
  %2259 = vmatpush.bf16.msra.mxu0 0
  %2260 = vmatpush.bf16.msra.mxu0 0
  %2261 = vmatpush.bf16.msra.mxu0 0
  %2262 = vmatpush.bf16.msra.mxu0 0
  %2263 = vmatpush.bf16.msra.mxu0 0
  %2264 = vmatpush.bf16.msra.mxu0 %v2175
  %2265 = vmatpush.bf16.msra.mxu0 %v2172
  %2266 = vmatmul.bf16.gmra.mxu0 %v1307
  %v2267 = vpop.f32.mrf.mxu0
  %v2268 = vadd.f32 %v2255, %v2267
  %v2269 = vpop.f32.mrf.mxu0
  %2270 = vdwg.mxu0
  %2271 = vmatpush.bf16.msra.mxu0 %v2146
  %2272 = vmatpush.bf16.msra.mxu0 %v2143
  %2273 = vmatpush.bf16.msra.mxu0 %v2140
  %2274 = vmatpush.bf16.msra.mxu0 %v2137
  %2275 = vmatpush.bf16.msra.mxu0 %v2134
  %2276 = vmatpush.bf16.msra.mxu0 %v2131
  %2277 = vmatpush.bf16.msra.mxu0 %v2128
  %2278 = vmatpush.bf16.msra.mxu0 %v2125
  %2279 = vmatmul.bf16.gmra.mxu0 %v1014
  %v2280 = vpop.f32.mrf.mxu0
  %v2281 = vadd.f32 0.0, %v2280
  %v2282 = vpop.f32.mrf.mxu0
  %2283 = vdwg.mxu0
  %2284 = vmatpush.bf16.msra.mxu0 %v2170
  %2285 = vmatpush.bf16.msra.mxu0 %v2167
  %2286 = vmatpush.bf16.msra.mxu0 %v2164
  %2287 = vmatpush.bf16.msra.mxu0 %v2161
  %2288 = vmatpush.bf16.msra.mxu0 %v2158
  %2289 = vmatpush.bf16.msra.mxu0 %v2155
  %2290 = vmatpush.bf16.msra.mxu0 %v2152
  %2291 = vmatpush.bf16.msra.mxu0 %v2149
  %2292 = vmatmul.bf16.gmra.mxu0 %v1015
  %v2293 = vpop.f32.mrf.mxu0
  %v2294 = vadd.f32 %v2281, %v2293
  %v2295 = vpop.f32.mrf.mxu0
  %2296 = vdwg.mxu0
  %2297 = vmatpush.bf16.msra.mxu0 0
  %2298 = vmatpush.bf16.msra.mxu0 0
  %2299 = vmatpush.bf16.msra.mxu0 0
  %2300 = vmatpush.bf16.msra.mxu0 0
  %2301 = vmatpush.bf16.msra.mxu0 0
  %2302 = vmatpush.bf16.msra.mxu0 0
  %2303 = vmatpush.bf16.msra.mxu0 %v2176
  %2304 = vmatpush.bf16.msra.mxu0 %v2173
  %2305 = vmatmul.bf16.gmra.mxu0 %v1307
  %v2306 = vpop.f32.mrf.mxu0
  %v2307 = vadd.f32 %v2294, %v2306
  %v2308 = vpop.f32.mrf.mxu0
  %2309 = vdwg.mxu0
  %2310 = vmatpush.bf16.msra.mxu0 %v2147
  %2311 = vmatpush.bf16.msra.mxu0 %v2144
  %2312 = vmatpush.bf16.msra.mxu0 %v2141
  %2313 = vmatpush.bf16.msra.mxu0 %v2138
  %2314 = vmatpush.bf16.msra.mxu0 %v2135
  %2315 = vmatpush.bf16.msra.mxu0 %v2132
  %2316 = vmatpush.bf16.msra.mxu0 %v2129
  %2317 = vmatpush.bf16.msra.mxu0 %v2126
  %2318 = vmatmul.bf16.gmra.mxu0 %v1014
  %v2319 = vpop.f32.mrf.mxu0
  %v2320 = vadd.f32 0.0, %v2319
  %v2321 = vpop.f32.mrf.mxu0
  %2322 = vdwg.mxu0
  %2323 = vmatpush.bf16.msra.mxu0 %v2171
  %2324 = vmatpush.bf16.msra.mxu0 %v2168
  %2325 = vmatpush.bf16.msra.mxu0 %v2165
  %2326 = vmatpush.bf16.msra.mxu0 %v2162
  %2327 = vmatpush.bf16.msra.mxu0 %v2159
  %2328 = vmatpush.bf16.msra.mxu0 %v2156
  %2329 = vmatpush.bf16.msra.mxu0 %v2153
  %2330 = vmatpush.bf16.msra.mxu0 %v2150
  %2331 = vmatmul.bf16.gmra.mxu0 %v1015
  %v2332 = vpop.f32.mrf.mxu0
  %v2333 = vadd.f32 %v2320, %v2332
  %v2334 = vpop.f32.mrf.mxu0
  %2335 = vdwg.mxu0
  %2336 = vmatpush.bf16.msra.mxu0 0
  %2337 = vmatpush.bf16.msra.mxu0 0
  %2338 = vmatpush.bf16.msra.mxu0 0
  %2339 = vmatpush.bf16.msra.mxu0 0
  %2340 = vmatpush.bf16.msra.mxu0 0
  %2341 = vmatpush.bf16.msra.mxu0 0
  %2342 = vmatpush.bf16.msra.mxu0 %v2177
  %2343 = vmatpush.bf16.msra.mxu0 %v2174
  %2344 = vmatmul.bf16.gmra.mxu0 %v1307
  %v2345 = vpop.f32.mrf.mxu0
  %v2346 = vadd.f32 %v2333, %v2345
  %v2347 = vpop.f32.mrf.mxu0
  %2348 = vdwg.mxu0
  %v2349 = vpack.c.bf16 %v2268, %v2268
  %v2350 = vpack.c.bf16 %v2307, %v2307
  %v2351 = vpack.c.bf16 %v2346, %v2346
  %s2352 = scalar_lea.vmem %s4, 8
  %v2353 = vld [vmem:[%s2352] sm:$0xf]
  %v2355 = vsel %vm1840, %v2353, 0
  %v2358 = vsel %vm1844, %v2349, 0
  %v2361 = vsel %vm1844, %v2350, 0
  %v2364 = vsel %vm1844, %v2351, 0
  %2366 = vmatpush.bf16.msra.mxu0 0
  %2367 = vmatpush.bf16.msra.mxu0 0
  %2368 = vmatpush.bf16.msra.mxu0 0
  %2369 = vmatpush.bf16.msra.mxu0 0
  %2370 = vmatpush.bf16.msra.mxu0 0
  %2371 = vmatpush.bf16.msra.mxu0 0
  %2372 = vmatpush.bf16.msra.mxu0 0
  %2373 = vmatpush.bf16.msra.mxu0 %v2358
  %2374 = vmatmul.bf16.gmra.mxu0 %v2355
  %v2375 = vpop.f32.mrf.mxu0
  %v2376 = vadd.f32 0.0, %v2375
  %v2377 = vpop.f32.mrf.mxu0
  %2378 = vdwg.mxu0
  %2379 = vmatpush.bf16.msra.mxu0 0
  %2380 = vmatpush.bf16.msra.mxu0 0
  %2381 = vmatpush.bf16.msra.mxu0 0
  %2382 = vmatpush.bf16.msra.mxu0 0
  %2383 = vmatpush.bf16.msra.mxu0 0
  %2384 = vmatpush.bf16.msra.mxu0 0
  %2385 = vmatpush.bf16.msra.mxu0 0
  %2386 = vmatpush.bf16.msra.mxu0 %v2361
  %2387 = vmatmul.bf16.gmra.mxu0 %v2355
  %v2388 = vpop.f32.mrf.mxu0
  %v2389 = vadd.f32 0.0, %v2388
  %v2390 = vpop.f32.mrf.mxu0
  %2391 = vdwg.mxu0
  %2392 = vmatpush.bf16.msra.mxu0 0
  %2393 = vmatpush.bf16.msra.mxu0 0
  %2394 = vmatpush.bf16.msra.mxu0 0
  %2395 = vmatpush.bf16.msra.mxu0 0
  %2396 = vmatpush.bf16.msra.mxu0 0
  %2397 = vmatpush.bf16.msra.mxu0 0
  %2398 = vmatpush.bf16.msra.mxu0 0
  %2399 = vmatpush.bf16.msra.mxu0 %v2364
  %2400 = vmatmul.bf16.gmra.mxu0 %v2355
  %v2401 = vpop.f32.mrf.mxu0
  %v2402 = vadd.f32 0.0, %v2401
  %v2403 = vpop.f32.mrf.mxu0
  %2404 = vdwg.mxu0
  %v2405 = vadd.f32 %v1915, %v2376
  %v2406 = vadd.f32 %v1928, %v2389
  %v2407 = vadd.f32 %v1941, %v2402
  %v2480 = vunpack.c.l.b16 %v276
  %v2481 = vunpack.c.h.b16 %v276
  %v2482 = vunpack.c.l.b16 %v277
  %v2483 = vunpack.c.l.b16 %v278
  %v2484 = vunpack.c.h.b16 %v278
  %v2485 = vunpack.c.l.b16 %v279
  %v2486 = vunpack.c.l.b16 %v280
  %v2487 = vunpack.c.h.b16 %v280
  %v2488 = vunpack.c.l.b16 %v281
  %v2489 = vunpack.c.l.b16 %v282
  %v2490 = vunpack.c.h.b16 %v282
  %v2491 = vunpack.c.l.b16 %v283
  %v2492 = vunpack.c.l.b16 %v284
  %v2493 = vunpack.c.h.b16 %v284
  %v2494 = vunpack.c.l.b16 %v285
  %v2495 = vunpack.c.l.b16 %v286
  %v2496 = vunpack.c.h.b16 %v286
  %v2497 = vunpack.c.l.b16 %v287
  %v2498 = vunpack.c.l.b16 %v288
  %v2499 = vunpack.c.h.b16 %v288
  %v2500 = vunpack.c.l.b16 %v289
  %v2501 = vunpack.c.l.b16 %v290
  %v2502 = vunpack.c.h.b16 %v290
  %v2503 = vunpack.c.l.b16 %v291
  %v2504 = vunpack.c.l.b16 %v292
  %v2505 = vunpack.c.h.b16 %v292
  %v2506 = vunpack.c.l.b16 %v293
  %v2507 = vunpack.c.l.b16 %v294
  %v2508 = vunpack.c.h.b16 %v294
  %v2509 = vunpack.c.l.b16 %v295
  %v2510 = vunpack.c.l.b16 %v296
  %v2511 = vunpack.c.h.b16 %v296
  %v2512 = vunpack.c.l.b16 %v297
  %v2513 = vunpack.c.l.b16 %v298
  %v2514 = vunpack.c.h.b16 %v298
  %v2515 = vunpack.c.l.b16 %v299
  %v2516 = vunpack.c.l.b16 %v300
  %v2517 = vunpack.c.h.b16 %v300
  %v2518 = vunpack.c.l.b16 %v301
  %v2519 = vunpack.c.l.b16 %v302
  %v2520 = vunpack.c.h.b16 %v302
  %v2521 = vunpack.c.l.b16 %v303
  %v2522 = vunpack.c.l.b16 %v304
  %v2523 = vunpack.c.h.b16 %v304
  %v2524 = vunpack.c.l.b16 %v305
  %v2525 = vunpack.c.l.b16 %v306
  %v2526 = vunpack.c.h.b16 %v306
  %v2527 = vunpack.c.l.b16 %v307
  %v2528 = vunpack.c.l.b16 %v308
  %v2529 = vunpack.c.h.b16 %v308
  %v2530 = vunpack.c.l.b16 %v309
  %v2531 = vunpack.c.l.b16 %v310
  %v2532 = vunpack.c.h.b16 %v310
  %v2533 = vunpack.c.l.b16 %v311
  %v2534 = vunpack.c.l.b16 %v312
  %v2535 = vunpack.c.h.b16 %v312
  %v2536 = vunpack.c.l.b16 %v313
  %v2537 = vunpack.c.l.b16 %v314
  %v2538 = vunpack.c.h.b16 %v314
  %v2539 = vunpack.c.l.b16 %v315
  %v2540 = vunpack.c.l.b16 %v316
  %v2541 = vunpack.c.h.b16 %v316
  %v2542 = vunpack.c.l.b16 %v317
  %v2543 = vunpack.c.l.b16 %v318
  %v2544 = vunpack.c.h.b16 %v318
  %v2545 = vunpack.c.l.b16 %v319
  %v2546 = vunpack.c.l.b16 %v320
  %v2547 = vunpack.c.h.b16 %v320
  %v2548 = vunpack.c.l.b16 %v321
  %v2549 = vunpack.c.l.b16 %v322
  %v2550 = vunpack.c.h.b16 %v322
  %v2551 = vunpack.c.l.b16 %v323
  %v2552 = vunpack.c.l.b16 %v324
  %v2553 = vunpack.c.h.b16 %v324
  %v2554 = vunpack.c.l.b16 %v325
  %v2555 = vunpack.c.l.b16 %v326
  %v2556 = vunpack.c.h.b16 %v326
  %v2557 = vunpack.c.l.b16 %v327
  %v2558 = vunpack.c.l.b16 %v328
  %v2559 = vunpack.c.h.b16 %v328
  %v2560 = vunpack.c.l.b16 %v329
  %v2561 = vunpack.c.l.b16 %v330
  %v2562 = vunpack.c.h.b16 %v330
  %v2563 = vunpack.c.l.b16 %v331
  %v2564 = vunpack.c.l.b16 %v332
  %v2565 = vunpack.c.h.b16 %v332
  %v2566 = vunpack.c.l.b16 %v333
  %v2567 = vunpack.c.l.b16 %v334
  %v2568 = vunpack.c.h.b16 %v334
  %v2569 = vunpack.c.l.b16 %v335
  %v2570 = vunpack.c.l.b16 %v336
  %v2571 = vunpack.c.h.b16 %v336
  %v2572 = vunpack.c.l.b16 %v337
  %v2573 = vunpack.c.l.b16 %v338
  %v2574 = vunpack.c.h.b16 %v338
  %v2575 = vunpack.c.l.b16 %v339
  %v2576 = vunpack.c.l.b16 %v340
  %v2577 = vunpack.c.h.b16 %v340
  %v2578 = vunpack.c.l.b16 %v341
  %v2579 = vunpack.c.l.b16 %v342
  %v2580 = vunpack.c.h.b16 %v342
  %v2581 = vunpack.c.l.b16 %v343
  %v2582 = vunpack.c.l.b16 %v344
  %v2583 = vunpack.c.h.b16 %v344
  %v2584 = vunpack.c.l.b16 %v345
  %v2585 = vunpack.c.l.b16 %v346
  %v2586 = vunpack.c.h.b16 %v346
  %v2587 = vunpack.c.l.b16 %v347
  %v2588 = vpack.c.b16 %v2483, %v2480
  %v2589 = vpack.c.b16 %v2484, %v2481
  %v2590 = vpack.c.b16 %v2485, %v2482
  %v2591 = vpack.c.b16 %v2489, %v2486
  %v2592 = vpack.c.b16 %v2490, %v2487
  %v2593 = vpack.c.b16 %v2491, %v2488
  %v2594 = vpack.c.b16 %v2495, %v2492
  %v2595 = vpack.c.b16 %v2496, %v2493
  %v2596 = vpack.c.b16 %v2497, %v2494
  %v2597 = vpack.c.b16 %v2501, %v2498
  %v2598 = vpack.c.b16 %v2502, %v2499
  %v2599 = vpack.c.b16 %v2503, %v2500
  %v2600 = vpack.c.b16 %v2507, %v2504
  %v2601 = vpack.c.b16 %v2508, %v2505
  %v2602 = vpack.c.b16 %v2509, %v2506
  %v2603 = vpack.c.b16 %v2513, %v2510
  %v2604 = vpack.c.b16 %v2514, %v2511
  %v2605 = vpack.c.b16 %v2515, %v2512
  %v2606 = vpack.c.b16 %v2519, %v2516
  %v2607 = vpack.c.b16 %v2520, %v2517
  %v2608 = vpack.c.b16 %v2521, %v2518
  %v2609 = vpack.c.b16 %v2525, %v2522
  %v2610 = vpack.c.b16 %v2526, %v2523
  %v2611 = vpack.c.b16 %v2527, %v2524
  %v2612 = vpack.c.b16 %v2531, %v2528
  %v2613 = vpack.c.b16 %v2532, %v2529
  %v2614 = vpack.c.b16 %v2533, %v2530
  %v2615 = vpack.c.b16 %v2537, %v2534
  %v2616 = vpack.c.b16 %v2538, %v2535
  %v2617 = vpack.c.b16 %v2539, %v2536
  %v2618 = vpack.c.b16 %v2543, %v2540
  %v2619 = vpack.c.b16 %v2544, %v2541
  %v2620 = vpack.c.b16 %v2545, %v2542
  %v2621 = vpack.c.b16 %v2549, %v2546
  %v2622 = vpack.c.b16 %v2550, %v2547
  %v2623 = vpack.c.b16 %v2551, %v2548
  %v2624 = vpack.c.b16 %v2555, %v2552
  %v2625 = vpack.c.b16 %v2556, %v2553
  %v2626 = vpack.c.b16 %v2557, %v2554
  %v2627 = vpack.c.b16 %v2561, %v2558
  %v2628 = vpack.c.b16 %v2562, %v2559
  %v2629 = vpack.c.b16 %v2563, %v2560
  %v2630 = vpack.c.b16 %v2567, %v2564
  %v2631 = vpack.c.b16 %v2568, %v2565
  %v2632 = vpack.c.b16 %v2569, %v2566
  %v2633 = vpack.c.b16 %v2573, %v2570
  %v2634 = vpack.c.b16 %v2574, %v2571
  %v2635 = vpack.c.b16 %v2575, %v2572
  %v2636 = vpack.c.b16 %v2579, %v2576
  %v2637 = vpack.c.b16 %v2580, %v2577
  %v2638 = vpack.c.b16 %v2581, %v2578
  %v2639 = vpack.c.b16 %v2585, %v2582
  %v2640 = vpack.c.b16 %v2586, %v2583
  %v2641 = vpack.c.b16 %v2587, %v2584
  %2696 = vmatpush.bf16.msra.mxu0 %v2609
  %2697 = vmatpush.bf16.msra.mxu0 %v2606
  %2698 = vmatpush.bf16.msra.mxu0 %v2603
  %2699 = vmatpush.bf16.msra.mxu0 %v2600
  %2700 = vmatpush.bf16.msra.mxu0 %v2597
  %2701 = vmatpush.bf16.msra.mxu0 %v2594
  %2702 = vmatpush.bf16.msra.mxu0 %v2591
  %2703 = vmatpush.bf16.msra.mxu0 %v2588
  %2704 = vmatmul.bf16.gmra.mxu0 %v1014
  %v2705 = vpop.f32.mrf.mxu0
  %v2706 = vadd.f32 0.0, %v2705
  %v2707 = vpop.f32.mrf.mxu0
  %2708 = vdwg.mxu0
  %2709 = vmatpush.bf16.msra.mxu0 %v2633
  %2710 = vmatpush.bf16.msra.mxu0 %v2630
  %2711 = vmatpush.bf16.msra.mxu0 %v2627
  %2712 = vmatpush.bf16.msra.mxu0 %v2624
  %2713 = vmatpush.bf16.msra.mxu0 %v2621
  %2714 = vmatpush.bf16.msra.mxu0 %v2618
  %2715 = vmatpush.bf16.msra.mxu0 %v2615
  %2716 = vmatpush.bf16.msra.mxu0 %v2612
  %2717 = vmatmul.bf16.gmra.mxu0 %v1015
  %v2718 = vpop.f32.mrf.mxu0
  %v2719 = vadd.f32 %v2706, %v2718
  %v2720 = vpop.f32.mrf.mxu0
  %2721 = vdwg.mxu0
  %2722 = vmatpush.bf16.msra.mxu0 0
  %2723 = vmatpush.bf16.msra.mxu0 0
  %2724 = vmatpush.bf16.msra.mxu0 0
  %2725 = vmatpush.bf16.msra.mxu0 0
  %2726 = vmatpush.bf16.msra.mxu0 0
  %2727 = vmatpush.bf16.msra.mxu0 0
  %2728 = vmatpush.bf16.msra.mxu0 %v2639
  %2729 = vmatpush.bf16.msra.mxu0 %v2636
  %2730 = vmatmul.bf16.gmra.mxu0 %v1307
  %v2731 = vpop.f32.mrf.mxu0
  %v2732 = vadd.f32 %v2719, %v2731
  %v2733 = vpop.f32.mrf.mxu0
  %2734 = vdwg.mxu0
  %2735 = vmatpush.bf16.msra.mxu0 %v2610
  %2736 = vmatpush.bf16.msra.mxu0 %v2607
  %2737 = vmatpush.bf16.msra.mxu0 %v2604
  %2738 = vmatpush.bf16.msra.mxu0 %v2601
  %2739 = vmatpush.bf16.msra.mxu0 %v2598
  %2740 = vmatpush.bf16.msra.mxu0 %v2595
  %2741 = vmatpush.bf16.msra.mxu0 %v2592
  %2742 = vmatpush.bf16.msra.mxu0 %v2589
  %2743 = vmatmul.bf16.gmra.mxu0 %v1014
  %v2744 = vpop.f32.mrf.mxu0
  %v2745 = vadd.f32 0.0, %v2744
  %v2746 = vpop.f32.mrf.mxu0
  %2747 = vdwg.mxu0
  %2748 = vmatpush.bf16.msra.mxu0 %v2634
  %2749 = vmatpush.bf16.msra.mxu0 %v2631
  %2750 = vmatpush.bf16.msra.mxu0 %v2628
  %2751 = vmatpush.bf16.msra.mxu0 %v2625
  %2752 = vmatpush.bf16.msra.mxu0 %v2622
  %2753 = vmatpush.bf16.msra.mxu0 %v2619
  %2754 = vmatpush.bf16.msra.mxu0 %v2616
  %2755 = vmatpush.bf16.msra.mxu0 %v2613
  %2756 = vmatmul.bf16.gmra.mxu0 %v1015
  %v2757 = vpop.f32.mrf.mxu0
  %v2758 = vadd.f32 %v2745, %v2757
  %v2759 = vpop.f32.mrf.mxu0
  %2760 = vdwg.mxu0
  %2761 = vmatpush.bf16.msra.mxu0 0
  %2762 = vmatpush.bf16.msra.mxu0 0
  %2763 = vmatpush.bf16.msra.mxu0 0
  %2764 = vmatpush.bf16.msra.mxu0 0
  %2765 = vmatpush.bf16.msra.mxu0 0
  %2766 = vmatpush.bf16.msra.mxu0 0
  %2767 = vmatpush.bf16.msra.mxu0 %v2640
  %2768 = vmatpush.bf16.msra.mxu0 %v2637
  %2769 = vmatmul.bf16.gmra.mxu0 %v1307
  %v2770 = vpop.f32.mrf.mxu0
  %v2771 = vadd.f32 %v2758, %v2770
  %v2772 = vpop.f32.mrf.mxu0
  %2773 = vdwg.mxu0
  %2774 = vmatpush.bf16.msra.mxu0 %v2611
  %2775 = vmatpush.bf16.msra.mxu0 %v2608
  %2776 = vmatpush.bf16.msra.mxu0 %v2605
  %2777 = vmatpush.bf16.msra.mxu0 %v2602
  %2778 = vmatpush.bf16.msra.mxu0 %v2599
  %2779 = vmatpush.bf16.msra.mxu0 %v2596
  %2780 = vmatpush.bf16.msra.mxu0 %v2593
  %2781 = vmatpush.bf16.msra.mxu0 %v2590
  %2782 = vmatmul.bf16.gmra.mxu0 %v1014
  %v2783 = vpop.f32.mrf.mxu0
  %v2784 = vadd.f32 0.0, %v2783
  %v2785 = vpop.f32.mrf.mxu0
  %2786 = vdwg.mxu0
  %2787 = vmatpush.bf16.msra.mxu0 %v2635
  %2788 = vmatpush.bf16.msra.mxu0 %v2632
  %2789 = vmatpush.bf16.msra.mxu0 %v2629
  %2790 = vmatpush.bf16.msra.mxu0 %v2626
  %2791 = vmatpush.bf16.msra.mxu0 %v2623
  %2792 = vmatpush.bf16.msra.mxu0 %v2620
  %2793 = vmatpush.bf16.msra.mxu0 %v2617
  %2794 = vmatpush.bf16.msra.mxu0 %v2614
  %2795 = vmatmul.bf16.gmra.mxu0 %v1015
  %v2796 = vpop.f32.mrf.mxu0
  %v2797 = vadd.f32 %v2784, %v2796
  %v2798 = vpop.f32.mrf.mxu0
  %2799 = vdwg.mxu0
  %2800 = vmatpush.bf16.msra.mxu0 0
  %2801 = vmatpush.bf16.msra.mxu0 0
  %2802 = vmatpush.bf16.msra.mxu0 0
  %2803 = vmatpush.bf16.msra.mxu0 0
  %2804 = vmatpush.bf16.msra.mxu0 0
  %2805 = vmatpush.bf16.msra.mxu0 0
  %2806 = vmatpush.bf16.msra.mxu0 %v2641
  %2807 = vmatpush.bf16.msra.mxu0 %v2638
  %2808 = vmatmul.bf16.gmra.mxu0 %v1307
  %v2809 = vpop.f32.mrf.mxu0
  %v2810 = vadd.f32 %v2797, %v2809
  %v2811 = vpop.f32.mrf.mxu0
  %2812 = vdwg.mxu0
  %v2813 = vpack.c.bf16 %v2732, %v2732
  %v2814 = vpack.c.bf16 %v2771, %v2771
  %v2815 = vpack.c.bf16 %v2810, %v2810
  %s2816 = scalar_lea.vmem %s4, 12
  %v2817 = vld [vmem:[%s2816] sm:$0xf]
  %v2819 = vsel %vm1840, %v2817, 0
  %v2822 = vsel %vm1844, %v2813, 0
  %v2825 = vsel %vm1844, %v2814, 0
  %v2828 = vsel %vm1844, %v2815, 0
  %2830 = vmatpush.bf16.msra.mxu0 0
  %2831 = vmatpush.bf16.msra.mxu0 0
  %2832 = vmatpush.bf16.msra.mxu0 0
  %2833 = vmatpush.bf16.msra.mxu0 0
  %2834 = vmatpush.bf16.msra.mxu0 0
  %2835 = vmatpush.bf16.msra.mxu0 0
  %2836 = vmatpush.bf16.msra.mxu0 0
  %2837 = vmatpush.bf16.msra.mxu0 %v2822
  %2838 = vmatmul.bf16.gmra.mxu0 %v2819
  %v2839 = vpop.f32.mrf.mxu0
  %v2840 = vadd.f32 0.0, %v2839
  %v2841 = vpop.f32.mrf.mxu0
  %2842 = vdwg.mxu0
  %2843 = vmatpush.bf16.msra.mxu0 0
  %2844 = vmatpush.bf16.msra.mxu0 0
  %2845 = vmatpush.bf16.msra.mxu0 0
  %2846 = vmatpush.bf16.msra.mxu0 0
  %2847 = vmatpush.bf16.msra.mxu0 0
  %2848 = vmatpush.bf16.msra.mxu0 0
  %2849 = vmatpush.bf16.msra.mxu0 0
  %2850 = vmatpush.bf16.msra.mxu0 %v2825
  %2851 = vmatmul.bf16.gmra.mxu0 %v2819
  %v2852 = vpop.f32.mrf.mxu0
  %v2853 = vadd.f32 0.0, %v2852
  %v2854 = vpop.f32.mrf.mxu0
  %2855 = vdwg.mxu0
  %2856 = vmatpush.bf16.msra.mxu0 0
  %2857 = vmatpush.bf16.msra.mxu0 0
  %2858 = vmatpush.bf16.msra.mxu0 0
  %2859 = vmatpush.bf16.msra.mxu0 0
  %2860 = vmatpush.bf16.msra.mxu0 0
  %2861 = vmatpush.bf16.msra.mxu0 0
  %2862 = vmatpush.bf16.msra.mxu0 0
  %2863 = vmatpush.bf16.msra.mxu0 %v2828
  %2864 = vmatmul.bf16.gmra.mxu0 %v2819
  %v2865 = vpop.f32.mrf.mxu0
  %v2866 = vadd.f32 0.0, %v2865
  %v2867 = vpop.f32.mrf.mxu0
  %2868 = vdwg.mxu0
  %v2869 = vadd.f32 %v2405, %v2840
  %v2870 = vadd.f32 %v2406, %v2853
  %v2871 = vadd.f32 %v2407, %v2866
  %v2944 = vunpack.c.l.b16 %v349
  %v2945 = vunpack.c.h.b16 %v349
  %v2946 = vunpack.c.l.b16 %v350
  %v2947 = vunpack.c.l.b16 %v351
  %v2948 = vunpack.c.h.b16 %v351
  %v2949 = vunpack.c.l.b16 %v352
  %v2950 = vunpack.c.l.b16 %v353
  %v2951 = vunpack.c.h.b16 %v353
  %v2952 = vunpack.c.l.b16 %v354
  %v2953 = vunpack.c.l.b16 %v355
  %v2954 = vunpack.c.h.b16 %v355
  %v2955 = vunpack.c.l.b16 %v356
  %v2956 = vunpack.c.l.b16 %v357
  %v2957 = vunpack.c.h.b16 %v357
  %v2958 = vunpack.c.l.b16 %v358
  %v2959 = vunpack.c.l.b16 %v359
  %v2960 = vunpack.c.h.b16 %v359
  %v2961 = vunpack.c.l.b16 %v360
  %v2962 = vunpack.c.l.b16 %v361
  %v2963 = vunpack.c.h.b16 %v361
  %v2964 = vunpack.c.l.b16 %v362
  %v2965 = vunpack.c.l.b16 %v363
  %v2966 = vunpack.c.h.b16 %v363
  %v2967 = vunpack.c.l.b16 %v364
  %v2968 = vunpack.c.l.b16 %v365
  %v2969 = vunpack.c.h.b16 %v365
  %v2970 = vunpack.c.l.b16 %v366
  %v2971 = vunpack.c.l.b16 %v367
  %v2972 = vunpack.c.h.b16 %v367
  %v2973 = vunpack.c.l.b16 %v368
  %v2974 = vunpack.c.l.b16 %v369
  %v2975 = vunpack.c.h.b16 %v369
  %v2976 = vunpack.c.l.b16 %v370
  %v2977 = vunpack.c.l.b16 %v371
  %v2978 = vunpack.c.h.b16 %v371
  %v2979 = vunpack.c.l.b16 %v372
  %v2980 = vunpack.c.l.b16 %v373
  %v2981 = vunpack.c.h.b16 %v373
  %v2982 = vunpack.c.l.b16 %v374
  %v2983 = vunpack.c.l.b16 %v375
  %v2984 = vunpack.c.h.b16 %v375
  %v2985 = vunpack.c.l.b16 %v376
  %v2986 = vunpack.c.l.b16 %v377
  %v2987 = vunpack.c.h.b16 %v377
  %v2988 = vunpack.c.l.b16 %v378
  %v2989 = vunpack.c.l.b16 %v379
  %v2990 = vunpack.c.h.b16 %v379
  %v2991 = vunpack.c.l.b16 %v380
  %v2992 = vunpack.c.l.b16 %v381
  %v2993 = vunpack.c.h.b16 %v381
  %v2994 = vunpack.c.l.b16 %v382
  %v2995 = vunpack.c.l.b16 %v383
  %v2996 = vunpack.c.h.b16 %v383
  %v2997 = vunpack.c.l.b16 %v384
  %v2998 = vunpack.c.l.b16 %v385
  %v2999 = vunpack.c.h.b16 %v385
  %v3000 = vunpack.c.l.b16 %v386
  %v3001 = vunpack.c.l.b16 %v387
  %v3002 = vunpack.c.h.b16 %v387
  %v3003 = vunpack.c.l.b16 %v388
  %v3004 = vunpack.c.l.b16 %v389
  %v3005 = vunpack.c.h.b16 %v389
  %v3006 = vunpack.c.l.b16 %v390
  %v3007 = vunpack.c.l.b16 %v391
  %v3008 = vunpack.c.h.b16 %v391
  %v3009 = vunpack.c.l.b16 %v392
  %v3010 = vunpack.c.l.b16 %v393
  %v3011 = vunpack.c.h.b16 %v393
  %v3012 = vunpack.c.l.b16 %v394
  %v3013 = vunpack.c.l.b16 %v395
  %v3014 = vunpack.c.h.b16 %v395
  %v3015 = vunpack.c.l.b16 %v396
  %v3016 = vunpack.c.l.b16 %v397
  %v3017 = vunpack.c.h.b16 %v397
  %v3018 = vunpack.c.l.b16 %v398
  %v3019 = vunpack.c.l.b16 %v399
  %v3020 = vunpack.c.h.b16 %v399
  %v3021 = vunpack.c.l.b16 %v400
  %v3022 = vunpack.c.l.b16 %v401
  %v3023 = vunpack.c.h.b16 %v401
  %v3024 = vunpack.c.l.b16 %v402
  %v3025 = vunpack.c.l.b16 %v403
  %v3026 = vunpack.c.h.b16 %v403
  %v3027 = vunpack.c.l.b16 %v404
  %v3028 = vunpack.c.l.b16 %v405
  %v3029 = vunpack.c.h.b16 %v405
  %v3030 = vunpack.c.l.b16 %v406
  %v3031 = vunpack.c.l.b16 %v407
  %v3032 = vunpack.c.h.b16 %v407
  %v3033 = vunpack.c.l.b16 %v408
  %v3034 = vunpack.c.l.b16 %v409
  %v3035 = vunpack.c.h.b16 %v409
  %v3036 = vunpack.c.l.b16 %v410
  %v3037 = vunpack.c.l.b16 %v411
  %v3038 = vunpack.c.h.b16 %v411
  %v3039 = vunpack.c.l.b16 %v412
  %v3040 = vunpack.c.l.b16 %v413
  %v3041 = vunpack.c.h.b16 %v413
  %v3042 = vunpack.c.l.b16 %v414
  %v3043 = vunpack.c.l.b16 %v415
  %v3044 = vunpack.c.h.b16 %v415
  %v3045 = vunpack.c.l.b16 %v416
  %v3046 = vunpack.c.l.b16 %v417
  %v3047 = vunpack.c.h.b16 %v417
  %v3048 = vunpack.c.l.b16 %v418
  %v3049 = vunpack.c.l.b16 %v419
  %v3050 = vunpack.c.h.b16 %v419
  %v3051 = vunpack.c.l.b16 %v420
  %v3052 = vpack.c.b16 %v2947, %v2944
  %v3053 = vpack.c.b16 %v2948, %v2945
  %v3054 = vpack.c.b16 %v2949, %v2946
  %v3055 = vpack.c.b16 %v2953, %v2950
  %v3056 = vpack.c.b16 %v2954, %v2951
  %v3057 = vpack.c.b16 %v2955, %v2952
  %v3058 = vpack.c.b16 %v2959, %v2956
  %v3059 = vpack.c.b16 %v2960, %v2957
  %v3060 = vpack.c.b16 %v2961, %v2958
  %v3061 = vpack.c.b16 %v2965, %v2962
  %v3062 = vpack.c.b16 %v2966, %v2963
  %v3063 = vpack.c.b16 %v2967, %v2964
  %v3064 = vpack.c.b16 %v2971, %v2968
  %v3065 = vpack.c.b16 %v2972, %v2969
  %v3066 = vpack.c.b16 %v2973, %v2970
  %v3067 = vpack.c.b16 %v2977, %v2974
  %v3068 = vpack.c.b16 %v2978, %v2975
  %v3069 = vpack.c.b16 %v2979, %v2976
  %v3070 = vpack.c.b16 %v2983, %v2980
  %v3071 = vpack.c.b16 %v2984, %v2981
  %v3072 = vpack.c.b16 %v2985, %v2982
  %v3073 = vpack.c.b16 %v2989, %v2986
  %v3074 = vpack.c.b16 %v2990, %v2987
  %v3075 = vpack.c.b16 %v2991, %v2988
  %v3076 = vpack.c.b16 %v2995, %v2992
  %v3077 = vpack.c.b16 %v2996, %v2993
  %v3078 = vpack.c.b16 %v2997, %v2994
  %v3079 = vpack.c.b16 %v3001, %v2998
  %v3080 = vpack.c.b16 %v3002, %v2999
  %v3081 = vpack.c.b16 %v3003, %v3000
  %v3082 = vpack.c.b16 %v3007, %v3004
  %v3083 = vpack.c.b16 %v3008, %v3005
  %v3084 = vpack.c.b16 %v3009, %v3006
  %v3085 = vpack.c.b16 %v3013, %v3010
  %v3086 = vpack.c.b16 %v3014, %v3011
  %v3087 = vpack.c.b16 %v3015, %v3012
  %v3088 = vpack.c.b16 %v3019, %v3016
  %v3089 = vpack.c.b16 %v3020, %v3017
  %v3090 = vpack.c.b16 %v3021, %v3018
  %v3091 = vpack.c.b16 %v3025, %v3022
  %v3092 = vpack.c.b16 %v3026, %v3023
  %v3093 = vpack.c.b16 %v3027, %v3024
  %v3094 = vpack.c.b16 %v3031, %v3028
  %v3095 = vpack.c.b16 %v3032, %v3029
  %v3096 = vpack.c.b16 %v3033, %v3030
  %v3097 = vpack.c.b16 %v3037, %v3034
  %v3098 = vpack.c.b16 %v3038, %v3035
  %v3099 = vpack.c.b16 %v3039, %v3036
  %v3100 = vpack.c.b16 %v3043, %v3040
  %v3101 = vpack.c.b16 %v3044, %v3041
  %v3102 = vpack.c.b16 %v3045, %v3042
  %v3103 = vpack.c.b16 %v3049, %v3046
  %v3104 = vpack.c.b16 %v3050, %v3047
  %v3105 = vpack.c.b16 %v3051, %v3048
  %3160 = vmatpush.bf16.msra.mxu0 %v3073
  %3161 = vmatpush.bf16.msra.mxu0 %v3070
  %3162 = vmatpush.bf16.msra.mxu0 %v3067
  %3163 = vmatpush.bf16.msra.mxu0 %v3064
  %3164 = vmatpush.bf16.msra.mxu0 %v3061
  %3165 = vmatpush.bf16.msra.mxu0 %v3058
  %3166 = vmatpush.bf16.msra.mxu0 %v3055
  %3167 = vmatpush.bf16.msra.mxu0 %v3052
  %3168 = vmatmul.bf16.gmra.mxu0 %v1014
  %v3169 = vpop.f32.mrf.mxu0
  %v3170 = vadd.f32 0.0, %v3169
  %v3171 = vpop.f32.mrf.mxu0
  %3172 = vdwg.mxu0
  %3173 = vmatpush.bf16.msra.mxu0 %v3097
  %3174 = vmatpush.bf16.msra.mxu0 %v3094
  %3175 = vmatpush.bf16.msra.mxu0 %v3091
  %3176 = vmatpush.bf16.msra.mxu0 %v3088
  %3177 = vmatpush.bf16.msra.mxu0 %v3085
  %3178 = vmatpush.bf16.msra.mxu0 %v3082
  %3179 = vmatpush.bf16.msra.mxu0 %v3079
  %3180 = vmatpush.bf16.msra.mxu0 %v3076
  %3181 = vmatmul.bf16.gmra.mxu0 %v1015
  %v3182 = vpop.f32.mrf.mxu0
  %v3183 = vadd.f32 %v3170, %v3182
  %v3184 = vpop.f32.mrf.mxu0
  %3185 = vdwg.mxu0
  %3186 = vmatpush.bf16.msra.mxu0 0
  %3187 = vmatpush.bf16.msra.mxu0 0
  %3188 = vmatpush.bf16.msra.mxu0 0
  %3189 = vmatpush.bf16.msra.mxu0 0
  %3190 = vmatpush.bf16.msra.mxu0 0
  %3191 = vmatpush.bf16.msra.mxu0 0
  %3192 = vmatpush.bf16.msra.mxu0 %v3103
  %3193 = vmatpush.bf16.msra.mxu0 %v3100
  %3194 = vmatmul.bf16.gmra.mxu0 %v1307
  %v3195 = vpop.f32.mrf.mxu0
  %v3196 = vadd.f32 %v3183, %v3195
  %v3197 = vpop.f32.mrf.mxu0
  %3198 = vdwg.mxu0
  %3199 = vmatpush.bf16.msra.mxu0 %v3074
  %3200 = vmatpush.bf16.msra.mxu0 %v3071
  %3201 = vmatpush.bf16.msra.mxu0 %v3068
  %3202 = vmatpush.bf16.msra.mxu0 %v3065
  %3203 = vmatpush.bf16.msra.mxu0 %v3062
  %3204 = vmatpush.bf16.msra.mxu0 %v3059
  %3205 = vmatpush.bf16.msra.mxu0 %v3056
  %3206 = vmatpush.bf16.msra.mxu0 %v3053
  %3207 = vmatmul.bf16.gmra.mxu0 %v1014
  %v3208 = vpop.f32.mrf.mxu0
  %v3209 = vadd.f32 0.0, %v3208
  %v3210 = vpop.f32.mrf.mxu0
  %3211 = vdwg.mxu0
  %3212 = vmatpush.bf16.msra.mxu0 %v3098
  %3213 = vmatpush.bf16.msra.mxu0 %v3095
  %3214 = vmatpush.bf16.msra.mxu0 %v3092
  %3215 = vmatpush.bf16.msra.mxu0 %v3089
  %3216 = vmatpush.bf16.msra.mxu0 %v3086
  %3217 = vmatpush.bf16.msra.mxu0 %v3083
  %3218 = vmatpush.bf16.msra.mxu0 %v3080
  %3219 = vmatpush.bf16.msra.mxu0 %v3077
  %3220 = vmatmul.bf16.gmra.mxu0 %v1015
  %v3221 = vpop.f32.mrf.mxu0
  %v3222 = vadd.f32 %v3209, %v3221
  %v3223 = vpop.f32.mrf.mxu0
  %3224 = vdwg.mxu0
  %3225 = vmatpush.bf16.msra.mxu0 0
  %3226 = vmatpush.bf16.msra.mxu0 0
  %3227 = vmatpush.bf16.msra.mxu0 0
  %3228 = vmatpush.bf16.msra.mxu0 0
  %3229 = vmatpush.bf16.msra.mxu0 0
  %3230 = vmatpush.bf16.msra.mxu0 0
  %3231 = vmatpush.bf16.msra.mxu0 %v3104
  %3232 = vmatpush.bf16.msra.mxu0 %v3101
  %3233 = vmatmul.bf16.gmra.mxu0 %v1307
  %v3234 = vpop.f32.mrf.mxu0
  %v3235 = vadd.f32 %v3222, %v3234
  %v3236 = vpop.f32.mrf.mxu0
  %3237 = vdwg.mxu0
  %3238 = vmatpush.bf16.msra.mxu0 %v3075
  %3239 = vmatpush.bf16.msra.mxu0 %v3072
  %3240 = vmatpush.bf16.msra.mxu0 %v3069
  %3241 = vmatpush.bf16.msra.mxu0 %v3066
  %3242 = vmatpush.bf16.msra.mxu0 %v3063
  %3243 = vmatpush.bf16.msra.mxu0 %v3060
  %3244 = vmatpush.bf16.msra.mxu0 %v3057
  %3245 = vmatpush.bf16.msra.mxu0 %v3054
  %3246 = vmatmul.bf16.gmra.mxu0 %v1014
  %v3247 = vpop.f32.mrf.mxu0
  %v3248 = vadd.f32 0.0, %v3247
  %v3249 = vpop.f32.mrf.mxu0
  %3250 = vdwg.mxu0
  %3251 = vmatpush.bf16.msra.mxu0 %v3099
  %3252 = vmatpush.bf16.msra.mxu0 %v3096
  %3253 = vmatpush.bf16.msra.mxu0 %v3093
  %3254 = vmatpush.bf16.msra.mxu0 %v3090
  %3255 = vmatpush.bf16.msra.mxu0 %v3087
  %3256 = vmatpush.bf16.msra.mxu0 %v3084
  %3257 = vmatpush.bf16.msra.mxu0 %v3081
  %3258 = vmatpush.bf16.msra.mxu0 %v3078
  %3259 = vmatmul.bf16.gmra.mxu0 %v1015
  %v3260 = vpop.f32.mrf.mxu0
  %v3261 = vadd.f32 %v3248, %v3260
  %v3262 = vpop.f32.mrf.mxu0
  %3263 = vdwg.mxu0
  %3264 = vmatpush.bf16.msra.mxu0 0
  %3265 = vmatpush.bf16.msra.mxu0 0
  %3266 = vmatpush.bf16.msra.mxu0 0
  %3267 = vmatpush.bf16.msra.mxu0 0
  %3268 = vmatpush.bf16.msra.mxu0 0
  %3269 = vmatpush.bf16.msra.mxu0 0
  %3270 = vmatpush.bf16.msra.mxu0 %v3105
  %3271 = vmatpush.bf16.msra.mxu0 %v3102
  %3272 = vmatmul.bf16.gmra.mxu0 %v1307
  %v3273 = vpop.f32.mrf.mxu0
  %v3274 = vadd.f32 %v3261, %v3273
  %v3275 = vpop.f32.mrf.mxu0
  %3276 = vdwg.mxu0
  %v3277 = vpack.c.bf16 %v3196, %v3196
  %v3278 = vpack.c.bf16 %v3235, %v3235
  %v3279 = vpack.c.bf16 %v3274, %v3274
  %s3280 = scalar_lea.vmem %s4, 16
  %v3281 = vld [vmem:[%s3280] sm:$0xf]
  %v3283 = vsel %vm1840, %v3281, 0
  %v3286 = vsel %vm1844, %v3277, 0
  %v3289 = vsel %vm1844, %v3278, 0
  %v3292 = vsel %vm1844, %v3279, 0
  %3294 = vmatpush.bf16.msra.mxu0 0
  %3295 = vmatpush.bf16.msra.mxu0 0
  %3296 = vmatpush.bf16.msra.mxu0 0
  %3297 = vmatpush.bf16.msra.mxu0 0
  %3298 = vmatpush.bf16.msra.mxu0 0
  %3299 = vmatpush.bf16.msra.mxu0 0
  %3300 = vmatpush.bf16.msra.mxu0 0
  %3301 = vmatpush.bf16.msra.mxu0 %v3286
  %3302 = vmatmul.bf16.gmra.mxu0 %v3283
  %v3303 = vpop.f32.mrf.mxu0
  %v3304 = vadd.f32 0.0, %v3303
  %v3305 = vpop.f32.mrf.mxu0
  %3306 = vdwg.mxu0
  %3307 = vmatpush.bf16.msra.mxu0 0
  %3308 = vmatpush.bf16.msra.mxu0 0
  %3309 = vmatpush.bf16.msra.mxu0 0
  %3310 = vmatpush.bf16.msra.mxu0 0
  %3311 = vmatpush.bf16.msra.mxu0 0
  %3312 = vmatpush.bf16.msra.mxu0 0
  %3313 = vmatpush.bf16.msra.mxu0 0
  %3314 = vmatpush.bf16.msra.mxu0 %v3289
  %3315 = vmatmul.bf16.gmra.mxu0 %v3283
  %v3316 = vpop.f32.mrf.mxu0
  %v3317 = vadd.f32 0.0, %v3316
  %v3318 = vpop.f32.mrf.mxu0
  %3319 = vdwg.mxu0
  %3320 = vmatpush.bf16.msra.mxu0 0
  %3321 = vmatpush.bf16.msra.mxu0 0
  %3322 = vmatpush.bf16.msra.mxu0 0
  %3323 = vmatpush.bf16.msra.mxu0 0
  %3324 = vmatpush.bf16.msra.mxu0 0
  %3325 = vmatpush.bf16.msra.mxu0 0
  %3326 = vmatpush.bf16.msra.mxu0 0
  %3327 = vmatpush.bf16.msra.mxu0 %v3292
  %3328 = vmatmul.bf16.gmra.mxu0 %v3283
  %v3329 = vpop.f32.mrf.mxu0
  %v3330 = vadd.f32 0.0, %v3329
  %v3331 = vpop.f32.mrf.mxu0
  %3332 = vdwg.mxu0
  %v3333 = vadd.f32 %v2869, %v3304
  %v3334 = vadd.f32 %v2870, %v3317
  %v3335 = vadd.f32 %v2871, %v3330
  %v3408 = vunpack.c.l.b16 %v422
  %v3409 = vunpack.c.h.b16 %v422
  %v3410 = vunpack.c.l.b16 %v423
  %v3411 = vunpack.c.l.b16 %v424
  %v3412 = vunpack.c.h.b16 %v424
  %v3413 = vunpack.c.l.b16 %v425
  %v3414 = vunpack.c.l.b16 %v426
  %v3415 = vunpack.c.h.b16 %v426
  %v3416 = vunpack.c.l.b16 %v427
  %v3417 = vunpack.c.l.b16 %v428
  %v3418 = vunpack.c.h.b16 %v428
  %v3419 = vunpack.c.l.b16 %v429
  %v3420 = vunpack.c.l.b16 %v430
  %v3421 = vunpack.c.h.b16 %v430
  %v3422 = vunpack.c.l.b16 %v431
  %v3423 = vunpack.c.l.b16 %v432
  %v3424 = vunpack.c.h.b16 %v432
  %v3425 = vunpack.c.l.b16 %v433
  %v3426 = vunpack.c.l.b16 %v434
  %v3427 = vunpack.c.h.b16 %v434
  %v3428 = vunpack.c.l.b16 %v435
  %v3429 = vunpack.c.l.b16 %v436
  %v3430 = vunpack.c.h.b16 %v436
  %v3431 = vunpack.c.l.b16 %v437
  %v3432 = vunpack.c.l.b16 %v438
  %v3433 = vunpack.c.h.b16 %v438
  %v3434 = vunpack.c.l.b16 %v439
  %v3435 = vunpack.c.l.b16 %v440
  %v3436 = vunpack.c.h.b16 %v440
  %v3437 = vunpack.c.l.b16 %v441
  %v3438 = vunpack.c.l.b16 %v442
  %v3439 = vunpack.c.h.b16 %v442
  %v3440 = vunpack.c.l.b16 %v443
  %v3441 = vunpack.c.l.b16 %v444
  %v3442 = vunpack.c.h.b16 %v444
  %v3443 = vunpack.c.l.b16 %v445
  %v3444 = vunpack.c.l.b16 %v446
  %v3445 = vunpack.c.h.b16 %v446
  %v3446 = vunpack.c.l.b16 %v447
  %v3447 = vunpack.c.l.b16 %v448
  %v3448 = vunpack.c.h.b16 %v448
  %v3449 = vunpack.c.l.b16 %v449
  %v3450 = vunpack.c.l.b16 %v450
  %v3451 = vunpack.c.h.b16 %v450
  %v3452 = vunpack.c.l.b16 %v451
  %v3453 = vunpack.c.l.b16 %v452
  %v3454 = vunpack.c.h.b16 %v452
  %v3455 = vunpack.c.l.b16 %v453
  %v3456 = vunpack.c.l.b16 %v454
  %v3457 = vunpack.c.h.b16 %v454
  %v3458 = vunpack.c.l.b16 %v455
  %v3459 = vunpack.c.l.b16 %v456
  %v3460 = vunpack.c.h.b16 %v456
  %v3461 = vunpack.c.l.b16 %v457
  %v3462 = vunpack.c.l.b16 %v458
  %v3463 = vunpack.c.h.b16 %v458
  %v3464 = vunpack.c.l.b16 %v459
  %v3465 = vunpack.c.l.b16 %v460
  %v3466 = vunpack.c.h.b16 %v460
  %v3467 = vunpack.c.l.b16 %v461
  %v3468 = vunpack.c.l.b16 %v462
  %v3469 = vunpack.c.h.b16 %v462
  %v3470 = vunpack.c.l.b16 %v463
  %v3471 = vunpack.c.l.b16 %v464
  %v3472 = vunpack.c.h.b16 %v464
  %v3473 = vunpack.c.l.b16 %v465
  %v3474 = vunpack.c.l.b16 %v466
  %v3475 = vunpack.c.h.b16 %v466
  %v3476 = vunpack.c.l.b16 %v467
  %v3477 = vunpack.c.l.b16 %v468
  %v3478 = vunpack.c.h.b16 %v468
  %v3479 = vunpack.c.l.b16 %v469
  %v3480 = vunpack.c.l.b16 %v470
  %v3481 = vunpack.c.h.b16 %v470
  %v3482 = vunpack.c.l.b16 %v471
  %v3483 = vunpack.c.l.b16 %v472
  %v3484 = vunpack.c.h.b16 %v472
  %v3485 = vunpack.c.l.b16 %v473
  %v3486 = vunpack.c.l.b16 %v474
  %v3487 = vunpack.c.h.b16 %v474
  %v3488 = vunpack.c.l.b16 %v475
  %v3489 = vunpack.c.l.b16 %v476
  %v3490 = vunpack.c.h.b16 %v476
  %v3491 = vunpack.c.l.b16 %v477
  %v3492 = vunpack.c.l.b16 %v478
  %v3493 = vunpack.c.h.b16 %v478
  %v3494 = vunpack.c.l.b16 %v479
  %v3495 = vunpack.c.l.b16 %v480
  %v3496 = vunpack.c.h.b16 %v480
  %v3497 = vunpack.c.l.b16 %v481
  %v3498 = vunpack.c.l.b16 %v482
  %v3499 = vunpack.c.h.b16 %v482
  %v3500 = vunpack.c.l.b16 %v483
  %v3501 = vunpack.c.l.b16 %v484
  %v3502 = vunpack.c.h.b16 %v484
  %v3503 = vunpack.c.l.b16 %v485
  %v3504 = vunpack.c.l.b16 %v486
  %v3505 = vunpack.c.h.b16 %v486
  %v3506 = vunpack.c.l.b16 %v487
  %v3507 = vunpack.c.l.b16 %v488
  %v3508 = vunpack.c.h.b16 %v488
  %v3509 = vunpack.c.l.b16 %v489
  %v3510 = vunpack.c.l.b16 %v490
  %v3511 = vunpack.c.h.b16 %v490
  %v3512 = vunpack.c.l.b16 %v491
  %v3513 = vunpack.c.l.b16 %v492
  %v3514 = vunpack.c.h.b16 %v492
  %v3515 = vunpack.c.l.b16 %v493
  %v3516 = vpack.c.b16 %v3411, %v3408
  %v3517 = vpack.c.b16 %v3412, %v3409
  %v3518 = vpack.c.b16 %v3413, %v3410
  %v3519 = vpack.c.b16 %v3417, %v3414
  %v3520 = vpack.c.b16 %v3418, %v3415
  %v3521 = vpack.c.b16 %v3419, %v3416
  %v3522 = vpack.c.b16 %v3423, %v3420
  %v3523 = vpack.c.b16 %v3424, %v3421
  %v3524 = vpack.c.b16 %v3425, %v3422
  %v3525 = vpack.c.b16 %v3429, %v3426
  %v3526 = vpack.c.b16 %v3430, %v3427
  %v3527 = vpack.c.b16 %v3431, %v3428
  %v3528 = vpack.c.b16 %v3435, %v3432
  %v3529 = vpack.c.b16 %v3436, %v3433
  %v3530 = vpack.c.b16 %v3437, %v3434
  %v3531 = vpack.c.b16 %v3441, %v3438
  %v3532 = vpack.c.b16 %v3442, %v3439
  %v3533 = vpack.c.b16 %v3443, %v3440
  %v3534 = vpack.c.b16 %v3447, %v3444
  %v3535 = vpack.c.b16 %v3448, %v3445
  %v3536 = vpack.c.b16 %v3449, %v3446
  %v3537 = vpack.c.b16 %v3453, %v3450
  %v3538 = vpack.c.b16 %v3454, %v3451
  %v3539 = vpack.c.b16 %v3455, %v3452
  %v3540 = vpack.c.b16 %v3459, %v3456
  %v3541 = vpack.c.b16 %v3460, %v3457
  %v3542 = vpack.c.b16 %v3461, %v3458
  %v3543 = vpack.c.b16 %v3465, %v3462
  %v3544 = vpack.c.b16 %v3466, %v3463
  %v3545 = vpack.c.b16 %v3467, %v3464
  %v3546 = vpack.c.b16 %v3471, %v3468
  %v3547 = vpack.c.b16 %v3472, %v3469
  %v3548 = vpack.c.b16 %v3473, %v3470
  %v3549 = vpack.c.b16 %v3477, %v3474
  %v3550 = vpack.c.b16 %v3478, %v3475
  %v3551 = vpack.c.b16 %v3479, %v3476
  %v3552 = vpack.c.b16 %v3483, %v3480
  %v3553 = vpack.c.b16 %v3484, %v3481
  %v3554 = vpack.c.b16 %v3485, %v3482
  %v3555 = vpack.c.b16 %v3489, %v3486
  %v3556 = vpack.c.b16 %v3490, %v3487
  %v3557 = vpack.c.b16 %v3491, %v3488
  %v3558 = vpack.c.b16 %v3495, %v3492
  %v3559 = vpack.c.b16 %v3496, %v3493
  %v3560 = vpack.c.b16 %v3497, %v3494
  %v3561 = vpack.c.b16 %v3501, %v3498
  %v3562 = vpack.c.b16 %v3502, %v3499
  %v3563 = vpack.c.b16 %v3503, %v3500
  %v3564 = vpack.c.b16 %v3507, %v3504
  %v3565 = vpack.c.b16 %v3508, %v3505
  %v3566 = vpack.c.b16 %v3509, %v3506
  %v3567 = vpack.c.b16 %v3513, %v3510
  %v3568 = vpack.c.b16 %v3514, %v3511
  %v3569 = vpack.c.b16 %v3515, %v3512
  %3624 = vmatpush.bf16.msra.mxu0 %v3537
  %3625 = vmatpush.bf16.msra.mxu0 %v3534
  %3626 = vmatpush.bf16.msra.mxu0 %v3531
  %3627 = vmatpush.bf16.msra.mxu0 %v3528
  %3628 = vmatpush.bf16.msra.mxu0 %v3525
  %3629 = vmatpush.bf16.msra.mxu0 %v3522
  %3630 = vmatpush.bf16.msra.mxu0 %v3519
  %3631 = vmatpush.bf16.msra.mxu0 %v3516
  %3632 = vmatmul.bf16.gmra.mxu0 %v1014
  %v3633 = vpop.f32.mrf.mxu0
  %v3634 = vadd.f32 0.0, %v3633
  %v3635 = vpop.f32.mrf.mxu0
  %3636 = vdwg.mxu0
  %3637 = vmatpush.bf16.msra.mxu0 %v3561
  %3638 = vmatpush.bf16.msra.mxu0 %v3558
  %3639 = vmatpush.bf16.msra.mxu0 %v3555
  %3640 = vmatpush.bf16.msra.mxu0 %v3552
  %3641 = vmatpush.bf16.msra.mxu0 %v3549
  %3642 = vmatpush.bf16.msra.mxu0 %v3546
  %3643 = vmatpush.bf16.msra.mxu0 %v3543
  %3644 = vmatpush.bf16.msra.mxu0 %v3540
  %3645 = vmatmul.bf16.gmra.mxu0 %v1015
  %v3646 = vpop.f32.mrf.mxu0
  %v3647 = vadd.f32 %v3634, %v3646
  %v3648 = vpop.f32.mrf.mxu0
  %3649 = vdwg.mxu0
  %3650 = vmatpush.bf16.msra.mxu0 0
  %3651 = vmatpush.bf16.msra.mxu0 0
  %3652 = vmatpush.bf16.msra.mxu0 0
  %3653 = vmatpush.bf16.msra.mxu0 0
  %3654 = vmatpush.bf16.msra.mxu0 0
  %3655 = vmatpush.bf16.msra.mxu0 0
  %3656 = vmatpush.bf16.msra.mxu0 %v3567
  %3657 = vmatpush.bf16.msra.mxu0 %v3564
  %3658 = vmatmul.bf16.gmra.mxu0 %v1307
  %v3659 = vpop.f32.mrf.mxu0
  %v3660 = vadd.f32 %v3647, %v3659
  %v3661 = vpop.f32.mrf.mxu0
  %3662 = vdwg.mxu0
  %3663 = vmatpush.bf16.msra.mxu0 %v3538
  %3664 = vmatpush.bf16.msra.mxu0 %v3535
  %3665 = vmatpush.bf16.msra.mxu0 %v3532
  %3666 = vmatpush.bf16.msra.mxu0 %v3529
  %3667 = vmatpush.bf16.msra.mxu0 %v3526
  %3668 = vmatpush.bf16.msra.mxu0 %v3523
  %3669 = vmatpush.bf16.msra.mxu0 %v3520
  %3670 = vmatpush.bf16.msra.mxu0 %v3517
  %3671 = vmatmul.bf16.gmra.mxu0 %v1014
  %v3672 = vpop.f32.mrf.mxu0
  %v3673 = vadd.f32 0.0, %v3672
  %v3674 = vpop.f32.mrf.mxu0
  %3675 = vdwg.mxu0
  %3676 = vmatpush.bf16.msra.mxu0 %v3562
  %3677 = vmatpush.bf16.msra.mxu0 %v3559
  %3678 = vmatpush.bf16.msra.mxu0 %v3556
  %3679 = vmatpush.bf16.msra.mxu0 %v3553
  %3680 = vmatpush.bf16.msra.mxu0 %v3550
  %3681 = vmatpush.bf16.msra.mxu0 %v3547
  %3682 = vmatpush.bf16.msra.mxu0 %v3544
  %3683 = vmatpush.bf16.msra.mxu0 %v3541
  %3684 = vmatmul.bf16.gmra.mxu0 %v1015
  %v3685 = vpop.f32.mrf.mxu0
  %v3686 = vadd.f32 %v3673, %v3685
  %v3687 = vpop.f32.mrf.mxu0
  %3688 = vdwg.mxu0
  %3689 = vmatpush.bf16.msra.mxu0 0
  %3690 = vmatpush.bf16.msra.mxu0 0
  %3691 = vmatpush.bf16.msra.mxu0 0
  %3692 = vmatpush.bf16.msra.mxu0 0
  %3693 = vmatpush.bf16.msra.mxu0 0
  %3694 = vmatpush.bf16.msra.mxu0 0
  %3695 = vmatpush.bf16.msra.mxu0 %v3568
  %3696 = vmatpush.bf16.msra.mxu0 %v3565
  %3697 = vmatmul.bf16.gmra.mxu0 %v1307
  %v3698 = vpop.f32.mrf.mxu0
  %v3699 = vadd.f32 %v3686, %v3698
  %v3700 = vpop.f32.mrf.mxu0
  %3701 = vdwg.mxu0
  %3702 = vmatpush.bf16.msra.mxu0 %v3539
  %3703 = vmatpush.bf16.msra.mxu0 %v3536
  %3704 = vmatpush.bf16.msra.mxu0 %v3533
  %3705 = vmatpush.bf16.msra.mxu0 %v3530
  %3706 = vmatpush.bf16.msra.mxu0 %v3527
  %3707 = vmatpush.bf16.msra.mxu0 %v3524
  %3708 = vmatpush.bf16.msra.mxu0 %v3521
  %3709 = vmatpush.bf16.msra.mxu0 %v3518
  %3710 = vmatmul.bf16.gmra.mxu0 %v1014
  %v3711 = vpop.f32.mrf.mxu0
  %v3712 = vadd.f32 0.0, %v3711
  %v3713 = vpop.f32.mrf.mxu0
  %3714 = vdwg.mxu0
  %3715 = vmatpush.bf16.msra.mxu0 %v3563
  %3716 = vmatpush.bf16.msra.mxu0 %v3560
  %3717 = vmatpush.bf16.msra.mxu0 %v3557
  %3718 = vmatpush.bf16.msra.mxu0 %v3554
  %3719 = vmatpush.bf16.msra.mxu0 %v3551
  %3720 = vmatpush.bf16.msra.mxu0 %v3548
  %3721 = vmatpush.bf16.msra.mxu0 %v3545
  %3722 = vmatpush.bf16.msra.mxu0 %v3542
  %3723 = vmatmul.bf16.gmra.mxu0 %v1015
  %v3724 = vpop.f32.mrf.mxu0
  %v3725 = vadd.f32 %v3712, %v3724
  %v3726 = vpop.f32.mrf.mxu0
  %3727 = vdwg.mxu0
  %3728 = vmatpush.bf16.msra.mxu0 0
  %3729 = vmatpush.bf16.msra.mxu0 0
  %3730 = vmatpush.bf16.msra.mxu0 0
  %3731 = vmatpush.bf16.msra.mxu0 0
  %3732 = vmatpush.bf16.msra.mxu0 0
  %3733 = vmatpush.bf16.msra.mxu0 0
  %3734 = vmatpush.bf16.msra.mxu0 %v3569
  %3735 = vmatpush.bf16.msra.mxu0 %v3566
  %3736 = vmatmul.bf16.gmra.mxu0 %v1307
  %v3737 = vpop.f32.mrf.mxu0
  %v3738 = vadd.f32 %v3725, %v3737
  %v3739 = vpop.f32.mrf.mxu0
  %3740 = vdwg.mxu0
  %v3741 = vpack.c.bf16 %v3660, %v3660
  %v3742 = vpack.c.bf16 %v3699, %v3699
  %v3743 = vpack.c.bf16 %v3738, %v3738
  %s3744 = scalar_lea.vmem %s4, 20
  %v3745 = vld [vmem:[%s3744] sm:$0xf]
  %v3747 = vsel %vm1840, %v3745, 0
  %v3750 = vsel %vm1844, %v3741, 0
  %v3753 = vsel %vm1844, %v3742, 0
  %v3756 = vsel %vm1844, %v3743, 0
  %3758 = vmatpush.bf16.msra.mxu0 0
  %3759 = vmatpush.bf16.msra.mxu0 0
  %3760 = vmatpush.bf16.msra.mxu0 0
  %3761 = vmatpush.bf16.msra.mxu0 0
  %3762 = vmatpush.bf16.msra.mxu0 0
  %3763 = vmatpush.bf16.msra.mxu0 0
  %3764 = vmatpush.bf16.msra.mxu0 0
  %3765 = vmatpush.bf16.msra.mxu0 %v3750
  %3766 = vmatmul.bf16.gmra.mxu0 %v3747
  %v3767 = vpop.f32.mrf.mxu0
  %v3768 = vadd.f32 0.0, %v3767
  %v3769 = vpop.f32.mrf.mxu0
  %3770 = vdwg.mxu0
  %3771 = vmatpush.bf16.msra.mxu0 0
  %3772 = vmatpush.bf16.msra.mxu0 0
  %3773 = vmatpush.bf16.msra.mxu0 0
  %3774 = vmatpush.bf16.msra.mxu0 0
  %3775 = vmatpush.bf16.msra.mxu0 0
  %3776 = vmatpush.bf16.msra.mxu0 0
  %3777 = vmatpush.bf16.msra.mxu0 0
  %3778 = vmatpush.bf16.msra.mxu0 %v3753
  %3779 = vmatmul.bf16.gmra.mxu0 %v3747
  %v3780 = vpop.f32.mrf.mxu0
  %v3781 = vadd.f32 0.0, %v3780
  %v3782 = vpop.f32.mrf.mxu0
  %3783 = vdwg.mxu0
  %3784 = vmatpush.bf16.msra.mxu0 0
  %3785 = vmatpush.bf16.msra.mxu0 0
  %3786 = vmatpush.bf16.msra.mxu0 0
  %3787 = vmatpush.bf16.msra.mxu0 0
  %3788 = vmatpush.bf16.msra.mxu0 0
  %3789 = vmatpush.bf16.msra.mxu0 0
  %3790 = vmatpush.bf16.msra.mxu0 0
  %3791 = vmatpush.bf16.msra.mxu0 %v3756
  %3792 = vmatmul.bf16.gmra.mxu0 %v3747
  %v3793 = vpop.f32.mrf.mxu0
  %v3794 = vadd.f32 0.0, %v3793
  %v3795 = vpop.f32.mrf.mxu0
  %3796 = vdwg.mxu0
  %v3797 = vadd.f32 %v3333, %v3768
  %v3798 = vadd.f32 %v3334, %v3781
  %v3799 = vadd.f32 %v3335, %v3794
  %v3872 = vunpack.c.l.b16 %v495
  %v3873 = vunpack.c.h.b16 %v495
  %v3874 = vunpack.c.l.b16 %v496
  %v3875 = vunpack.c.l.b16 %v497
  %v3876 = vunpack.c.h.b16 %v497
  %v3877 = vunpack.c.l.b16 %v498
  %v3878 = vunpack.c.l.b16 %v499
  %v3879 = vunpack.c.h.b16 %v499
  %v3880 = vunpack.c.l.b16 %v500
  %v3881 = vunpack.c.l.b16 %v501
  %v3882 = vunpack.c.h.b16 %v501
  %v3883 = vunpack.c.l.b16 %v502
  %v3884 = vunpack.c.l.b16 %v503
  %v3885 = vunpack.c.h.b16 %v503
  %v3886 = vunpack.c.l.b16 %v504
  %v3887 = vunpack.c.l.b16 %v505
  %v3888 = vunpack.c.h.b16 %v505
  %v3889 = vunpack.c.l.b16 %v506
  %v3890 = vunpack.c.l.b16 %v507
  %v3891 = vunpack.c.h.b16 %v507
  %v3892 = vunpack.c.l.b16 %v508
  %v3893 = vunpack.c.l.b16 %v509
  %v3894 = vunpack.c.h.b16 %v509
  %v3895 = vunpack.c.l.b16 %v510
  %v3896 = vunpack.c.l.b16 %v511
  %v3897 = vunpack.c.h.b16 %v511
  %v3898 = vunpack.c.l.b16 %v512
  %v3899 = vunpack.c.l.b16 %v513
  %v3900 = vunpack.c.h.b16 %v513
  %v3901 = vunpack.c.l.b16 %v514
  %v3902 = vunpack.c.l.b16 %v515
  %v3903 = vunpack.c.h.b16 %v515
  %v3904 = vunpack.c.l.b16 %v516
  %v3905 = vunpack.c.l.b16 %v517
  %v3906 = vunpack.c.h.b16 %v517
  %v3907 = vunpack.c.l.b16 %v518
  %v3908 = vunpack.c.l.b16 %v519
  %v3909 = vunpack.c.h.b16 %v519
  %v3910 = vunpack.c.l.b16 %v520
  %v3911 = vunpack.c.l.b16 %v521
  %v3912 = vunpack.c.h.b16 %v521
  %v3913 = vunpack.c.l.b16 %v522
  %v3914 = vunpack.c.l.b16 %v523
  %v3915 = vunpack.c.h.b16 %v523
  %v3916 = vunpack.c.l.b16 %v524
  %v3917 = vunpack.c.l.b16 %v525
  %v3918 = vunpack.c.h.b16 %v525
  %v3919 = vunpack.c.l.b16 %v526
  %v3920 = vunpack.c.l.b16 %v527
  %v3921 = vunpack.c.h.b16 %v527
  %v3922 = vunpack.c.l.b16 %v528
  %v3923 = vunpack.c.l.b16 %v529
  %v3924 = vunpack.c.h.b16 %v529
  %v3925 = vunpack.c.l.b16 %v530
  %v3926 = vunpack.c.l.b16 %v531
  %v3927 = vunpack.c.h.b16 %v531
  %v3928 = vunpack.c.l.b16 %v532
  %v3929 = vunpack.c.l.b16 %v533
  %v3930 = vunpack.c.h.b16 %v533
  %v3931 = vunpack.c.l.b16 %v534
  %v3932 = vunpack.c.l.b16 %v535
  %v3933 = vunpack.c.h.b16 %v535
  %v3934 = vunpack.c.l.b16 %v536
  %v3935 = vunpack.c.l.b16 %v537
  %v3936 = vunpack.c.h.b16 %v537
  %v3937 = vunpack.c.l.b16 %v538
  %v3938 = vunpack.c.l.b16 %v539
  %v3939 = vunpack.c.h.b16 %v539
  %v3940 = vunpack.c.l.b16 %v540
  %v3941 = vunpack.c.l.b16 %v541
  %v3942 = vunpack.c.h.b16 %v541
  %v3943 = vunpack.c.l.b16 %v542
  %v3944 = vunpack.c.l.b16 %v543
  %v3945 = vunpack.c.h.b16 %v543
  %v3946 = vunpack.c.l.b16 %v544
  %v3947 = vunpack.c.l.b16 %v545
  %v3948 = vunpack.c.h.b16 %v545
  %v3949 = vunpack.c.l.b16 %v546
  %v3950 = vunpack.c.l.b16 %v547
  %v3951 = vunpack.c.h.b16 %v547
  %v3952 = vunpack.c.l.b16 %v548
  %v3953 = vunpack.c.l.b16 %v549
  %v3954 = vunpack.c.h.b16 %v549
  %v3955 = vunpack.c.l.b16 %v550
  %v3956 = vunpack.c.l.b16 %v551
  %v3957 = vunpack.c.h.b16 %v551
  %v3958 = vunpack.c.l.b16 %v552
  %v3959 = vunpack.c.l.b16 %v553
  %v3960 = vunpack.c.h.b16 %v553
  %v3961 = vunpack.c.l.b16 %v554
  %v3962 = vunpack.c.l.b16 %v555
  %v3963 = vunpack.c.h.b16 %v555
  %v3964 = vunpack.c.l.b16 %v556
  %v3965 = vunpack.c.l.b16 %v557
  %v3966 = vunpack.c.h.b16 %v557
  %v3967 = vunpack.c.l.b16 %v558
  %v3968 = vunpack.c.l.b16 %v559
  %v3969 = vunpack.c.h.b16 %v559
  %v3970 = vunpack.c.l.b16 %v560
  %v3971 = vunpack.c.l.b16 %v561
  %v3972 = vunpack.c.h.b16 %v561
  %v3973 = vunpack.c.l.b16 %v562
  %v3974 = vunpack.c.l.b16 %v563
  %v3975 = vunpack.c.h.b16 %v563
  %v3976 = vunpack.c.l.b16 %v564
  %v3977 = vunpack.c.l.b16 %v565
  %v3978 = vunpack.c.h.b16 %v565
  %v3979 = vunpack.c.l.b16 %v566
  %v3980 = vpack.c.b16 %v3875, %v3872
  %v3981 = vpack.c.b16 %v3876, %v3873
  %v3982 = vpack.c.b16 %v3877, %v3874
  %v3983 = vpack.c.b16 %v3881, %v3878
  %v3984 = vpack.c.b16 %v3882, %v3879
  %v3985 = vpack.c.b16 %v3883, %v3880
  %v3986 = vpack.c.b16 %v3887, %v3884
  %v3987 = vpack.c.b16 %v3888, %v3885
  %v3988 = vpack.c.b16 %v3889, %v3886
  %v3989 = vpack.c.b16 %v3893, %v3890
  %v3990 = vpack.c.b16 %v3894, %v3891
  %v3991 = vpack.c.b16 %v3895, %v3892
  %v3992 = vpack.c.b16 %v3899, %v3896
  %v3993 = vpack.c.b16 %v3900, %v3897
  %v3994 = vpack.c.b16 %v3901, %v3898
  %v3995 = vpack.c.b16 %v3905, %v3902
  %v3996 = vpack.c.b16 %v3906, %v3903
  %v3997 = vpack.c.b16 %v3907, %v3904
  %v3998 = vpack.c.b16 %v3911, %v3908
  %v3999 = vpack.c.b16 %v3912, %v3909
  %v4000 = vpack.c.b16 %v3913, %v3910
  %v4001 = vpack.c.b16 %v3917, %v3914
  %v4002 = vpack.c.b16 %v3918, %v3915
  %v4003 = vpack.c.b16 %v3919, %v3916
  %v4004 = vpack.c.b16 %v3923, %v3920
  %v4005 = vpack.c.b16 %v3924, %v3921
  %v4006 = vpack.c.b16 %v3925, %v3922
  %v4007 = vpack.c.b16 %v3929, %v3926
  %v4008 = vpack.c.b16 %v3930, %v3927
  %v4009 = vpack.c.b16 %v3931, %v3928
  %v4010 = vpack.c.b16 %v3935, %v3932
  %v4011 = vpack.c.b16 %v3936, %v3933
  %v4012 = vpack.c.b16 %v3937, %v3934
  %v4013 = vpack.c.b16 %v3941, %v3938
  %v4014 = vpack.c.b16 %v3942, %v3939
  %v4015 = vpack.c.b16 %v3943, %v3940
  %v4016 = vpack.c.b16 %v3947, %v3944
  %v4017 = vpack.c.b16 %v3948, %v3945
  %v4018 = vpack.c.b16 %v3949, %v3946
  %v4019 = vpack.c.b16 %v3953, %v3950
  %v4020 = vpack.c.b16 %v3954, %v3951
  %v4021 = vpack.c.b16 %v3955, %v3952
  %v4022 = vpack.c.b16 %v3959, %v3956
  %v4023 = vpack.c.b16 %v3960, %v3957
  %v4024 = vpack.c.b16 %v3961, %v3958
  %v4025 = vpack.c.b16 %v3965, %v3962
  %v4026 = vpack.c.b16 %v3966, %v3963
  %v4027 = vpack.c.b16 %v3967, %v3964
  %v4028 = vpack.c.b16 %v3971, %v3968
  %v4029 = vpack.c.b16 %v3972, %v3969
  %v4030 = vpack.c.b16 %v3973, %v3970
  %v4031 = vpack.c.b16 %v3977, %v3974
  %v4032 = vpack.c.b16 %v3978, %v3975
  %v4033 = vpack.c.b16 %v3979, %v3976
  %4088 = vmatpush.bf16.msra.mxu0 %v4001
  %4089 = vmatpush.bf16.msra.mxu0 %v3998
  %4090 = vmatpush.bf16.msra.mxu0 %v3995
  %4091 = vmatpush.bf16.msra.mxu0 %v3992
  %4092 = vmatpush.bf16.msra.mxu0 %v3989
  %4093 = vmatpush.bf16.msra.mxu0 %v3986
  %4094 = vmatpush.bf16.msra.mxu0 %v3983
  %4095 = vmatpush.bf16.msra.mxu0 %v3980
  %4096 = vmatmul.bf16.gmra.mxu0 %v1014
  %v4097 = vpop.f32.mrf.mxu0
  %v4098 = vadd.f32 0.0, %v4097
  %v4099 = vpop.f32.mrf.mxu0
  %4100 = vdwg.mxu0
  %4101 = vmatpush.bf16.msra.mxu0 %v4025
  %4102 = vmatpush.bf16.msra.mxu0 %v4022
  %4103 = vmatpush.bf16.msra.mxu0 %v4019
  %4104 = vmatpush.bf16.msra.mxu0 %v4016
  %4105 = vmatpush.bf16.msra.mxu0 %v4013
  %4106 = vmatpush.bf16.msra.mxu0 %v4010
  %4107 = vmatpush.bf16.msra.mxu0 %v4007
  %4108 = vmatpush.bf16.msra.mxu0 %v4004
  %4109 = vmatmul.bf16.gmra.mxu0 %v1015
  %v4110 = vpop.f32.mrf.mxu0
  %v4111 = vadd.f32 %v4098, %v4110
  %v4112 = vpop.f32.mrf.mxu0
  %4113 = vdwg.mxu0
  %4114 = vmatpush.bf16.msra.mxu0 0
  %4115 = vmatpush.bf16.msra.mxu0 0
  %4116 = vmatpush.bf16.msra.mxu0 0
  %4117 = vmatpush.bf16.msra.mxu0 0
  %4118 = vmatpush.bf16.msra.mxu0 0
  %4119 = vmatpush.bf16.msra.mxu0 0
  %4120 = vmatpush.bf16.msra.mxu0 %v4031
  %4121 = vmatpush.bf16.msra.mxu0 %v4028
  %4122 = vmatmul.bf16.gmra.mxu0 %v1307
  %v4123 = vpop.f32.mrf.mxu0
  %v4124 = vadd.f32 %v4111, %v4123
  %v4125 = vpop.f32.mrf.mxu0
  %4126 = vdwg.mxu0
  %4127 = vmatpush.bf16.msra.mxu0 %v4002
  %4128 = vmatpush.bf16.msra.mxu0 %v3999
  %4129 = vmatpush.bf16.msra.mxu0 %v3996
  %4130 = vmatpush.bf16.msra.mxu0 %v3993
  %4131 = vmatpush.bf16.msra.mxu0 %v3990
  %4132 = vmatpush.bf16.msra.mxu0 %v3987
  %4133 = vmatpush.bf16.msra.mxu0 %v3984
  %4134 = vmatpush.bf16.msra.mxu0 %v3981
  %4135 = vmatmul.bf16.gmra.mxu0 %v1014
  %v4136 = vpop.f32.mrf.mxu0
  %v4137 = vadd.f32 0.0, %v4136
  %v4138 = vpop.f32.mrf.mxu0
  %4139 = vdwg.mxu0
  %4140 = vmatpush.bf16.msra.mxu0 %v4026
  %4141 = vmatpush.bf16.msra.mxu0 %v4023
  %4142 = vmatpush.bf16.msra.mxu0 %v4020
  %4143 = vmatpush.bf16.msra.mxu0 %v4017
  %4144 = vmatpush.bf16.msra.mxu0 %v4014
  %4145 = vmatpush.bf16.msra.mxu0 %v4011
  %4146 = vmatpush.bf16.msra.mxu0 %v4008
  %4147 = vmatpush.bf16.msra.mxu0 %v4005
  %4148 = vmatmul.bf16.gmra.mxu0 %v1015
  %v4149 = vpop.f32.mrf.mxu0
  %v4150 = vadd.f32 %v4137, %v4149
  %v4151 = vpop.f32.mrf.mxu0
  %4152 = vdwg.mxu0
  %4153 = vmatpush.bf16.msra.mxu0 0
  %4154 = vmatpush.bf16.msra.mxu0 0
  %4155 = vmatpush.bf16.msra.mxu0 0
  %4156 = vmatpush.bf16.msra.mxu0 0
  %4157 = vmatpush.bf16.msra.mxu0 0
  %4158 = vmatpush.bf16.msra.mxu0 0
  %4159 = vmatpush.bf16.msra.mxu0 %v4032
  %4160 = vmatpush.bf16.msra.mxu0 %v4029
  %4161 = vmatmul.bf16.gmra.mxu0 %v1307
  %v4162 = vpop.f32.mrf.mxu0
  %v4163 = vadd.f32 %v4150, %v4162
  %v4164 = vpop.f32.mrf.mxu0
  %4165 = vdwg.mxu0
  %4166 = vmatpush.bf16.msra.mxu0 %v4003
  %4167 = vmatpush.bf16.msra.mxu0 %v4000
  %4168 = vmatpush.bf16.msra.mxu0 %v3997
  %4169 = vmatpush.bf16.msra.mxu0 %v3994
  %4170 = vmatpush.bf16.msra.mxu0 %v3991
  %4171 = vmatpush.bf16.msra.mxu0 %v3988
  %4172 = vmatpush.bf16.msra.mxu0 %v3985
  %4173 = vmatpush.bf16.msra.mxu0 %v3982
  %4174 = vmatmul.bf16.gmra.mxu0 %v1014
  %v4175 = vpop.f32.mrf.mxu0
  %v4176 = vadd.f32 0.0, %v4175
  %v4177 = vpop.f32.mrf.mxu0
  %4178 = vdwg.mxu0
  %4179 = vmatpush.bf16.msra.mxu0 %v4027
  %4180 = vmatpush.bf16.msra.mxu0 %v4024
  %4181 = vmatpush.bf16.msra.mxu0 %v4021
  %4182 = vmatpush.bf16.msra.mxu0 %v4018
  %4183 = vmatpush.bf16.msra.mxu0 %v4015
  %4184 = vmatpush.bf16.msra.mxu0 %v4012
  %4185 = vmatpush.bf16.msra.mxu0 %v4009
  %4186 = vmatpush.bf16.msra.mxu0 %v4006
  %4187 = vmatmul.bf16.gmra.mxu0 %v1015
  %v4188 = vpop.f32.mrf.mxu0
  %v4189 = vadd.f32 %v4176, %v4188
  %v4190 = vpop.f32.mrf.mxu0
  %4191 = vdwg.mxu0
  %4192 = vmatpush.bf16.msra.mxu0 0
  %4193 = vmatpush.bf16.msra.mxu0 0
  %4194 = vmatpush.bf16.msra.mxu0 0
  %4195 = vmatpush.bf16.msra.mxu0 0
  %4196 = vmatpush.bf16.msra.mxu0 0
  %4197 = vmatpush.bf16.msra.mxu0 0
  %4198 = vmatpush.bf16.msra.mxu0 %v4033
  %4199 = vmatpush.bf16.msra.mxu0 %v4030
  %4200 = vmatmul.bf16.gmra.mxu0 %v1307
  %v4201 = vpop.f32.mrf.mxu0
  %v4202 = vadd.f32 %v4189, %v4201
  %v4203 = vpop.f32.mrf.mxu0
  %4204 = vdwg.mxu0
  %v4205 = vpack.c.bf16 %v4124, %v4124
  %v4206 = vpack.c.bf16 %v4163, %v4163
  %v4207 = vpack.c.bf16 %v4202, %v4202
  %s4208 = scalar_lea.vmem %s4, 24
  %v4209 = vld [vmem:[%s4208] sm:$0xf]
  %v4211 = vsel %vm1840, %v4209, 0
  %v4214 = vsel %vm1844, %v4205, 0
  %v4217 = vsel %vm1844, %v4206, 0
  %v4220 = vsel %vm1844, %v4207, 0
  %4222 = vmatpush.bf16.msra.mxu0 0
  %4223 = vmatpush.bf16.msra.mxu0 0
  %4224 = vmatpush.bf16.msra.mxu0 0
  %4225 = vmatpush.bf16.msra.mxu0 0
  %4226 = vmatpush.bf16.msra.mxu0 0
  %4227 = vmatpush.bf16.msra.mxu0 0
  %4228 = vmatpush.bf16.msra.mxu0 0
  %4229 = vmatpush.bf16.msra.mxu0 %v4214
  %4230 = vmatmul.bf16.gmra.mxu0 %v4211
  %v4231 = vpop.f32.mrf.mxu0
  %v4232 = vadd.f32 0.0, %v4231
  %v4233 = vpop.f32.mrf.mxu0
  %4234 = vdwg.mxu0
  %4235 = vmatpush.bf16.msra.mxu0 0
  %4236 = vmatpush.bf16.msra.mxu0 0
  %4237 = vmatpush.bf16.msra.mxu0 0
  %4238 = vmatpush.bf16.msra.mxu0 0
  %4239 = vmatpush.bf16.msra.mxu0 0
  %4240 = vmatpush.bf16.msra.mxu0 0
  %4241 = vmatpush.bf16.msra.mxu0 0
  %4242 = vmatpush.bf16.msra.mxu0 %v4217
  %4243 = vmatmul.bf16.gmra.mxu0 %v4211
  %v4244 = vpop.f32.mrf.mxu0
  %v4245 = vadd.f32 0.0, %v4244
  %v4246 = vpop.f32.mrf.mxu0
  %4247 = vdwg.mxu0
  %4248 = vmatpush.bf16.msra.mxu0 0
  %4249 = vmatpush.bf16.msra.mxu0 0
  %4250 = vmatpush.bf16.msra.mxu0 0
  %4251 = vmatpush.bf16.msra.mxu0 0
  %4252 = vmatpush.bf16.msra.mxu0 0
  %4253 = vmatpush.bf16.msra.mxu0 0
  %4254 = vmatpush.bf16.msra.mxu0 0
  %4255 = vmatpush.bf16.msra.mxu0 %v4220
  %4256 = vmatmul.bf16.gmra.mxu0 %v4211
  %v4257 = vpop.f32.mrf.mxu0
  %v4258 = vadd.f32 0.0, %v4257
  %v4259 = vpop.f32.mrf.mxu0
  %4260 = vdwg.mxu0
  %v4261 = vadd.f32 %v3797, %v4232
  %v4262 = vadd.f32 %v3798, %v4245
  %v4263 = vadd.f32 %v3799, %v4258
  %v4336 = vunpack.c.l.b16 %v568
  %v4337 = vunpack.c.h.b16 %v568
  %v4338 = vunpack.c.l.b16 %v569
  %v4339 = vunpack.c.l.b16 %v570
  %v4340 = vunpack.c.h.b16 %v570
  %v4341 = vunpack.c.l.b16 %v571
  %v4342 = vunpack.c.l.b16 %v572
  %v4343 = vunpack.c.h.b16 %v572
  %v4344 = vunpack.c.l.b16 %v573
  %v4345 = vunpack.c.l.b16 %v574
  %v4346 = vunpack.c.h.b16 %v574
  %v4347 = vunpack.c.l.b16 %v575
  %v4348 = vunpack.c.l.b16 %v576
  %v4349 = vunpack.c.h.b16 %v576
  %v4350 = vunpack.c.l.b16 %v577
  %v4351 = vunpack.c.l.b16 %v578
  %v4352 = vunpack.c.h.b16 %v578
  %v4353 = vunpack.c.l.b16 %v579
  %v4354 = vunpack.c.l.b16 %v580
  %v4355 = vunpack.c.h.b16 %v580
  %v4356 = vunpack.c.l.b16 %v581
  %v4357 = vunpack.c.l.b16 %v582
  %v4358 = vunpack.c.h.b16 %v582
  %v4359 = vunpack.c.l.b16 %v583
  %v4360 = vunpack.c.l.b16 %v584
  %v4361 = vunpack.c.h.b16 %v584
  %v4362 = vunpack.c.l.b16 %v585
  %v4363 = vunpack.c.l.b16 %v586
  %v4364 = vunpack.c.h.b16 %v586
  %v4365 = vunpack.c.l.b16 %v587
  %v4366 = vunpack.c.l.b16 %v588
  %v4367 = vunpack.c.h.b16 %v588
  %v4368 = vunpack.c.l.b16 %v589
  %v4369 = vunpack.c.l.b16 %v590
  %v4370 = vunpack.c.h.b16 %v590
  %v4371 = vunpack.c.l.b16 %v591
  %v4372 = vunpack.c.l.b16 %v592
  %v4373 = vunpack.c.h.b16 %v592
  %v4374 = vunpack.c.l.b16 %v593
  %v4375 = vunpack.c.l.b16 %v594
  %v4376 = vunpack.c.h.b16 %v594
  %v4377 = vunpack.c.l.b16 %v595
  %v4378 = vunpack.c.l.b16 %v596
  %v4379 = vunpack.c.h.b16 %v596
  %v4380 = vunpack.c.l.b16 %v597
  %v4381 = vunpack.c.l.b16 %v598
  %v4382 = vunpack.c.h.b16 %v598
  %v4383 = vunpack.c.l.b16 %v599
  %v4384 = vunpack.c.l.b16 %v600
  %v4385 = vunpack.c.h.b16 %v600
  %v4386 = vunpack.c.l.b16 %v601
  %v4387 = vunpack.c.l.b16 %v602
  %v4388 = vunpack.c.h.b16 %v602
  %v4389 = vunpack.c.l.b16 %v603
  %v4390 = vunpack.c.l.b16 %v604
  %v4391 = vunpack.c.h.b16 %v604
  %v4392 = vunpack.c.l.b16 %v605
  %v4393 = vunpack.c.l.b16 %v606
  %v4394 = vunpack.c.h.b16 %v606
  %v4395 = vunpack.c.l.b16 %v607
  %v4396 = vunpack.c.l.b16 %v608
  %v4397 = vunpack.c.h.b16 %v608
  %v4398 = vunpack.c.l.b16 %v609
  %v4399 = vunpack.c.l.b16 %v610
  %v4400 = vunpack.c.h.b16 %v610
  %v4401 = vunpack.c.l.b16 %v611
  %v4402 = vunpack.c.l.b16 %v612
  %v4403 = vunpack.c.h.b16 %v612
  %v4404 = vunpack.c.l.b16 %v613
  %v4405 = vunpack.c.l.b16 %v614
  %v4406 = vunpack.c.h.b16 %v614
  %v4407 = vunpack.c.l.b16 %v615
  %v4408 = vunpack.c.l.b16 %v616
  %v4409 = vunpack.c.h.b16 %v616
  %v4410 = vunpack.c.l.b16 %v617
  %v4411 = vunpack.c.l.b16 %v618
  %v4412 = vunpack.c.h.b16 %v618
  %v4413 = vunpack.c.l.b16 %v619
  %v4414 = vunpack.c.l.b16 %v620
  %v4415 = vunpack.c.h.b16 %v620
  %v4416 = vunpack.c.l.b16 %v621
  %v4417 = vunpack.c.l.b16 %v622
  %v4418 = vunpack.c.h.b16 %v622
  %v4419 = vunpack.c.l.b16 %v623
  %v4420 = vunpack.c.l.b16 %v624
  %v4421 = vunpack.c.h.b16 %v624
  %v4422 = vunpack.c.l.b16 %v625
  %v4423 = vunpack.c.l.b16 %v626
  %v4424 = vunpack.c.h.b16 %v626
  %v4425 = vunpack.c.l.b16 %v627
  %v4426 = vunpack.c.l.b16 %v628
  %v4427 = vunpack.c.h.b16 %v628
  %v4428 = vunpack.c.l.b16 %v629
  %v4429 = vunpack.c.l.b16 %v630
  %v4430 = vunpack.c.h.b16 %v630
  %v4431 = vunpack.c.l.b16 %v631
  %v4432 = vunpack.c.l.b16 %v632
  %v4433 = vunpack.c.h.b16 %v632
  %v4434 = vunpack.c.l.b16 %v633
  %v4435 = vunpack.c.l.b16 %v634
  %v4436 = vunpack.c.h.b16 %v634
  %v4437 = vunpack.c.l.b16 %v635
  %v4438 = vunpack.c.l.b16 %v636
  %v4439 = vunpack.c.h.b16 %v636
  %v4440 = vunpack.c.l.b16 %v637
  %v4441 = vunpack.c.l.b16 %v638
  %v4442 = vunpack.c.h.b16 %v638
  %v4443 = vunpack.c.l.b16 %v639
  %v4444 = vpack.c.b16 %v4339, %v4336
  %v4445 = vpack.c.b16 %v4340, %v4337
  %v4446 = vpack.c.b16 %v4341, %v4338
  %v4447 = vpack.c.b16 %v4345, %v4342
  %v4448 = vpack.c.b16 %v4346, %v4343
  %v4449 = vpack.c.b16 %v4347, %v4344
  %v4450 = vpack.c.b16 %v4351, %v4348
  %v4451 = vpack.c.b16 %v4352, %v4349
  %v4452 = vpack.c.b16 %v4353, %v4350
  %v4453 = vpack.c.b16 %v4357, %v4354
  %v4454 = vpack.c.b16 %v4358, %v4355
  %v4455 = vpack.c.b16 %v4359, %v4356
  %v4456 = vpack.c.b16 %v4363, %v4360
  %v4457 = vpack.c.b16 %v4364, %v4361
  %v4458 = vpack.c.b16 %v4365, %v4362
  %v4459 = vpack.c.b16 %v4369, %v4366
  %v4460 = vpack.c.b16 %v4370, %v4367
  %v4461 = vpack.c.b16 %v4371, %v4368
  %v4462 = vpack.c.b16 %v4375, %v4372
  %v4463 = vpack.c.b16 %v4376, %v4373
  %v4464 = vpack.c.b16 %v4377, %v4374
  %v4465 = vpack.c.b16 %v4381, %v4378
  %v4466 = vpack.c.b16 %v4382, %v4379
  %v4467 = vpack.c.b16 %v4383, %v4380
  %v4468 = vpack.c.b16 %v4387, %v4384
  %v4469 = vpack.c.b16 %v4388, %v4385
  %v4470 = vpack.c.b16 %v4389, %v4386
  %v4471 = vpack.c.b16 %v4393, %v4390
  %v4472 = vpack.c.b16 %v4394, %v4391
  %v4473 = vpack.c.b16 %v4395, %v4392
  %v4474 = vpack.c.b16 %v4399, %v4396
  %v4475 = vpack.c.b16 %v4400, %v4397
  %v4476 = vpack.c.b16 %v4401, %v4398
  %v4477 = vpack.c.b16 %v4405, %v4402
  %v4478 = vpack.c.b16 %v4406, %v4403
  %v4479 = vpack.c.b16 %v4407, %v4404
  %v4480 = vpack.c.b16 %v4411, %v4408
  %v4481 = vpack.c.b16 %v4412, %v4409
  %v4482 = vpack.c.b16 %v4413, %v4410
  %v4483 = vpack.c.b16 %v4417, %v4414
  %v4484 = vpack.c.b16 %v4418, %v4415
  %v4485 = vpack.c.b16 %v4419, %v4416
  %v4486 = vpack.c.b16 %v4423, %v4420
  %v4487 = vpack.c.b16 %v4424, %v4421
  %v4488 = vpack.c.b16 %v4425, %v4422
  %v4489 = vpack.c.b16 %v4429, %v4426
  %v4490 = vpack.c.b16 %v4430, %v4427
  %v4491 = vpack.c.b16 %v4431, %v4428
  %v4492 = vpack.c.b16 %v4435, %v4432
  %v4493 = vpack.c.b16 %v4436, %v4433
  %v4494 = vpack.c.b16 %v4437, %v4434
  %v4495 = vpack.c.b16 %v4441, %v4438
  %v4496 = vpack.c.b16 %v4442, %v4439
  %v4497 = vpack.c.b16 %v4443, %v4440
  %4552 = vmatpush.bf16.msra.mxu0 %v4465
  %4553 = vmatpush.bf16.msra.mxu0 %v4462
  %4554 = vmatpush.bf16.msra.mxu0 %v4459
  %4555 = vmatpush.bf16.msra.mxu0 %v4456
  %4556 = vmatpush.bf16.msra.mxu0 %v4453
  %4557 = vmatpush.bf16.msra.mxu0 %v4450
  %4558 = vmatpush.bf16.msra.mxu0 %v4447
  %4559 = vmatpush.bf16.msra.mxu0 %v4444
  %4560 = vmatmul.bf16.gmra.mxu0 %v1014
  %v4561 = vpop.f32.mrf.mxu0
  %v4562 = vadd.f32 0.0, %v4561
  %v4563 = vpop.f32.mrf.mxu0
  %4564 = vdwg.mxu0
  %4565 = vmatpush.bf16.msra.mxu0 %v4489
  %4566 = vmatpush.bf16.msra.mxu0 %v4486
  %4567 = vmatpush.bf16.msra.mxu0 %v4483
  %4568 = vmatpush.bf16.msra.mxu0 %v4480
  %4569 = vmatpush.bf16.msra.mxu0 %v4477
  %4570 = vmatpush.bf16.msra.mxu0 %v4474
  %4571 = vmatpush.bf16.msra.mxu0 %v4471
  %4572 = vmatpush.bf16.msra.mxu0 %v4468
  %4573 = vmatmul.bf16.gmra.mxu0 %v1015
  %v4574 = vpop.f32.mrf.mxu0
  %v4575 = vadd.f32 %v4562, %v4574
  %v4576 = vpop.f32.mrf.mxu0
  %4577 = vdwg.mxu0
  %4578 = vmatpush.bf16.msra.mxu0 0
  %4579 = vmatpush.bf16.msra.mxu0 0
  %4580 = vmatpush.bf16.msra.mxu0 0
  %4581 = vmatpush.bf16.msra.mxu0 0
  %4582 = vmatpush.bf16.msra.mxu0 0
  %4583 = vmatpush.bf16.msra.mxu0 0
  %4584 = vmatpush.bf16.msra.mxu0 %v4495
  %4585 = vmatpush.bf16.msra.mxu0 %v4492
  %4586 = vmatmul.bf16.gmra.mxu0 %v1307
  %v4587 = vpop.f32.mrf.mxu0
  %v4588 = vadd.f32 %v4575, %v4587
  %v4589 = vpop.f32.mrf.mxu0
  %4590 = vdwg.mxu0
  %4591 = vmatpush.bf16.msra.mxu0 %v4466
  %4592 = vmatpush.bf16.msra.mxu0 %v4463
  %4593 = vmatpush.bf16.msra.mxu0 %v4460
  %4594 = vmatpush.bf16.msra.mxu0 %v4457
  %4595 = vmatpush.bf16.msra.mxu0 %v4454
  %4596 = vmatpush.bf16.msra.mxu0 %v4451
  %4597 = vmatpush.bf16.msra.mxu0 %v4448
  %4598 = vmatpush.bf16.msra.mxu0 %v4445
  %4599 = vmatmul.bf16.gmra.mxu0 %v1014
  %v4600 = vpop.f32.mrf.mxu0
  %v4601 = vadd.f32 0.0, %v4600
  %v4602 = vpop.f32.mrf.mxu0
  %4603 = vdwg.mxu0
  %4604 = vmatpush.bf16.msra.mxu0 %v4490
  %4605 = vmatpush.bf16.msra.mxu0 %v4487
  %4606 = vmatpush.bf16.msra.mxu0 %v4484
  %4607 = vmatpush.bf16.msra.mxu0 %v4481
  %4608 = vmatpush.bf16.msra.mxu0 %v4478
  %4609 = vmatpush.bf16.msra.mxu0 %v4475
  %4610 = vmatpush.bf16.msra.mxu0 %v4472
  %4611 = vmatpush.bf16.msra.mxu0 %v4469
  %4612 = vmatmul.bf16.gmra.mxu0 %v1015
  %v4613 = vpop.f32.mrf.mxu0
  %v4614 = vadd.f32 %v4601, %v4613
  %v4615 = vpop.f32.mrf.mxu0
  %4616 = vdwg.mxu0
  %4617 = vmatpush.bf16.msra.mxu0 0
  %4618 = vmatpush.bf16.msra.mxu0 0
  %4619 = vmatpush.bf16.msra.mxu0 0
  %4620 = vmatpush.bf16.msra.mxu0 0
  %4621 = vmatpush.bf16.msra.mxu0 0
  %4622 = vmatpush.bf16.msra.mxu0 0
  %4623 = vmatpush.bf16.msra.mxu0 %v4496
  %4624 = vmatpush.bf16.msra.mxu0 %v4493
  %4625 = vmatmul.bf16.gmra.mxu0 %v1307
  %v4626 = vpop.f32.mrf.mxu0
  %v4627 = vadd.f32 %v4614, %v4626
  %v4628 = vpop.f32.mrf.mxu0
  %4629 = vdwg.mxu0
  %4630 = vmatpush.bf16.msra.mxu0 %v4467
  %4631 = vmatpush.bf16.msra.mxu0 %v4464
  %4632 = vmatpush.bf16.msra.mxu0 %v4461
  %4633 = vmatpush.bf16.msra.mxu0 %v4458
  %4634 = vmatpush.bf16.msra.mxu0 %v4455
  %4635 = vmatpush.bf16.msra.mxu0 %v4452
  %4636 = vmatpush.bf16.msra.mxu0 %v4449
  %4637 = vmatpush.bf16.msra.mxu0 %v4446
  %4638 = vmatmul.bf16.gmra.mxu0 %v1014
  %v4639 = vpop.f32.mrf.mxu0
  %v4640 = vadd.f32 0.0, %v4639
  %v4641 = vpop.f32.mrf.mxu0
  %4642 = vdwg.mxu0
  %4643 = vmatpush.bf16.msra.mxu0 %v4491
  %4644 = vmatpush.bf16.msra.mxu0 %v4488
  %4645 = vmatpush.bf16.msra.mxu0 %v4485
  %4646 = vmatpush.bf16.msra.mxu0 %v4482
  %4647 = vmatpush.bf16.msra.mxu0 %v4479
  %4648 = vmatpush.bf16.msra.mxu0 %v4476
  %4649 = vmatpush.bf16.msra.mxu0 %v4473
  %4650 = vmatpush.bf16.msra.mxu0 %v4470
  %4651 = vmatmul.bf16.gmra.mxu0 %v1015
  %v4652 = vpop.f32.mrf.mxu0
  %v4653 = vadd.f32 %v4640, %v4652
  %v4654 = vpop.f32.mrf.mxu0
  %4655 = vdwg.mxu0
  %4656 = vmatpush.bf16.msra.mxu0 0
  %4657 = vmatpush.bf16.msra.mxu0 0
  %4658 = vmatpush.bf16.msra.mxu0 0
  %4659 = vmatpush.bf16.msra.mxu0 0
  %4660 = vmatpush.bf16.msra.mxu0 0
  %4661 = vmatpush.bf16.msra.mxu0 0
  %4662 = vmatpush.bf16.msra.mxu0 %v4497
  %4663 = vmatpush.bf16.msra.mxu0 %v4494
  %4664 = vmatmul.bf16.gmra.mxu0 %v1307
  %v4665 = vpop.f32.mrf.mxu0
  %v4666 = vadd.f32 %v4653, %v4665
  %v4667 = vpop.f32.mrf.mxu0
  %4668 = vdwg.mxu0
  %v4669 = vpack.c.bf16 %v4588, %v4588
  %v4670 = vpack.c.bf16 %v4627, %v4627
  %v4671 = vpack.c.bf16 %v4666, %v4666
  %s4672 = scalar_lea.vmem %s4, 28
  %v4673 = vld [vmem:[%s4672] sm:$0xf]
  %v4675 = vsel %vm1840, %v4673, 0
  %v4678 = vsel %vm1844, %v4669, 0
  %v4681 = vsel %vm1844, %v4670, 0
  %v4684 = vsel %vm1844, %v4671, 0
  %4686 = vmatpush.bf16.msra.mxu0 0
  %4687 = vmatpush.bf16.msra.mxu0 0
  %4688 = vmatpush.bf16.msra.mxu0 0
  %4689 = vmatpush.bf16.msra.mxu0 0
  %4690 = vmatpush.bf16.msra.mxu0 0
  %4691 = vmatpush.bf16.msra.mxu0 0
  %4692 = vmatpush.bf16.msra.mxu0 0
  %4693 = vmatpush.bf16.msra.mxu0 %v4678
  %4694 = vmatmul.bf16.gmra.mxu0 %v4675
  %v4695 = vpop.f32.mrf.mxu0
  %v4696 = vadd.f32 0.0, %v4695
  %v4697 = vpop.f32.mrf.mxu0
  %4698 = vdwg.mxu0
  %4699 = vmatpush.bf16.msra.mxu0 0
  %4700 = vmatpush.bf16.msra.mxu0 0
  %4701 = vmatpush.bf16.msra.mxu0 0
  %4702 = vmatpush.bf16.msra.mxu0 0
  %4703 = vmatpush.bf16.msra.mxu0 0
  %4704 = vmatpush.bf16.msra.mxu0 0
  %4705 = vmatpush.bf16.msra.mxu0 0
  %4706 = vmatpush.bf16.msra.mxu0 %v4681
  %4707 = vmatmul.bf16.gmra.mxu0 %v4675
  %v4708 = vpop.f32.mrf.mxu0
  %v4709 = vadd.f32 0.0, %v4708
  %v4710 = vpop.f32.mrf.mxu0
  %4711 = vdwg.mxu0
  %4712 = vmatpush.bf16.msra.mxu0 0
  %4713 = vmatpush.bf16.msra.mxu0 0
  %4714 = vmatpush.bf16.msra.mxu0 0
  %4715 = vmatpush.bf16.msra.mxu0 0
  %4716 = vmatpush.bf16.msra.mxu0 0
  %4717 = vmatpush.bf16.msra.mxu0 0
  %4718 = vmatpush.bf16.msra.mxu0 0
  %4719 = vmatpush.bf16.msra.mxu0 %v4684
  %4720 = vmatmul.bf16.gmra.mxu0 %v4675
  %v4721 = vpop.f32.mrf.mxu0
  %v4722 = vadd.f32 0.0, %v4721
  %v4723 = vpop.f32.mrf.mxu0
  %4724 = vdwg.mxu0
  %v4725 = vadd.f32 %v4261, %v4696
  %v4726 = vadd.f32 %v4262, %v4709
  %v4727 = vadd.f32 %v4263, %v4722
  %v4800 = vunpack.c.l.b16 %v641
  %v4801 = vunpack.c.h.b16 %v641
  %v4802 = vunpack.c.l.b16 %v642
  %v4803 = vunpack.c.l.b16 %v643
  %v4804 = vunpack.c.h.b16 %v643
  %v4805 = vunpack.c.l.b16 %v644
  %v4806 = vunpack.c.l.b16 %v645
  %v4807 = vunpack.c.h.b16 %v645
  %v4808 = vunpack.c.l.b16 %v646
  %v4809 = vunpack.c.l.b16 %v647
  %v4810 = vunpack.c.h.b16 %v647
  %v4811 = vunpack.c.l.b16 %v648
  %v4812 = vunpack.c.l.b16 %v649
  %v4813 = vunpack.c.h.b16 %v649
  %v4814 = vunpack.c.l.b16 %v650
  %v4815 = vunpack.c.l.b16 %v651
  %v4816 = vunpack.c.h.b16 %v651
  %v4817 = vunpack.c.l.b16 %v652
  %v4818 = vunpack.c.l.b16 %v653
  %v4819 = vunpack.c.h.b16 %v653
  %v4820 = vunpack.c.l.b16 %v654
  %v4821 = vunpack.c.l.b16 %v655
  %v4822 = vunpack.c.h.b16 %v655
  %v4823 = vunpack.c.l.b16 %v656
  %v4824 = vunpack.c.l.b16 %v657
  %v4825 = vunpack.c.h.b16 %v657
  %v4826 = vunpack.c.l.b16 %v658
  %v4827 = vunpack.c.l.b16 %v659
  %v4828 = vunpack.c.h.b16 %v659
  %v4829 = vunpack.c.l.b16 %v660
  %v4830 = vunpack.c.l.b16 %v661
  %v4831 = vunpack.c.h.b16 %v661
  %v4832 = vunpack.c.l.b16 %v662
  %v4833 = vunpack.c.l.b16 %v663
  %v4834 = vunpack.c.h.b16 %v663
  %v4835 = vunpack.c.l.b16 %v664
  %v4836 = vunpack.c.l.b16 %v665
  %v4837 = vunpack.c.h.b16 %v665
  %v4838 = vunpack.c.l.b16 %v666
  %v4839 = vunpack.c.l.b16 %v667
  %v4840 = vunpack.c.h.b16 %v667
  %v4841 = vunpack.c.l.b16 %v668
  %v4842 = vunpack.c.l.b16 %v669
  %v4843 = vunpack.c.h.b16 %v669
  %v4844 = vunpack.c.l.b16 %v670
  %v4845 = vunpack.c.l.b16 %v671
  %v4846 = vunpack.c.h.b16 %v671
  %v4847 = vunpack.c.l.b16 %v672
  %v4848 = vunpack.c.l.b16 %v673
  %v4849 = vunpack.c.h.b16 %v673
  %v4850 = vunpack.c.l.b16 %v674
  %v4851 = vunpack.c.l.b16 %v675
  %v4852 = vunpack.c.h.b16 %v675
  %v4853 = vunpack.c.l.b16 %v676
  %v4854 = vunpack.c.l.b16 %v677
  %v4855 = vunpack.c.h.b16 %v677
  %v4856 = vunpack.c.l.b16 %v678
  %v4857 = vunpack.c.l.b16 %v679
  %v4858 = vunpack.c.h.b16 %v679
  %v4859 = vunpack.c.l.b16 %v680
  %v4860 = vunpack.c.l.b16 %v681
  %v4861 = vunpack.c.h.b16 %v681
  %v4862 = vunpack.c.l.b16 %v682
  %v4863 = vunpack.c.l.b16 %v683
  %v4864 = vunpack.c.h.b16 %v683
  %v4865 = vunpack.c.l.b16 %v684
  %v4866 = vunpack.c.l.b16 %v685
  %v4867 = vunpack.c.h.b16 %v685
  %v4868 = vunpack.c.l.b16 %v686
  %v4869 = vunpack.c.l.b16 %v687
  %v4870 = vunpack.c.h.b16 %v687
  %v4871 = vunpack.c.l.b16 %v688
  %v4872 = vunpack.c.l.b16 %v689
  %v4873 = vunpack.c.h.b16 %v689
  %v4874 = vunpack.c.l.b16 %v690
  %v4875 = vunpack.c.l.b16 %v691
  %v4876 = vunpack.c.h.b16 %v691
  %v4877 = vunpack.c.l.b16 %v692
  %v4878 = vunpack.c.l.b16 %v693
  %v4879 = vunpack.c.h.b16 %v693
  %v4880 = vunpack.c.l.b16 %v694
  %v4881 = vunpack.c.l.b16 %v695
  %v4882 = vunpack.c.h.b16 %v695
  %v4883 = vunpack.c.l.b16 %v696
  %v4884 = vunpack.c.l.b16 %v697
  %v4885 = vunpack.c.h.b16 %v697
  %v4886 = vunpack.c.l.b16 %v698
  %v4887 = vunpack.c.l.b16 %v699
  %v4888 = vunpack.c.h.b16 %v699
  %v4889 = vunpack.c.l.b16 %v700
  %v4890 = vunpack.c.l.b16 %v701
  %v4891 = vunpack.c.h.b16 %v701
  %v4892 = vunpack.c.l.b16 %v702
  %v4893 = vunpack.c.l.b16 %v703
  %v4894 = vunpack.c.h.b16 %v703
  %v4895 = vunpack.c.l.b16 %v704
  %v4896 = vunpack.c.l.b16 %v705
  %v4897 = vunpack.c.h.b16 %v705
  %v4898 = vunpack.c.l.b16 %v706
  %v4899 = vunpack.c.l.b16 %v707
  %v4900 = vunpack.c.h.b16 %v707
  %v4901 = vunpack.c.l.b16 %v708
  %v4902 = vunpack.c.l.b16 %v709
  %v4903 = vunpack.c.h.b16 %v709
  %v4904 = vunpack.c.l.b16 %v710
  %v4905 = vunpack.c.l.b16 %v711
  %v4906 = vunpack.c.h.b16 %v711
  %v4907 = vunpack.c.l.b16 %v712
  %v4908 = vpack.c.b16 %v4803, %v4800
  %v4909 = vpack.c.b16 %v4804, %v4801
  %v4910 = vpack.c.b16 %v4805, %v4802
  %v4911 = vpack.c.b16 %v4809, %v4806
  %v4912 = vpack.c.b16 %v4810, %v4807
  %v4913 = vpack.c.b16 %v4811, %v4808
  %v4914 = vpack.c.b16 %v4815, %v4812
  %v4915 = vpack.c.b16 %v4816, %v4813
  %v4916 = vpack.c.b16 %v4817, %v4814
  %v4917 = vpack.c.b16 %v4821, %v4818
  %v4918 = vpack.c.b16 %v4822, %v4819
  %v4919 = vpack.c.b16 %v4823, %v4820
  %v4920 = vpack.c.b16 %v4827, %v4824
  %v4921 = vpack.c.b16 %v4828, %v4825
  %v4922 = vpack.c.b16 %v4829, %v4826
  %v4923 = vpack.c.b16 %v4833, %v4830
  %v4924 = vpack.c.b16 %v4834, %v4831
  %v4925 = vpack.c.b16 %v4835, %v4832
  %v4926 = vpack.c.b16 %v4839, %v4836
  %v4927 = vpack.c.b16 %v4840, %v4837
  %v4928 = vpack.c.b16 %v4841, %v4838
  %v4929 = vpack.c.b16 %v4845, %v4842
  %v4930 = vpack.c.b16 %v4846, %v4843
  %v4931 = vpack.c.b16 %v4847, %v4844
  %v4932 = vpack.c.b16 %v4851, %v4848
  %v4933 = vpack.c.b16 %v4852, %v4849
  %v4934 = vpack.c.b16 %v4853, %v4850
  %v4935 = vpack.c.b16 %v4857, %v4854
  %v4936 = vpack.c.b16 %v4858, %v4855
  %v4937 = vpack.c.b16 %v4859, %v4856
  %v4938 = vpack.c.b16 %v4863, %v4860
  %v4939 = vpack.c.b16 %v4864, %v4861
  %v4940 = vpack.c.b16 %v4865, %v4862
  %v4941 = vpack.c.b16 %v4869, %v4866
  %v4942 = vpack.c.b16 %v4870, %v4867
  %v4943 = vpack.c.b16 %v4871, %v4868
  %v4944 = vpack.c.b16 %v4875, %v4872
  %v4945 = vpack.c.b16 %v4876, %v4873
  %v4946 = vpack.c.b16 %v4877, %v4874
  %v4947 = vpack.c.b16 %v4881, %v4878
  %v4948 = vpack.c.b16 %v4882, %v4879
  %v4949 = vpack.c.b16 %v4883, %v4880
  %v4950 = vpack.c.b16 %v4887, %v4884
  %v4951 = vpack.c.b16 %v4888, %v4885
  %v4952 = vpack.c.b16 %v4889, %v4886
  %v4953 = vpack.c.b16 %v4893, %v4890
  %v4954 = vpack.c.b16 %v4894, %v4891
  %v4955 = vpack.c.b16 %v4895, %v4892
  %v4956 = vpack.c.b16 %v4899, %v4896
  %v4957 = vpack.c.b16 %v4900, %v4897
  %v4958 = vpack.c.b16 %v4901, %v4898
  %v4959 = vpack.c.b16 %v4905, %v4902
  %v4960 = vpack.c.b16 %v4906, %v4903
  %v4961 = vpack.c.b16 %v4907, %v4904
  %5016 = vmatpush.bf16.msra.mxu0 %v4929
  %5017 = vmatpush.bf16.msra.mxu0 %v4926
  %5018 = vmatpush.bf16.msra.mxu0 %v4923
  %5019 = vmatpush.bf16.msra.mxu0 %v4920
  %5020 = vmatpush.bf16.msra.mxu0 %v4917
  %5021 = vmatpush.bf16.msra.mxu0 %v4914
  %5022 = vmatpush.bf16.msra.mxu0 %v4911
  %5023 = vmatpush.bf16.msra.mxu0 %v4908
  %5024 = vmatmul.bf16.gmra.mxu0 %v1014
  %v5025 = vpop.f32.mrf.mxu0
  %v5026 = vadd.f32 0.0, %v5025
  %v5027 = vpop.f32.mrf.mxu0
  %5028 = vdwg.mxu0
  %5029 = vmatpush.bf16.msra.mxu0 %v4953
  %5030 = vmatpush.bf16.msra.mxu0 %v4950
  %5031 = vmatpush.bf16.msra.mxu0 %v4947
  %5032 = vmatpush.bf16.msra.mxu0 %v4944
  %5033 = vmatpush.bf16.msra.mxu0 %v4941
  %5034 = vmatpush.bf16.msra.mxu0 %v4938
  %5035 = vmatpush.bf16.msra.mxu0 %v4935
  %5036 = vmatpush.bf16.msra.mxu0 %v4932
  %5037 = vmatmul.bf16.gmra.mxu0 %v1015
  %v5038 = vpop.f32.mrf.mxu0
  %v5039 = vadd.f32 %v5026, %v5038
  %v5040 = vpop.f32.mrf.mxu0
  %5041 = vdwg.mxu0
  %5042 = vmatpush.bf16.msra.mxu0 0
  %5043 = vmatpush.bf16.msra.mxu0 0
  %5044 = vmatpush.bf16.msra.mxu0 0
  %5045 = vmatpush.bf16.msra.mxu0 0
  %5046 = vmatpush.bf16.msra.mxu0 0
  %5047 = vmatpush.bf16.msra.mxu0 0
  %5048 = vmatpush.bf16.msra.mxu0 %v4959
  %5049 = vmatpush.bf16.msra.mxu0 %v4956
  %5050 = vmatmul.bf16.gmra.mxu0 %v1307
  %v5051 = vpop.f32.mrf.mxu0
  %v5052 = vadd.f32 %v5039, %v5051
  %v5053 = vpop.f32.mrf.mxu0
  %5054 = vdwg.mxu0
  %5055 = vmatpush.bf16.msra.mxu0 %v4930
  %5056 = vmatpush.bf16.msra.mxu0 %v4927
  %5057 = vmatpush.bf16.msra.mxu0 %v4924
  %5058 = vmatpush.bf16.msra.mxu0 %v4921
  %5059 = vmatpush.bf16.msra.mxu0 %v4918
  %5060 = vmatpush.bf16.msra.mxu0 %v4915
  %5061 = vmatpush.bf16.msra.mxu0 %v4912
  %5062 = vmatpush.bf16.msra.mxu0 %v4909
  %5063 = vmatmul.bf16.gmra.mxu0 %v1014
  %v5064 = vpop.f32.mrf.mxu0
  %v5065 = vadd.f32 0.0, %v5064
  %v5066 = vpop.f32.mrf.mxu0
  %5067 = vdwg.mxu0
  %5068 = vmatpush.bf16.msra.mxu0 %v4954
  %5069 = vmatpush.bf16.msra.mxu0 %v4951
  %5070 = vmatpush.bf16.msra.mxu0 %v4948
  %5071 = vmatpush.bf16.msra.mxu0 %v4945
  %5072 = vmatpush.bf16.msra.mxu0 %v4942
  %5073 = vmatpush.bf16.msra.mxu0 %v4939
  %5074 = vmatpush.bf16.msra.mxu0 %v4936
  %5075 = vmatpush.bf16.msra.mxu0 %v4933
  %5076 = vmatmul.bf16.gmra.mxu0 %v1015
  %v5077 = vpop.f32.mrf.mxu0
  %v5078 = vadd.f32 %v5065, %v5077
  %v5079 = vpop.f32.mrf.mxu0
  %5080 = vdwg.mxu0
  %5081 = vmatpush.bf16.msra.mxu0 0
  %5082 = vmatpush.bf16.msra.mxu0 0
  %5083 = vmatpush.bf16.msra.mxu0 0
  %5084 = vmatpush.bf16.msra.mxu0 0
  %5085 = vmatpush.bf16.msra.mxu0 0
  %5086 = vmatpush.bf16.msra.mxu0 0
  %5087 = vmatpush.bf16.msra.mxu0 %v4960
  %5088 = vmatpush.bf16.msra.mxu0 %v4957
  %5089 = vmatmul.bf16.gmra.mxu0 %v1307
  %v5090 = vpop.f32.mrf.mxu0
  %v5091 = vadd.f32 %v5078, %v5090
  %v5092 = vpop.f32.mrf.mxu0
  %5093 = vdwg.mxu0
  %5094 = vmatpush.bf16.msra.mxu0 %v4931
  %5095 = vmatpush.bf16.msra.mxu0 %v4928
  %5096 = vmatpush.bf16.msra.mxu0 %v4925
  %5097 = vmatpush.bf16.msra.mxu0 %v4922
  %5098 = vmatpush.bf16.msra.mxu0 %v4919
  %5099 = vmatpush.bf16.msra.mxu0 %v4916
  %5100 = vmatpush.bf16.msra.mxu0 %v4913
  %5101 = vmatpush.bf16.msra.mxu0 %v4910
  %5102 = vmatmul.bf16.gmra.mxu0 %v1014
  %v5103 = vpop.f32.mrf.mxu0
  %v5104 = vadd.f32 0.0, %v5103
  %v5105 = vpop.f32.mrf.mxu0
  %5106 = vdwg.mxu0
  %5107 = vmatpush.bf16.msra.mxu0 %v4955
  %5108 = vmatpush.bf16.msra.mxu0 %v4952
  %5109 = vmatpush.bf16.msra.mxu0 %v4949
  %5110 = vmatpush.bf16.msra.mxu0 %v4946
  %5111 = vmatpush.bf16.msra.mxu0 %v4943
  %5112 = vmatpush.bf16.msra.mxu0 %v4940
  %5113 = vmatpush.bf16.msra.mxu0 %v4937
  %5114 = vmatpush.bf16.msra.mxu0 %v4934
  %5115 = vmatmul.bf16.gmra.mxu0 %v1015
  %v5116 = vpop.f32.mrf.mxu0
  %v5117 = vadd.f32 %v5104, %v5116
  %v5118 = vpop.f32.mrf.mxu0
  %5119 = vdwg.mxu0
  %5120 = vmatpush.bf16.msra.mxu0 0
  %5121 = vmatpush.bf16.msra.mxu0 0
  %5122 = vmatpush.bf16.msra.mxu0 0
  %5123 = vmatpush.bf16.msra.mxu0 0
  %5124 = vmatpush.bf16.msra.mxu0 0
  %5125 = vmatpush.bf16.msra.mxu0 0
  %5126 = vmatpush.bf16.msra.mxu0 %v4961
  %5127 = vmatpush.bf16.msra.mxu0 %v4958
  %5128 = vmatmul.bf16.gmra.mxu0 %v1307
  %v5129 = vpop.f32.mrf.mxu0
  %v5130 = vadd.f32 %v5117, %v5129
  %v5131 = vpop.f32.mrf.mxu0
  %5132 = vdwg.mxu0
  %v5133 = vpack.c.bf16 %v5052, %v5052
  %v5134 = vpack.c.bf16 %v5091, %v5091
  %v5135 = vpack.c.bf16 %v5130, %v5130
  %s5136 = scalar_lea.vmem %s4, 32
  %v5137 = vld [vmem:[%s5136] sm:$0xf]
  %v5139 = vsel %vm1840, %v5137, 0
  %v5142 = vsel %vm1844, %v5133, 0
  %v5145 = vsel %vm1844, %v5134, 0
  %v5148 = vsel %vm1844, %v5135, 0
  %5150 = vmatpush.bf16.msra.mxu0 0
  %5151 = vmatpush.bf16.msra.mxu0 0
  %5152 = vmatpush.bf16.msra.mxu0 0
  %5153 = vmatpush.bf16.msra.mxu0 0
  %5154 = vmatpush.bf16.msra.mxu0 0
  %5155 = vmatpush.bf16.msra.mxu0 0
  %5156 = vmatpush.bf16.msra.mxu0 0
  %5157 = vmatpush.bf16.msra.mxu0 %v5142
  %5158 = vmatmul.bf16.gmra.mxu0 %v5139
  %v5159 = vpop.f32.mrf.mxu0
  %v5160 = vadd.f32 0.0, %v5159
  %v5161 = vpop.f32.mrf.mxu0
  %5162 = vdwg.mxu0
  %5163 = vmatpush.bf16.msra.mxu0 0
  %5164 = vmatpush.bf16.msra.mxu0 0
  %5165 = vmatpush.bf16.msra.mxu0 0
  %5166 = vmatpush.bf16.msra.mxu0 0
  %5167 = vmatpush.bf16.msra.mxu0 0
  %5168 = vmatpush.bf16.msra.mxu0 0
  %5169 = vmatpush.bf16.msra.mxu0 0
  %5170 = vmatpush.bf16.msra.mxu0 %v5145
  %5171 = vmatmul.bf16.gmra.mxu0 %v5139
  %v5172 = vpop.f32.mrf.mxu0
  %v5173 = vadd.f32 0.0, %v5172
  %v5174 = vpop.f32.mrf.mxu0
  %5175 = vdwg.mxu0
  %5176 = vmatpush.bf16.msra.mxu0 0
  %5177 = vmatpush.bf16.msra.mxu0 0
  %5178 = vmatpush.bf16.msra.mxu0 0
  %5179 = vmatpush.bf16.msra.mxu0 0
  %5180 = vmatpush.bf16.msra.mxu0 0
  %5181 = vmatpush.bf16.msra.mxu0 0
  %5182 = vmatpush.bf16.msra.mxu0 0
  %5183 = vmatpush.bf16.msra.mxu0 %v5148
  %5184 = vmatmul.bf16.gmra.mxu0 %v5139
  %v5185 = vpop.f32.mrf.mxu0
  %v5186 = vadd.f32 0.0, %v5185
  %v5187 = vpop.f32.mrf.mxu0
  %5188 = vdwg.mxu0
  %v5189 = vadd.f32 %v4725, %v5160
  %v5190 = vadd.f32 %v4726, %v5173
  %v5191 = vadd.f32 %v4727, %v5186
  %v5192 = vld [vmem:[%s5] sm:$0xff]
  %5194 = vset.pattern.permute.xlu0 0
  %5195 = vperm.xlu0 %5194, %v5192
  %v5196 = vpop.permute.xlu0 %5195
  %v5198 = vadd.f32 %v5189, %v5196
  %v5199 = vadd.f32 %v5190, %v5196
  %v5200 = vadd.f32 %v5191, %v5196
  %v5201 = vmax.f32 %v5198, 0.0
  %v5202 = vmax.f32 %v5199, 0.0
  %v5203 = vmax.f32 %v5200, 0.0
  %v5204 = vpack.c.bf16 %v5201, %v5201
  %v5205 = vpack.c.bf16 %v5202, %v5202
  %v5206 = vpack.c.bf16 %v5203, %v5203
  %v5208 = vsel %vm1305, %v5206, 0
  %5210 = vmatpush.bf16.msra.mxu0 %v1218
  %5211 = vmatpush.bf16.msra.mxu0 %v1215
  %5212 = vmatpush.bf16.msra.mxu0 %v1212
  %5213 = vmatpush.bf16.msra.mxu0 %v1209
  %5214 = vmatpush.bf16.msra.mxu0 %v1206
  %5215 = vmatpush.bf16.msra.mxu0 %v1203
  %5216 = vmatpush.bf16.msra.mxu0 %v1200
  %5217 = vmatpush.bf16.msra.mxu0 %v1197
  %5218 = vmatmul.bf16.gmra.mxu0 %v5204
  %v5219 = vpop.f32.mrf.mxu0
  %v5220 = vadd.f32 0.0, %v5219
  %v5221 = vpop.f32.mrf.mxu0
  %5222 = vdwg.mxu0
  %5223 = vmatpush.bf16.msra.mxu0 %v1242
  %5224 = vmatpush.bf16.msra.mxu0 %v1239
  %5225 = vmatpush.bf16.msra.mxu0 %v1236
  %5226 = vmatpush.bf16.msra.mxu0 %v1233
  %5227 = vmatpush.bf16.msra.mxu0 %v1230
  %5228 = vmatpush.bf16.msra.mxu0 %v1227
  %5229 = vmatpush.bf16.msra.mxu0 %v1224
  %5230 = vmatpush.bf16.msra.mxu0 %v1221
  %5231 = vmatmul.bf16.gmra.mxu0 %v5205
  %v5232 = vpop.f32.mrf.mxu0
  %v5233 = vadd.f32 %v5220, %v5232
  %v5234 = vpop.f32.mrf.mxu0
  %5235 = vdwg.mxu0
  %5236 = vmatpush.bf16.msra.mxu0 0
  %5237 = vmatpush.bf16.msra.mxu0 0
  %5238 = vmatpush.bf16.msra.mxu0 0
  %5239 = vmatpush.bf16.msra.mxu0 0
  %5240 = vmatpush.bf16.msra.mxu0 0
  %5241 = vmatpush.bf16.msra.mxu0 0
  %5242 = vmatpush.bf16.msra.mxu0 %v1248
  %5243 = vmatpush.bf16.msra.mxu0 %v1245
  %5244 = vmatmul.bf16.gmra.mxu0 %v5208
  %v5245 = vpop.f32.mrf.mxu0
  %v5246 = vadd.f32 %v5233, %v5245
  %v5247 = vpop.f32.mrf.mxu0
  %5248 = vdwg.mxu0
  %5249 = vmatpush.bf16.msra.mxu0 %v1219
  %5250 = vmatpush.bf16.msra.mxu0 %v1216
  %5251 = vmatpush.bf16.msra.mxu0 %v1213
  %5252 = vmatpush.bf16.msra.mxu0 %v1210
  %5253 = vmatpush.bf16.msra.mxu0 %v1207
  %5254 = vmatpush.bf16.msra.mxu0 %v1204
  %5255 = vmatpush.bf16.msra.mxu0 %v1201
  %5256 = vmatpush.bf16.msra.mxu0 %v1198
  %5257 = vmatmul.bf16.gmra.mxu0 %v5204
  %v5258 = vpop.f32.mrf.mxu0
  %v5259 = vadd.f32 0.0, %v5258
  %v5260 = vpop.f32.mrf.mxu0
  %5261 = vdwg.mxu0
  %5262 = vmatpush.bf16.msra.mxu0 %v1243
  %5263 = vmatpush.bf16.msra.mxu0 %v1240
  %5264 = vmatpush.bf16.msra.mxu0 %v1237
  %5265 = vmatpush.bf16.msra.mxu0 %v1234
  %5266 = vmatpush.bf16.msra.mxu0 %v1231
  %5267 = vmatpush.bf16.msra.mxu0 %v1228
  %5268 = vmatpush.bf16.msra.mxu0 %v1225
  %5269 = vmatpush.bf16.msra.mxu0 %v1222
  %5270 = vmatmul.bf16.gmra.mxu0 %v5205
  %v5271 = vpop.f32.mrf.mxu0
  %v5272 = vadd.f32 %v5259, %v5271
  %v5273 = vpop.f32.mrf.mxu0
  %5274 = vdwg.mxu0
  %5275 = vmatpush.bf16.msra.mxu0 0
  %5276 = vmatpush.bf16.msra.mxu0 0
  %5277 = vmatpush.bf16.msra.mxu0 0
  %5278 = vmatpush.bf16.msra.mxu0 0
  %5279 = vmatpush.bf16.msra.mxu0 0
  %5280 = vmatpush.bf16.msra.mxu0 0
  %5281 = vmatpush.bf16.msra.mxu0 %v1249
  %5282 = vmatpush.bf16.msra.mxu0 %v1246
  %5283 = vmatmul.bf16.gmra.mxu0 %v5208
  %v5284 = vpop.f32.mrf.mxu0
  %v5285 = vadd.f32 %v5272, %v5284
  %v5286 = vpop.f32.mrf.mxu0
  %5287 = vdwg.mxu0
  %5288 = vmatpush.bf16.msra.mxu0 %v1220
  %5289 = vmatpush.bf16.msra.mxu0 %v1217
  %5290 = vmatpush.bf16.msra.mxu0 %v1214
  %5291 = vmatpush.bf16.msra.mxu0 %v1211
  %5292 = vmatpush.bf16.msra.mxu0 %v1208
  %5293 = vmatpush.bf16.msra.mxu0 %v1205
  %5294 = vmatpush.bf16.msra.mxu0 %v1202
  %5295 = vmatpush.bf16.msra.mxu0 %v1199
  %5296 = vmatmul.bf16.gmra.mxu0 %v5204
  %v5297 = vpop.f32.mrf.mxu0
  %v5298 = vadd.f32 0.0, %v5297
  %v5299 = vpop.f32.mrf.mxu0
  %5300 = vdwg.mxu0
  %5301 = vmatpush.bf16.msra.mxu0 %v1244
  %5302 = vmatpush.bf16.msra.mxu0 %v1241
  %5303 = vmatpush.bf16.msra.mxu0 %v1238
  %5304 = vmatpush.bf16.msra.mxu0 %v1235
  %5305 = vmatpush.bf16.msra.mxu0 %v1232
  %5306 = vmatpush.bf16.msra.mxu0 %v1229
  %5307 = vmatpush.bf16.msra.mxu0 %v1226
  %5308 = vmatpush.bf16.msra.mxu0 %v1223
  %5309 = vmatmul.bf16.gmra.mxu0 %v5205
  %v5310 = vpop.f32.mrf.mxu0
  %v5311 = vadd.f32 %v5298, %v5310
  %v5312 = vpop.f32.mrf.mxu0
  %5313 = vdwg.mxu0
  %5314 = vmatpush.bf16.msra.mxu0 0
  %5315 = vmatpush.bf16.msra.mxu0 0
  %5316 = vmatpush.bf16.msra.mxu0 0
  %5317 = vmatpush.bf16.msra.mxu0 0
  %5318 = vmatpush.bf16.msra.mxu0 0
  %5319 = vmatpush.bf16.msra.mxu0 0
  %5320 = vmatpush.bf16.msra.mxu0 %v1250
  %5321 = vmatpush.bf16.msra.mxu0 %v1247
  %5322 = vmatmul.bf16.gmra.mxu0 %v5208
  %v5323 = vpop.f32.mrf.mxu0
  %v5324 = vadd.f32 %v5311, %v5323
  %v5325 = vpop.f32.mrf.mxu0
  %5326 = vdwg.mxu0
  %v5327 = vpack.c.bf16 %v5246, %v5246
  %v5328 = vpack.c.bf16 %v5285, %v5285
  %v5329 = vpack.c.bf16 %v5324, %v5324
  %v5330 = vld [vmem:[%s6] sm:$0xf]
  %5331 = vmatpush.bf16.msra.mxu0 %v1631
  %5332 = vmatpush.bf16.msra.mxu0 %v1628
  %5333 = vmatpush.bf16.msra.mxu0 %v1625
  %5334 = vmatpush.bf16.msra.mxu0 %v1622
  %5335 = vmatpush.bf16.msra.mxu0 %v1619
  %5336 = vmatpush.bf16.msra.mxu0 %v1616
  %5337 = vmatpush.bf16.msra.mxu0 %v1613
  %5338 = vmatpush.bf16.msra.mxu0 %v1610
  %5339 = vmatmul.bf16.gmra.mxu0 %v5204
  %v5340 = vpop.f32.mrf.mxu0
  %v5341 = vadd.f32 0.0, %v5340
  %v5342 = vpop.f32.mrf.mxu0
  %5343 = vdwg.mxu0
  %5344 = vmatpush.bf16.msra.mxu0 %v1655
  %5345 = vmatpush.bf16.msra.mxu0 %v1652
  %5346 = vmatpush.bf16.msra.mxu0 %v1649
  %5347 = vmatpush.bf16.msra.mxu0 %v1646
  %5348 = vmatpush.bf16.msra.mxu0 %v1643
  %5349 = vmatpush.bf16.msra.mxu0 %v1640
  %5350 = vmatpush.bf16.msra.mxu0 %v1637
  %5351 = vmatpush.bf16.msra.mxu0 %v1634
  %5352 = vmatmul.bf16.gmra.mxu0 %v5205
  %v5353 = vpop.f32.mrf.mxu0
  %v5354 = vadd.f32 %v5341, %v5353
  %v5355 = vpop.f32.mrf.mxu0
  %5356 = vdwg.mxu0
  %5357 = vmatpush.bf16.msra.mxu0 0
  %5358 = vmatpush.bf16.msra.mxu0 0
  %5359 = vmatpush.bf16.msra.mxu0 0
  %5360 = vmatpush.bf16.msra.mxu0 0
  %5361 = vmatpush.bf16.msra.mxu0 0
  %5362 = vmatpush.bf16.msra.mxu0 0
  %5363 = vmatpush.bf16.msra.mxu0 %v1661
  %5364 = vmatpush.bf16.msra.mxu0 %v1658
  %5365 = vmatmul.bf16.gmra.mxu0 %v5208
  %v5366 = vpop.f32.mrf.mxu0
  %v5367 = vadd.f32 %v5354, %v5366
  %v5368 = vpop.f32.mrf.mxu0
  %5369 = vdwg.mxu0
  %5370 = vmatpush.bf16.msra.mxu0 %v1632
  %5371 = vmatpush.bf16.msra.mxu0 %v1629
  %5372 = vmatpush.bf16.msra.mxu0 %v1626
  %5373 = vmatpush.bf16.msra.mxu0 %v1623
  %5374 = vmatpush.bf16.msra.mxu0 %v1620
  %5375 = vmatpush.bf16.msra.mxu0 %v1617
  %5376 = vmatpush.bf16.msra.mxu0 %v1614
  %5377 = vmatpush.bf16.msra.mxu0 %v1611
  %5378 = vmatmul.bf16.gmra.mxu0 %v5204
  %v5379 = vpop.f32.mrf.mxu0
  %v5380 = vadd.f32 0.0, %v5379
  %v5381 = vpop.f32.mrf.mxu0
  %5382 = vdwg.mxu0
  %5383 = vmatpush.bf16.msra.mxu0 %v1656
  %5384 = vmatpush.bf16.msra.mxu0 %v1653
  %5385 = vmatpush.bf16.msra.mxu0 %v1650
  %5386 = vmatpush.bf16.msra.mxu0 %v1647
  %5387 = vmatpush.bf16.msra.mxu0 %v1644
  %5388 = vmatpush.bf16.msra.mxu0 %v1641
  %5389 = vmatpush.bf16.msra.mxu0 %v1638
  %5390 = vmatpush.bf16.msra.mxu0 %v1635
  %5391 = vmatmul.bf16.gmra.mxu0 %v5205
  %v5392 = vpop.f32.mrf.mxu0
  %v5393 = vadd.f32 %v5380, %v5392
  %v5394 = vpop.f32.mrf.mxu0
  %5395 = vdwg.mxu0
  %5396 = vmatpush.bf16.msra.mxu0 0
  %5397 = vmatpush.bf16.msra.mxu0 0
  %5398 = vmatpush.bf16.msra.mxu0 0
  %5399 = vmatpush.bf16.msra.mxu0 0
  %5400 = vmatpush.bf16.msra.mxu0 0
  %5401 = vmatpush.bf16.msra.mxu0 0
  %5402 = vmatpush.bf16.msra.mxu0 %v1662
  %5403 = vmatpush.bf16.msra.mxu0 %v1659
  %5404 = vmatmul.bf16.gmra.mxu0 %v5208
  %v5405 = vpop.f32.mrf.mxu0
  %v5406 = vadd.f32 %v5393, %v5405
  %v5407 = vpop.f32.mrf.mxu0
  %5408 = vdwg.mxu0
  %5409 = vmatpush.bf16.msra.mxu0 %v1633
  %5410 = vmatpush.bf16.msra.mxu0 %v1630
  %5411 = vmatpush.bf16.msra.mxu0 %v1627
  %5412 = vmatpush.bf16.msra.mxu0 %v1624
  %5413 = vmatpush.bf16.msra.mxu0 %v1621
  %5414 = vmatpush.bf16.msra.mxu0 %v1618
  %5415 = vmatpush.bf16.msra.mxu0 %v1615
  %5416 = vmatpush.bf16.msra.mxu0 %v1612
  %5417 = vmatmul.bf16.gmra.mxu0 %v5204
  %v5418 = vpop.f32.mrf.mxu0
  %v5419 = vadd.f32 0.0, %v5418
  %v5420 = vpop.f32.mrf.mxu0
  %5421 = vdwg.mxu0
  %5422 = vmatpush.bf16.msra.mxu0 %v1657
  %5423 = vmatpush.bf16.msra.mxu0 %v1654
  %5424 = vmatpush.bf16.msra.mxu0 %v1651
  %5425 = vmatpush.bf16.msra.mxu0 %v1648
  %5426 = vmatpush.bf16.msra.mxu0 %v1645
  %5427 = vmatpush.bf16.msra.mxu0 %v1642
  %5428 = vmatpush.bf16.msra.mxu0 %v1639
  %5429 = vmatpush.bf16.msra.mxu0 %v1636
  %5430 = vmatmul.bf16.gmra.mxu0 %v5205
  %v5431 = vpop.f32.mrf.mxu0
  %v5432 = vadd.f32 %v5419, %v5431
  %v5433 = vpop.f32.mrf.mxu0
  %5434 = vdwg.mxu0
  %5435 = vmatpush.bf16.msra.mxu0 0
  %5436 = vmatpush.bf16.msra.mxu0 0
  %5437 = vmatpush.bf16.msra.mxu0 0
  %5438 = vmatpush.bf16.msra.mxu0 0
  %5439 = vmatpush.bf16.msra.mxu0 0
  %5440 = vmatpush.bf16.msra.mxu0 0
  %5441 = vmatpush.bf16.msra.mxu0 %v1663
  %5442 = vmatpush.bf16.msra.mxu0 %v1660
  %5443 = vmatmul.bf16.gmra.mxu0 %v5208
  %v5444 = vpop.f32.mrf.mxu0
  %v5445 = vadd.f32 %v5432, %v5444
  %v5446 = vpop.f32.mrf.mxu0
  %5447 = vdwg.mxu0
  %v5448 = vpack.c.bf16 %v5367, %v5367
  %v5449 = vpack.c.bf16 %v5406, %v5406
  %v5450 = vpack.c.bf16 %v5445, %v5445
  %s5451 = scalar_lea.vmem %s6, 4
  %v5452 = vld [vmem:[%s5451] sm:$0xf]
  %v5454 = vsel %vm1840, %v5452, 0
  %v5457 = vsel %vm1844, %v5448, 0
  %v5460 = vsel %vm1844, %v5449, 0
  %v5463 = vsel %vm1844, %v5450, 0
  %5465 = vmatpush.bf16.msra.mxu0 0
  %5466 = vmatpush.bf16.msra.mxu0 0
  %5467 = vmatpush.bf16.msra.mxu0 0
  %5468 = vmatpush.bf16.msra.mxu0 0
  %5469 = vmatpush.bf16.msra.mxu0 0
  %5470 = vmatpush.bf16.msra.mxu0 0
  %5471 = vmatpush.bf16.msra.mxu0 0
  %5472 = vmatpush.bf16.msra.mxu0 %v5457
  %5473 = vmatmul.bf16.gmra.mxu0 %v5454
  %v5474 = vpop.f32.mrf.mxu0
  %v5475 = vadd.f32 0.0, %v5474
  %v5476 = vpop.f32.mrf.mxu0
  %5477 = vdwg.mxu0
  %5478 = vmatpush.bf16.msra.mxu0 0
  %5479 = vmatpush.bf16.msra.mxu0 0
  %5480 = vmatpush.bf16.msra.mxu0 0
  %5481 = vmatpush.bf16.msra.mxu0 0
  %5482 = vmatpush.bf16.msra.mxu0 0
  %5483 = vmatpush.bf16.msra.mxu0 0
  %5484 = vmatpush.bf16.msra.mxu0 0
  %5485 = vmatpush.bf16.msra.mxu0 %v5460
  %5486 = vmatmul.bf16.gmra.mxu0 %v5454
  %v5487 = vpop.f32.mrf.mxu0
  %v5488 = vadd.f32 0.0, %v5487
  %v5489 = vpop.f32.mrf.mxu0
  %5490 = vdwg.mxu0
  %5491 = vmatpush.bf16.msra.mxu0 0
  %5492 = vmatpush.bf16.msra.mxu0 0
  %5493 = vmatpush.bf16.msra.mxu0 0
  %5494 = vmatpush.bf16.msra.mxu0 0
  %5495 = vmatpush.bf16.msra.mxu0 0
  %5496 = vmatpush.bf16.msra.mxu0 0
  %5497 = vmatpush.bf16.msra.mxu0 0
  %5498 = vmatpush.bf16.msra.mxu0 %v5463
  %5499 = vmatmul.bf16.gmra.mxu0 %v5454
  %v5500 = vpop.f32.mrf.mxu0
  %v5501 = vadd.f32 0.0, %v5500
  %v5502 = vpop.f32.mrf.mxu0
  %5503 = vdwg.mxu0
  %v5505 = vsel %vm1840, %v5330, 0
  %v5508 = vsel %vm1844, %v5327, 0
  %v5511 = vsel %vm1844, %v5328, 0
  %v5514 = vsel %vm1844, %v5329, 0
  %5516 = vmatpush.bf16.msra.mxu0 0
  %5517 = vmatpush.bf16.msra.mxu0 0
  %5518 = vmatpush.bf16.msra.mxu0 0
  %5519 = vmatpush.bf16.msra.mxu0 0
  %5520 = vmatpush.bf16.msra.mxu0 0
  %5521 = vmatpush.bf16.msra.mxu0 0
  %5522 = vmatpush.bf16.msra.mxu0 0
  %5523 = vmatpush.bf16.msra.mxu0 %v5508
  %5524 = vmatmul.bf16.gmra.mxu0 %v5505
  %v5525 = vpop.f32.mrf.mxu0
  %v5526 = vadd.f32 %v5475, %v5525
  %v5527 = vpop.f32.mrf.mxu0
  %5528 = vdwg.mxu0
  %5529 = vmatpush.bf16.msra.mxu0 0
  %5530 = vmatpush.bf16.msra.mxu0 0
  %5531 = vmatpush.bf16.msra.mxu0 0
  %5532 = vmatpush.bf16.msra.mxu0 0
  %5533 = vmatpush.bf16.msra.mxu0 0
  %5534 = vmatpush.bf16.msra.mxu0 0
  %5535 = vmatpush.bf16.msra.mxu0 0
  %5536 = vmatpush.bf16.msra.mxu0 %v5511
  %5537 = vmatmul.bf16.gmra.mxu0 %v5505
  %v5538 = vpop.f32.mrf.mxu0
  %v5539 = vadd.f32 %v5488, %v5538
  %v5540 = vpop.f32.mrf.mxu0
  %5541 = vdwg.mxu0
  %5542 = vmatpush.bf16.msra.mxu0 0
  %5543 = vmatpush.bf16.msra.mxu0 0
  %5544 = vmatpush.bf16.msra.mxu0 0
  %5545 = vmatpush.bf16.msra.mxu0 0
  %5546 = vmatpush.bf16.msra.mxu0 0
  %5547 = vmatpush.bf16.msra.mxu0 0
  %5548 = vmatpush.bf16.msra.mxu0 0
  %5549 = vmatpush.bf16.msra.mxu0 %v5514
  %5550 = vmatmul.bf16.gmra.mxu0 %v5505
  %v5551 = vpop.f32.mrf.mxu0
  %v5552 = vadd.f32 %v5501, %v5551
  %v5553 = vpop.f32.mrf.mxu0
  %5554 = vdwg.mxu0
  %5555 = vmatpush.bf16.msra.mxu0 %v2145
  %5556 = vmatpush.bf16.msra.mxu0 %v2142
  %5557 = vmatpush.bf16.msra.mxu0 %v2139
  %5558 = vmatpush.bf16.msra.mxu0 %v2136
  %5559 = vmatpush.bf16.msra.mxu0 %v2133
  %5560 = vmatpush.bf16.msra.mxu0 %v2130
  %5561 = vmatpush.bf16.msra.mxu0 %v2127
  %5562 = vmatpush.bf16.msra.mxu0 %v2124
  %5563 = vmatmul.bf16.gmra.mxu0 %v5204
  %v5564 = vpop.f32.mrf.mxu0
  %v5565 = vadd.f32 0.0, %v5564
  %v5566 = vpop.f32.mrf.mxu0
  %5567 = vdwg.mxu0
  %5568 = vmatpush.bf16.msra.mxu0 %v2169
  %5569 = vmatpush.bf16.msra.mxu0 %v2166
  %5570 = vmatpush.bf16.msra.mxu0 %v2163
  %5571 = vmatpush.bf16.msra.mxu0 %v2160
  %5572 = vmatpush.bf16.msra.mxu0 %v2157
  %5573 = vmatpush.bf16.msra.mxu0 %v2154
  %5574 = vmatpush.bf16.msra.mxu0 %v2151
  %5575 = vmatpush.bf16.msra.mxu0 %v2148
  %5576 = vmatmul.bf16.gmra.mxu0 %v5205
  %v5577 = vpop.f32.mrf.mxu0
  %v5578 = vadd.f32 %v5565, %v5577
  %v5579 = vpop.f32.mrf.mxu0
  %5580 = vdwg.mxu0
  %5581 = vmatpush.bf16.msra.mxu0 0
  %5582 = vmatpush.bf16.msra.mxu0 0
  %5583 = vmatpush.bf16.msra.mxu0 0
  %5584 = vmatpush.bf16.msra.mxu0 0
  %5585 = vmatpush.bf16.msra.mxu0 0
  %5586 = vmatpush.bf16.msra.mxu0 0
  %5587 = vmatpush.bf16.msra.mxu0 %v2175
  %5588 = vmatpush.bf16.msra.mxu0 %v2172
  %5589 = vmatmul.bf16.gmra.mxu0 %v5208
  %v5590 = vpop.f32.mrf.mxu0
  %v5591 = vadd.f32 %v5578, %v5590
  %v5592 = vpop.f32.mrf.mxu0
  %5593 = vdwg.mxu0
  %5594 = vmatpush.bf16.msra.mxu0 %v2146
  %5595 = vmatpush.bf16.msra.mxu0 %v2143
  %5596 = vmatpush.bf16.msra.mxu0 %v2140
  %5597 = vmatpush.bf16.msra.mxu0 %v2137
  %5598 = vmatpush.bf16.msra.mxu0 %v2134
  %5599 = vmatpush.bf16.msra.mxu0 %v2131
  %5600 = vmatpush.bf16.msra.mxu0 %v2128
  %5601 = vmatpush.bf16.msra.mxu0 %v2125
  %5602 = vmatmul.bf16.gmra.mxu0 %v5204
  %v5603 = vpop.f32.mrf.mxu0
  %v5604 = vadd.f32 0.0, %v5603
  %v5605 = vpop.f32.mrf.mxu0
  %5606 = vdwg.mxu0
  %5607 = vmatpush.bf16.msra.mxu0 %v2170
  %5608 = vmatpush.bf16.msra.mxu0 %v2167
  %5609 = vmatpush.bf16.msra.mxu0 %v2164
  %5610 = vmatpush.bf16.msra.mxu0 %v2161
  %5611 = vmatpush.bf16.msra.mxu0 %v2158
  %5612 = vmatpush.bf16.msra.mxu0 %v2155
  %5613 = vmatpush.bf16.msra.mxu0 %v2152
  %5614 = vmatpush.bf16.msra.mxu0 %v2149
  %5615 = vmatmul.bf16.gmra.mxu0 %v5205
  %v5616 = vpop.f32.mrf.mxu0
  %v5617 = vadd.f32 %v5604, %v5616
  %v5618 = vpop.f32.mrf.mxu0
  %5619 = vdwg.mxu0
  %5620 = vmatpush.bf16.msra.mxu0 0
  %5621 = vmatpush.bf16.msra.mxu0 0
  %5622 = vmatpush.bf16.msra.mxu0 0
  %5623 = vmatpush.bf16.msra.mxu0 0
  %5624 = vmatpush.bf16.msra.mxu0 0
  %5625 = vmatpush.bf16.msra.mxu0 0
  %5626 = vmatpush.bf16.msra.mxu0 %v2176
  %5627 = vmatpush.bf16.msra.mxu0 %v2173
  %5628 = vmatmul.bf16.gmra.mxu0 %v5208
  %v5629 = vpop.f32.mrf.mxu0
  %v5630 = vadd.f32 %v5617, %v5629
  %v5631 = vpop.f32.mrf.mxu0
  %5632 = vdwg.mxu0
  %5633 = vmatpush.bf16.msra.mxu0 %v2147
  %5634 = vmatpush.bf16.msra.mxu0 %v2144
  %5635 = vmatpush.bf16.msra.mxu0 %v2141
  %5636 = vmatpush.bf16.msra.mxu0 %v2138
  %5637 = vmatpush.bf16.msra.mxu0 %v2135
  %5638 = vmatpush.bf16.msra.mxu0 %v2132
  %5639 = vmatpush.bf16.msra.mxu0 %v2129
  %5640 = vmatpush.bf16.msra.mxu0 %v2126
  %5641 = vmatmul.bf16.gmra.mxu0 %v5204
  %v5642 = vpop.f32.mrf.mxu0
  %v5643 = vadd.f32 0.0, %v5642
  %v5644 = vpop.f32.mrf.mxu0
  %5645 = vdwg.mxu0
  %5646 = vmatpush.bf16.msra.mxu0 %v2171
  %5647 = vmatpush.bf16.msra.mxu0 %v2168
  %5648 = vmatpush.bf16.msra.mxu0 %v2165
  %5649 = vmatpush.bf16.msra.mxu0 %v2162
  %5650 = vmatpush.bf16.msra.mxu0 %v2159
  %5651 = vmatpush.bf16.msra.mxu0 %v2156
  %5652 = vmatpush.bf16.msra.mxu0 %v2153
  %5653 = vmatpush.bf16.msra.mxu0 %v2150
  %5654 = vmatmul.bf16.gmra.mxu0 %v5205
  %v5655 = vpop.f32.mrf.mxu0
  %v5656 = vadd.f32 %v5643, %v5655
  %v5657 = vpop.f32.mrf.mxu0
  %5658 = vdwg.mxu0
  %5659 = vmatpush.bf16.msra.mxu0 0
  %5660 = vmatpush.bf16.msra.mxu0 0
  %5661 = vmatpush.bf16.msra.mxu0 0
  %5662 = vmatpush.bf16.msra.mxu0 0
  %5663 = vmatpush.bf16.msra.mxu0 0
  %5664 = vmatpush.bf16.msra.mxu0 0
  %5665 = vmatpush.bf16.msra.mxu0 %v2177
  %5666 = vmatpush.bf16.msra.mxu0 %v2174
  %5667 = vmatmul.bf16.gmra.mxu0 %v5208
  %v5668 = vpop.f32.mrf.mxu0
  %v5669 = vadd.f32 %v5656, %v5668
  %v5670 = vpop.f32.mrf.mxu0
  %5671 = vdwg.mxu0
  %v5672 = vpack.c.bf16 %v5591, %v5591
  %v5673 = vpack.c.bf16 %v5630, %v5630
  %v5674 = vpack.c.bf16 %v5669, %v5669
  %s5675 = scalar_lea.vmem %s6, 8
  %v5676 = vld [vmem:[%s5675] sm:$0xf]
  %v5678 = vsel %vm1840, %v5676, 0
  %v5681 = vsel %vm1844, %v5672, 0
  %v5684 = vsel %vm1844, %v5673, 0
  %v5687 = vsel %vm1844, %v5674, 0
  %5689 = vmatpush.bf16.msra.mxu0 0
  %5690 = vmatpush.bf16.msra.mxu0 0
  %5691 = vmatpush.bf16.msra.mxu0 0
  %5692 = vmatpush.bf16.msra.mxu0 0
  %5693 = vmatpush.bf16.msra.mxu0 0
  %5694 = vmatpush.bf16.msra.mxu0 0
  %5695 = vmatpush.bf16.msra.mxu0 0
  %5696 = vmatpush.bf16.msra.mxu0 %v5681
  %5697 = vmatmul.bf16.gmra.mxu0 %v5678
  %v5698 = vpop.f32.mrf.mxu0
  %v5699 = vadd.f32 0.0, %v5698
  %v5700 = vpop.f32.mrf.mxu0
  %5701 = vdwg.mxu0
  %5702 = vmatpush.bf16.msra.mxu0 0
  %5703 = vmatpush.bf16.msra.mxu0 0
  %5704 = vmatpush.bf16.msra.mxu0 0
  %5705 = vmatpush.bf16.msra.mxu0 0
  %5706 = vmatpush.bf16.msra.mxu0 0
  %5707 = vmatpush.bf16.msra.mxu0 0
  %5708 = vmatpush.bf16.msra.mxu0 0
  %5709 = vmatpush.bf16.msra.mxu0 %v5684
  %5710 = vmatmul.bf16.gmra.mxu0 %v5678
  %v5711 = vpop.f32.mrf.mxu0
  %v5712 = vadd.f32 0.0, %v5711
  %v5713 = vpop.f32.mrf.mxu0
  %5714 = vdwg.mxu0
  %5715 = vmatpush.bf16.msra.mxu0 0
  %5716 = vmatpush.bf16.msra.mxu0 0
  %5717 = vmatpush.bf16.msra.mxu0 0
  %5718 = vmatpush.bf16.msra.mxu0 0
  %5719 = vmatpush.bf16.msra.mxu0 0
  %5720 = vmatpush.bf16.msra.mxu0 0
  %5721 = vmatpush.bf16.msra.mxu0 0
  %5722 = vmatpush.bf16.msra.mxu0 %v5687
  %5723 = vmatmul.bf16.gmra.mxu0 %v5678
  %v5724 = vpop.f32.mrf.mxu0
  %v5725 = vadd.f32 0.0, %v5724
  %v5726 = vpop.f32.mrf.mxu0
  %5727 = vdwg.mxu0
  %v5728 = vadd.f32 %v5526, %v5699
  %v5729 = vadd.f32 %v5539, %v5712
  %v5730 = vadd.f32 %v5552, %v5725
  %5731 = vmatpush.bf16.msra.mxu0 %v2609
  %5732 = vmatpush.bf16.msra.mxu0 %v2606
  %5733 = vmatpush.bf16.msra.mxu0 %v2603
  %5734 = vmatpush.bf16.msra.mxu0 %v2600
  %5735 = vmatpush.bf16.msra.mxu0 %v2597
  %5736 = vmatpush.bf16.msra.mxu0 %v2594
  %5737 = vmatpush.bf16.msra.mxu0 %v2591
  %5738 = vmatpush.bf16.msra.mxu0 %v2588
  %5739 = vmatmul.bf16.gmra.mxu0 %v5204
  %v5740 = vpop.f32.mrf.mxu0
  %v5741 = vadd.f32 0.0, %v5740
  %v5742 = vpop.f32.mrf.mxu0
  %5743 = vdwg.mxu0
  %5744 = vmatpush.bf16.msra.mxu0 %v2633
  %5745 = vmatpush.bf16.msra.mxu0 %v2630
  %5746 = vmatpush.bf16.msra.mxu0 %v2627
  %5747 = vmatpush.bf16.msra.mxu0 %v2624
  %5748 = vmatpush.bf16.msra.mxu0 %v2621
  %5749 = vmatpush.bf16.msra.mxu0 %v2618
  %5750 = vmatpush.bf16.msra.mxu0 %v2615
  %5751 = vmatpush.bf16.msra.mxu0 %v2612
  %5752 = vmatmul.bf16.gmra.mxu0 %v5205
  %v5753 = vpop.f32.mrf.mxu0
  %v5754 = vadd.f32 %v5741, %v5753
  %v5755 = vpop.f32.mrf.mxu0
  %5756 = vdwg.mxu0
  %5757 = vmatpush.bf16.msra.mxu0 0
  %5758 = vmatpush.bf16.msra.mxu0 0
  %5759 = vmatpush.bf16.msra.mxu0 0
  %5760 = vmatpush.bf16.msra.mxu0 0
  %5761 = vmatpush.bf16.msra.mxu0 0
  %5762 = vmatpush.bf16.msra.mxu0 0
  %5763 = vmatpush.bf16.msra.mxu0 %v2639
  %5764 = vmatpush.bf16.msra.mxu0 %v2636
  %5765 = vmatmul.bf16.gmra.mxu0 %v5208
  %v5766 = vpop.f32.mrf.mxu0
  %v5767 = vadd.f32 %v5754, %v5766
  %v5768 = vpop.f32.mrf.mxu0
  %5769 = vdwg.mxu0
  %5770 = vmatpush.bf16.msra.mxu0 %v2610
  %5771 = vmatpush.bf16.msra.mxu0 %v2607
  %5772 = vmatpush.bf16.msra.mxu0 %v2604
  %5773 = vmatpush.bf16.msra.mxu0 %v2601
  %5774 = vmatpush.bf16.msra.mxu0 %v2598
  %5775 = vmatpush.bf16.msra.mxu0 %v2595
  %5776 = vmatpush.bf16.msra.mxu0 %v2592
  %5777 = vmatpush.bf16.msra.mxu0 %v2589
  %5778 = vmatmul.bf16.gmra.mxu0 %v5204
  %v5779 = vpop.f32.mrf.mxu0
  %v5780 = vadd.f32 0.0, %v5779
  %v5781 = vpop.f32.mrf.mxu0
  %5782 = vdwg.mxu0
  %5783 = vmatpush.bf16.msra.mxu0 %v2634
  %5784 = vmatpush.bf16.msra.mxu0 %v2631
  %5785 = vmatpush.bf16.msra.mxu0 %v2628
  %5786 = vmatpush.bf16.msra.mxu0 %v2625
  %5787 = vmatpush.bf16.msra.mxu0 %v2622
  %5788 = vmatpush.bf16.msra.mxu0 %v2619
  %5789 = vmatpush.bf16.msra.mxu0 %v2616
  %5790 = vmatpush.bf16.msra.mxu0 %v2613
  %5791 = vmatmul.bf16.gmra.mxu0 %v5205
  %v5792 = vpop.f32.mrf.mxu0
  %v5793 = vadd.f32 %v5780, %v5792
  %v5794 = vpop.f32.mrf.mxu0
  %5795 = vdwg.mxu0
  %5796 = vmatpush.bf16.msra.mxu0 0
  %5797 = vmatpush.bf16.msra.mxu0 0
  %5798 = vmatpush.bf16.msra.mxu0 0
  %5799 = vmatpush.bf16.msra.mxu0 0
  %5800 = vmatpush.bf16.msra.mxu0 0
  %5801 = vmatpush.bf16.msra.mxu0 0
  %5802 = vmatpush.bf16.msra.mxu0 %v2640
  %5803 = vmatpush.bf16.msra.mxu0 %v2637
  %5804 = vmatmul.bf16.gmra.mxu0 %v5208
  %v5805 = vpop.f32.mrf.mxu0
  %v5806 = vadd.f32 %v5793, %v5805
  %v5807 = vpop.f32.mrf.mxu0
  %5808 = vdwg.mxu0
  %5809 = vmatpush.bf16.msra.mxu0 %v2611
  %5810 = vmatpush.bf16.msra.mxu0 %v2608
  %5811 = vmatpush.bf16.msra.mxu0 %v2605
  %5812 = vmatpush.bf16.msra.mxu0 %v2602
  %5813 = vmatpush.bf16.msra.mxu0 %v2599
  %5814 = vmatpush.bf16.msra.mxu0 %v2596
  %5815 = vmatpush.bf16.msra.mxu0 %v2593
  %5816 = vmatpush.bf16.msra.mxu0 %v2590
  %5817 = vmatmul.bf16.gmra.mxu0 %v5204
  %v5818 = vpop.f32.mrf.mxu0
  %v5819 = vadd.f32 0.0, %v5818
  %v5820 = vpop.f32.mrf.mxu0
  %5821 = vdwg.mxu0
  %5822 = vmatpush.bf16.msra.mxu0 %v2635
  %5823 = vmatpush.bf16.msra.mxu0 %v2632
  %5824 = vmatpush.bf16.msra.mxu0 %v2629
  %5825 = vmatpush.bf16.msra.mxu0 %v2626
  %5826 = vmatpush.bf16.msra.mxu0 %v2623
  %5827 = vmatpush.bf16.msra.mxu0 %v2620
  %5828 = vmatpush.bf16.msra.mxu0 %v2617
  %5829 = vmatpush.bf16.msra.mxu0 %v2614
  %5830 = vmatmul.bf16.gmra.mxu0 %v5205
  %v5831 = vpop.f32.mrf.mxu0
  %v5832 = vadd.f32 %v5819, %v5831
  %v5833 = vpop.f32.mrf.mxu0
  %5834 = vdwg.mxu0
  %5835 = vmatpush.bf16.msra.mxu0 0
  %5836 = vmatpush.bf16.msra.mxu0 0
  %5837 = vmatpush.bf16.msra.mxu0 0
  %5838 = vmatpush.bf16.msra.mxu0 0
  %5839 = vmatpush.bf16.msra.mxu0 0
  %5840 = vmatpush.bf16.msra.mxu0 0
  %5841 = vmatpush.bf16.msra.mxu0 %v2641
  %5842 = vmatpush.bf16.msra.mxu0 %v2638
  %5843 = vmatmul.bf16.gmra.mxu0 %v5208
  %v5844 = vpop.f32.mrf.mxu0
  %v5845 = vadd.f32 %v5832, %v5844
  %v5846 = vpop.f32.mrf.mxu0
  %5847 = vdwg.mxu0
  %v5848 = vpack.c.bf16 %v5767, %v5767
  %v5849 = vpack.c.bf16 %v5806, %v5806
  %v5850 = vpack.c.bf16 %v5845, %v5845
  %s5851 = scalar_lea.vmem %s6, 12
  %v5852 = vld [vmem:[%s5851] sm:$0xf]
  %v5854 = vsel %vm1840, %v5852, 0
  %v5857 = vsel %vm1844, %v5848, 0
  %v5860 = vsel %vm1844, %v5849, 0
  %v5863 = vsel %vm1844, %v5850, 0
  %5865 = vmatpush.bf16.msra.mxu0 0
  %5866 = vmatpush.bf16.msra.mxu0 0
  %5867 = vmatpush.bf16.msra.mxu0 0
  %5868 = vmatpush.bf16.msra.mxu0 0
  %5869 = vmatpush.bf16.msra.mxu0 0
  %5870 = vmatpush.bf16.msra.mxu0 0
  %5871 = vmatpush.bf16.msra.mxu0 0
  %5872 = vmatpush.bf16.msra.mxu0 %v5857
  %5873 = vmatmul.bf16.gmra.mxu0 %v5854
  %v5874 = vpop.f32.mrf.mxu0
  %v5875 = vadd.f32 0.0, %v5874
  %v5876 = vpop.f32.mrf.mxu0
  %5877 = vdwg.mxu0
  %5878 = vmatpush.bf16.msra.mxu0 0
  %5879 = vmatpush.bf16.msra.mxu0 0
  %5880 = vmatpush.bf16.msra.mxu0 0
  %5881 = vmatpush.bf16.msra.mxu0 0
  %5882 = vmatpush.bf16.msra.mxu0 0
  %5883 = vmatpush.bf16.msra.mxu0 0
  %5884 = vmatpush.bf16.msra.mxu0 0
  %5885 = vmatpush.bf16.msra.mxu0 %v5860
  %5886 = vmatmul.bf16.gmra.mxu0 %v5854
  %v5887 = vpop.f32.mrf.mxu0
  %v5888 = vadd.f32 0.0, %v5887
  %v5889 = vpop.f32.mrf.mxu0
  %5890 = vdwg.mxu0
  %5891 = vmatpush.bf16.msra.mxu0 0
  %5892 = vmatpush.bf16.msra.mxu0 0
  %5893 = vmatpush.bf16.msra.mxu0 0
  %5894 = vmatpush.bf16.msra.mxu0 0
  %5895 = vmatpush.bf16.msra.mxu0 0
  %5896 = vmatpush.bf16.msra.mxu0 0
  %5897 = vmatpush.bf16.msra.mxu0 0
  %5898 = vmatpush.bf16.msra.mxu0 %v5863
  %5899 = vmatmul.bf16.gmra.mxu0 %v5854
  %v5900 = vpop.f32.mrf.mxu0
  %v5901 = vadd.f32 0.0, %v5900
  %v5902 = vpop.f32.mrf.mxu0
  %5903 = vdwg.mxu0
  %v5904 = vadd.f32 %v5728, %v5875
  %v5905 = vadd.f32 %v5729, %v5888
  %v5906 = vadd.f32 %v5730, %v5901
  %5907 = vmatpush.bf16.msra.mxu0 %v3073
  %5908 = vmatpush.bf16.msra.mxu0 %v3070
  %5909 = vmatpush.bf16.msra.mxu0 %v3067
  %5910 = vmatpush.bf16.msra.mxu0 %v3064
  %5911 = vmatpush.bf16.msra.mxu0 %v3061
  %5912 = vmatpush.bf16.msra.mxu0 %v3058
  %5913 = vmatpush.bf16.msra.mxu0 %v3055
  %5914 = vmatpush.bf16.msra.mxu0 %v3052
  %5915 = vmatmul.bf16.gmra.mxu0 %v5204
  %v5916 = vpop.f32.mrf.mxu0
  %v5917 = vadd.f32 0.0, %v5916
  %v5918 = vpop.f32.mrf.mxu0
  %5919 = vdwg.mxu0
  %5920 = vmatpush.bf16.msra.mxu0 %v3097
  %5921 = vmatpush.bf16.msra.mxu0 %v3094
  %5922 = vmatpush.bf16.msra.mxu0 %v3091
  %5923 = vmatpush.bf16.msra.mxu0 %v3088
  %5924 = vmatpush.bf16.msra.mxu0 %v3085
  %5925 = vmatpush.bf16.msra.mxu0 %v3082
  %5926 = vmatpush.bf16.msra.mxu0 %v3079
  %5927 = vmatpush.bf16.msra.mxu0 %v3076
  %5928 = vmatmul.bf16.gmra.mxu0 %v5205
  %v5929 = vpop.f32.mrf.mxu0
  %v5930 = vadd.f32 %v5917, %v5929
  %v5931 = vpop.f32.mrf.mxu0
  %5932 = vdwg.mxu0
  %5933 = vmatpush.bf16.msra.mxu0 0
  %5934 = vmatpush.bf16.msra.mxu0 0
  %5935 = vmatpush.bf16.msra.mxu0 0
  %5936 = vmatpush.bf16.msra.mxu0 0
  %5937 = vmatpush.bf16.msra.mxu0 0
  %5938 = vmatpush.bf16.msra.mxu0 0
  %5939 = vmatpush.bf16.msra.mxu0 %v3103
  %5940 = vmatpush.bf16.msra.mxu0 %v3100
  %5941 = vmatmul.bf16.gmra.mxu0 %v5208
  %v5942 = vpop.f32.mrf.mxu0
  %v5943 = vadd.f32 %v5930, %v5942
  %v5944 = vpop.f32.mrf.mxu0
  %5945 = vdwg.mxu0
  %5946 = vmatpush.bf16.msra.mxu0 %v3074
  %5947 = vmatpush.bf16.msra.mxu0 %v3071
  %5948 = vmatpush.bf16.msra.mxu0 %v3068
  %5949 = vmatpush.bf16.msra.mxu0 %v3065
  %5950 = vmatpush.bf16.msra.mxu0 %v3062
  %5951 = vmatpush.bf16.msra.mxu0 %v3059
  %5952 = vmatpush.bf16.msra.mxu0 %v3056
  %5953 = vmatpush.bf16.msra.mxu0 %v3053
  %5954 = vmatmul.bf16.gmra.mxu0 %v5204
  %v5955 = vpop.f32.mrf.mxu0
  %v5956 = vadd.f32 0.0, %v5955
  %v5957 = vpop.f32.mrf.mxu0
  %5958 = vdwg.mxu0
  %5959 = vmatpush.bf16.msra.mxu0 %v3098
  %5960 = vmatpush.bf16.msra.mxu0 %v3095
  %5961 = vmatpush.bf16.msra.mxu0 %v3092
  %5962 = vmatpush.bf16.msra.mxu0 %v3089
  %5963 = vmatpush.bf16.msra.mxu0 %v3086
  %5964 = vmatpush.bf16.msra.mxu0 %v3083
  %5965 = vmatpush.bf16.msra.mxu0 %v3080
  %5966 = vmatpush.bf16.msra.mxu0 %v3077
  %5967 = vmatmul.bf16.gmra.mxu0 %v5205
  %v5968 = vpop.f32.mrf.mxu0
  %v5969 = vadd.f32 %v5956, %v5968
  %v5970 = vpop.f32.mrf.mxu0
  %5971 = vdwg.mxu0
  %5972 = vmatpush.bf16.msra.mxu0 0
  %5973 = vmatpush.bf16.msra.mxu0 0
  %5974 = vmatpush.bf16.msra.mxu0 0
  %5975 = vmatpush.bf16.msra.mxu0 0
  %5976 = vmatpush.bf16.msra.mxu0 0
  %5977 = vmatpush.bf16.msra.mxu0 0
  %5978 = vmatpush.bf16.msra.mxu0 %v3104
  %5979 = vmatpush.bf16.msra.mxu0 %v3101
  %5980 = vmatmul.bf16.gmra.mxu0 %v5208
  %v5981 = vpop.f32.mrf.mxu0
  %v5982 = vadd.f32 %v5969, %v5981
  %v5983 = vpop.f32.mrf.mxu0
  %5984 = vdwg.mxu0
  %5985 = vmatpush.bf16.msra.mxu0 %v3075
  %5986 = vmatpush.bf16.msra.mxu0 %v3072
  %5987 = vmatpush.bf16.msra.mxu0 %v3069
  %5988 = vmatpush.bf16.msra.mxu0 %v3066
  %5989 = vmatpush.bf16.msra.mxu0 %v3063
  %5990 = vmatpush.bf16.msra.mxu0 %v3060
  %5991 = vmatpush.bf16.msra.mxu0 %v3057
  %5992 = vmatpush.bf16.msra.mxu0 %v3054
  %5993 = vmatmul.bf16.gmra.mxu0 %v5204
  %v5994 = vpop.f32.mrf.mxu0
  %v5995 = vadd.f32 0.0, %v5994
  %v5996 = vpop.f32.mrf.mxu0
  %5997 = vdwg.mxu0
  %5998 = vmatpush.bf16.msra.mxu0 %v3099
  %5999 = vmatpush.bf16.msra.mxu0 %v3096
  %6000 = vmatpush.bf16.msra.mxu0 %v3093
  %6001 = vmatpush.bf16.msra.mxu0 %v3090
  %6002 = vmatpush.bf16.msra.mxu0 %v3087
  %6003 = vmatpush.bf16.msra.mxu0 %v3084
  %6004 = vmatpush.bf16.msra.mxu0 %v3081
  %6005 = vmatpush.bf16.msra.mxu0 %v3078
  %6006 = vmatmul.bf16.gmra.mxu0 %v5205
  %v6007 = vpop.f32.mrf.mxu0
  %v6008 = vadd.f32 %v5995, %v6007
  %v6009 = vpop.f32.mrf.mxu0
  %6010 = vdwg.mxu0
  %6011 = vmatpush.bf16.msra.mxu0 0
  %6012 = vmatpush.bf16.msra.mxu0 0
  %6013 = vmatpush.bf16.msra.mxu0 0
  %6014 = vmatpush.bf16.msra.mxu0 0
  %6015 = vmatpush.bf16.msra.mxu0 0
  %6016 = vmatpush.bf16.msra.mxu0 0
  %6017 = vmatpush.bf16.msra.mxu0 %v3105
  %6018 = vmatpush.bf16.msra.mxu0 %v3102
  %6019 = vmatmul.bf16.gmra.mxu0 %v5208
  %v6020 = vpop.f32.mrf.mxu0
  %v6021 = vadd.f32 %v6008, %v6020
  %v6022 = vpop.f32.mrf.mxu0
  %6023 = vdwg.mxu0
  %v6024 = vpack.c.bf16 %v5943, %v5943
  %v6025 = vpack.c.bf16 %v5982, %v5982
  %v6026 = vpack.c.bf16 %v6021, %v6021
  %s6027 = scalar_lea.vmem %s6, 16
  %v6028 = vld [vmem:[%s6027] sm:$0xf]
  %v6030 = vsel %vm1840, %v6028, 0
  %v6033 = vsel %vm1844, %v6024, 0
  %v6036 = vsel %vm1844, %v6025, 0
  %v6039 = vsel %vm1844, %v6026, 0
  %6041 = vmatpush.bf16.msra.mxu0 0
  %6042 = vmatpush.bf16.msra.mxu0 0
  %6043 = vmatpush.bf16.msra.mxu0 0
  %6044 = vmatpush.bf16.msra.mxu0 0
  %6045 = vmatpush.bf16.msra.mxu0 0
  %6046 = vmatpush.bf16.msra.mxu0 0
  %6047 = vmatpush.bf16.msra.mxu0 0
  %6048 = vmatpush.bf16.msra.mxu0 %v6033
  %6049 = vmatmul.bf16.gmra.mxu0 %v6030
  %v6050 = vpop.f32.mrf.mxu0
  %v6051 = vadd.f32 0.0, %v6050
  %v6052 = vpop.f32.mrf.mxu0
  %6053 = vdwg.mxu0
  %6054 = vmatpush.bf16.msra.mxu0 0
  %6055 = vmatpush.bf16.msra.mxu0 0
  %6056 = vmatpush.bf16.msra.mxu0 0
  %6057 = vmatpush.bf16.msra.mxu0 0
  %6058 = vmatpush.bf16.msra.mxu0 0
  %6059 = vmatpush.bf16.msra.mxu0 0
  %6060 = vmatpush.bf16.msra.mxu0 0
  %6061 = vmatpush.bf16.msra.mxu0 %v6036
  %6062 = vmatmul.bf16.gmra.mxu0 %v6030
  %v6063 = vpop.f32.mrf.mxu0
  %v6064 = vadd.f32 0.0, %v6063
  %v6065 = vpop.f32.mrf.mxu0
  %6066 = vdwg.mxu0
  %6067 = vmatpush.bf16.msra.mxu0 0
  %6068 = vmatpush.bf16.msra.mxu0 0
  %6069 = vmatpush.bf16.msra.mxu0 0
  %6070 = vmatpush.bf16.msra.mxu0 0
  %6071 = vmatpush.bf16.msra.mxu0 0
  %6072 = vmatpush.bf16.msra.mxu0 0
  %6073 = vmatpush.bf16.msra.mxu0 0
  %6074 = vmatpush.bf16.msra.mxu0 %v6039
  %6075 = vmatmul.bf16.gmra.mxu0 %v6030
  %v6076 = vpop.f32.mrf.mxu0
  %v6077 = vadd.f32 0.0, %v6076
  %v6078 = vpop.f32.mrf.mxu0
  %6079 = vdwg.mxu0
  %v6080 = vadd.f32 %v5904, %v6051
  %v6081 = vadd.f32 %v5905, %v6064
  %v6082 = vadd.f32 %v5906, %v6077
  %6083 = vmatpush.bf16.msra.mxu0 %v3537
  %6084 = vmatpush.bf16.msra.mxu0 %v3534
  %6085 = vmatpush.bf16.msra.mxu0 %v3531
  %6086 = vmatpush.bf16.msra.mxu0 %v3528
  %6087 = vmatpush.bf16.msra.mxu0 %v3525
  %6088 = vmatpush.bf16.msra.mxu0 %v3522
  %6089 = vmatpush.bf16.msra.mxu0 %v3519
  %6090 = vmatpush.bf16.msra.mxu0 %v3516
  %6091 = vmatmul.bf16.gmra.mxu0 %v5204
  %v6092 = vpop.f32.mrf.mxu0
  %v6093 = vadd.f32 0.0, %v6092
  %v6094 = vpop.f32.mrf.mxu0
  %6095 = vdwg.mxu0
  %6096 = vmatpush.bf16.msra.mxu0 %v3561
  %6097 = vmatpush.bf16.msra.mxu0 %v3558
  %6098 = vmatpush.bf16.msra.mxu0 %v3555
  %6099 = vmatpush.bf16.msra.mxu0 %v3552
  %6100 = vmatpush.bf16.msra.mxu0 %v3549
  %6101 = vmatpush.bf16.msra.mxu0 %v3546
  %6102 = vmatpush.bf16.msra.mxu0 %v3543
  %6103 = vmatpush.bf16.msra.mxu0 %v3540
  %6104 = vmatmul.bf16.gmra.mxu0 %v5205
  %v6105 = vpop.f32.mrf.mxu0
  %v6106 = vadd.f32 %v6093, %v6105
  %v6107 = vpop.f32.mrf.mxu0
  %6108 = vdwg.mxu0
  %6109 = vmatpush.bf16.msra.mxu0 0
  %6110 = vmatpush.bf16.msra.mxu0 0
  %6111 = vmatpush.bf16.msra.mxu0 0
  %6112 = vmatpush.bf16.msra.mxu0 0
  %6113 = vmatpush.bf16.msra.mxu0 0
  %6114 = vmatpush.bf16.msra.mxu0 0
  %6115 = vmatpush.bf16.msra.mxu0 %v3567
  %6116 = vmatpush.bf16.msra.mxu0 %v3564
  %6117 = vmatmul.bf16.gmra.mxu0 %v5208
  %v6118 = vpop.f32.mrf.mxu0
  %v6119 = vadd.f32 %v6106, %v6118
  %v6120 = vpop.f32.mrf.mxu0
  %6121 = vdwg.mxu0
  %6122 = vmatpush.bf16.msra.mxu0 %v3538
  %6123 = vmatpush.bf16.msra.mxu0 %v3535
  %6124 = vmatpush.bf16.msra.mxu0 %v3532
  %6125 = vmatpush.bf16.msra.mxu0 %v3529
  %6126 = vmatpush.bf16.msra.mxu0 %v3526
  %6127 = vmatpush.bf16.msra.mxu0 %v3523
  %6128 = vmatpush.bf16.msra.mxu0 %v3520
  %6129 = vmatpush.bf16.msra.mxu0 %v3517
  %6130 = vmatmul.bf16.gmra.mxu0 %v5204
  %v6131 = vpop.f32.mrf.mxu0
  %v6132 = vadd.f32 0.0, %v6131
  %v6133 = vpop.f32.mrf.mxu0
  %6134 = vdwg.mxu0
  %6135 = vmatpush.bf16.msra.mxu0 %v3562
  %6136 = vmatpush.bf16.msra.mxu0 %v3559
  %6137 = vmatpush.bf16.msra.mxu0 %v3556
  %6138 = vmatpush.bf16.msra.mxu0 %v3553
  %6139 = vmatpush.bf16.msra.mxu0 %v3550
  %6140 = vmatpush.bf16.msra.mxu0 %v3547
  %6141 = vmatpush.bf16.msra.mxu0 %v3544
  %6142 = vmatpush.bf16.msra.mxu0 %v3541
  %6143 = vmatmul.bf16.gmra.mxu0 %v5205
  %v6144 = vpop.f32.mrf.mxu0
  %v6145 = vadd.f32 %v6132, %v6144
  %v6146 = vpop.f32.mrf.mxu0
  %6147 = vdwg.mxu0
  %6148 = vmatpush.bf16.msra.mxu0 0
  %6149 = vmatpush.bf16.msra.mxu0 0
  %6150 = vmatpush.bf16.msra.mxu0 0
  %6151 = vmatpush.bf16.msra.mxu0 0
  %6152 = vmatpush.bf16.msra.mxu0 0
  %6153 = vmatpush.bf16.msra.mxu0 0
  %6154 = vmatpush.bf16.msra.mxu0 %v3568
  %6155 = vmatpush.bf16.msra.mxu0 %v3565
  %6156 = vmatmul.bf16.gmra.mxu0 %v5208
  %v6157 = vpop.f32.mrf.mxu0
  %v6158 = vadd.f32 %v6145, %v6157
  %v6159 = vpop.f32.mrf.mxu0
  %6160 = vdwg.mxu0
  %6161 = vmatpush.bf16.msra.mxu0 %v3539
  %6162 = vmatpush.bf16.msra.mxu0 %v3536
  %6163 = vmatpush.bf16.msra.mxu0 %v3533
  %6164 = vmatpush.bf16.msra.mxu0 %v3530
  %6165 = vmatpush.bf16.msra.mxu0 %v3527
  %6166 = vmatpush.bf16.msra.mxu0 %v3524
  %6167 = vmatpush.bf16.msra.mxu0 %v3521
  %6168 = vmatpush.bf16.msra.mxu0 %v3518
  %6169 = vmatmul.bf16.gmra.mxu0 %v5204
  %v6170 = vpop.f32.mrf.mxu0
  %v6171 = vadd.f32 0.0, %v6170
  %v6172 = vpop.f32.mrf.mxu0
  %6173 = vdwg.mxu0
  %6174 = vmatpush.bf16.msra.mxu0 %v3563
  %6175 = vmatpush.bf16.msra.mxu0 %v3560
  %6176 = vmatpush.bf16.msra.mxu0 %v3557
  %6177 = vmatpush.bf16.msra.mxu0 %v3554
  %6178 = vmatpush.bf16.msra.mxu0 %v3551
  %6179 = vmatpush.bf16.msra.mxu0 %v3548
  %6180 = vmatpush.bf16.msra.mxu0 %v3545
  %6181 = vmatpush.bf16.msra.mxu0 %v3542
  %6182 = vmatmul.bf16.gmra.mxu0 %v5205
  %v6183 = vpop.f32.mrf.mxu0
  %v6184 = vadd.f32 %v6171, %v6183
  %v6185 = vpop.f32.mrf.mxu0
  %6186 = vdwg.mxu0
  %6187 = vmatpush.bf16.msra.mxu0 0
  %6188 = vmatpush.bf16.msra.mxu0 0
  %6189 = vmatpush.bf16.msra.mxu0 0
  %6190 = vmatpush.bf16.msra.mxu0 0
  %6191 = vmatpush.bf16.msra.mxu0 0
  %6192 = vmatpush.bf16.msra.mxu0 0
  %6193 = vmatpush.bf16.msra.mxu0 %v3569
  %6194 = vmatpush.bf16.msra.mxu0 %v3566
  %6195 = vmatmul.bf16.gmra.mxu0 %v5208
  %v6196 = vpop.f32.mrf.mxu0
  %v6197 = vadd.f32 %v6184, %v6196
  %v6198 = vpop.f32.mrf.mxu0
  %6199 = vdwg.mxu0
  %v6200 = vpack.c.bf16 %v6119, %v6119
  %v6201 = vpack.c.bf16 %v6158, %v6158
  %v6202 = vpack.c.bf16 %v6197, %v6197
  %s6203 = scalar_lea.vmem %s6, 20
  %v6204 = vld [vmem:[%s6203] sm:$0xf]
  %v6206 = vsel %vm1840, %v6204, 0
  %v6209 = vsel %vm1844, %v6200, 0
  %v6212 = vsel %vm1844, %v6201, 0
  %v6215 = vsel %vm1844, %v6202, 0
  %6217 = vmatpush.bf16.msra.mxu0 0
  %6218 = vmatpush.bf16.msra.mxu0 0
  %6219 = vmatpush.bf16.msra.mxu0 0
  %6220 = vmatpush.bf16.msra.mxu0 0
  %6221 = vmatpush.bf16.msra.mxu0 0
  %6222 = vmatpush.bf16.msra.mxu0 0
  %6223 = vmatpush.bf16.msra.mxu0 0
  %6224 = vmatpush.bf16.msra.mxu0 %v6209
  %6225 = vmatmul.bf16.gmra.mxu0 %v6206
  %v6226 = vpop.f32.mrf.mxu0
  %v6227 = vadd.f32 0.0, %v6226
  %v6228 = vpop.f32.mrf.mxu0
  %6229 = vdwg.mxu0
  %6230 = vmatpush.bf16.msra.mxu0 0
  %6231 = vmatpush.bf16.msra.mxu0 0
  %6232 = vmatpush.bf16.msra.mxu0 0
  %6233 = vmatpush.bf16.msra.mxu0 0
  %6234 = vmatpush.bf16.msra.mxu0 0
  %6235 = vmatpush.bf16.msra.mxu0 0
  %6236 = vmatpush.bf16.msra.mxu0 0
  %6237 = vmatpush.bf16.msra.mxu0 %v6212
  %6238 = vmatmul.bf16.gmra.mxu0 %v6206
  %v6239 = vpop.f32.mrf.mxu0
  %v6240 = vadd.f32 0.0, %v6239
  %v6241 = vpop.f32.mrf.mxu0
  %6242 = vdwg.mxu0
  %6243 = vmatpush.bf16.msra.mxu0 0
  %6244 = vmatpush.bf16.msra.mxu0 0
  %6245 = vmatpush.bf16.msra.mxu0 0
  %6246 = vmatpush.bf16.msra.mxu0 0
  %6247 = vmatpush.bf16.msra.mxu0 0
  %6248 = vmatpush.bf16.msra.mxu0 0
  %6249 = vmatpush.bf16.msra.mxu0 0
  %6250 = vmatpush.bf16.msra.mxu0 %v6215
  %6251 = vmatmul.bf16.gmra.mxu0 %v6206
  %v6252 = vpop.f32.mrf.mxu0
  %v6253 = vadd.f32 0.0, %v6252
  %v6254 = vpop.f32.mrf.mxu0
  %6255 = vdwg.mxu0
  %v6256 = vadd.f32 %v6080, %v6227
  %v6257 = vadd.f32 %v6081, %v6240
  %v6258 = vadd.f32 %v6082, %v6253
  %6259 = vmatpush.bf16.msra.mxu0 %v4001
  %6260 = vmatpush.bf16.msra.mxu0 %v3998
  %6261 = vmatpush.bf16.msra.mxu0 %v3995
  %6262 = vmatpush.bf16.msra.mxu0 %v3992
  %6263 = vmatpush.bf16.msra.mxu0 %v3989
  %6264 = vmatpush.bf16.msra.mxu0 %v3986
  %6265 = vmatpush.bf16.msra.mxu0 %v3983
  %6266 = vmatpush.bf16.msra.mxu0 %v3980
  %6267 = vmatmul.bf16.gmra.mxu0 %v5204
  %v6268 = vpop.f32.mrf.mxu0
  %v6269 = vadd.f32 0.0, %v6268
  %v6270 = vpop.f32.mrf.mxu0
  %6271 = vdwg.mxu0
  %6272 = vmatpush.bf16.msra.mxu0 %v4025
  %6273 = vmatpush.bf16.msra.mxu0 %v4022
  %6274 = vmatpush.bf16.msra.mxu0 %v4019
  %6275 = vmatpush.bf16.msra.mxu0 %v4016
  %6276 = vmatpush.bf16.msra.mxu0 %v4013
  %6277 = vmatpush.bf16.msra.mxu0 %v4010
  %6278 = vmatpush.bf16.msra.mxu0 %v4007
  %6279 = vmatpush.bf16.msra.mxu0 %v4004
  %6280 = vmatmul.bf16.gmra.mxu0 %v5205
  %v6281 = vpop.f32.mrf.mxu0
  %v6282 = vadd.f32 %v6269, %v6281
  %v6283 = vpop.f32.mrf.mxu0
  %6284 = vdwg.mxu0
  %6285 = vmatpush.bf16.msra.mxu0 0
  %6286 = vmatpush.bf16.msra.mxu0 0
  %6287 = vmatpush.bf16.msra.mxu0 0
  %6288 = vmatpush.bf16.msra.mxu0 0
  %6289 = vmatpush.bf16.msra.mxu0 0
  %6290 = vmatpush.bf16.msra.mxu0 0
  %6291 = vmatpush.bf16.msra.mxu0 %v4031
  %6292 = vmatpush.bf16.msra.mxu0 %v4028
  %6293 = vmatmul.bf16.gmra.mxu0 %v5208
  %v6294 = vpop.f32.mrf.mxu0
  %v6295 = vadd.f32 %v6282, %v6294
  %v6296 = vpop.f32.mrf.mxu0
  %6297 = vdwg.mxu0
  %6298 = vmatpush.bf16.msra.mxu0 %v4002
  %6299 = vmatpush.bf16.msra.mxu0 %v3999
  %6300 = vmatpush.bf16.msra.mxu0 %v3996
  %6301 = vmatpush.bf16.msra.mxu0 %v3993
  %6302 = vmatpush.bf16.msra.mxu0 %v3990
  %6303 = vmatpush.bf16.msra.mxu0 %v3987
  %6304 = vmatpush.bf16.msra.mxu0 %v3984
  %6305 = vmatpush.bf16.msra.mxu0 %v3981
  %6306 = vmatmul.bf16.gmra.mxu0 %v5204
  %v6307 = vpop.f32.mrf.mxu0
  %v6308 = vadd.f32 0.0, %v6307
  %v6309 = vpop.f32.mrf.mxu0
  %6310 = vdwg.mxu0
  %6311 = vmatpush.bf16.msra.mxu0 %v4026
  %6312 = vmatpush.bf16.msra.mxu0 %v4023
  %6313 = vmatpush.bf16.msra.mxu0 %v4020
  %6314 = vmatpush.bf16.msra.mxu0 %v4017
  %6315 = vmatpush.bf16.msra.mxu0 %v4014
  %6316 = vmatpush.bf16.msra.mxu0 %v4011
  %6317 = vmatpush.bf16.msra.mxu0 %v4008
  %6318 = vmatpush.bf16.msra.mxu0 %v4005
  %6319 = vmatmul.bf16.gmra.mxu0 %v5205
  %v6320 = vpop.f32.mrf.mxu0
  %v6321 = vadd.f32 %v6308, %v6320
  %v6322 = vpop.f32.mrf.mxu0
  %6323 = vdwg.mxu0
  %6324 = vmatpush.bf16.msra.mxu0 0
  %6325 = vmatpush.bf16.msra.mxu0 0
  %6326 = vmatpush.bf16.msra.mxu0 0
  %6327 = vmatpush.bf16.msra.mxu0 0
  %6328 = vmatpush.bf16.msra.mxu0 0
  %6329 = vmatpush.bf16.msra.mxu0 0
  %6330 = vmatpush.bf16.msra.mxu0 %v4032
  %6331 = vmatpush.bf16.msra.mxu0 %v4029
  %6332 = vmatmul.bf16.gmra.mxu0 %v5208
  %v6333 = vpop.f32.mrf.mxu0
  %v6334 = vadd.f32 %v6321, %v6333
  %v6335 = vpop.f32.mrf.mxu0
  %6336 = vdwg.mxu0
  %6337 = vmatpush.bf16.msra.mxu0 %v4003
  %6338 = vmatpush.bf16.msra.mxu0 %v4000
  %6339 = vmatpush.bf16.msra.mxu0 %v3997
  %6340 = vmatpush.bf16.msra.mxu0 %v3994
  %6341 = vmatpush.bf16.msra.mxu0 %v3991
  %6342 = vmatpush.bf16.msra.mxu0 %v3988
  %6343 = vmatpush.bf16.msra.mxu0 %v3985
  %6344 = vmatpush.bf16.msra.mxu0 %v3982
  %6345 = vmatmul.bf16.gmra.mxu0 %v5204
  %v6346 = vpop.f32.mrf.mxu0
  %v6347 = vadd.f32 0.0, %v6346
  %v6348 = vpop.f32.mrf.mxu0
  %6349 = vdwg.mxu0
  %6350 = vmatpush.bf16.msra.mxu0 %v4027
  %6351 = vmatpush.bf16.msra.mxu0 %v4024
  %6352 = vmatpush.bf16.msra.mxu0 %v4021
  %6353 = vmatpush.bf16.msra.mxu0 %v4018
  %6354 = vmatpush.bf16.msra.mxu0 %v4015
  %6355 = vmatpush.bf16.msra.mxu0 %v4012
  %6356 = vmatpush.bf16.msra.mxu0 %v4009
  %6357 = vmatpush.bf16.msra.mxu0 %v4006
  %6358 = vmatmul.bf16.gmra.mxu0 %v5205
  %v6359 = vpop.f32.mrf.mxu0
  %v6360 = vadd.f32 %v6347, %v6359
  %v6361 = vpop.f32.mrf.mxu0
  %6362 = vdwg.mxu0
  %6363 = vmatpush.bf16.msra.mxu0 0
  %6364 = vmatpush.bf16.msra.mxu0 0
  %6365 = vmatpush.bf16.msra.mxu0 0
  %6366 = vmatpush.bf16.msra.mxu0 0
  %6367 = vmatpush.bf16.msra.mxu0 0
  %6368 = vmatpush.bf16.msra.mxu0 0
  %6369 = vmatpush.bf16.msra.mxu0 %v4033
  %6370 = vmatpush.bf16.msra.mxu0 %v4030
  %6371 = vmatmul.bf16.gmra.mxu0 %v5208
  %v6372 = vpop.f32.mrf.mxu0
  %v6373 = vadd.f32 %v6360, %v6372
  %v6374 = vpop.f32.mrf.mxu0
  %6375 = vdwg.mxu0
  %v6376 = vpack.c.bf16 %v6295, %v6295
  %v6377 = vpack.c.bf16 %v6334, %v6334
  %v6378 = vpack.c.bf16 %v6373, %v6373
  %s6379 = scalar_lea.vmem %s6, 24
  %v6380 = vld [vmem:[%s6379] sm:$0xf]
  %v6382 = vsel %vm1840, %v6380, 0
  %v6385 = vsel %vm1844, %v6376, 0
  %v6388 = vsel %vm1844, %v6377, 0
  %v6391 = vsel %vm1844, %v6378, 0
  %6393 = vmatpush.bf16.msra.mxu0 0
  %6394 = vmatpush.bf16.msra.mxu0 0
  %6395 = vmatpush.bf16.msra.mxu0 0
  %6396 = vmatpush.bf16.msra.mxu0 0
  %6397 = vmatpush.bf16.msra.mxu0 0
  %6398 = vmatpush.bf16.msra.mxu0 0
  %6399 = vmatpush.bf16.msra.mxu0 0
  %6400 = vmatpush.bf16.msra.mxu0 %v6385
  %6401 = vmatmul.bf16.gmra.mxu0 %v6382
  %v6402 = vpop.f32.mrf.mxu0
  %v6403 = vadd.f32 0.0, %v6402
  %v6404 = vpop.f32.mrf.mxu0
  %6405 = vdwg.mxu0
  %6406 = vmatpush.bf16.msra.mxu0 0
  %6407 = vmatpush.bf16.msra.mxu0 0
  %6408 = vmatpush.bf16.msra.mxu0 0
  %6409 = vmatpush.bf16.msra.mxu0 0
  %6410 = vmatpush.bf16.msra.mxu0 0
  %6411 = vmatpush.bf16.msra.mxu0 0
  %6412 = vmatpush.bf16.msra.mxu0 0
  %6413 = vmatpush.bf16.msra.mxu0 %v6388
  %6414 = vmatmul.bf16.gmra.mxu0 %v6382
  %v6415 = vpop.f32.mrf.mxu0
  %v6416 = vadd.f32 0.0, %v6415
  %v6417 = vpop.f32.mrf.mxu0
  %6418 = vdwg.mxu0
  %6419 = vmatpush.bf16.msra.mxu0 0
  %6420 = vmatpush.bf16.msra.mxu0 0
  %6421 = vmatpush.bf16.msra.mxu0 0
  %6422 = vmatpush.bf16.msra.mxu0 0
  %6423 = vmatpush.bf16.msra.mxu0 0
  %6424 = vmatpush.bf16.msra.mxu0 0
  %6425 = vmatpush.bf16.msra.mxu0 0
  %6426 = vmatpush.bf16.msra.mxu0 %v6391
  %6427 = vmatmul.bf16.gmra.mxu0 %v6382
  %v6428 = vpop.f32.mrf.mxu0
  %v6429 = vadd.f32 0.0, %v6428
  %v6430 = vpop.f32.mrf.mxu0
  %6431 = vdwg.mxu0
  %v6432 = vadd.f32 %v6256, %v6403
  %v6433 = vadd.f32 %v6257, %v6416
  %v6434 = vadd.f32 %v6258, %v6429
  %6435 = vmatpush.bf16.msra.mxu0 %v4465
  %6436 = vmatpush.bf16.msra.mxu0 %v4462
  %6437 = vmatpush.bf16.msra.mxu0 %v4459
  %6438 = vmatpush.bf16.msra.mxu0 %v4456
  %6439 = vmatpush.bf16.msra.mxu0 %v4453
  %6440 = vmatpush.bf16.msra.mxu0 %v4450
  %6441 = vmatpush.bf16.msra.mxu0 %v4447
  %6442 = vmatpush.bf16.msra.mxu0 %v4444
  %6443 = vmatmul.bf16.gmra.mxu0 %v5204
  %v6444 = vpop.f32.mrf.mxu0
  %v6445 = vadd.f32 0.0, %v6444
  %v6446 = vpop.f32.mrf.mxu0
  %6447 = vdwg.mxu0
  %6448 = vmatpush.bf16.msra.mxu0 %v4489
  %6449 = vmatpush.bf16.msra.mxu0 %v4486
  %6450 = vmatpush.bf16.msra.mxu0 %v4483
  %6451 = vmatpush.bf16.msra.mxu0 %v4480
  %6452 = vmatpush.bf16.msra.mxu0 %v4477
  %6453 = vmatpush.bf16.msra.mxu0 %v4474
  %6454 = vmatpush.bf16.msra.mxu0 %v4471
  %6455 = vmatpush.bf16.msra.mxu0 %v4468
  %6456 = vmatmul.bf16.gmra.mxu0 %v5205
  %v6457 = vpop.f32.mrf.mxu0
  %v6458 = vadd.f32 %v6445, %v6457
  %v6459 = vpop.f32.mrf.mxu0
  %6460 = vdwg.mxu0
  %6461 = vmatpush.bf16.msra.mxu0 0
  %6462 = vmatpush.bf16.msra.mxu0 0
  %6463 = vmatpush.bf16.msra.mxu0 0
  %6464 = vmatpush.bf16.msra.mxu0 0
  %6465 = vmatpush.bf16.msra.mxu0 0
  %6466 = vmatpush.bf16.msra.mxu0 0
  %6467 = vmatpush.bf16.msra.mxu0 %v4495
  %6468 = vmatpush.bf16.msra.mxu0 %v4492
  %6469 = vmatmul.bf16.gmra.mxu0 %v5208
  %v6470 = vpop.f32.mrf.mxu0
  %v6471 = vadd.f32 %v6458, %v6470
  %v6472 = vpop.f32.mrf.mxu0
  %6473 = vdwg.mxu0
  %6474 = vmatpush.bf16.msra.mxu0 %v4466
  %6475 = vmatpush.bf16.msra.mxu0 %v4463
  %6476 = vmatpush.bf16.msra.mxu0 %v4460
  %6477 = vmatpush.bf16.msra.mxu0 %v4457
  %6478 = vmatpush.bf16.msra.mxu0 %v4454
  %6479 = vmatpush.bf16.msra.mxu0 %v4451
  %6480 = vmatpush.bf16.msra.mxu0 %v4448
  %6481 = vmatpush.bf16.msra.mxu0 %v4445
  %6482 = vmatmul.bf16.gmra.mxu0 %v5204
  %v6483 = vpop.f32.mrf.mxu0
  %v6484 = vadd.f32 0.0, %v6483
  %v6485 = vpop.f32.mrf.mxu0
  %6486 = vdwg.mxu0
  %6487 = vmatpush.bf16.msra.mxu0 %v4490
  %6488 = vmatpush.bf16.msra.mxu0 %v4487
  %6489 = vmatpush.bf16.msra.mxu0 %v4484
  %6490 = vmatpush.bf16.msra.mxu0 %v4481
  %6491 = vmatpush.bf16.msra.mxu0 %v4478
  %6492 = vmatpush.bf16.msra.mxu0 %v4475
  %6493 = vmatpush.bf16.msra.mxu0 %v4472
  %6494 = vmatpush.bf16.msra.mxu0 %v4469
  %6495 = vmatmul.bf16.gmra.mxu0 %v5205
  %v6496 = vpop.f32.mrf.mxu0
  %v6497 = vadd.f32 %v6484, %v6496
  %v6498 = vpop.f32.mrf.mxu0
  %6499 = vdwg.mxu0
  %6500 = vmatpush.bf16.msra.mxu0 0
  %6501 = vmatpush.bf16.msra.mxu0 0
  %6502 = vmatpush.bf16.msra.mxu0 0
  %6503 = vmatpush.bf16.msra.mxu0 0
  %6504 = vmatpush.bf16.msra.mxu0 0
  %6505 = vmatpush.bf16.msra.mxu0 0
  %6506 = vmatpush.bf16.msra.mxu0 %v4496
  %6507 = vmatpush.bf16.msra.mxu0 %v4493
  %6508 = vmatmul.bf16.gmra.mxu0 %v5208
  %v6509 = vpop.f32.mrf.mxu0
  %v6510 = vadd.f32 %v6497, %v6509
  %v6511 = vpop.f32.mrf.mxu0
  %6512 = vdwg.mxu0
  %6513 = vmatpush.bf16.msra.mxu0 %v4467
  %6514 = vmatpush.bf16.msra.mxu0 %v4464
  %6515 = vmatpush.bf16.msra.mxu0 %v4461
  %6516 = vmatpush.bf16.msra.mxu0 %v4458
  %6517 = vmatpush.bf16.msra.mxu0 %v4455
  %6518 = vmatpush.bf16.msra.mxu0 %v4452
  %6519 = vmatpush.bf16.msra.mxu0 %v4449
  %6520 = vmatpush.bf16.msra.mxu0 %v4446
  %6521 = vmatmul.bf16.gmra.mxu0 %v5204
  %v6522 = vpop.f32.mrf.mxu0
  %v6523 = vadd.f32 0.0, %v6522
  %v6524 = vpop.f32.mrf.mxu0
  %6525 = vdwg.mxu0
  %6526 = vmatpush.bf16.msra.mxu0 %v4491
  %6527 = vmatpush.bf16.msra.mxu0 %v4488
  %6528 = vmatpush.bf16.msra.mxu0 %v4485
  %6529 = vmatpush.bf16.msra.mxu0 %v4482
  %6530 = vmatpush.bf16.msra.mxu0 %v4479
  %6531 = vmatpush.bf16.msra.mxu0 %v4476
  %6532 = vmatpush.bf16.msra.mxu0 %v4473
  %6533 = vmatpush.bf16.msra.mxu0 %v4470
  %6534 = vmatmul.bf16.gmra.mxu0 %v5205
  %v6535 = vpop.f32.mrf.mxu0
  %v6536 = vadd.f32 %v6523, %v6535
  %v6537 = vpop.f32.mrf.mxu0
  %6538 = vdwg.mxu0
  %6539 = vmatpush.bf16.msra.mxu0 0
  %6540 = vmatpush.bf16.msra.mxu0 0
  %6541 = vmatpush.bf16.msra.mxu0 0
  %6542 = vmatpush.bf16.msra.mxu0 0
  %6543 = vmatpush.bf16.msra.mxu0 0
  %6544 = vmatpush.bf16.msra.mxu0 0
  %6545 = vmatpush.bf16.msra.mxu0 %v4497
  %6546 = vmatpush.bf16.msra.mxu0 %v4494
  %6547 = vmatmul.bf16.gmra.mxu0 %v5208
  %v6548 = vpop.f32.mrf.mxu0
  %v6549 = vadd.f32 %v6536, %v6548
  %v6550 = vpop.f32.mrf.mxu0
  %6551 = vdwg.mxu0
  %v6552 = vpack.c.bf16 %v6471, %v6471
  %v6553 = vpack.c.bf16 %v6510, %v6510
  %v6554 = vpack.c.bf16 %v6549, %v6549
  %s6555 = scalar_lea.vmem %s6, 28
  %v6556 = vld [vmem:[%s6555] sm:$0xf]
  %v6558 = vsel %vm1840, %v6556, 0
  %v6561 = vsel %vm1844, %v6552, 0
  %v6564 = vsel %vm1844, %v6553, 0
  %v6567 = vsel %vm1844, %v6554, 0
  %6569 = vmatpush.bf16.msra.mxu0 0
  %6570 = vmatpush.bf16.msra.mxu0 0
  %6571 = vmatpush.bf16.msra.mxu0 0
  %6572 = vmatpush.bf16.msra.mxu0 0
  %6573 = vmatpush.bf16.msra.mxu0 0
  %6574 = vmatpush.bf16.msra.mxu0 0
  %6575 = vmatpush.bf16.msra.mxu0 0
  %6576 = vmatpush.bf16.msra.mxu0 %v6561
  %6577 = vmatmul.bf16.gmra.mxu0 %v6558
  %v6578 = vpop.f32.mrf.mxu0
  %v6579 = vadd.f32 0.0, %v6578
  %v6580 = vpop.f32.mrf.mxu0
  %6581 = vdwg.mxu0
  %6582 = vmatpush.bf16.msra.mxu0 0
  %6583 = vmatpush.bf16.msra.mxu0 0
  %6584 = vmatpush.bf16.msra.mxu0 0
  %6585 = vmatpush.bf16.msra.mxu0 0
  %6586 = vmatpush.bf16.msra.mxu0 0
  %6587 = vmatpush.bf16.msra.mxu0 0
  %6588 = vmatpush.bf16.msra.mxu0 0
  %6589 = vmatpush.bf16.msra.mxu0 %v6564
  %6590 = vmatmul.bf16.gmra.mxu0 %v6558
  %v6591 = vpop.f32.mrf.mxu0
  %v6592 = vadd.f32 0.0, %v6591
  %v6593 = vpop.f32.mrf.mxu0
  %6594 = vdwg.mxu0
  %6595 = vmatpush.bf16.msra.mxu0 0
  %6596 = vmatpush.bf16.msra.mxu0 0
  %6597 = vmatpush.bf16.msra.mxu0 0
  %6598 = vmatpush.bf16.msra.mxu0 0
  %6599 = vmatpush.bf16.msra.mxu0 0
  %6600 = vmatpush.bf16.msra.mxu0 0
  %6601 = vmatpush.bf16.msra.mxu0 0
  %6602 = vmatpush.bf16.msra.mxu0 %v6567
  %6603 = vmatmul.bf16.gmra.mxu0 %v6558
  %v6604 = vpop.f32.mrf.mxu0
  %v6605 = vadd.f32 0.0, %v6604
  %v6606 = vpop.f32.mrf.mxu0
  %6607 = vdwg.mxu0
  %v6608 = vadd.f32 %v6432, %v6579
  %v6609 = vadd.f32 %v6433, %v6592
  %v6610 = vadd.f32 %v6434, %v6605
  %6611 = vmatpush.bf16.msra.mxu0 %v4929
  %6612 = vmatpush.bf16.msra.mxu0 %v4926
  %6613 = vmatpush.bf16.msra.mxu0 %v4923
  %6614 = vmatpush.bf16.msra.mxu0 %v4920
  %6615 = vmatpush.bf16.msra.mxu0 %v4917
  %6616 = vmatpush.bf16.msra.mxu0 %v4914
  %6617 = vmatpush.bf16.msra.mxu0 %v4911
  %6618 = vmatpush.bf16.msra.mxu0 %v4908
  %6619 = vmatmul.bf16.gmra.mxu0 %v5204
  %v6620 = vpop.f32.mrf.mxu0
  %v6621 = vadd.f32 0.0, %v6620
  %v6622 = vpop.f32.mrf.mxu0
  %6623 = vdwg.mxu0
  %6624 = vmatpush.bf16.msra.mxu0 %v4953
  %6625 = vmatpush.bf16.msra.mxu0 %v4950
  %6626 = vmatpush.bf16.msra.mxu0 %v4947
  %6627 = vmatpush.bf16.msra.mxu0 %v4944
  %6628 = vmatpush.bf16.msra.mxu0 %v4941
  %6629 = vmatpush.bf16.msra.mxu0 %v4938
  %6630 = vmatpush.bf16.msra.mxu0 %v4935
  %6631 = vmatpush.bf16.msra.mxu0 %v4932
  %6632 = vmatmul.bf16.gmra.mxu0 %v5205
  %v6633 = vpop.f32.mrf.mxu0
  %v6634 = vadd.f32 %v6621, %v6633
  %v6635 = vpop.f32.mrf.mxu0
  %6636 = vdwg.mxu0
  %6637 = vmatpush.bf16.msra.mxu0 0
  %6638 = vmatpush.bf16.msra.mxu0 0
  %6639 = vmatpush.bf16.msra.mxu0 0
  %6640 = vmatpush.bf16.msra.mxu0 0
  %6641 = vmatpush.bf16.msra.mxu0 0
  %6642 = vmatpush.bf16.msra.mxu0 0
  %6643 = vmatpush.bf16.msra.mxu0 %v4959
  %6644 = vmatpush.bf16.msra.mxu0 %v4956
  %6645 = vmatmul.bf16.gmra.mxu0 %v5208
  %v6646 = vpop.f32.mrf.mxu0
  %v6647 = vadd.f32 %v6634, %v6646
  %v6648 = vpop.f32.mrf.mxu0
  %6649 = vdwg.mxu0
  %6650 = vmatpush.bf16.msra.mxu0 %v4930
  %6651 = vmatpush.bf16.msra.mxu0 %v4927
  %6652 = vmatpush.bf16.msra.mxu0 %v4924
  %6653 = vmatpush.bf16.msra.mxu0 %v4921
  %6654 = vmatpush.bf16.msra.mxu0 %v4918
  %6655 = vmatpush.bf16.msra.mxu0 %v4915
  %6656 = vmatpush.bf16.msra.mxu0 %v4912
  %6657 = vmatpush.bf16.msra.mxu0 %v4909
  %6658 = vmatmul.bf16.gmra.mxu0 %v5204
  %v6659 = vpop.f32.mrf.mxu0
  %v6660 = vadd.f32 0.0, %v6659
  %v6661 = vpop.f32.mrf.mxu0
  %6662 = vdwg.mxu0
  %6663 = vmatpush.bf16.msra.mxu0 %v4954
  %6664 = vmatpush.bf16.msra.mxu0 %v4951
  %6665 = vmatpush.bf16.msra.mxu0 %v4948
  %6666 = vmatpush.bf16.msra.mxu0 %v4945
  %6667 = vmatpush.bf16.msra.mxu0 %v4942
  %6668 = vmatpush.bf16.msra.mxu0 %v4939
  %6669 = vmatpush.bf16.msra.mxu0 %v4936
  %6670 = vmatpush.bf16.msra.mxu0 %v4933
  %6671 = vmatmul.bf16.gmra.mxu0 %v5205
  %v6672 = vpop.f32.mrf.mxu0
  %v6673 = vadd.f32 %v6660, %v6672
  %v6674 = vpop.f32.mrf.mxu0
  %6675 = vdwg.mxu0
  %6676 = vmatpush.bf16.msra.mxu0 0
  %6677 = vmatpush.bf16.msra.mxu0 0
  %6678 = vmatpush.bf16.msra.mxu0 0
  %6679 = vmatpush.bf16.msra.mxu0 0
  %6680 = vmatpush.bf16.msra.mxu0 0
  %6681 = vmatpush.bf16.msra.mxu0 0
  %6682 = vmatpush.bf16.msra.mxu0 %v4960
  %6683 = vmatpush.bf16.msra.mxu0 %v4957
  %6684 = vmatmul.bf16.gmra.mxu0 %v5208
  %v6685 = vpop.f32.mrf.mxu0
  %v6686 = vadd.f32 %v6673, %v6685
  %v6687 = vpop.f32.mrf.mxu0
  %6688 = vdwg.mxu0
  %6689 = vmatpush.bf16.msra.mxu0 %v4931
  %6690 = vmatpush.bf16.msra.mxu0 %v4928
  %6691 = vmatpush.bf16.msra.mxu0 %v4925
  %6692 = vmatpush.bf16.msra.mxu0 %v4922
  %6693 = vmatpush.bf16.msra.mxu0 %v4919
  %6694 = vmatpush.bf16.msra.mxu0 %v4916
  %6695 = vmatpush.bf16.msra.mxu0 %v4913
  %6696 = vmatpush.bf16.msra.mxu0 %v4910
  %6697 = vmatmul.bf16.gmra.mxu0 %v5204
  %v6698 = vpop.f32.mrf.mxu0
  %v6699 = vadd.f32 0.0, %v6698
  %v6700 = vpop.f32.mrf.mxu0
  %6701 = vdwg.mxu0
  %6702 = vmatpush.bf16.msra.mxu0 %v4955
  %6703 = vmatpush.bf16.msra.mxu0 %v4952
  %6704 = vmatpush.bf16.msra.mxu0 %v4949
  %6705 = vmatpush.bf16.msra.mxu0 %v4946
  %6706 = vmatpush.bf16.msra.mxu0 %v4943
  %6707 = vmatpush.bf16.msra.mxu0 %v4940
  %6708 = vmatpush.bf16.msra.mxu0 %v4937
  %6709 = vmatpush.bf16.msra.mxu0 %v4934
  %6710 = vmatmul.bf16.gmra.mxu0 %v5205
  %v6711 = vpop.f32.mrf.mxu0
  %v6712 = vadd.f32 %v6699, %v6711
  %v6713 = vpop.f32.mrf.mxu0
  %6714 = vdwg.mxu0
  %6715 = vmatpush.bf16.msra.mxu0 0
  %6716 = vmatpush.bf16.msra.mxu0 0
  %6717 = vmatpush.bf16.msra.mxu0 0
  %6718 = vmatpush.bf16.msra.mxu0 0
  %6719 = vmatpush.bf16.msra.mxu0 0
  %6720 = vmatpush.bf16.msra.mxu0 0
  %6721 = vmatpush.bf16.msra.mxu0 %v4961
  %6722 = vmatpush.bf16.msra.mxu0 %v4958
  %6723 = vmatmul.bf16.gmra.mxu0 %v5208
  %v6724 = vpop.f32.mrf.mxu0
  %v6725 = vadd.f32 %v6712, %v6724
  %v6726 = vpop.f32.mrf.mxu0
  %6727 = vdwg.mxu0
  %v6728 = vpack.c.bf16 %v6647, %v6647
  %v6729 = vpack.c.bf16 %v6686, %v6686
  %v6730 = vpack.c.bf16 %v6725, %v6725
  %s6731 = scalar_lea.vmem %s6, 32
  %v6732 = vld [vmem:[%s6731] sm:$0xf]
  %v6734 = vsel %vm1840, %v6732, 0
  %v6737 = vsel %vm1844, %v6728, 0
  %v6740 = vsel %vm1844, %v6729, 0
  %v6743 = vsel %vm1844, %v6730, 0
  %6745 = vmatpush.bf16.msra.mxu0 0
  %6746 = vmatpush.bf16.msra.mxu0 0
  %6747 = vmatpush.bf16.msra.mxu0 0
  %6748 = vmatpush.bf16.msra.mxu0 0
  %6749 = vmatpush.bf16.msra.mxu0 0
  %6750 = vmatpush.bf16.msra.mxu0 0
  %6751 = vmatpush.bf16.msra.mxu0 0
  %6752 = vmatpush.bf16.msra.mxu0 %v6737
  %6753 = vmatmul.bf16.gmra.mxu0 %v6734
  %v6754 = vpop.f32.mrf.mxu0
  %v6755 = vadd.f32 0.0, %v6754
  %v6756 = vpop.f32.mrf.mxu0
  %6757 = vdwg.mxu0
  %6758 = vmatpush.bf16.msra.mxu0 0
  %6759 = vmatpush.bf16.msra.mxu0 0
  %6760 = vmatpush.bf16.msra.mxu0 0
  %6761 = vmatpush.bf16.msra.mxu0 0
  %6762 = vmatpush.bf16.msra.mxu0 0
  %6763 = vmatpush.bf16.msra.mxu0 0
  %6764 = vmatpush.bf16.msra.mxu0 0
  %6765 = vmatpush.bf16.msra.mxu0 %v6740
  %6766 = vmatmul.bf16.gmra.mxu0 %v6734
  %v6767 = vpop.f32.mrf.mxu0
  %v6768 = vadd.f32 0.0, %v6767
  %v6769 = vpop.f32.mrf.mxu0
  %6770 = vdwg.mxu0
  %6771 = vmatpush.bf16.msra.mxu0 0
  %6772 = vmatpush.bf16.msra.mxu0 0
  %6773 = vmatpush.bf16.msra.mxu0 0
  %6774 = vmatpush.bf16.msra.mxu0 0
  %6775 = vmatpush.bf16.msra.mxu0 0
  %6776 = vmatpush.bf16.msra.mxu0 0
  %6777 = vmatpush.bf16.msra.mxu0 0
  %6778 = vmatpush.bf16.msra.mxu0 %v6743
  %6779 = vmatmul.bf16.gmra.mxu0 %v6734
  %v6780 = vpop.f32.mrf.mxu0
  %v6781 = vadd.f32 0.0, %v6780
  %v6782 = vpop.f32.mrf.mxu0
  %6783 = vdwg.mxu0
  %v6784 = vadd.f32 %v6608, %v6755
  %v6785 = vadd.f32 %v6609, %v6768
  %v6786 = vadd.f32 %v6610, %v6781
  %v6787 = vld [vmem:[%s7] sm:$0xff]
  %6789 = vset.pattern.permute.xlu0 0
  %6790 = vperm.xlu0 %6789, %v6787
  %v6791 = vpop.permute.xlu0 %6790
  %v6793 = vadd.f32 %v6784, %v6791
  %v6794 = vadd.f32 %v6785, %v6791
  %v6795 = vadd.f32 %v6786, %v6791
  %v6796 = vadd.f32 %v6793, %v956
  %v6797 = vadd.f32 %v6794, %v982
  %v6798 = vadd.f32 %v6795, %v1008
  %v6799 = vmax.f32 %v6796, 0.0
  %v6800 = vmax.f32 %v6797, 0.0
  %v6801 = vmax.f32 %v6798, 0.0
  %v6802 = vpack.c.bf16 %v6799, %v6799
  %v6803 = vpack.c.bf16 %v6800, %v6800
  %v6804 = vpack.c.bf16 %v6801, %v6801
  %v6806 = vsel %vm1305, %v6804, 0
  %6808 = vmatpush.bf16.msra.mxu0 %v1218
  %6809 = vmatpush.bf16.msra.mxu0 %v1215
  %6810 = vmatpush.bf16.msra.mxu0 %v1212
  %6811 = vmatpush.bf16.msra.mxu0 %v1209
  %6812 = vmatpush.bf16.msra.mxu0 %v1206
  %6813 = vmatpush.bf16.msra.mxu0 %v1203
  %6814 = vmatpush.bf16.msra.mxu0 %v1200
  %6815 = vmatpush.bf16.msra.mxu0 %v1197
  %6816 = vmatmul.bf16.gmra.mxu0 %v6802
  %v6817 = vpop.f32.mrf.mxu0
  %v6818 = vadd.f32 0.0, %v6817
  %v6819 = vpop.f32.mrf.mxu0
  %6820 = vdwg.mxu0
  %6821 = vmatpush.bf16.msra.mxu0 %v1242
  %6822 = vmatpush.bf16.msra.mxu0 %v1239
  %6823 = vmatpush.bf16.msra.mxu0 %v1236
  %6824 = vmatpush.bf16.msra.mxu0 %v1233
  %6825 = vmatpush.bf16.msra.mxu0 %v1230
  %6826 = vmatpush.bf16.msra.mxu0 %v1227
  %6827 = vmatpush.bf16.msra.mxu0 %v1224
  %6828 = vmatpush.bf16.msra.mxu0 %v1221
  %6829 = vmatmul.bf16.gmra.mxu0 %v6803
  %v6830 = vpop.f32.mrf.mxu0
  %v6831 = vadd.f32 %v6818, %v6830
  %v6832 = vpop.f32.mrf.mxu0
  %6833 = vdwg.mxu0
  %6834 = vmatpush.bf16.msra.mxu0 0
  %6835 = vmatpush.bf16.msra.mxu0 0
  %6836 = vmatpush.bf16.msra.mxu0 0
  %6837 = vmatpush.bf16.msra.mxu0 0
  %6838 = vmatpush.bf16.msra.mxu0 0
  %6839 = vmatpush.bf16.msra.mxu0 0
  %6840 = vmatpush.bf16.msra.mxu0 %v1248
  %6841 = vmatpush.bf16.msra.mxu0 %v1245
  %6842 = vmatmul.bf16.gmra.mxu0 %v6806
  %v6843 = vpop.f32.mrf.mxu0
  %v6844 = vadd.f32 %v6831, %v6843
  %v6845 = vpop.f32.mrf.mxu0
  %6846 = vdwg.mxu0
  %6847 = vmatpush.bf16.msra.mxu0 %v1219
  %6848 = vmatpush.bf16.msra.mxu0 %v1216
  %6849 = vmatpush.bf16.msra.mxu0 %v1213
  %6850 = vmatpush.bf16.msra.mxu0 %v1210
  %6851 = vmatpush.bf16.msra.mxu0 %v1207
  %6852 = vmatpush.bf16.msra.mxu0 %v1204
  %6853 = vmatpush.bf16.msra.mxu0 %v1201
  %6854 = vmatpush.bf16.msra.mxu0 %v1198
  %6855 = vmatmul.bf16.gmra.mxu0 %v6802
  %v6856 = vpop.f32.mrf.mxu0
  %v6857 = vadd.f32 0.0, %v6856
  %v6858 = vpop.f32.mrf.mxu0
  %6859 = vdwg.mxu0
  %6860 = vmatpush.bf16.msra.mxu0 %v1243
  %6861 = vmatpush.bf16.msra.mxu0 %v1240
  %6862 = vmatpush.bf16.msra.mxu0 %v1237
  %6863 = vmatpush.bf16.msra.mxu0 %v1234
  %6864 = vmatpush.bf16.msra.mxu0 %v1231
  %6865 = vmatpush.bf16.msra.mxu0 %v1228
  %6866 = vmatpush.bf16.msra.mxu0 %v1225
  %6867 = vmatpush.bf16.msra.mxu0 %v1222
  %6868 = vmatmul.bf16.gmra.mxu0 %v6803
  %v6869 = vpop.f32.mrf.mxu0
  %v6870 = vadd.f32 %v6857, %v6869
  %v6871 = vpop.f32.mrf.mxu0
  %6872 = vdwg.mxu0
  %6873 = vmatpush.bf16.msra.mxu0 0
  %6874 = vmatpush.bf16.msra.mxu0 0
  %6875 = vmatpush.bf16.msra.mxu0 0
  %6876 = vmatpush.bf16.msra.mxu0 0
  %6877 = vmatpush.bf16.msra.mxu0 0
  %6878 = vmatpush.bf16.msra.mxu0 0
  %6879 = vmatpush.bf16.msra.mxu0 %v1249
  %6880 = vmatpush.bf16.msra.mxu0 %v1246
  %6881 = vmatmul.bf16.gmra.mxu0 %v6806
  %v6882 = vpop.f32.mrf.mxu0
  %v6883 = vadd.f32 %v6870, %v6882
  %v6884 = vpop.f32.mrf.mxu0
  %6885 = vdwg.mxu0
  %6886 = vmatpush.bf16.msra.mxu0 %v1220
  %6887 = vmatpush.bf16.msra.mxu0 %v1217
  %6888 = vmatpush.bf16.msra.mxu0 %v1214
  %6889 = vmatpush.bf16.msra.mxu0 %v1211
  %6890 = vmatpush.bf16.msra.mxu0 %v1208
  %6891 = vmatpush.bf16.msra.mxu0 %v1205
  %6892 = vmatpush.bf16.msra.mxu0 %v1202
  %6893 = vmatpush.bf16.msra.mxu0 %v1199
  %6894 = vmatmul.bf16.gmra.mxu0 %v6802
  %v6895 = vpop.f32.mrf.mxu0
  %v6896 = vadd.f32 0.0, %v6895
  %v6897 = vpop.f32.mrf.mxu0
  %6898 = vdwg.mxu0
  %6899 = vmatpush.bf16.msra.mxu0 %v1244
  %6900 = vmatpush.bf16.msra.mxu0 %v1241
  %6901 = vmatpush.bf16.msra.mxu0 %v1238
  %6902 = vmatpush.bf16.msra.mxu0 %v1235
  %6903 = vmatpush.bf16.msra.mxu0 %v1232
  %6904 = vmatpush.bf16.msra.mxu0 %v1229
  %6905 = vmatpush.bf16.msra.mxu0 %v1226
  %6906 = vmatpush.bf16.msra.mxu0 %v1223
  %6907 = vmatmul.bf16.gmra.mxu0 %v6803
  %v6908 = vpop.f32.mrf.mxu0
  %v6909 = vadd.f32 %v6896, %v6908
  %v6910 = vpop.f32.mrf.mxu0
  %6911 = vdwg.mxu0
  %6912 = vmatpush.bf16.msra.mxu0 0
  %6913 = vmatpush.bf16.msra.mxu0 0
  %6914 = vmatpush.bf16.msra.mxu0 0
  %6915 = vmatpush.bf16.msra.mxu0 0
  %6916 = vmatpush.bf16.msra.mxu0 0
  %6917 = vmatpush.bf16.msra.mxu0 0
  %6918 = vmatpush.bf16.msra.mxu0 %v1250
  %6919 = vmatpush.bf16.msra.mxu0 %v1247
  %6920 = vmatmul.bf16.gmra.mxu0 %v6806
  %v6921 = vpop.f32.mrf.mxu0
  %v6922 = vadd.f32 %v6909, %v6921
  %v6923 = vpop.f32.mrf.mxu0
  %6924 = vdwg.mxu0
  %v6925 = vpack.c.bf16 %v6844, %v6844
  %v6926 = vpack.c.bf16 %v6883, %v6883
  %v6927 = vpack.c.bf16 %v6922, %v6922
  %v6928 = vld [vmem:[%s8] sm:$0xf]
  %v6929 = vld [vmem:[%s8 + $0x4] sm:$0xf]
  %v6930 = vld [vmem:[%s8 + $0x8] sm:$0xf]
  %v6931 = vld [vmem:[%s8 + $0xc] sm:$0xf]
  %6932 = vmatpush.bf16.msra.mxu0 %v1631
  %6933 = vmatpush.bf16.msra.mxu0 %v1628
  %6934 = vmatpush.bf16.msra.mxu0 %v1625
  %6935 = vmatpush.bf16.msra.mxu0 %v1622
  %6936 = vmatpush.bf16.msra.mxu0 %v1619
  %6937 = vmatpush.bf16.msra.mxu0 %v1616
  %6938 = vmatpush.bf16.msra.mxu0 %v1613
  %6939 = vmatpush.bf16.msra.mxu0 %v1610
  %6940 = vmatmul.bf16.gmra.mxu0 %v6802
  %v6941 = vpop.f32.mrf.mxu0
  %v6942 = vadd.f32 0.0, %v6941
  %v6943 = vpop.f32.mrf.mxu0
  %6944 = vdwg.mxu0
  %6945 = vmatpush.bf16.msra.mxu0 %v1655
  %6946 = vmatpush.bf16.msra.mxu0 %v1652
  %6947 = vmatpush.bf16.msra.mxu0 %v1649
  %6948 = vmatpush.bf16.msra.mxu0 %v1646
  %6949 = vmatpush.bf16.msra.mxu0 %v1643
  %6950 = vmatpush.bf16.msra.mxu0 %v1640
  %6951 = vmatpush.bf16.msra.mxu0 %v1637
  %6952 = vmatpush.bf16.msra.mxu0 %v1634
  %6953 = vmatmul.bf16.gmra.mxu0 %v6803
  %v6954 = vpop.f32.mrf.mxu0
  %v6955 = vadd.f32 %v6942, %v6954
  %v6956 = vpop.f32.mrf.mxu0
  %6957 = vdwg.mxu0
  %6958 = vmatpush.bf16.msra.mxu0 0
  %6959 = vmatpush.bf16.msra.mxu0 0
  %6960 = vmatpush.bf16.msra.mxu0 0
  %6961 = vmatpush.bf16.msra.mxu0 0
  %6962 = vmatpush.bf16.msra.mxu0 0
  %6963 = vmatpush.bf16.msra.mxu0 0
  %6964 = vmatpush.bf16.msra.mxu0 %v1661
  %6965 = vmatpush.bf16.msra.mxu0 %v1658
  %6966 = vmatmul.bf16.gmra.mxu0 %v6806
  %v6967 = vpop.f32.mrf.mxu0
  %v6968 = vadd.f32 %v6955, %v6967
  %v6969 = vpop.f32.mrf.mxu0
  %6970 = vdwg.mxu0
  %6971 = vmatpush.bf16.msra.mxu0 %v1632
  %6972 = vmatpush.bf16.msra.mxu0 %v1629
  %6973 = vmatpush.bf16.msra.mxu0 %v1626
  %6974 = vmatpush.bf16.msra.mxu0 %v1623
  %6975 = vmatpush.bf16.msra.mxu0 %v1620
  %6976 = vmatpush.bf16.msra.mxu0 %v1617
  %6977 = vmatpush.bf16.msra.mxu0 %v1614
  %6978 = vmatpush.bf16.msra.mxu0 %v1611
  %6979 = vmatmul.bf16.gmra.mxu0 %v6802
  %v6980 = vpop.f32.mrf.mxu0
  %v6981 = vadd.f32 0.0, %v6980
  %v6982 = vpop.f32.mrf.mxu0
  %6983 = vdwg.mxu0
  %6984 = vmatpush.bf16.msra.mxu0 %v1656
  %6985 = vmatpush.bf16.msra.mxu0 %v1653
  %6986 = vmatpush.bf16.msra.mxu0 %v1650
  %6987 = vmatpush.bf16.msra.mxu0 %v1647
  %6988 = vmatpush.bf16.msra.mxu0 %v1644
  %6989 = vmatpush.bf16.msra.mxu0 %v1641
  %6990 = vmatpush.bf16.msra.mxu0 %v1638
  %6991 = vmatpush.bf16.msra.mxu0 %v1635
  %6992 = vmatmul.bf16.gmra.mxu0 %v6803
  %v6993 = vpop.f32.mrf.mxu0
  %v6994 = vadd.f32 %v6981, %v6993
  %v6995 = vpop.f32.mrf.mxu0
  %6996 = vdwg.mxu0
  %6997 = vmatpush.bf16.msra.mxu0 0
  %6998 = vmatpush.bf16.msra.mxu0 0
  %6999 = vmatpush.bf16.msra.mxu0 0
  %7000 = vmatpush.bf16.msra.mxu0 0
  %7001 = vmatpush.bf16.msra.mxu0 0
  %7002 = vmatpush.bf16.msra.mxu0 0
  %7003 = vmatpush.bf16.msra.mxu0 %v1662
  %7004 = vmatpush.bf16.msra.mxu0 %v1659
  %7005 = vmatmul.bf16.gmra.mxu0 %v6806
  %v7006 = vpop.f32.mrf.mxu0
  %v7007 = vadd.f32 %v6994, %v7006
  %v7008 = vpop.f32.mrf.mxu0
  %7009 = vdwg.mxu0
  %7010 = vmatpush.bf16.msra.mxu0 %v1633
  %7011 = vmatpush.bf16.msra.mxu0 %v1630
  %7012 = vmatpush.bf16.msra.mxu0 %v1627
  %7013 = vmatpush.bf16.msra.mxu0 %v1624
  %7014 = vmatpush.bf16.msra.mxu0 %v1621
  %7015 = vmatpush.bf16.msra.mxu0 %v1618
  %7016 = vmatpush.bf16.msra.mxu0 %v1615
  %7017 = vmatpush.bf16.msra.mxu0 %v1612
  %7018 = vmatmul.bf16.gmra.mxu0 %v6802
  %v7019 = vpop.f32.mrf.mxu0
  %v7020 = vadd.f32 0.0, %v7019
  %v7021 = vpop.f32.mrf.mxu0
  %7022 = vdwg.mxu0
  %7023 = vmatpush.bf16.msra.mxu0 %v1657
  %7024 = vmatpush.bf16.msra.mxu0 %v1654
  %7025 = vmatpush.bf16.msra.mxu0 %v1651
  %7026 = vmatpush.bf16.msra.mxu0 %v1648
  %7027 = vmatpush.bf16.msra.mxu0 %v1645
  %7028 = vmatpush.bf16.msra.mxu0 %v1642
  %7029 = vmatpush.bf16.msra.mxu0 %v1639
  %7030 = vmatpush.bf16.msra.mxu0 %v1636
  %7031 = vmatmul.bf16.gmra.mxu0 %v6803
  %v7032 = vpop.f32.mrf.mxu0
  %v7033 = vadd.f32 %v7020, %v7032
  %v7034 = vpop.f32.mrf.mxu0
  %7035 = vdwg.mxu0
  %7036 = vmatpush.bf16.msra.mxu0 0
  %7037 = vmatpush.bf16.msra.mxu0 0
  %7038 = vmatpush.bf16.msra.mxu0 0
  %7039 = vmatpush.bf16.msra.mxu0 0
  %7040 = vmatpush.bf16.msra.mxu0 0
  %7041 = vmatpush.bf16.msra.mxu0 0
  %7042 = vmatpush.bf16.msra.mxu0 %v1663
  %7043 = vmatpush.bf16.msra.mxu0 %v1660
  %7044 = vmatmul.bf16.gmra.mxu0 %v6806
  %v7045 = vpop.f32.mrf.mxu0
  %v7046 = vadd.f32 %v7033, %v7045
  %v7047 = vpop.f32.mrf.mxu0
  %7048 = vdwg.mxu0
  %v7049 = vpack.c.bf16 %v6968, %v6968
  %v7050 = vpack.c.bf16 %v7007, %v7007
  %v7051 = vpack.c.bf16 %v7046, %v7046
  %s7052 = scalar_lea.vmem %s8, 16
  %v7053 = vld [vmem:[%s7052] sm:$0xf]
  %v7054 = vld [vmem:[%s7052 + $0x4] sm:$0xf]
  %v7055 = vld [vmem:[%s7052 + $0x8] sm:$0xf]
  %v7056 = vld [vmem:[%s7052 + $0xc] sm:$0xf]
  %v7061 = vunpack.c.l.b16 %v7053
  %v7062 = vunpack.c.l.b16 %v7054
  %v7063 = vunpack.c.l.b16 %v7055
  %v7064 = vunpack.c.l.b16 %v7056
  %v7065 = vpack.c.b16 %v7062, %v7061
  %v7066 = vpack.c.b16 %v7064, %v7063
  %v7068 = vsel %vm1840, %v7065, 0
  %v7071 = vsel %vm1840, %v7066, 0
  %v7074 = vsel %vm1844, %v7049, 0
  %v7077 = vsel %vm1844, %v7050, 0
  %v7080 = vsel %vm1844, %v7051, 0
  %7082 = vmatpush.bf16.msra.mxu0 0
  %7083 = vmatpush.bf16.msra.mxu0 0
  %7084 = vmatpush.bf16.msra.mxu0 0
  %7085 = vmatpush.bf16.msra.mxu0 0
  %7086 = vmatpush.bf16.msra.mxu0 0
  %7087 = vmatpush.bf16.msra.mxu0 0
  %7088 = vmatpush.bf16.msra.mxu0 0
  %7089 = vmatpush.bf16.msra.mxu0 %v7074
  %7090 = vmatmul.bf16.gmra.mxu0 %v7068
  %v7091 = vpop.f32.mrf.mxu0
  %v7092 = vadd.f32 0.0, %v7091
  %v7093 = vpop.f32.mrf.mxu0
  %v7094 = vadd.f32 0.0, %v7093
  %7095 = vmatmul.bf16.gmra.mxu0 %v7071
  %v7096 = vpop.f32.mrf.mxu0
  %v7097 = vadd.f32 0.0, %v7096
  %v7098 = vpop.f32.mrf.mxu0
  %v7099 = vadd.f32 0.0, %v7098
  %7100 = vdwg.mxu0
  %7101 = vmatpush.bf16.msra.mxu0 0
  %7102 = vmatpush.bf16.msra.mxu0 0
  %7103 = vmatpush.bf16.msra.mxu0 0
  %7104 = vmatpush.bf16.msra.mxu0 0
  %7105 = vmatpush.bf16.msra.mxu0 0
  %7106 = vmatpush.bf16.msra.mxu0 0
  %7107 = vmatpush.bf16.msra.mxu0 0
  %7108 = vmatpush.bf16.msra.mxu0 %v7077
  %7109 = vmatmul.bf16.gmra.mxu0 %v7068
  %v7110 = vpop.f32.mrf.mxu0
  %v7111 = vadd.f32 0.0, %v7110
  %v7112 = vpop.f32.mrf.mxu0
  %v7113 = vadd.f32 0.0, %v7112
  %7114 = vmatmul.bf16.gmra.mxu0 %v7071
  %v7115 = vpop.f32.mrf.mxu0
  %v7116 = vadd.f32 0.0, %v7115
  %v7117 = vpop.f32.mrf.mxu0
  %v7118 = vadd.f32 0.0, %v7117
  %7119 = vdwg.mxu0
  %7120 = vmatpush.bf16.msra.mxu0 0
  %7121 = vmatpush.bf16.msra.mxu0 0
  %7122 = vmatpush.bf16.msra.mxu0 0
  %7123 = vmatpush.bf16.msra.mxu0 0
  %7124 = vmatpush.bf16.msra.mxu0 0
  %7125 = vmatpush.bf16.msra.mxu0 0
  %7126 = vmatpush.bf16.msra.mxu0 0
  %7127 = vmatpush.bf16.msra.mxu0 %v7080
  %7128 = vmatmul.bf16.gmra.mxu0 %v7068
  %v7129 = vpop.f32.mrf.mxu0
  %v7130 = vadd.f32 0.0, %v7129
  %v7131 = vpop.f32.mrf.mxu0
  %v7132 = vadd.f32 0.0, %v7131
  %7133 = vmatmul.bf16.gmra.mxu0 %v7071
  %v7134 = vpop.f32.mrf.mxu0
  %v7135 = vadd.f32 0.0, %v7134
  %v7136 = vpop.f32.mrf.mxu0
  %v7137 = vadd.f32 0.0, %v7136
  %7138 = vdwg.mxu0
  %v7143 = vunpack.c.l.b16 %v6928
  %v7144 = vunpack.c.l.b16 %v6929
  %v7145 = vunpack.c.l.b16 %v6930
  %v7146 = vunpack.c.l.b16 %v6931
  %v7147 = vpack.c.b16 %v7144, %v7143
  %v7148 = vpack.c.b16 %v7146, %v7145
  %v7150 = vsel %vm1840, %v7147, 0
  %v7153 = vsel %vm1840, %v7148, 0
  %v7156 = vsel %vm1844, %v6925, 0
  %v7159 = vsel %vm1844, %v6926, 0
  %v7162 = vsel %vm1844, %v6927, 0
  %7164 = vmatpush.bf16.msra.mxu0 0
  %7165 = vmatpush.bf16.msra.mxu0 0
  %7166 = vmatpush.bf16.msra.mxu0 0
  %7167 = vmatpush.bf16.msra.mxu0 0
  %7168 = vmatpush.bf16.msra.mxu0 0
  %7169 = vmatpush.bf16.msra.mxu0 0
  %7170 = vmatpush.bf16.msra.mxu0 0
  %7171 = vmatpush.bf16.msra.mxu0 %v7156
  %7172 = vmatmul.bf16.gmra.mxu0 %v7150
  %v7173 = vpop.f32.mrf.mxu0
  %v7174 = vadd.f32 %v7092, %v7173
  %v7175 = vpop.f32.mrf.mxu0
  %v7176 = vadd.f32 %v7094, %v7175
  %7177 = vmatmul.bf16.gmra.mxu0 %v7153
  %v7178 = vpop.f32.mrf.mxu0
  %v7179 = vadd.f32 %v7097, %v7178
  %v7180 = vpop.f32.mrf.mxu0
  %v7181 = vadd.f32 %v7099, %v7180
  %7182 = vdwg.mxu0
  %7183 = vmatpush.bf16.msra.mxu0 0
  %7184 = vmatpush.bf16.msra.mxu0 0
  %7185 = vmatpush.bf16.msra.mxu0 0
  %7186 = vmatpush.bf16.msra.mxu0 0
  %7187 = vmatpush.bf16.msra.mxu0 0
  %7188 = vmatpush.bf16.msra.mxu0 0
  %7189 = vmatpush.bf16.msra.mxu0 0
  %7190 = vmatpush.bf16.msra.mxu0 %v7159
  %7191 = vmatmul.bf16.gmra.mxu0 %v7150
  %v7192 = vpop.f32.mrf.mxu0
  %v7193 = vadd.f32 %v7111, %v7192
  %v7194 = vpop.f32.mrf.mxu0
  %v7195 = vadd.f32 %v7113, %v7194
  %7196 = vmatmul.bf16.gmra.mxu0 %v7153
  %v7197 = vpop.f32.mrf.mxu0
  %v7198 = vadd.f32 %v7116, %v7197
  %v7199 = vpop.f32.mrf.mxu0
  %v7200 = vadd.f32 %v7118, %v7199
  %7201 = vdwg.mxu0
  %7202 = vmatpush.bf16.msra.mxu0 0
  %7203 = vmatpush.bf16.msra.mxu0 0
  %7204 = vmatpush.bf16.msra.mxu0 0
  %7205 = vmatpush.bf16.msra.mxu0 0
  %7206 = vmatpush.bf16.msra.mxu0 0
  %7207 = vmatpush.bf16.msra.mxu0 0
  %7208 = vmatpush.bf16.msra.mxu0 0
  %7209 = vmatpush.bf16.msra.mxu0 %v7162
  %7210 = vmatmul.bf16.gmra.mxu0 %v7150
  %v7211 = vpop.f32.mrf.mxu0
  %v7212 = vadd.f32 %v7130, %v7211
  %v7213 = vpop.f32.mrf.mxu0
  %v7214 = vadd.f32 %v7132, %v7213
  %7215 = vmatmul.bf16.gmra.mxu0 %v7153
  %v7216 = vpop.f32.mrf.mxu0
  %v7217 = vadd.f32 %v7135, %v7216
  %v7218 = vpop.f32.mrf.mxu0
  %v7219 = vadd.f32 %v7137, %v7218
  %7220 = vdwg.mxu0
  %7221 = vmatpush.bf16.msra.mxu0 %v2145
  %7222 = vmatpush.bf16.msra.mxu0 %v2142
  %7223 = vmatpush.bf16.msra.mxu0 %v2139
  %7224 = vmatpush.bf16.msra.mxu0 %v2136
  %7225 = vmatpush.bf16.msra.mxu0 %v2133
  %7226 = vmatpush.bf16.msra.mxu0 %v2130
  %7227 = vmatpush.bf16.msra.mxu0 %v2127
  %7228 = vmatpush.bf16.msra.mxu0 %v2124
  %7229 = vmatmul.bf16.gmra.mxu0 %v6802
  %v7230 = vpop.f32.mrf.mxu0
  %v7231 = vadd.f32 0.0, %v7230
  %v7232 = vpop.f32.mrf.mxu0
  %7233 = vdwg.mxu0
  %7234 = vmatpush.bf16.msra.mxu0 %v2169
  %7235 = vmatpush.bf16.msra.mxu0 %v2166
  %7236 = vmatpush.bf16.msra.mxu0 %v2163
  %7237 = vmatpush.bf16.msra.mxu0 %v2160
  %7238 = vmatpush.bf16.msra.mxu0 %v2157
  %7239 = vmatpush.bf16.msra.mxu0 %v2154
  %7240 = vmatpush.bf16.msra.mxu0 %v2151
  %7241 = vmatpush.bf16.msra.mxu0 %v2148
  %7242 = vmatmul.bf16.gmra.mxu0 %v6803
  %v7243 = vpop.f32.mrf.mxu0
  %v7244 = vadd.f32 %v7231, %v7243
  %v7245 = vpop.f32.mrf.mxu0
  %7246 = vdwg.mxu0
  %7247 = vmatpush.bf16.msra.mxu0 0
  %7248 = vmatpush.bf16.msra.mxu0 0
  %7249 = vmatpush.bf16.msra.mxu0 0
  %7250 = vmatpush.bf16.msra.mxu0 0
  %7251 = vmatpush.bf16.msra.mxu0 0
  %7252 = vmatpush.bf16.msra.mxu0 0
  %7253 = vmatpush.bf16.msra.mxu0 %v2175
  %7254 = vmatpush.bf16.msra.mxu0 %v2172
  %7255 = vmatmul.bf16.gmra.mxu0 %v6806
  %v7256 = vpop.f32.mrf.mxu0
  %v7257 = vadd.f32 %v7244, %v7256
  %v7258 = vpop.f32.mrf.mxu0
  %7259 = vdwg.mxu0
  %7260 = vmatpush.bf16.msra.mxu0 %v2146
  %7261 = vmatpush.bf16.msra.mxu0 %v2143
  %7262 = vmatpush.bf16.msra.mxu0 %v2140
  %7263 = vmatpush.bf16.msra.mxu0 %v2137
  %7264 = vmatpush.bf16.msra.mxu0 %v2134
  %7265 = vmatpush.bf16.msra.mxu0 %v2131
  %7266 = vmatpush.bf16.msra.mxu0 %v2128
  %7267 = vmatpush.bf16.msra.mxu0 %v2125
  %7268 = vmatmul.bf16.gmra.mxu0 %v6802
  %v7269 = vpop.f32.mrf.mxu0
  %v7270 = vadd.f32 0.0, %v7269
  %v7271 = vpop.f32.mrf.mxu0
  %7272 = vdwg.mxu0
  %7273 = vmatpush.bf16.msra.mxu0 %v2170
  %7274 = vmatpush.bf16.msra.mxu0 %v2167
  %7275 = vmatpush.bf16.msra.mxu0 %v2164
  %7276 = vmatpush.bf16.msra.mxu0 %v2161
  %7277 = vmatpush.bf16.msra.mxu0 %v2158
  %7278 = vmatpush.bf16.msra.mxu0 %v2155
  %7279 = vmatpush.bf16.msra.mxu0 %v2152
  %7280 = vmatpush.bf16.msra.mxu0 %v2149
  %7281 = vmatmul.bf16.gmra.mxu0 %v6803
  %v7282 = vpop.f32.mrf.mxu0
  %v7283 = vadd.f32 %v7270, %v7282
  %v7284 = vpop.f32.mrf.mxu0
  %7285 = vdwg.mxu0
  %7286 = vmatpush.bf16.msra.mxu0 0
  %7287 = vmatpush.bf16.msra.mxu0 0
  %7288 = vmatpush.bf16.msra.mxu0 0
  %7289 = vmatpush.bf16.msra.mxu0 0
  %7290 = vmatpush.bf16.msra.mxu0 0
  %7291 = vmatpush.bf16.msra.mxu0 0
  %7292 = vmatpush.bf16.msra.mxu0 %v2176
  %7293 = vmatpush.bf16.msra.mxu0 %v2173
  %7294 = vmatmul.bf16.gmra.mxu0 %v6806
  %v7295 = vpop.f32.mrf.mxu0
  %v7296 = vadd.f32 %v7283, %v7295
  %v7297 = vpop.f32.mrf.mxu0
  %7298 = vdwg.mxu0
  %7299 = vmatpush.bf16.msra.mxu0 %v2147
  %7300 = vmatpush.bf16.msra.mxu0 %v2144
  %7301 = vmatpush.bf16.msra.mxu0 %v2141
  %7302 = vmatpush.bf16.msra.mxu0 %v2138
  %7303 = vmatpush.bf16.msra.mxu0 %v2135
  %7304 = vmatpush.bf16.msra.mxu0 %v2132
  %7305 = vmatpush.bf16.msra.mxu0 %v2129
  %7306 = vmatpush.bf16.msra.mxu0 %v2126
  %7307 = vmatmul.bf16.gmra.mxu0 %v6802
  %v7308 = vpop.f32.mrf.mxu0
  %v7309 = vadd.f32 0.0, %v7308
  %v7310 = vpop.f32.mrf.mxu0
  %7311 = vdwg.mxu0
  %7312 = vmatpush.bf16.msra.mxu0 %v2171
  %7313 = vmatpush.bf16.msra.mxu0 %v2168
  %7314 = vmatpush.bf16.msra.mxu0 %v2165
  %7315 = vmatpush.bf16.msra.mxu0 %v2162
  %7316 = vmatpush.bf16.msra.mxu0 %v2159
  %7317 = vmatpush.bf16.msra.mxu0 %v2156
  %7318 = vmatpush.bf16.msra.mxu0 %v2153
  %7319 = vmatpush.bf16.msra.mxu0 %v2150
  %7320 = vmatmul.bf16.gmra.mxu0 %v6803
  %v7321 = vpop.f32.mrf.mxu0
  %v7322 = vadd.f32 %v7309, %v7321
  %v7323 = vpop.f32.mrf.mxu0
  %7324 = vdwg.mxu0
  %7325 = vmatpush.bf16.msra.mxu0 0
  %7326 = vmatpush.bf16.msra.mxu0 0
  %7327 = vmatpush.bf16.msra.mxu0 0
  %7328 = vmatpush.bf16.msra.mxu0 0
  %7329 = vmatpush.bf16.msra.mxu0 0
  %7330 = vmatpush.bf16.msra.mxu0 0
  %7331 = vmatpush.bf16.msra.mxu0 %v2177
  %7332 = vmatpush.bf16.msra.mxu0 %v2174
  %7333 = vmatmul.bf16.gmra.mxu0 %v6806
  %v7334 = vpop.f32.mrf.mxu0
  %v7335 = vadd.f32 %v7322, %v7334
  %v7336 = vpop.f32.mrf.mxu0
  %7337 = vdwg.mxu0
  %v7338 = vpack.c.bf16 %v7257, %v7257
  %v7339 = vpack.c.bf16 %v7296, %v7296
  %v7340 = vpack.c.bf16 %v7335, %v7335
  %s7341 = scalar_lea.vmem %s8, 32
  %v7342 = vld [vmem:[%s7341] sm:$0xf]
  %v7343 = vld [vmem:[%s7341 + $0x4] sm:$0xf]
  %v7344 = vld [vmem:[%s7341 + $0x8] sm:$0xf]
  %v7345 = vld [vmem:[%s7341 + $0xc] sm:$0xf]
  %v7350 = vunpack.c.l.b16 %v7342
  %v7351 = vunpack.c.l.b16 %v7343
  %v7352 = vunpack.c.l.b16 %v7344
  %v7353 = vunpack.c.l.b16 %v7345
  %v7354 = vpack.c.b16 %v7351, %v7350
  %v7355 = vpack.c.b16 %v7353, %v7352
  %v7357 = vsel %vm1840, %v7354, 0
  %v7360 = vsel %vm1840, %v7355, 0
  %v7363 = vsel %vm1844, %v7338, 0
  %v7366 = vsel %vm1844, %v7339, 0
  %v7369 = vsel %vm1844, %v7340, 0
  %7371 = vmatpush.bf16.msra.mxu0 0
  %7372 = vmatpush.bf16.msra.mxu0 0
  %7373 = vmatpush.bf16.msra.mxu0 0
  %7374 = vmatpush.bf16.msra.mxu0 0
  %7375 = vmatpush.bf16.msra.mxu0 0
  %7376 = vmatpush.bf16.msra.mxu0 0
  %7377 = vmatpush.bf16.msra.mxu0 0
  %7378 = vmatpush.bf16.msra.mxu0 %v7363
  %7379 = vmatmul.bf16.gmra.mxu0 %v7357
  %v7380 = vpop.f32.mrf.mxu0
  %v7381 = vadd.f32 0.0, %v7380
  %v7382 = vpop.f32.mrf.mxu0
  %v7383 = vadd.f32 0.0, %v7382
  %7384 = vmatmul.bf16.gmra.mxu0 %v7360
  %v7385 = vpop.f32.mrf.mxu0
  %v7386 = vadd.f32 0.0, %v7385
  %v7387 = vpop.f32.mrf.mxu0
  %v7388 = vadd.f32 0.0, %v7387
  %7389 = vdwg.mxu0
  %7390 = vmatpush.bf16.msra.mxu0 0
  %7391 = vmatpush.bf16.msra.mxu0 0
  %7392 = vmatpush.bf16.msra.mxu0 0
  %7393 = vmatpush.bf16.msra.mxu0 0
  %7394 = vmatpush.bf16.msra.mxu0 0
  %7395 = vmatpush.bf16.msra.mxu0 0
  %7396 = vmatpush.bf16.msra.mxu0 0
  %7397 = vmatpush.bf16.msra.mxu0 %v7366
  %7398 = vmatmul.bf16.gmra.mxu0 %v7357
  %v7399 = vpop.f32.mrf.mxu0
  %v7400 = vadd.f32 0.0, %v7399
  %v7401 = vpop.f32.mrf.mxu0
  %v7402 = vadd.f32 0.0, %v7401
  %7403 = vmatmul.bf16.gmra.mxu0 %v7360
  %v7404 = vpop.f32.mrf.mxu0
  %v7405 = vadd.f32 0.0, %v7404
  %v7406 = vpop.f32.mrf.mxu0
  %v7407 = vadd.f32 0.0, %v7406
  %7408 = vdwg.mxu0
  %7409 = vmatpush.bf16.msra.mxu0 0
  %7410 = vmatpush.bf16.msra.mxu0 0
  %7411 = vmatpush.bf16.msra.mxu0 0
  %7412 = vmatpush.bf16.msra.mxu0 0
  %7413 = vmatpush.bf16.msra.mxu0 0
  %7414 = vmatpush.bf16.msra.mxu0 0
  %7415 = vmatpush.bf16.msra.mxu0 0
  %7416 = vmatpush.bf16.msra.mxu0 %v7369
  %7417 = vmatmul.bf16.gmra.mxu0 %v7357
  %v7418 = vpop.f32.mrf.mxu0
  %v7419 = vadd.f32 0.0, %v7418
  %v7420 = vpop.f32.mrf.mxu0
  %v7421 = vadd.f32 0.0, %v7420
  %7422 = vmatmul.bf16.gmra.mxu0 %v7360
  %v7423 = vpop.f32.mrf.mxu0
  %v7424 = vadd.f32 0.0, %v7423
  %v7425 = vpop.f32.mrf.mxu0
  %v7426 = vadd.f32 0.0, %v7425
  %7427 = vdwg.mxu0
  %v7428 = vadd.f32 %v7174, %v7381
  %v7429 = vadd.f32 %v7193, %v7400
  %v7430 = vadd.f32 %v7212, %v7419
  %v7431 = vadd.f32 %v7176, %v7383
  %v7432 = vadd.f32 %v7195, %v7402
  %v7433 = vadd.f32 %v7214, %v7421
  %v7434 = vadd.f32 %v7179, %v7386
  %v7435 = vadd.f32 %v7198, %v7405
  %v7436 = vadd.f32 %v7217, %v7424
  %v7437 = vadd.f32 %v7181, %v7388
  %v7438 = vadd.f32 %v7200, %v7407
  %v7439 = vadd.f32 %v7219, %v7426
  %7440 = vmatpush.bf16.msra.mxu0 %v2609
  %7441 = vmatpush.bf16.msra.mxu0 %v2606
  %7442 = vmatpush.bf16.msra.mxu0 %v2603
  %7443 = vmatpush.bf16.msra.mxu0 %v2600
  %7444 = vmatpush.bf16.msra.mxu0 %v2597
  %7445 = vmatpush.bf16.msra.mxu0 %v2594
  %7446 = vmatpush.bf16.msra.mxu0 %v2591
  %7447 = vmatpush.bf16.msra.mxu0 %v2588
  %7448 = vmatmul.bf16.gmra.mxu0 %v6802
  %v7449 = vpop.f32.mrf.mxu0
  %v7450 = vadd.f32 0.0, %v7449
  %v7451 = vpop.f32.mrf.mxu0
  %7452 = vdwg.mxu0
  %7453 = vmatpush.bf16.msra.mxu0 %v2633
  %7454 = vmatpush.bf16.msra.mxu0 %v2630
  %7455 = vmatpush.bf16.msra.mxu0 %v2627
  %7456 = vmatpush.bf16.msra.mxu0 %v2624
  %7457 = vmatpush.bf16.msra.mxu0 %v2621
  %7458 = vmatpush.bf16.msra.mxu0 %v2618
  %7459 = vmatpush.bf16.msra.mxu0 %v2615
  %7460 = vmatpush.bf16.msra.mxu0 %v2612
  %7461 = vmatmul.bf16.gmra.mxu0 %v6803
  %v7462 = vpop.f32.mrf.mxu0
  %v7463 = vadd.f32 %v7450, %v7462
  %v7464 = vpop.f32.mrf.mxu0
  %7465 = vdwg.mxu0
  %7466 = vmatpush.bf16.msra.mxu0 0
  %7467 = vmatpush.bf16.msra.mxu0 0
  %7468 = vmatpush.bf16.msra.mxu0 0
  %7469 = vmatpush.bf16.msra.mxu0 0
  %7470 = vmatpush.bf16.msra.mxu0 0
  %7471 = vmatpush.bf16.msra.mxu0 0
  %7472 = vmatpush.bf16.msra.mxu0 %v2639
  %7473 = vmatpush.bf16.msra.mxu0 %v2636
  %7474 = vmatmul.bf16.gmra.mxu0 %v6806
  %v7475 = vpop.f32.mrf.mxu0
  %v7476 = vadd.f32 %v7463, %v7475
  %v7477 = vpop.f32.mrf.mxu0
  %7478 = vdwg.mxu0
  %7479 = vmatpush.bf16.msra.mxu0 %v2610
  %7480 = vmatpush.bf16.msra.mxu0 %v2607
  %7481 = vmatpush.bf16.msra.mxu0 %v2604
  %7482 = vmatpush.bf16.msra.mxu0 %v2601
  %7483 = vmatpush.bf16.msra.mxu0 %v2598
  %7484 = vmatpush.bf16.msra.mxu0 %v2595
  %7485 = vmatpush.bf16.msra.mxu0 %v2592
  %7486 = vmatpush.bf16.msra.mxu0 %v2589
  %7487 = vmatmul.bf16.gmra.mxu0 %v6802
  %v7488 = vpop.f32.mrf.mxu0
  %v7489 = vadd.f32 0.0, %v7488
  %v7490 = vpop.f32.mrf.mxu0
  %7491 = vdwg.mxu0
  %7492 = vmatpush.bf16.msra.mxu0 %v2634
  %7493 = vmatpush.bf16.msra.mxu0 %v2631
  %7494 = vmatpush.bf16.msra.mxu0 %v2628
  %7495 = vmatpush.bf16.msra.mxu0 %v2625
  %7496 = vmatpush.bf16.msra.mxu0 %v2622
  %7497 = vmatpush.bf16.msra.mxu0 %v2619
  %7498 = vmatpush.bf16.msra.mxu0 %v2616
  %7499 = vmatpush.bf16.msra.mxu0 %v2613
  %7500 = vmatmul.bf16.gmra.mxu0 %v6803
  %v7501 = vpop.f32.mrf.mxu0
  %v7502 = vadd.f32 %v7489, %v7501
  %v7503 = vpop.f32.mrf.mxu0
  %7504 = vdwg.mxu0
  %7505 = vmatpush.bf16.msra.mxu0 0
  %7506 = vmatpush.bf16.msra.mxu0 0
  %7507 = vmatpush.bf16.msra.mxu0 0
  %7508 = vmatpush.bf16.msra.mxu0 0
  %7509 = vmatpush.bf16.msra.mxu0 0
  %7510 = vmatpush.bf16.msra.mxu0 0
  %7511 = vmatpush.bf16.msra.mxu0 %v2640
  %7512 = vmatpush.bf16.msra.mxu0 %v2637
  %7513 = vmatmul.bf16.gmra.mxu0 %v6806
  %v7514 = vpop.f32.mrf.mxu0
  %v7515 = vadd.f32 %v7502, %v7514
  %v7516 = vpop.f32.mrf.mxu0
  %7517 = vdwg.mxu0
  %7518 = vmatpush.bf16.msra.mxu0 %v2611
  %7519 = vmatpush.bf16.msra.mxu0 %v2608
  %7520 = vmatpush.bf16.msra.mxu0 %v2605
  %7521 = vmatpush.bf16.msra.mxu0 %v2602
  %7522 = vmatpush.bf16.msra.mxu0 %v2599
  %7523 = vmatpush.bf16.msra.mxu0 %v2596
  %7524 = vmatpush.bf16.msra.mxu0 %v2593
  %7525 = vmatpush.bf16.msra.mxu0 %v2590
  %7526 = vmatmul.bf16.gmra.mxu0 %v6802
  %v7527 = vpop.f32.mrf.mxu0
  %v7528 = vadd.f32 0.0, %v7527
  %v7529 = vpop.f32.mrf.mxu0
  %7530 = vdwg.mxu0
  %7531 = vmatpush.bf16.msra.mxu0 %v2635
  %7532 = vmatpush.bf16.msra.mxu0 %v2632
  %7533 = vmatpush.bf16.msra.mxu0 %v2629
  %7534 = vmatpush.bf16.msra.mxu0 %v2626
  %7535 = vmatpush.bf16.msra.mxu0 %v2623
  %7536 = vmatpush.bf16.msra.mxu0 %v2620
  %7537 = vmatpush.bf16.msra.mxu0 %v2617
  %7538 = vmatpush.bf16.msra.mxu0 %v2614
  %7539 = vmatmul.bf16.gmra.mxu0 %v6803
  %v7540 = vpop.f32.mrf.mxu0
  %v7541 = vadd.f32 %v7528, %v7540
  %v7542 = vpop.f32.mrf.mxu0
  %7543 = vdwg.mxu0
  %7544 = vmatpush.bf16.msra.mxu0 0
  %7545 = vmatpush.bf16.msra.mxu0 0
  %7546 = vmatpush.bf16.msra.mxu0 0
  %7547 = vmatpush.bf16.msra.mxu0 0
  %7548 = vmatpush.bf16.msra.mxu0 0
  %7549 = vmatpush.bf16.msra.mxu0 0
  %7550 = vmatpush.bf16.msra.mxu0 %v2641
  %7551 = vmatpush.bf16.msra.mxu0 %v2638
  %7552 = vmatmul.bf16.gmra.mxu0 %v6806
  %v7553 = vpop.f32.mrf.mxu0
  %v7554 = vadd.f32 %v7541, %v7553
  %v7555 = vpop.f32.mrf.mxu0
  %7556 = vdwg.mxu0
  %v7557 = vpack.c.bf16 %v7476, %v7476
  %v7558 = vpack.c.bf16 %v7515, %v7515
  %v7559 = vpack.c.bf16 %v7554, %v7554
  %s7560 = scalar_lea.vmem %s8, 48
  %v7561 = vld [vmem:[%s7560] sm:$0xf]
  %v7562 = vld [vmem:[%s7560 + $0x4] sm:$0xf]
  %v7563 = vld [vmem:[%s7560 + $0x8] sm:$0xf]
  %v7564 = vld [vmem:[%s7560 + $0xc] sm:$0xf]
  %v7569 = vunpack.c.l.b16 %v7561
  %v7570 = vunpack.c.l.b16 %v7562
  %v7571 = vunpack.c.l.b16 %v7563
  %v7572 = vunpack.c.l.b16 %v7564
  %v7573 = vpack.c.b16 %v7570, %v7569
  %v7574 = vpack.c.b16 %v7572, %v7571
  %v7576 = vsel %vm1840, %v7573, 0
  %v7579 = vsel %vm1840, %v7574, 0
  %v7582 = vsel %vm1844, %v7557, 0
  %v7585 = vsel %vm1844, %v7558, 0
  %v7588 = vsel %vm1844, %v7559, 0
  %7590 = vmatpush.bf16.msra.mxu0 0
  %7591 = vmatpush.bf16.msra.mxu0 0
  %7592 = vmatpush.bf16.msra.mxu0 0
  %7593 = vmatpush.bf16.msra.mxu0 0
  %7594 = vmatpush.bf16.msra.mxu0 0
  %7595 = vmatpush.bf16.msra.mxu0 0
  %7596 = vmatpush.bf16.msra.mxu0 0
  %7597 = vmatpush.bf16.msra.mxu0 %v7582
  %7598 = vmatmul.bf16.gmra.mxu0 %v7576
  %v7599 = vpop.f32.mrf.mxu0
  %v7600 = vadd.f32 0.0, %v7599
  %v7601 = vpop.f32.mrf.mxu0
  %v7602 = vadd.f32 0.0, %v7601
  %7603 = vmatmul.bf16.gmra.mxu0 %v7579
  %v7604 = vpop.f32.mrf.mxu0
  %v7605 = vadd.f32 0.0, %v7604
  %v7606 = vpop.f32.mrf.mxu0
  %v7607 = vadd.f32 0.0, %v7606
  %7608 = vdwg.mxu0
  %7609 = vmatpush.bf16.msra.mxu0 0
  %7610 = vmatpush.bf16.msra.mxu0 0
  %7611 = vmatpush.bf16.msra.mxu0 0
  %7612 = vmatpush.bf16.msra.mxu0 0
  %7613 = vmatpush.bf16.msra.mxu0 0
  %7614 = vmatpush.bf16.msra.mxu0 0
  %7615 = vmatpush.bf16.msra.mxu0 0
  %7616 = vmatpush.bf16.msra.mxu0 %v7585
  %7617 = vmatmul.bf16.gmra.mxu0 %v7576
  %v7618 = vpop.f32.mrf.mxu0
  %v7619 = vadd.f32 0.0, %v7618
  %v7620 = vpop.f32.mrf.mxu0
  %v7621 = vadd.f32 0.0, %v7620
  %7622 = vmatmul.bf16.gmra.mxu0 %v7579
  %v7623 = vpop.f32.mrf.mxu0
  %v7624 = vadd.f32 0.0, %v7623
  %v7625 = vpop.f32.mrf.mxu0
  %v7626 = vadd.f32 0.0, %v7625
  %7627 = vdwg.mxu0
  %7628 = vmatpush.bf16.msra.mxu0 0
  %7629 = vmatpush.bf16.msra.mxu0 0
  %7630 = vmatpush.bf16.msra.mxu0 0
  %7631 = vmatpush.bf16.msra.mxu0 0
  %7632 = vmatpush.bf16.msra.mxu0 0
  %7633 = vmatpush.bf16.msra.mxu0 0
  %7634 = vmatpush.bf16.msra.mxu0 0
  %7635 = vmatpush.bf16.msra.mxu0 %v7588
  %7636 = vmatmul.bf16.gmra.mxu0 %v7576
  %v7637 = vpop.f32.mrf.mxu0
  %v7638 = vadd.f32 0.0, %v7637
  %v7639 = vpop.f32.mrf.mxu0
  %v7640 = vadd.f32 0.0, %v7639
  %7641 = vmatmul.bf16.gmra.mxu0 %v7579
  %v7642 = vpop.f32.mrf.mxu0
  %v7643 = vadd.f32 0.0, %v7642
  %v7644 = vpop.f32.mrf.mxu0
  %v7645 = vadd.f32 0.0, %v7644
  %7646 = vdwg.mxu0
  %v7647 = vadd.f32 %v7428, %v7600
  %v7648 = vadd.f32 %v7429, %v7619
  %v7649 = vadd.f32 %v7430, %v7638
  %v7650 = vadd.f32 %v7431, %v7602
  %v7651 = vadd.f32 %v7432, %v7621
  %v7652 = vadd.f32 %v7433, %v7640
  %v7653 = vadd.f32 %v7434, %v7605
  %v7654 = vadd.f32 %v7435, %v7624
  %v7655 = vadd.f32 %v7436, %v7643
  %v7656 = vadd.f32 %v7437, %v7607
  %v7657 = vadd.f32 %v7438, %v7626
  %v7658 = vadd.f32 %v7439, %v7645
  %7659 = vmatpush.bf16.msra.mxu0 %v3073
  %7660 = vmatpush.bf16.msra.mxu0 %v3070
  %7661 = vmatpush.bf16.msra.mxu0 %v3067
  %7662 = vmatpush.bf16.msra.mxu0 %v3064
  %7663 = vmatpush.bf16.msra.mxu0 %v3061
  %7664 = vmatpush.bf16.msra.mxu0 %v3058
  %7665 = vmatpush.bf16.msra.mxu0 %v3055
  %7666 = vmatpush.bf16.msra.mxu0 %v3052
  %7667 = vmatmul.bf16.gmra.mxu0 %v6802
  %v7668 = vpop.f32.mrf.mxu0
  %v7669 = vadd.f32 0.0, %v7668
  %v7670 = vpop.f32.mrf.mxu0
  %7671 = vdwg.mxu0
  %7672 = vmatpush.bf16.msra.mxu0 %v3097
  %7673 = vmatpush.bf16.msra.mxu0 %v3094
  %7674 = vmatpush.bf16.msra.mxu0 %v3091
  %7675 = vmatpush.bf16.msra.mxu0 %v3088
  %7676 = vmatpush.bf16.msra.mxu0 %v3085
  %7677 = vmatpush.bf16.msra.mxu0 %v3082
  %7678 = vmatpush.bf16.msra.mxu0 %v3079
  %7679 = vmatpush.bf16.msra.mxu0 %v3076
  %7680 = vmatmul.bf16.gmra.mxu0 %v6803
  %v7681 = vpop.f32.mrf.mxu0
  %v7682 = vadd.f32 %v7669, %v7681
  %v7683 = vpop.f32.mrf.mxu0
  %7684 = vdwg.mxu0
  %7685 = vmatpush.bf16.msra.mxu0 0
  %7686 = vmatpush.bf16.msra.mxu0 0
  %7687 = vmatpush.bf16.msra.mxu0 0
  %7688 = vmatpush.bf16.msra.mxu0 0
  %7689 = vmatpush.bf16.msra.mxu0 0
  %7690 = vmatpush.bf16.msra.mxu0 0
  %7691 = vmatpush.bf16.msra.mxu0 %v3103
  %7692 = vmatpush.bf16.msra.mxu0 %v3100
  %7693 = vmatmul.bf16.gmra.mxu0 %v6806
  %v7694 = vpop.f32.mrf.mxu0
  %v7695 = vadd.f32 %v7682, %v7694
  %v7696 = vpop.f32.mrf.mxu0
  %7697 = vdwg.mxu0
  %7698 = vmatpush.bf16.msra.mxu0 %v3074
  %7699 = vmatpush.bf16.msra.mxu0 %v3071
  %7700 = vmatpush.bf16.msra.mxu0 %v3068
  %7701 = vmatpush.bf16.msra.mxu0 %v3065
  %7702 = vmatpush.bf16.msra.mxu0 %v3062
  %7703 = vmatpush.bf16.msra.mxu0 %v3059
  %7704 = vmatpush.bf16.msra.mxu0 %v3056
  %7705 = vmatpush.bf16.msra.mxu0 %v3053
  %7706 = vmatmul.bf16.gmra.mxu0 %v6802
  %v7707 = vpop.f32.mrf.mxu0
  %v7708 = vadd.f32 0.0, %v7707
  %v7709 = vpop.f32.mrf.mxu0
  %7710 = vdwg.mxu0
  %7711 = vmatpush.bf16.msra.mxu0 %v3098
  %7712 = vmatpush.bf16.msra.mxu0 %v3095
  %7713 = vmatpush.bf16.msra.mxu0 %v3092
  %7714 = vmatpush.bf16.msra.mxu0 %v3089
  %7715 = vmatpush.bf16.msra.mxu0 %v3086
  %7716 = vmatpush.bf16.msra.mxu0 %v3083
  %7717 = vmatpush.bf16.msra.mxu0 %v3080
  %7718 = vmatpush.bf16.msra.mxu0 %v3077
  %7719 = vmatmul.bf16.gmra.mxu0 %v6803
  %v7720 = vpop.f32.mrf.mxu0
  %v7721 = vadd.f32 %v7708, %v7720
  %v7722 = vpop.f32.mrf.mxu0
  %7723 = vdwg.mxu0
  %7724 = vmatpush.bf16.msra.mxu0 0
  %7725 = vmatpush.bf16.msra.mxu0 0
  %7726 = vmatpush.bf16.msra.mxu0 0
  %7727 = vmatpush.bf16.msra.mxu0 0
  %7728 = vmatpush.bf16.msra.mxu0 0
  %7729 = vmatpush.bf16.msra.mxu0 0
  %7730 = vmatpush.bf16.msra.mxu0 %v3104
  %7731 = vmatpush.bf16.msra.mxu0 %v3101
  %7732 = vmatmul.bf16.gmra.mxu0 %v6806
  %v7733 = vpop.f32.mrf.mxu0
  %v7734 = vadd.f32 %v7721, %v7733
  %v7735 = vpop.f32.mrf.mxu0
  %7736 = vdwg.mxu0
  %7737 = vmatpush.bf16.msra.mxu0 %v3075
  %7738 = vmatpush.bf16.msra.mxu0 %v3072
  %7739 = vmatpush.bf16.msra.mxu0 %v3069
  %7740 = vmatpush.bf16.msra.mxu0 %v3066
  %7741 = vmatpush.bf16.msra.mxu0 %v3063
  %7742 = vmatpush.bf16.msra.mxu0 %v3060
  %7743 = vmatpush.bf16.msra.mxu0 %v3057
  %7744 = vmatpush.bf16.msra.mxu0 %v3054
  %7745 = vmatmul.bf16.gmra.mxu0 %v6802
  %v7746 = vpop.f32.mrf.mxu0
  %v7747 = vadd.f32 0.0, %v7746
  %v7748 = vpop.f32.mrf.mxu0
  %7749 = vdwg.mxu0
  %7750 = vmatpush.bf16.msra.mxu0 %v3099
  %7751 = vmatpush.bf16.msra.mxu0 %v3096
  %7752 = vmatpush.bf16.msra.mxu0 %v3093
  %7753 = vmatpush.bf16.msra.mxu0 %v3090
  %7754 = vmatpush.bf16.msra.mxu0 %v3087
  %7755 = vmatpush.bf16.msra.mxu0 %v3084
  %7756 = vmatpush.bf16.msra.mxu0 %v3081
  %7757 = vmatpush.bf16.msra.mxu0 %v3078
  %7758 = vmatmul.bf16.gmra.mxu0 %v6803
  %v7759 = vpop.f32.mrf.mxu0
  %v7760 = vadd.f32 %v7747, %v7759
  %v7761 = vpop.f32.mrf.mxu0
  %7762 = vdwg.mxu0
  %7763 = vmatpush.bf16.msra.mxu0 0
  %7764 = vmatpush.bf16.msra.mxu0 0
  %7765 = vmatpush.bf16.msra.mxu0 0
  %7766 = vmatpush.bf16.msra.mxu0 0
  %7767 = vmatpush.bf16.msra.mxu0 0
  %7768 = vmatpush.bf16.msra.mxu0 0
  %7769 = vmatpush.bf16.msra.mxu0 %v3105
  %7770 = vmatpush.bf16.msra.mxu0 %v3102
  %7771 = vmatmul.bf16.gmra.mxu0 %v6806
  %v7772 = vpop.f32.mrf.mxu0
  %v7773 = vadd.f32 %v7760, %v7772
  %v7774 = vpop.f32.mrf.mxu0
  %7775 = vdwg.mxu0
  %v7776 = vpack.c.bf16 %v7695, %v7695
  %v7777 = vpack.c.bf16 %v7734, %v7734
  %v7778 = vpack.c.bf16 %v7773, %v7773
  %s7779 = scalar_lea.vmem %s8, 64
  %v7780 = vld [vmem:[%s7779] sm:$0xf]
  %v7781 = vld [vmem:[%s7779 + $0x4] sm:$0xf]
  %v7782 = vld [vmem:[%s7779 + $0x8] sm:$0xf]
  %v7783 = vld [vmem:[%s7779 + $0xc] sm:$0xf]
  %v7788 = vunpack.c.l.b16 %v7780
  %v7789 = vunpack.c.l.b16 %v7781
  %v7790 = vunpack.c.l.b16 %v7782
  %v7791 = vunpack.c.l.b16 %v7783
  %v7792 = vpack.c.b16 %v7789, %v7788
  %v7793 = vpack.c.b16 %v7791, %v7790
  %v7795 = vsel %vm1840, %v7792, 0
  %v7798 = vsel %vm1840, %v7793, 0
  %v7801 = vsel %vm1844, %v7776, 0
  %v7804 = vsel %vm1844, %v7777, 0
  %v7807 = vsel %vm1844, %v7778, 0
  %7809 = vmatpush.bf16.msra.mxu0 0
  %7810 = vmatpush.bf16.msra.mxu0 0
  %7811 = vmatpush.bf16.msra.mxu0 0
  %7812 = vmatpush.bf16.msra.mxu0 0
  %7813 = vmatpush.bf16.msra.mxu0 0
  %7814 = vmatpush.bf16.msra.mxu0 0
  %7815 = vmatpush.bf16.msra.mxu0 0
  %7816 = vmatpush.bf16.msra.mxu0 %v7801
  %7817 = vmatmul.bf16.gmra.mxu0 %v7795
  %v7818 = vpop.f32.mrf.mxu0
  %v7819 = vadd.f32 0.0, %v7818
  %v7820 = vpop.f32.mrf.mxu0
  %v7821 = vadd.f32 0.0, %v7820
  %7822 = vmatmul.bf16.gmra.mxu0 %v7798
  %v7823 = vpop.f32.mrf.mxu0
  %v7824 = vadd.f32 0.0, %v7823
  %v7825 = vpop.f32.mrf.mxu0
  %v7826 = vadd.f32 0.0, %v7825
  %7827 = vdwg.mxu0
  %7828 = vmatpush.bf16.msra.mxu0 0
  %7829 = vmatpush.bf16.msra.mxu0 0
  %7830 = vmatpush.bf16.msra.mxu0 0
  %7831 = vmatpush.bf16.msra.mxu0 0
  %7832 = vmatpush.bf16.msra.mxu0 0
  %7833 = vmatpush.bf16.msra.mxu0 0
  %7834 = vmatpush.bf16.msra.mxu0 0
  %7835 = vmatpush.bf16.msra.mxu0 %v7804
  %7836 = vmatmul.bf16.gmra.mxu0 %v7795
  %v7837 = vpop.f32.mrf.mxu0
  %v7838 = vadd.f32 0.0, %v7837
  %v7839 = vpop.f32.mrf.mxu0
  %v7840 = vadd.f32 0.0, %v7839
  %7841 = vmatmul.bf16.gmra.mxu0 %v7798
  %v7842 = vpop.f32.mrf.mxu0
  %v7843 = vadd.f32 0.0, %v7842
  %v7844 = vpop.f32.mrf.mxu0
  %v7845 = vadd.f32 0.0, %v7844
  %7846 = vdwg.mxu0
  %7847 = vmatpush.bf16.msra.mxu0 0
  %7848 = vmatpush.bf16.msra.mxu0 0
  %7849 = vmatpush.bf16.msra.mxu0 0
  %7850 = vmatpush.bf16.msra.mxu0 0
  %7851 = vmatpush.bf16.msra.mxu0 0
  %7852 = vmatpush.bf16.msra.mxu0 0
  %7853 = vmatpush.bf16.msra.mxu0 0
  %7854 = vmatpush.bf16.msra.mxu0 %v7807
  %7855 = vmatmul.bf16.gmra.mxu0 %v7795
  %v7856 = vpop.f32.mrf.mxu0
  %v7857 = vadd.f32 0.0, %v7856
  %v7858 = vpop.f32.mrf.mxu0
  %v7859 = vadd.f32 0.0, %v7858
  %7860 = vmatmul.bf16.gmra.mxu0 %v7798
  %v7861 = vpop.f32.mrf.mxu0
  %v7862 = vadd.f32 0.0, %v7861
  %v7863 = vpop.f32.mrf.mxu0
  %v7864 = vadd.f32 0.0, %v7863
  %7865 = vdwg.mxu0
  %v7866 = vadd.f32 %v7647, %v7819
  %v7867 = vadd.f32 %v7648, %v7838
  %v7868 = vadd.f32 %v7649, %v7857
  %v7869 = vadd.f32 %v7650, %v7821
  %v7870 = vadd.f32 %v7651, %v7840
  %v7871 = vadd.f32 %v7652, %v7859
  %v7872 = vadd.f32 %v7653, %v7824
  %v7873 = vadd.f32 %v7654, %v7843
  %v7874 = vadd.f32 %v7655, %v7862
  %v7875 = vadd.f32 %v7656, %v7826
  %v7876 = vadd.f32 %v7657, %v7845
  %v7877 = vadd.f32 %v7658, %v7864
  %7878 = vmatpush.bf16.msra.mxu0 %v3537
  %7879 = vmatpush.bf16.msra.mxu0 %v3534
  %7880 = vmatpush.bf16.msra.mxu0 %v3531
  %7881 = vmatpush.bf16.msra.mxu0 %v3528
  %7882 = vmatpush.bf16.msra.mxu0 %v3525
  %7883 = vmatpush.bf16.msra.mxu0 %v3522
  %7884 = vmatpush.bf16.msra.mxu0 %v3519
  %7885 = vmatpush.bf16.msra.mxu0 %v3516
  %7886 = vmatmul.bf16.gmra.mxu0 %v6802
  %v7887 = vpop.f32.mrf.mxu0
  %v7888 = vadd.f32 0.0, %v7887
  %v7889 = vpop.f32.mrf.mxu0
  %7890 = vdwg.mxu0
  %7891 = vmatpush.bf16.msra.mxu0 %v3561
  %7892 = vmatpush.bf16.msra.mxu0 %v3558
  %7893 = vmatpush.bf16.msra.mxu0 %v3555
  %7894 = vmatpush.bf16.msra.mxu0 %v3552
  %7895 = vmatpush.bf16.msra.mxu0 %v3549
  %7896 = vmatpush.bf16.msra.mxu0 %v3546
  %7897 = vmatpush.bf16.msra.mxu0 %v3543
  %7898 = vmatpush.bf16.msra.mxu0 %v3540
  %7899 = vmatmul.bf16.gmra.mxu0 %v6803
  %v7900 = vpop.f32.mrf.mxu0
  %v7901 = vadd.f32 %v7888, %v7900
  %v7902 = vpop.f32.mrf.mxu0
  %7903 = vdwg.mxu0
  %7904 = vmatpush.bf16.msra.mxu0 0
  %7905 = vmatpush.bf16.msra.mxu0 0
  %7906 = vmatpush.bf16.msra.mxu0 0
  %7907 = vmatpush.bf16.msra.mxu0 0
  %7908 = vmatpush.bf16.msra.mxu0 0
  %7909 = vmatpush.bf16.msra.mxu0 0
  %7910 = vmatpush.bf16.msra.mxu0 %v3567
  %7911 = vmatpush.bf16.msra.mxu0 %v3564
  %7912 = vmatmul.bf16.gmra.mxu0 %v6806
  %v7913 = vpop.f32.mrf.mxu0
  %v7914 = vadd.f32 %v7901, %v7913
  %v7915 = vpop.f32.mrf.mxu0
  %7916 = vdwg.mxu0
  %7917 = vmatpush.bf16.msra.mxu0 %v3538
  %7918 = vmatpush.bf16.msra.mxu0 %v3535
  %7919 = vmatpush.bf16.msra.mxu0 %v3532
  %7920 = vmatpush.bf16.msra.mxu0 %v3529
  %7921 = vmatpush.bf16.msra.mxu0 %v3526
  %7922 = vmatpush.bf16.msra.mxu0 %v3523
  %7923 = vmatpush.bf16.msra.mxu0 %v3520
  %7924 = vmatpush.bf16.msra.mxu0 %v3517
  %7925 = vmatmul.bf16.gmra.mxu0 %v6802
  %v7926 = vpop.f32.mrf.mxu0
  %v7927 = vadd.f32 0.0, %v7926
  %v7928 = vpop.f32.mrf.mxu0
  %7929 = vdwg.mxu0
  %7930 = vmatpush.bf16.msra.mxu0 %v3562
  %7931 = vmatpush.bf16.msra.mxu0 %v3559
  %7932 = vmatpush.bf16.msra.mxu0 %v3556
  %7933 = vmatpush.bf16.msra.mxu0 %v3553
  %7934 = vmatpush.bf16.msra.mxu0 %v3550
  %7935 = vmatpush.bf16.msra.mxu0 %v3547
  %7936 = vmatpush.bf16.msra.mxu0 %v3544
  %7937 = vmatpush.bf16.msra.mxu0 %v3541
  %7938 = vmatmul.bf16.gmra.mxu0 %v6803
  %v7939 = vpop.f32.mrf.mxu0
  %v7940 = vadd.f32 %v7927, %v7939
  %v7941 = vpop.f32.mrf.mxu0
  %7942 = vdwg.mxu0
  %7943 = vmatpush.bf16.msra.mxu0 0
  %7944 = vmatpush.bf16.msra.mxu0 0
  %7945 = vmatpush.bf16.msra.mxu0 0
  %7946 = vmatpush.bf16.msra.mxu0 0
  %7947 = vmatpush.bf16.msra.mxu0 0
  %7948 = vmatpush.bf16.msra.mxu0 0
  %7949 = vmatpush.bf16.msra.mxu0 %v3568
  %7950 = vmatpush.bf16.msra.mxu0 %v3565
  %7951 = vmatmul.bf16.gmra.mxu0 %v6806
  %v7952 = vpop.f32.mrf.mxu0
  %v7953 = vadd.f32 %v7940, %v7952
  %v7954 = vpop.f32.mrf.mxu0
  %7955 = vdwg.mxu0
  %7956 = vmatpush.bf16.msra.mxu0 %v3539
  %7957 = vmatpush.bf16.msra.mxu0 %v3536
  %7958 = vmatpush.bf16.msra.mxu0 %v3533
  %7959 = vmatpush.bf16.msra.mxu0 %v3530
  %7960 = vmatpush.bf16.msra.mxu0 %v3527
  %7961 = vmatpush.bf16.msra.mxu0 %v3524
  %7962 = vmatpush.bf16.msra.mxu0 %v3521
  %7963 = vmatpush.bf16.msra.mxu0 %v3518
  %7964 = vmatmul.bf16.gmra.mxu0 %v6802
  %v7965 = vpop.f32.mrf.mxu0
  %v7966 = vadd.f32 0.0, %v7965
  %v7967 = vpop.f32.mrf.mxu0
  %7968 = vdwg.mxu0
  %7969 = vmatpush.bf16.msra.mxu0 %v3563
  %7970 = vmatpush.bf16.msra.mxu0 %v3560
  %7971 = vmatpush.bf16.msra.mxu0 %v3557
  %7972 = vmatpush.bf16.msra.mxu0 %v3554
  %7973 = vmatpush.bf16.msra.mxu0 %v3551
  %7974 = vmatpush.bf16.msra.mxu0 %v3548
  %7975 = vmatpush.bf16.msra.mxu0 %v3545
  %7976 = vmatpush.bf16.msra.mxu0 %v3542
  %7977 = vmatmul.bf16.gmra.mxu0 %v6803
  %v7978 = vpop.f32.mrf.mxu0
  %v7979 = vadd.f32 %v7966, %v7978
  %v7980 = vpop.f32.mrf.mxu0
  %7981 = vdwg.mxu0
  %7982 = vmatpush.bf16.msra.mxu0 0
  %7983 = vmatpush.bf16.msra.mxu0 0
  %7984 = vmatpush.bf16.msra.mxu0 0
  %7985 = vmatpush.bf16.msra.mxu0 0
  %7986 = vmatpush.bf16.msra.mxu0 0
  %7987 = vmatpush.bf16.msra.mxu0 0
  %7988 = vmatpush.bf16.msra.mxu0 %v3569
  %7989 = vmatpush.bf16.msra.mxu0 %v3566
  %7990 = vmatmul.bf16.gmra.mxu0 %v6806
  %v7991 = vpop.f32.mrf.mxu0
  %v7992 = vadd.f32 %v7979, %v7991
  %v7993 = vpop.f32.mrf.mxu0
  %7994 = vdwg.mxu0
  %v7995 = vpack.c.bf16 %v7914, %v7914
  %v7996 = vpack.c.bf16 %v7953, %v7953
  %v7997 = vpack.c.bf16 %v7992, %v7992
  %s7998 = scalar_lea.vmem %s8, 80
  %v7999 = vld [vmem:[%s7998] sm:$0xf]
  %v8000 = vld [vmem:[%s7998 + $0x4] sm:$0xf]
  %v8001 = vld [vmem:[%s7998 + $0x8] sm:$0xf]
  %v8002 = vld [vmem:[%s7998 + $0xc] sm:$0xf]
  %v8007 = vunpack.c.l.b16 %v7999
  %v8008 = vunpack.c.l.b16 %v8000
  %v8009 = vunpack.c.l.b16 %v8001
  %v8010 = vunpack.c.l.b16 %v8002
  %v8011 = vpack.c.b16 %v8008, %v8007
  %v8012 = vpack.c.b16 %v8010, %v8009
  %v8014 = vsel %vm1840, %v8011, 0
  %v8017 = vsel %vm1840, %v8012, 0
  %v8020 = vsel %vm1844, %v7995, 0
  %v8023 = vsel %vm1844, %v7996, 0
  %v8026 = vsel %vm1844, %v7997, 0
  %8028 = vmatpush.bf16.msra.mxu0 0
  %8029 = vmatpush.bf16.msra.mxu0 0
  %8030 = vmatpush.bf16.msra.mxu0 0
  %8031 = vmatpush.bf16.msra.mxu0 0
  %8032 = vmatpush.bf16.msra.mxu0 0
  %8033 = vmatpush.bf16.msra.mxu0 0
  %8034 = vmatpush.bf16.msra.mxu0 0
  %8035 = vmatpush.bf16.msra.mxu0 %v8020
  %8036 = vmatmul.bf16.gmra.mxu0 %v8014
  %v8037 = vpop.f32.mrf.mxu0
  %v8038 = vadd.f32 0.0, %v8037
  %v8039 = vpop.f32.mrf.mxu0
  %v8040 = vadd.f32 0.0, %v8039
  %8041 = vmatmul.bf16.gmra.mxu0 %v8017
  %v8042 = vpop.f32.mrf.mxu0
  %v8043 = vadd.f32 0.0, %v8042
  %v8044 = vpop.f32.mrf.mxu0
  %v8045 = vadd.f32 0.0, %v8044
  %8046 = vdwg.mxu0
  %8047 = vmatpush.bf16.msra.mxu0 0
  %8048 = vmatpush.bf16.msra.mxu0 0
  %8049 = vmatpush.bf16.msra.mxu0 0
  %8050 = vmatpush.bf16.msra.mxu0 0
  %8051 = vmatpush.bf16.msra.mxu0 0
  %8052 = vmatpush.bf16.msra.mxu0 0
  %8053 = vmatpush.bf16.msra.mxu0 0
  %8054 = vmatpush.bf16.msra.mxu0 %v8023
  %8055 = vmatmul.bf16.gmra.mxu0 %v8014
  %v8056 = vpop.f32.mrf.mxu0
  %v8057 = vadd.f32 0.0, %v8056
  %v8058 = vpop.f32.mrf.mxu0
  %v8059 = vadd.f32 0.0, %v8058
  %8060 = vmatmul.bf16.gmra.mxu0 %v8017
  %v8061 = vpop.f32.mrf.mxu0
  %v8062 = vadd.f32 0.0, %v8061
  %v8063 = vpop.f32.mrf.mxu0
  %v8064 = vadd.f32 0.0, %v8063
  %8065 = vdwg.mxu0
  %8066 = vmatpush.bf16.msra.mxu0 0
  %8067 = vmatpush.bf16.msra.mxu0 0
  %8068 = vmatpush.bf16.msra.mxu0 0
  %8069 = vmatpush.bf16.msra.mxu0 0
  %8070 = vmatpush.bf16.msra.mxu0 0
  %8071 = vmatpush.bf16.msra.mxu0 0
  %8072 = vmatpush.bf16.msra.mxu0 0
  %8073 = vmatpush.bf16.msra.mxu0 %v8026
  %8074 = vmatmul.bf16.gmra.mxu0 %v8014
  %v8075 = vpop.f32.mrf.mxu0
  %v8076 = vadd.f32 0.0, %v8075
  %v8077 = vpop.f32.mrf.mxu0
  %v8078 = vadd.f32 0.0, %v8077
  %8079 = vmatmul.bf16.gmra.mxu0 %v8017
  %v8080 = vpop.f32.mrf.mxu0
  %v8081 = vadd.f32 0.0, %v8080
  %v8082 = vpop.f32.mrf.mxu0
  %v8083 = vadd.f32 0.0, %v8082
  %8084 = vdwg.mxu0
  %v8085 = vadd.f32 %v7866, %v8038
  %v8086 = vadd.f32 %v7867, %v8057
  %v8087 = vadd.f32 %v7868, %v8076
  %v8088 = vadd.f32 %v7869, %v8040
  %v8089 = vadd.f32 %v7870, %v8059
  %v8090 = vadd.f32 %v7871, %v8078
  %v8091 = vadd.f32 %v7872, %v8043
  %v8092 = vadd.f32 %v7873, %v8062
  %v8093 = vadd.f32 %v7874, %v8081
  %v8094 = vadd.f32 %v7875, %v8045
  %v8095 = vadd.f32 %v7876, %v8064
  %v8096 = vadd.f32 %v7877, %v8083
  %8097 = vmatpush.bf16.msra.mxu0 %v4001
  %8098 = vmatpush.bf16.msra.mxu0 %v3998
  %8099 = vmatpush.bf16.msra.mxu0 %v3995
  %8100 = vmatpush.bf16.msra.mxu0 %v3992
  %8101 = vmatpush.bf16.msra.mxu0 %v3989
  %8102 = vmatpush.bf16.msra.mxu0 %v3986
  %8103 = vmatpush.bf16.msra.mxu0 %v3983
  %8104 = vmatpush.bf16.msra.mxu0 %v3980
  %8105 = vmatmul.bf16.gmra.mxu0 %v6802
  %v8106 = vpop.f32.mrf.mxu0
  %v8107 = vadd.f32 0.0, %v8106
  %v8108 = vpop.f32.mrf.mxu0
  %8109 = vdwg.mxu0
  %8110 = vmatpush.bf16.msra.mxu0 %v4025
  %8111 = vmatpush.bf16.msra.mxu0 %v4022
  %8112 = vmatpush.bf16.msra.mxu0 %v4019
  %8113 = vmatpush.bf16.msra.mxu0 %v4016
  %8114 = vmatpush.bf16.msra.mxu0 %v4013
  %8115 = vmatpush.bf16.msra.mxu0 %v4010
  %8116 = vmatpush.bf16.msra.mxu0 %v4007
  %8117 = vmatpush.bf16.msra.mxu0 %v4004
  %8118 = vmatmul.bf16.gmra.mxu0 %v6803
  %v8119 = vpop.f32.mrf.mxu0
  %v8120 = vadd.f32 %v8107, %v8119
  %v8121 = vpop.f32.mrf.mxu0
  %8122 = vdwg.mxu0
  %8123 = vmatpush.bf16.msra.mxu0 0
  %8124 = vmatpush.bf16.msra.mxu0 0
  %8125 = vmatpush.bf16.msra.mxu0 0
  %8126 = vmatpush.bf16.msra.mxu0 0
  %8127 = vmatpush.bf16.msra.mxu0 0
  %8128 = vmatpush.bf16.msra.mxu0 0
  %8129 = vmatpush.bf16.msra.mxu0 %v4031
  %8130 = vmatpush.bf16.msra.mxu0 %v4028
  %8131 = vmatmul.bf16.gmra.mxu0 %v6806
  %v8132 = vpop.f32.mrf.mxu0
  %v8133 = vadd.f32 %v8120, %v8132
  %v8134 = vpop.f32.mrf.mxu0
  %8135 = vdwg.mxu0
  %8136 = vmatpush.bf16.msra.mxu0 %v4002
  %8137 = vmatpush.bf16.msra.mxu0 %v3999
  %8138 = vmatpush.bf16.msra.mxu0 %v3996
  %8139 = vmatpush.bf16.msra.mxu0 %v3993
  %8140 = vmatpush.bf16.msra.mxu0 %v3990
  %8141 = vmatpush.bf16.msra.mxu0 %v3987
  %8142 = vmatpush.bf16.msra.mxu0 %v3984
  %8143 = vmatpush.bf16.msra.mxu0 %v3981
  %8144 = vmatmul.bf16.gmra.mxu0 %v6802
  %v8145 = vpop.f32.mrf.mxu0
  %v8146 = vadd.f32 0.0, %v8145
  %v8147 = vpop.f32.mrf.mxu0
  %8148 = vdwg.mxu0
  %8149 = vmatpush.bf16.msra.mxu0 %v4026
  %8150 = vmatpush.bf16.msra.mxu0 %v4023
  %8151 = vmatpush.bf16.msra.mxu0 %v4020
  %8152 = vmatpush.bf16.msra.mxu0 %v4017
  %8153 = vmatpush.bf16.msra.mxu0 %v4014
  %8154 = vmatpush.bf16.msra.mxu0 %v4011
  %8155 = vmatpush.bf16.msra.mxu0 %v4008
  %8156 = vmatpush.bf16.msra.mxu0 %v4005
  %8157 = vmatmul.bf16.gmra.mxu0 %v6803
  %v8158 = vpop.f32.mrf.mxu0
  %v8159 = vadd.f32 %v8146, %v8158
  %v8160 = vpop.f32.mrf.mxu0
  %8161 = vdwg.mxu0
  %8162 = vmatpush.bf16.msra.mxu0 0
  %8163 = vmatpush.bf16.msra.mxu0 0
  %8164 = vmatpush.bf16.msra.mxu0 0
  %8165 = vmatpush.bf16.msra.mxu0 0
  %8166 = vmatpush.bf16.msra.mxu0 0
  %8167 = vmatpush.bf16.msra.mxu0 0
  %8168 = vmatpush.bf16.msra.mxu0 %v4032
  %8169 = vmatpush.bf16.msra.mxu0 %v4029
  %8170 = vmatmul.bf16.gmra.mxu0 %v6806
  %v8171 = vpop.f32.mrf.mxu0
  %v8172 = vadd.f32 %v8159, %v8171
  %v8173 = vpop.f32.mrf.mxu0
  %8174 = vdwg.mxu0
  %8175 = vmatpush.bf16.msra.mxu0 %v4003
  %8176 = vmatpush.bf16.msra.mxu0 %v4000
  %8177 = vmatpush.bf16.msra.mxu0 %v3997
  %8178 = vmatpush.bf16.msra.mxu0 %v3994
  %8179 = vmatpush.bf16.msra.mxu0 %v3991
  %8180 = vmatpush.bf16.msra.mxu0 %v3988
  %8181 = vmatpush.bf16.msra.mxu0 %v3985
  %8182 = vmatpush.bf16.msra.mxu0 %v3982
  %8183 = vmatmul.bf16.gmra.mxu0 %v6802
  %v8184 = vpop.f32.mrf.mxu0
  %v8185 = vadd.f32 0.0, %v8184
  %v8186 = vpop.f32.mrf.mxu0
  %8187 = vdwg.mxu0
  %8188 = vmatpush.bf16.msra.mxu0 %v4027
  %8189 = vmatpush.bf16.msra.mxu0 %v4024
  %8190 = vmatpush.bf16.msra.mxu0 %v4021
  %8191 = vmatpush.bf16.msra.mxu0 %v4018
  %8192 = vmatpush.bf16.msra.mxu0 %v4015
  %8193 = vmatpush.bf16.msra.mxu0 %v4012
  %8194 = vmatpush.bf16.msra.mxu0 %v4009
  %8195 = vmatpush.bf16.msra.mxu0 %v4006
  %8196 = vmatmul.bf16.gmra.mxu0 %v6803
  %v8197 = vpop.f32.mrf.mxu0
  %v8198 = vadd.f32 %v8185, %v8197
  %v8199 = vpop.f32.mrf.mxu0
  %8200 = vdwg.mxu0
  %8201 = vmatpush.bf16.msra.mxu0 0
  %8202 = vmatpush.bf16.msra.mxu0 0
  %8203 = vmatpush.bf16.msra.mxu0 0
  %8204 = vmatpush.bf16.msra.mxu0 0
  %8205 = vmatpush.bf16.msra.mxu0 0
  %8206 = vmatpush.bf16.msra.mxu0 0
  %8207 = vmatpush.bf16.msra.mxu0 %v4033
  %8208 = vmatpush.bf16.msra.mxu0 %v4030
  %8209 = vmatmul.bf16.gmra.mxu0 %v6806
  %v8210 = vpop.f32.mrf.mxu0
  %v8211 = vadd.f32 %v8198, %v8210
  %v8212 = vpop.f32.mrf.mxu0
  %8213 = vdwg.mxu0
  %v8214 = vpack.c.bf16 %v8133, %v8133
  %v8215 = vpack.c.bf16 %v8172, %v8172
  %v8216 = vpack.c.bf16 %v8211, %v8211
  %s8217 = scalar_lea.vmem %s8, 96
  %v8218 = vld [vmem:[%s8217] sm:$0xf]
  %v8219 = vld [vmem:[%s8217 + $0x4] sm:$0xf]
  %v8220 = vld [vmem:[%s8217 + $0x8] sm:$0xf]
  %v8221 = vld [vmem:[%s8217 + $0xc] sm:$0xf]
  %v8226 = vunpack.c.l.b16 %v8218
  %v8227 = vunpack.c.l.b16 %v8219
  %v8228 = vunpack.c.l.b16 %v8220
  %v8229 = vunpack.c.l.b16 %v8221
  %v8230 = vpack.c.b16 %v8227, %v8226
  %v8231 = vpack.c.b16 %v8229, %v8228
  %v8233 = vsel %vm1840, %v8230, 0
  %v8236 = vsel %vm1840, %v8231, 0
  %v8239 = vsel %vm1844, %v8214, 0
  %v8242 = vsel %vm1844, %v8215, 0
  %v8245 = vsel %vm1844, %v8216, 0
  %8247 = vmatpush.bf16.msra.mxu0 0
  %8248 = vmatpush.bf16.msra.mxu0 0
  %8249 = vmatpush.bf16.msra.mxu0 0
  %8250 = vmatpush.bf16.msra.mxu0 0
  %8251 = vmatpush.bf16.msra.mxu0 0
  %8252 = vmatpush.bf16.msra.mxu0 0
  %8253 = vmatpush.bf16.msra.mxu0 0
  %8254 = vmatpush.bf16.msra.mxu0 %v8239
  %8255 = vmatmul.bf16.gmra.mxu0 %v8233
  %v8256 = vpop.f32.mrf.mxu0
  %v8257 = vadd.f32 0.0, %v8256
  %v8258 = vpop.f32.mrf.mxu0
  %v8259 = vadd.f32 0.0, %v8258
  %8260 = vmatmul.bf16.gmra.mxu0 %v8236
  %v8261 = vpop.f32.mrf.mxu0
  %v8262 = vadd.f32 0.0, %v8261
  %v8263 = vpop.f32.mrf.mxu0
  %v8264 = vadd.f32 0.0, %v8263
  %8265 = vdwg.mxu0
  %8266 = vmatpush.bf16.msra.mxu0 0
  %8267 = vmatpush.bf16.msra.mxu0 0
  %8268 = vmatpush.bf16.msra.mxu0 0
  %8269 = vmatpush.bf16.msra.mxu0 0
  %8270 = vmatpush.bf16.msra.mxu0 0
  %8271 = vmatpush.bf16.msra.mxu0 0
  %8272 = vmatpush.bf16.msra.mxu0 0
  %8273 = vmatpush.bf16.msra.mxu0 %v8242
  %8274 = vmatmul.bf16.gmra.mxu0 %v8233
  %v8275 = vpop.f32.mrf.mxu0
  %v8276 = vadd.f32 0.0, %v8275
  %v8277 = vpop.f32.mrf.mxu0
  %v8278 = vadd.f32 0.0, %v8277
  %8279 = vmatmul.bf16.gmra.mxu0 %v8236
  %v8280 = vpop.f32.mrf.mxu0
  %v8281 = vadd.f32 0.0, %v8280
  %v8282 = vpop.f32.mrf.mxu0
  %v8283 = vadd.f32 0.0, %v8282
  %8284 = vdwg.mxu0
  %8285 = vmatpush.bf16.msra.mxu0 0
  %8286 = vmatpush.bf16.msra.mxu0 0
  %8287 = vmatpush.bf16.msra.mxu0 0
  %8288 = vmatpush.bf16.msra.mxu0 0
  %8289 = vmatpush.bf16.msra.mxu0 0
  %8290 = vmatpush.bf16.msra.mxu0 0
  %8291 = vmatpush.bf16.msra.mxu0 0
  %8292 = vmatpush.bf16.msra.mxu0 %v8245
  %8293 = vmatmul.bf16.gmra.mxu0 %v8233
  %v8294 = vpop.f32.mrf.mxu0
  %v8295 = vadd.f32 0.0, %v8294
  %v8296 = vpop.f32.mrf.mxu0
  %v8297 = vadd.f32 0.0, %v8296
  %8298 = vmatmul.bf16.gmra.mxu0 %v8236
  %v8299 = vpop.f32.mrf.mxu0
  %v8300 = vadd.f32 0.0, %v8299
  %v8301 = vpop.f32.mrf.mxu0
  %v8302 = vadd.f32 0.0, %v8301
  %8303 = vdwg.mxu0
  %v8304 = vadd.f32 %v8085, %v8257
  %v8305 = vadd.f32 %v8086, %v8276
  %v8306 = vadd.f32 %v8087, %v8295
  %v8307 = vadd.f32 %v8088, %v8259
  %v8308 = vadd.f32 %v8089, %v8278
  %v8309 = vadd.f32 %v8090, %v8297
  %v8310 = vadd.f32 %v8091, %v8262
  %v8311 = vadd.f32 %v8092, %v8281
  %v8312 = vadd.f32 %v8093, %v8300
  %v8313 = vadd.f32 %v8094, %v8264
  %v8314 = vadd.f32 %v8095, %v8283
  %v8315 = vadd.f32 %v8096, %v8302
  %8316 = vmatpush.bf16.msra.mxu0 %v4465
  %8317 = vmatpush.bf16.msra.mxu0 %v4462
  %8318 = vmatpush.bf16.msra.mxu0 %v4459
  %8319 = vmatpush.bf16.msra.mxu0 %v4456
  %8320 = vmatpush.bf16.msra.mxu0 %v4453
  %8321 = vmatpush.bf16.msra.mxu0 %v4450
  %8322 = vmatpush.bf16.msra.mxu0 %v4447
  %8323 = vmatpush.bf16.msra.mxu0 %v4444
  %8324 = vmatmul.bf16.gmra.mxu0 %v6802
  %v8325 = vpop.f32.mrf.mxu0
  %v8326 = vadd.f32 0.0, %v8325
  %v8327 = vpop.f32.mrf.mxu0
  %8328 = vdwg.mxu0
  %8329 = vmatpush.bf16.msra.mxu0 %v4489
  %8330 = vmatpush.bf16.msra.mxu0 %v4486
  %8331 = vmatpush.bf16.msra.mxu0 %v4483
  %8332 = vmatpush.bf16.msra.mxu0 %v4480
  %8333 = vmatpush.bf16.msra.mxu0 %v4477
  %8334 = vmatpush.bf16.msra.mxu0 %v4474
  %8335 = vmatpush.bf16.msra.mxu0 %v4471
  %8336 = vmatpush.bf16.msra.mxu0 %v4468
  %8337 = vmatmul.bf16.gmra.mxu0 %v6803
  %v8338 = vpop.f32.mrf.mxu0
  %v8339 = vadd.f32 %v8326, %v8338
  %v8340 = vpop.f32.mrf.mxu0
  %8341 = vdwg.mxu0
  %8342 = vmatpush.bf16.msra.mxu0 0
  %8343 = vmatpush.bf16.msra.mxu0 0
  %8344 = vmatpush.bf16.msra.mxu0 0
  %8345 = vmatpush.bf16.msra.mxu0 0
  %8346 = vmatpush.bf16.msra.mxu0 0
  %8347 = vmatpush.bf16.msra.mxu0 0
  %8348 = vmatpush.bf16.msra.mxu0 %v4495
  %8349 = vmatpush.bf16.msra.mxu0 %v4492
  %8350 = vmatmul.bf16.gmra.mxu0 %v6806
  %v8351 = vpop.f32.mrf.mxu0
  %v8352 = vadd.f32 %v8339, %v8351
  %v8353 = vpop.f32.mrf.mxu0
  %8354 = vdwg.mxu0
  %8355 = vmatpush.bf16.msra.mxu0 %v4466
  %8356 = vmatpush.bf16.msra.mxu0 %v4463
  %8357 = vmatpush.bf16.msra.mxu0 %v4460
  %8358 = vmatpush.bf16.msra.mxu0 %v4457
  %8359 = vmatpush.bf16.msra.mxu0 %v4454
  %8360 = vmatpush.bf16.msra.mxu0 %v4451
  %8361 = vmatpush.bf16.msra.mxu0 %v4448
  %8362 = vmatpush.bf16.msra.mxu0 %v4445
  %8363 = vmatmul.bf16.gmra.mxu0 %v6802
  %v8364 = vpop.f32.mrf.mxu0
  %v8365 = vadd.f32 0.0, %v8364
  %v8366 = vpop.f32.mrf.mxu0
  %8367 = vdwg.mxu0
  %8368 = vmatpush.bf16.msra.mxu0 %v4490
  %8369 = vmatpush.bf16.msra.mxu0 %v4487
  %8370 = vmatpush.bf16.msra.mxu0 %v4484
  %8371 = vmatpush.bf16.msra.mxu0 %v4481
  %8372 = vmatpush.bf16.msra.mxu0 %v4478
  %8373 = vmatpush.bf16.msra.mxu0 %v4475
  %8374 = vmatpush.bf16.msra.mxu0 %v4472
  %8375 = vmatpush.bf16.msra.mxu0 %v4469
  %8376 = vmatmul.bf16.gmra.mxu0 %v6803
  %v8377 = vpop.f32.mrf.mxu0
  %v8378 = vadd.f32 %v8365, %v8377
  %v8379 = vpop.f32.mrf.mxu0
  %8380 = vdwg.mxu0
  %8381 = vmatpush.bf16.msra.mxu0 0
  %8382 = vmatpush.bf16.msra.mxu0 0
  %8383 = vmatpush.bf16.msra.mxu0 0
  %8384 = vmatpush.bf16.msra.mxu0 0
  %8385 = vmatpush.bf16.msra.mxu0 0
  %8386 = vmatpush.bf16.msra.mxu0 0
  %8387 = vmatpush.bf16.msra.mxu0 %v4496
  %8388 = vmatpush.bf16.msra.mxu0 %v4493
  %8389 = vmatmul.bf16.gmra.mxu0 %v6806
  %v8390 = vpop.f32.mrf.mxu0
  %v8391 = vadd.f32 %v8378, %v8390
  %v8392 = vpop.f32.mrf.mxu0
  %8393 = vdwg.mxu0
  %8394 = vmatpush.bf16.msra.mxu0 %v4467
  %8395 = vmatpush.bf16.msra.mxu0 %v4464
  %8396 = vmatpush.bf16.msra.mxu0 %v4461
  %8397 = vmatpush.bf16.msra.mxu0 %v4458
  %8398 = vmatpush.bf16.msra.mxu0 %v4455
  %8399 = vmatpush.bf16.msra.mxu0 %v4452
  %8400 = vmatpush.bf16.msra.mxu0 %v4449
  %8401 = vmatpush.bf16.msra.mxu0 %v4446
  %8402 = vmatmul.bf16.gmra.mxu0 %v6802
  %v8403 = vpop.f32.mrf.mxu0
  %v8404 = vadd.f32 0.0, %v8403
  %v8405 = vpop.f32.mrf.mxu0
  %8406 = vdwg.mxu0
  %8407 = vmatpush.bf16.msra.mxu0 %v4491
  %8408 = vmatpush.bf16.msra.mxu0 %v4488
  %8409 = vmatpush.bf16.msra.mxu0 %v4485
  %8410 = vmatpush.bf16.msra.mxu0 %v4482
  %8411 = vmatpush.bf16.msra.mxu0 %v4479
  %8412 = vmatpush.bf16.msra.mxu0 %v4476
  %8413 = vmatpush.bf16.msra.mxu0 %v4473
  %8414 = vmatpush.bf16.msra.mxu0 %v4470
  %8415 = vmatmul.bf16.gmra.mxu0 %v6803
  %v8416 = vpop.f32.mrf.mxu0
  %v8417 = vadd.f32 %v8404, %v8416
  %v8418 = vpop.f32.mrf.mxu0
  %8419 = vdwg.mxu0
  %8420 = vmatpush.bf16.msra.mxu0 0
  %8421 = vmatpush.bf16.msra.mxu0 0
  %8422 = vmatpush.bf16.msra.mxu0 0
  %8423 = vmatpush.bf16.msra.mxu0 0
  %8424 = vmatpush.bf16.msra.mxu0 0
  %8425 = vmatpush.bf16.msra.mxu0 0
  %8426 = vmatpush.bf16.msra.mxu0 %v4497
  %8427 = vmatpush.bf16.msra.mxu0 %v4494
  %8428 = vmatmul.bf16.gmra.mxu0 %v6806
  %v8429 = vpop.f32.mrf.mxu0
  %v8430 = vadd.f32 %v8417, %v8429
  %v8431 = vpop.f32.mrf.mxu0
  %8432 = vdwg.mxu0
  %v8433 = vpack.c.bf16 %v8352, %v8352
  %v8434 = vpack.c.bf16 %v8391, %v8391
  %v8435 = vpack.c.bf16 %v8430, %v8430
  %s8436 = scalar_lea.vmem %s8, 112
  %v8437 = vld [vmem:[%s8436] sm:$0xf]
  %v8438 = vld [vmem:[%s8436 + $0x4] sm:$0xf]
  %v8439 = vld [vmem:[%s8436 + $0x8] sm:$0xf]
  %v8440 = vld [vmem:[%s8436 + $0xc] sm:$0xf]
  %v8445 = vunpack.c.l.b16 %v8437
  %v8446 = vunpack.c.l.b16 %v8438
  %v8447 = vunpack.c.l.b16 %v8439
  %v8448 = vunpack.c.l.b16 %v8440
  %v8449 = vpack.c.b16 %v8446, %v8445
  %v8450 = vpack.c.b16 %v8448, %v8447
  %v8452 = vsel %vm1840, %v8449, 0
  %v8455 = vsel %vm1840, %v8450, 0
  %v8458 = vsel %vm1844, %v8433, 0
  %v8461 = vsel %vm1844, %v8434, 0
  %v8464 = vsel %vm1844, %v8435, 0
  %8466 = vmatpush.bf16.msra.mxu0 0
  %8467 = vmatpush.bf16.msra.mxu0 0
  %8468 = vmatpush.bf16.msra.mxu0 0
  %8469 = vmatpush.bf16.msra.mxu0 0
  %8470 = vmatpush.bf16.msra.mxu0 0
  %8471 = vmatpush.bf16.msra.mxu0 0
  %8472 = vmatpush.bf16.msra.mxu0 0
  %8473 = vmatpush.bf16.msra.mxu0 %v8458
  %8474 = vmatmul.bf16.gmra.mxu0 %v8452
  %v8475 = vpop.f32.mrf.mxu0
  %v8476 = vadd.f32 0.0, %v8475
  %v8477 = vpop.f32.mrf.mxu0
  %v8478 = vadd.f32 0.0, %v8477
  %8479 = vmatmul.bf16.gmra.mxu0 %v8455
  %v8480 = vpop.f32.mrf.mxu0
  %v8481 = vadd.f32 0.0, %v8480
  %v8482 = vpop.f32.mrf.mxu0
  %v8483 = vadd.f32 0.0, %v8482
  %8484 = vdwg.mxu0
  %8485 = vmatpush.bf16.msra.mxu0 0
  %8486 = vmatpush.bf16.msra.mxu0 0
  %8487 = vmatpush.bf16.msra.mxu0 0
  %8488 = vmatpush.bf16.msra.mxu0 0
  %8489 = vmatpush.bf16.msra.mxu0 0
  %8490 = vmatpush.bf16.msra.mxu0 0
  %8491 = vmatpush.bf16.msra.mxu0 0
  %8492 = vmatpush.bf16.msra.mxu0 %v8461
  %8493 = vmatmul.bf16.gmra.mxu0 %v8452
  %v8494 = vpop.f32.mrf.mxu0
  %v8495 = vadd.f32 0.0, %v8494
  %v8496 = vpop.f32.mrf.mxu0
  %v8497 = vadd.f32 0.0, %v8496
  %8498 = vmatmul.bf16.gmra.mxu0 %v8455
  %v8499 = vpop.f32.mrf.mxu0
  %v8500 = vadd.f32 0.0, %v8499
  %v8501 = vpop.f32.mrf.mxu0
  %v8502 = vadd.f32 0.0, %v8501
  %8503 = vdwg.mxu0
  %8504 = vmatpush.bf16.msra.mxu0 0
  %8505 = vmatpush.bf16.msra.mxu0 0
  %8506 = vmatpush.bf16.msra.mxu0 0
  %8507 = vmatpush.bf16.msra.mxu0 0
  %8508 = vmatpush.bf16.msra.mxu0 0
  %8509 = vmatpush.bf16.msra.mxu0 0
  %8510 = vmatpush.bf16.msra.mxu0 0
  %8511 = vmatpush.bf16.msra.mxu0 %v8464
  %8512 = vmatmul.bf16.gmra.mxu0 %v8452
  %v8513 = vpop.f32.mrf.mxu0
  %v8514 = vadd.f32 0.0, %v8513
  %v8515 = vpop.f32.mrf.mxu0
  %v8516 = vadd.f32 0.0, %v8515
  %8517 = vmatmul.bf16.gmra.mxu0 %v8455
  %v8518 = vpop.f32.mrf.mxu0
  %v8519 = vadd.f32 0.0, %v8518
  %v8520 = vpop.f32.mrf.mxu0
  %v8521 = vadd.f32 0.0, %v8520
  %8522 = vdwg.mxu0
  %v8523 = vadd.f32 %v8304, %v8476
  %v8524 = vadd.f32 %v8305, %v8495
  %v8525 = vadd.f32 %v8306, %v8514
  %v8526 = vadd.f32 %v8307, %v8478
  %v8527 = vadd.f32 %v8308, %v8497
  %v8528 = vadd.f32 %v8309, %v8516
  %v8529 = vadd.f32 %v8310, %v8481
  %v8530 = vadd.f32 %v8311, %v8500
  %v8531 = vadd.f32 %v8312, %v8519
  %v8532 = vadd.f32 %v8313, %v8483
  %v8533 = vadd.f32 %v8314, %v8502
  %v8534 = vadd.f32 %v8315, %v8521
  %8535 = vmatpush.bf16.msra.mxu0 %v4929
  %8536 = vmatpush.bf16.msra.mxu0 %v4926
  %8537 = vmatpush.bf16.msra.mxu0 %v4923
  %8538 = vmatpush.bf16.msra.mxu0 %v4920
  %8539 = vmatpush.bf16.msra.mxu0 %v4917
  %8540 = vmatpush.bf16.msra.mxu0 %v4914
  %8541 = vmatpush.bf16.msra.mxu0 %v4911
  %8542 = vmatpush.bf16.msra.mxu0 %v4908
  %8543 = vmatmul.bf16.gmra.mxu0 %v6802
  %v8544 = vpop.f32.mrf.mxu0
  %v8545 = vadd.f32 0.0, %v8544
  %v8546 = vpop.f32.mrf.mxu0
  %8547 = vdwg.mxu0
  %8548 = vmatpush.bf16.msra.mxu0 %v4953
  %8549 = vmatpush.bf16.msra.mxu0 %v4950
  %8550 = vmatpush.bf16.msra.mxu0 %v4947
  %8551 = vmatpush.bf16.msra.mxu0 %v4944
  %8552 = vmatpush.bf16.msra.mxu0 %v4941
  %8553 = vmatpush.bf16.msra.mxu0 %v4938
  %8554 = vmatpush.bf16.msra.mxu0 %v4935
  %8555 = vmatpush.bf16.msra.mxu0 %v4932
  %8556 = vmatmul.bf16.gmra.mxu0 %v6803
  %v8557 = vpop.f32.mrf.mxu0
  %v8558 = vadd.f32 %v8545, %v8557
  %v8559 = vpop.f32.mrf.mxu0
  %8560 = vdwg.mxu0
  %8561 = vmatpush.bf16.msra.mxu0 0
  %8562 = vmatpush.bf16.msra.mxu0 0
  %8563 = vmatpush.bf16.msra.mxu0 0
  %8564 = vmatpush.bf16.msra.mxu0 0
  %8565 = vmatpush.bf16.msra.mxu0 0
  %8566 = vmatpush.bf16.msra.mxu0 0
  %8567 = vmatpush.bf16.msra.mxu0 %v4959
  %8568 = vmatpush.bf16.msra.mxu0 %v4956
  %8569 = vmatmul.bf16.gmra.mxu0 %v6806
  %v8570 = vpop.f32.mrf.mxu0
  %v8571 = vadd.f32 %v8558, %v8570
  %v8572 = vpop.f32.mrf.mxu0
  %8573 = vdwg.mxu0
  %8574 = vmatpush.bf16.msra.mxu0 %v4930
  %8575 = vmatpush.bf16.msra.mxu0 %v4927
  %8576 = vmatpush.bf16.msra.mxu0 %v4924
  %8577 = vmatpush.bf16.msra.mxu0 %v4921
  %8578 = vmatpush.bf16.msra.mxu0 %v4918
  %8579 = vmatpush.bf16.msra.mxu0 %v4915
  %8580 = vmatpush.bf16.msra.mxu0 %v4912
  %8581 = vmatpush.bf16.msra.mxu0 %v4909
  %8582 = vmatmul.bf16.gmra.mxu0 %v6802
  %v8583 = vpop.f32.mrf.mxu0
  %v8584 = vadd.f32 0.0, %v8583
  %v8585 = vpop.f32.mrf.mxu0
  %8586 = vdwg.mxu0
  %8587 = vmatpush.bf16.msra.mxu0 %v4954
  %8588 = vmatpush.bf16.msra.mxu0 %v4951
  %8589 = vmatpush.bf16.msra.mxu0 %v4948
  %8590 = vmatpush.bf16.msra.mxu0 %v4945
  %8591 = vmatpush.bf16.msra.mxu0 %v4942
  %8592 = vmatpush.bf16.msra.mxu0 %v4939
  %8593 = vmatpush.bf16.msra.mxu0 %v4936
  %8594 = vmatpush.bf16.msra.mxu0 %v4933
  %8595 = vmatmul.bf16.gmra.mxu0 %v6803
  %v8596 = vpop.f32.mrf.mxu0
  %v8597 = vadd.f32 %v8584, %v8596
  %v8598 = vpop.f32.mrf.mxu0
  %8599 = vdwg.mxu0
  %8600 = vmatpush.bf16.msra.mxu0 0
  %8601 = vmatpush.bf16.msra.mxu0 0
  %8602 = vmatpush.bf16.msra.mxu0 0
  %8603 = vmatpush.bf16.msra.mxu0 0
  %8604 = vmatpush.bf16.msra.mxu0 0
  %8605 = vmatpush.bf16.msra.mxu0 0
  %8606 = vmatpush.bf16.msra.mxu0 %v4960
  %8607 = vmatpush.bf16.msra.mxu0 %v4957
  %8608 = vmatmul.bf16.gmra.mxu0 %v6806
  %v8609 = vpop.f32.mrf.mxu0
  %v8610 = vadd.f32 %v8597, %v8609
  %v8611 = vpop.f32.mrf.mxu0
  %8612 = vdwg.mxu0
  %8613 = vmatpush.bf16.msra.mxu0 %v4931
  %8614 = vmatpush.bf16.msra.mxu0 %v4928
  %8615 = vmatpush.bf16.msra.mxu0 %v4925
  %8616 = vmatpush.bf16.msra.mxu0 %v4922
  %8617 = vmatpush.bf16.msra.mxu0 %v4919
  %8618 = vmatpush.bf16.msra.mxu0 %v4916
  %8619 = vmatpush.bf16.msra.mxu0 %v4913
  %8620 = vmatpush.bf16.msra.mxu0 %v4910
  %8621 = vmatmul.bf16.gmra.mxu0 %v6802
  %v8622 = vpop.f32.mrf.mxu0
  %v8623 = vadd.f32 0.0, %v8622
  %v8624 = vpop.f32.mrf.mxu0
  %8625 = vdwg.mxu0
  %8626 = vmatpush.bf16.msra.mxu0 %v4955
  %8627 = vmatpush.bf16.msra.mxu0 %v4952
  %8628 = vmatpush.bf16.msra.mxu0 %v4949
  %8629 = vmatpush.bf16.msra.mxu0 %v4946
  %8630 = vmatpush.bf16.msra.mxu0 %v4943
  %8631 = vmatpush.bf16.msra.mxu0 %v4940
  %8632 = vmatpush.bf16.msra.mxu0 %v4937
  %8633 = vmatpush.bf16.msra.mxu0 %v4934
  %8634 = vmatmul.bf16.gmra.mxu0 %v6803
  %v8635 = vpop.f32.mrf.mxu0
  %v8636 = vadd.f32 %v8623, %v8635
  %v8637 = vpop.f32.mrf.mxu0
  %8638 = vdwg.mxu0
  %8639 = vmatpush.bf16.msra.mxu0 0
  %8640 = vmatpush.bf16.msra.mxu0 0
  %8641 = vmatpush.bf16.msra.mxu0 0
  %8642 = vmatpush.bf16.msra.mxu0 0
  %8643 = vmatpush.bf16.msra.mxu0 0
  %8644 = vmatpush.bf16.msra.mxu0 0
  %8645 = vmatpush.bf16.msra.mxu0 %v4961
  %8646 = vmatpush.bf16.msra.mxu0 %v4958
  %8647 = vmatmul.bf16.gmra.mxu0 %v6806
  %v8648 = vpop.f32.mrf.mxu0
  %v8649 = vadd.f32 %v8636, %v8648
  %v8650 = vpop.f32.mrf.mxu0
  %8651 = vdwg.mxu0
  %v8652 = vpack.c.bf16 %v8571, %v8571
  %v8653 = vpack.c.bf16 %v8610, %v8610
  %v8654 = vpack.c.bf16 %v8649, %v8649
  %s8655 = scalar_lea.vmem %s8, 128
  %v8656 = vld [vmem:[%s8655] sm:$0xf]
  %v8657 = vld [vmem:[%s8655 + $0x4] sm:$0xf]
  %v8658 = vld [vmem:[%s8655 + $0x8] sm:$0xf]
  %v8659 = vld [vmem:[%s8655 + $0xc] sm:$0xf]
  %v8664 = vunpack.c.l.b16 %v8656
  %v8665 = vunpack.c.l.b16 %v8657
  %v8666 = vunpack.c.l.b16 %v8658
  %v8667 = vunpack.c.l.b16 %v8659
  %v8668 = vpack.c.b16 %v8665, %v8664
  %v8669 = vpack.c.b16 %v8667, %v8666
  %v8671 = vsel %vm1840, %v8668, 0
  %v8674 = vsel %vm1840, %v8669, 0
  %v8677 = vsel %vm1844, %v8652, 0
  %v8680 = vsel %vm1844, %v8653, 0
  %v8683 = vsel %vm1844, %v8654, 0
  %8685 = vmatpush.bf16.msra.mxu0 0
  %8686 = vmatpush.bf16.msra.mxu0 0
  %8687 = vmatpush.bf16.msra.mxu0 0
  %8688 = vmatpush.bf16.msra.mxu0 0
  %8689 = vmatpush.bf16.msra.mxu0 0
  %8690 = vmatpush.bf16.msra.mxu0 0
  %8691 = vmatpush.bf16.msra.mxu0 0
  %8692 = vmatpush.bf16.msra.mxu0 %v8677
  %8693 = vmatmul.bf16.gmra.mxu0 %v8671
  %v8694 = vpop.f32.mrf.mxu0
  %v8695 = vadd.f32 0.0, %v8694
  %v8696 = vpop.f32.mrf.mxu0
  %v8697 = vadd.f32 0.0, %v8696
  %8698 = vmatmul.bf16.gmra.mxu0 %v8674
  %v8699 = vpop.f32.mrf.mxu0
  %v8700 = vadd.f32 0.0, %v8699
  %v8701 = vpop.f32.mrf.mxu0
  %v8702 = vadd.f32 0.0, %v8701
  %8703 = vdwg.mxu0
  %8704 = vmatpush.bf16.msra.mxu0 0
  %8705 = vmatpush.bf16.msra.mxu0 0
  %8706 = vmatpush.bf16.msra.mxu0 0
  %8707 = vmatpush.bf16.msra.mxu0 0
  %8708 = vmatpush.bf16.msra.mxu0 0
  %8709 = vmatpush.bf16.msra.mxu0 0
  %8710 = vmatpush.bf16.msra.mxu0 0
  %8711 = vmatpush.bf16.msra.mxu0 %v8680
  %8712 = vmatmul.bf16.gmra.mxu0 %v8671
  %v8713 = vpop.f32.mrf.mxu0
  %v8714 = vadd.f32 0.0, %v8713
  %v8715 = vpop.f32.mrf.mxu0
  %v8716 = vadd.f32 0.0, %v8715
  %8717 = vmatmul.bf16.gmra.mxu0 %v8674
  %v8718 = vpop.f32.mrf.mxu0
  %v8719 = vadd.f32 0.0, %v8718
  %v8720 = vpop.f32.mrf.mxu0
  %v8721 = vadd.f32 0.0, %v8720
  %8722 = vdwg.mxu0
  %8723 = vmatpush.bf16.msra.mxu0 0
  %8724 = vmatpush.bf16.msra.mxu0 0
  %8725 = vmatpush.bf16.msra.mxu0 0
  %8726 = vmatpush.bf16.msra.mxu0 0
  %8727 = vmatpush.bf16.msra.mxu0 0
  %8728 = vmatpush.bf16.msra.mxu0 0
  %8729 = vmatpush.bf16.msra.mxu0 0
  %8730 = vmatpush.bf16.msra.mxu0 %v8683
  %8731 = vmatmul.bf16.gmra.mxu0 %v8671
  %v8732 = vpop.f32.mrf.mxu0
  %v8733 = vadd.f32 0.0, %v8732
  %v8734 = vpop.f32.mrf.mxu0
  %v8735 = vadd.f32 0.0, %v8734
  %8736 = vmatmul.bf16.gmra.mxu0 %v8674
  %v8737 = vpop.f32.mrf.mxu0
  %v8738 = vadd.f32 0.0, %v8737
  %v8739 = vpop.f32.mrf.mxu0
  %v8740 = vadd.f32 0.0, %v8739
  %8741 = vdwg.mxu0
  %v8742 = vadd.f32 %v8523, %v8695
  %v8743 = vadd.f32 %v8524, %v8714
  %v8744 = vadd.f32 %v8525, %v8733
  %v8745 = vadd.f32 %v8526, %v8697
  %v8746 = vadd.f32 %v8527, %v8716
  %v8747 = vadd.f32 %v8528, %v8735
  %v8748 = vadd.f32 %v8529, %v8700
  %v8749 = vadd.f32 %v8530, %v8719
  %v8750 = vadd.f32 %v8531, %v8738
  %v8751 = vadd.f32 %v8532, %v8702
  %v8752 = vadd.f32 %v8533, %v8721
  %v8753 = vadd.f32 %v8534, %v8740
  %v8754 = vld [vmem:[%s9] sm:$0xff]
  %v8755 = vld [vmem:[%s9 + $0x8] sm:$0xff]
  %v8756 = vld [vmem:[%s9 + $0x10] sm:$0xff]
  %v8757 = vld [vmem:[%s9 + $0x18] sm:$0xff]
  %8759 = vset.pattern.permute.xlu0 0
  %8760 = vperm.xlu0 %8759, %v8754
  %v8761 = vpop.permute.xlu0 %8760
  %8764 = vset.pattern.permute.xlu0 0
  %8765 = vperm.xlu0 %8764, %v8755
  %v8766 = vpop.permute.xlu0 %8765
  %8769 = vset.pattern.permute.xlu0 0
  %8770 = vperm.xlu0 %8769, %v8756
  %v8771 = vpop.permute.xlu0 %8770
  %8774 = vset.pattern.permute.xlu0 0
  %8775 = vperm.xlu0 %8774, %v8757
  %v8776 = vpop.permute.xlu0 %8775
  %v8778 = vadd.f32 %v8742, %v8761
  %v8779 = vadd.f32 %v8743, %v8761
  %v8780 = vadd.f32 %v8744, %v8761
  %v8781 = vadd.f32 %v8745, %v8766
  %v8782 = vadd.f32 %v8746, %v8766
  %v8783 = vadd.f32 %v8747, %v8766
  %v8784 = vadd.f32 %v8748, %v8771
  %v8785 = vadd.f32 %v8749, %v8771
  %v8786 = vadd.f32 %v8750, %v8771
  %v8787 = vadd.f32 %v8751, %v8776
  %v8788 = vadd.f32 %v8752, %v8776
  %v8789 = vadd.f32 %v8753, %v8776
  %v8790 = vmax.f32 %v8778, 0.0
  %v8791 = vmax.f32 %v8779, 0.0
  %v8792 = vmax.f32 %v8780, 0.0
  %v8793 = vmax.f32 %v8781, 0.0
  %v8794 = vmax.f32 %v8782, 0.0
  %v8795 = vmax.f32 %v8783, 0.0
  %v8796 = vmax.f32 %v8784, 0.0
  %v8797 = vmax.f32 %v8785, 0.0
  %v8798 = vmax.f32 %v8786, 0.0
  %v8799 = vmax.f32 %v8787, 0.0
  %v8800 = vmax.f32 %v8788, 0.0
  %v8801 = vmax.f32 %v8789, 0.0
  %v8802 = vpack.c.bf16 %v8793, %v8790
  %v8803 = vpack.c.bf16 %v8794, %v8791
  %v8804 = vpack.c.bf16 %v8795, %v8792
  %v8805 = vpack.c.bf16 %v8799, %v8796
  %v8806 = vpack.c.bf16 %v8800, %v8797
  %v8807 = vpack.c.bf16 %v8801, %v8798
  %v8809 = vsel %vm1305, %v8804, 0
  %v8812 = vsel %vm1305, %v8807, 0
  %8814 = vmatpush.bf16.msra.mxu0 %v1218
  %8815 = vmatpush.bf16.msra.mxu0 %v1215
  %8816 = vmatpush.bf16.msra.mxu0 %v1212
  %8817 = vmatpush.bf16.msra.mxu0 %v1209
  %8818 = vmatpush.bf16.msra.mxu0 %v1206
  %8819 = vmatpush.bf16.msra.mxu0 %v1203
  %8820 = vmatpush.bf16.msra.mxu0 %v1200
  %8821 = vmatpush.bf16.msra.mxu0 %v1197
  %8822 = vmatmul.bf16.gmra.mxu0 %v8802
  %v8823 = vpop.f32.mrf.mxu0
  %v8824 = vadd.f32 0.0, %v8823
  %v8825 = vpop.f32.mrf.mxu0
  %v8826 = vadd.f32 0.0, %v8825
  %8827 = vmatmul.bf16.gmra.mxu0 %v8805
  %v8828 = vpop.f32.mrf.mxu0
  %v8829 = vadd.f32 0.0, %v8828
  %v8830 = vpop.f32.mrf.mxu0
  %v8831 = vadd.f32 0.0, %v8830
  %8832 = vdwg.mxu0
  %8833 = vmatpush.bf16.msra.mxu0 %v1242
  %8834 = vmatpush.bf16.msra.mxu0 %v1239
  %8835 = vmatpush.bf16.msra.mxu0 %v1236
  %8836 = vmatpush.bf16.msra.mxu0 %v1233
  %8837 = vmatpush.bf16.msra.mxu0 %v1230
  %8838 = vmatpush.bf16.msra.mxu0 %v1227
  %8839 = vmatpush.bf16.msra.mxu0 %v1224
  %8840 = vmatpush.bf16.msra.mxu0 %v1221
  %8841 = vmatmul.bf16.gmra.mxu0 %v8803
  %v8842 = vpop.f32.mrf.mxu0
  %v8843 = vadd.f32 %v8824, %v8842
  %v8844 = vpop.f32.mrf.mxu0
  %v8845 = vadd.f32 %v8826, %v8844
  %8846 = vmatmul.bf16.gmra.mxu0 %v8806
  %v8847 = vpop.f32.mrf.mxu0
  %v8848 = vadd.f32 %v8829, %v8847
  %v8849 = vpop.f32.mrf.mxu0
  %v8850 = vadd.f32 %v8831, %v8849
  %8851 = vdwg.mxu0
  %8852 = vmatpush.bf16.msra.mxu0 0
  %8853 = vmatpush.bf16.msra.mxu0 0
  %8854 = vmatpush.bf16.msra.mxu0 0
  %8855 = vmatpush.bf16.msra.mxu0 0
  %8856 = vmatpush.bf16.msra.mxu0 0
  %8857 = vmatpush.bf16.msra.mxu0 0
  %8858 = vmatpush.bf16.msra.mxu0 %v1248
  %8859 = vmatpush.bf16.msra.mxu0 %v1245
  %8860 = vmatmul.bf16.gmra.mxu0 %v8809
  %v8861 = vpop.f32.mrf.mxu0
  %v8862 = vadd.f32 %v8843, %v8861
  %v8863 = vpop.f32.mrf.mxu0
  %v8864 = vadd.f32 %v8845, %v8863
  %8865 = vmatmul.bf16.gmra.mxu0 %v8812
  %v8866 = vpop.f32.mrf.mxu0
  %v8867 = vadd.f32 %v8848, %v8866
  %v8868 = vpop.f32.mrf.mxu0
  %v8869 = vadd.f32 %v8850, %v8868
  %8870 = vdwg.mxu0
  %8871 = vmatpush.bf16.msra.mxu0 %v1219
  %8872 = vmatpush.bf16.msra.mxu0 %v1216
  %8873 = vmatpush.bf16.msra.mxu0 %v1213
  %8874 = vmatpush.bf16.msra.mxu0 %v1210
  %8875 = vmatpush.bf16.msra.mxu0 %v1207
  %8876 = vmatpush.bf16.msra.mxu0 %v1204
  %8877 = vmatpush.bf16.msra.mxu0 %v1201
  %8878 = vmatpush.bf16.msra.mxu0 %v1198
  %8879 = vmatmul.bf16.gmra.mxu0 %v8802
  %v8880 = vpop.f32.mrf.mxu0
  %v8881 = vadd.f32 0.0, %v8880
  %v8882 = vpop.f32.mrf.mxu0
  %v8883 = vadd.f32 0.0, %v8882
  %8884 = vmatmul.bf16.gmra.mxu0 %v8805
  %v8885 = vpop.f32.mrf.mxu0
  %v8886 = vadd.f32 0.0, %v8885
  %v8887 = vpop.f32.mrf.mxu0
  %v8888 = vadd.f32 0.0, %v8887
  %8889 = vdwg.mxu0
  %8890 = vmatpush.bf16.msra.mxu0 %v1243
  %8891 = vmatpush.bf16.msra.mxu0 %v1240
  %8892 = vmatpush.bf16.msra.mxu0 %v1237
  %8893 = vmatpush.bf16.msra.mxu0 %v1234
  %8894 = vmatpush.bf16.msra.mxu0 %v1231
  %8895 = vmatpush.bf16.msra.mxu0 %v1228
  %8896 = vmatpush.bf16.msra.mxu0 %v1225
  %8897 = vmatpush.bf16.msra.mxu0 %v1222
  %8898 = vmatmul.bf16.gmra.mxu0 %v8803
  %v8899 = vpop.f32.mrf.mxu0
  %v8900 = vadd.f32 %v8881, %v8899
  %v8901 = vpop.f32.mrf.mxu0
  %v8902 = vadd.f32 %v8883, %v8901
  %8903 = vmatmul.bf16.gmra.mxu0 %v8806
  %v8904 = vpop.f32.mrf.mxu0
  %v8905 = vadd.f32 %v8886, %v8904
  %v8906 = vpop.f32.mrf.mxu0
  %v8907 = vadd.f32 %v8888, %v8906
  %8908 = vdwg.mxu0
  %8909 = vmatpush.bf16.msra.mxu0 0
  %8910 = vmatpush.bf16.msra.mxu0 0
  %8911 = vmatpush.bf16.msra.mxu0 0
  %8912 = vmatpush.bf16.msra.mxu0 0
  %8913 = vmatpush.bf16.msra.mxu0 0
  %8914 = vmatpush.bf16.msra.mxu0 0
  %8915 = vmatpush.bf16.msra.mxu0 %v1249
  %8916 = vmatpush.bf16.msra.mxu0 %v1246
  %8917 = vmatmul.bf16.gmra.mxu0 %v8809
  %v8918 = vpop.f32.mrf.mxu0
  %v8919 = vadd.f32 %v8900, %v8918
  %v8920 = vpop.f32.mrf.mxu0
  %v8921 = vadd.f32 %v8902, %v8920
  %8922 = vmatmul.bf16.gmra.mxu0 %v8812
  %v8923 = vpop.f32.mrf.mxu0
  %v8924 = vadd.f32 %v8905, %v8923
  %v8925 = vpop.f32.mrf.mxu0
  %v8926 = vadd.f32 %v8907, %v8925
  %8927 = vdwg.mxu0
  %8928 = vmatpush.bf16.msra.mxu0 %v1220
  %8929 = vmatpush.bf16.msra.mxu0 %v1217
  %8930 = vmatpush.bf16.msra.mxu0 %v1214
  %8931 = vmatpush.bf16.msra.mxu0 %v1211
  %8932 = vmatpush.bf16.msra.mxu0 %v1208
  %8933 = vmatpush.bf16.msra.mxu0 %v1205
  %8934 = vmatpush.bf16.msra.mxu0 %v1202
  %8935 = vmatpush.bf16.msra.mxu0 %v1199
  %8936 = vmatmul.bf16.gmra.mxu0 %v8802
  %v8937 = vpop.f32.mrf.mxu0
  %v8938 = vadd.f32 0.0, %v8937
  %v8939 = vpop.f32.mrf.mxu0
  %v8940 = vadd.f32 0.0, %v8939
  %8941 = vmatmul.bf16.gmra.mxu0 %v8805
  %v8942 = vpop.f32.mrf.mxu0
  %v8943 = vadd.f32 0.0, %v8942
  %v8944 = vpop.f32.mrf.mxu0
  %v8945 = vadd.f32 0.0, %v8944
  %8946 = vdwg.mxu0
  %8947 = vmatpush.bf16.msra.mxu0 %v1244
  %8948 = vmatpush.bf16.msra.mxu0 %v1241
  %8949 = vmatpush.bf16.msra.mxu0 %v1238
  %8950 = vmatpush.bf16.msra.mxu0 %v1235
  %8951 = vmatpush.bf16.msra.mxu0 %v1232
  %8952 = vmatpush.bf16.msra.mxu0 %v1229
  %8953 = vmatpush.bf16.msra.mxu0 %v1226
  %8954 = vmatpush.bf16.msra.mxu0 %v1223
  %8955 = vmatmul.bf16.gmra.mxu0 %v8803
  %v8956 = vpop.f32.mrf.mxu0
  %v8957 = vadd.f32 %v8938, %v8956
  %v8958 = vpop.f32.mrf.mxu0
  %v8959 = vadd.f32 %v8940, %v8958
  %8960 = vmatmul.bf16.gmra.mxu0 %v8806
  %v8961 = vpop.f32.mrf.mxu0
  %v8962 = vadd.f32 %v8943, %v8961
  %v8963 = vpop.f32.mrf.mxu0
  %v8964 = vadd.f32 %v8945, %v8963
  %8965 = vdwg.mxu0
  %8966 = vmatpush.bf16.msra.mxu0 0
  %8967 = vmatpush.bf16.msra.mxu0 0
  %8968 = vmatpush.bf16.msra.mxu0 0
  %8969 = vmatpush.bf16.msra.mxu0 0
  %8970 = vmatpush.bf16.msra.mxu0 0
  %8971 = vmatpush.bf16.msra.mxu0 0
  %8972 = vmatpush.bf16.msra.mxu0 %v1250
  %8973 = vmatpush.bf16.msra.mxu0 %v1247
  %8974 = vmatmul.bf16.gmra.mxu0 %v8809
  %v8975 = vpop.f32.mrf.mxu0
  %v8976 = vadd.f32 %v8957, %v8975
  %v8977 = vpop.f32.mrf.mxu0
  %v8978 = vadd.f32 %v8959, %v8977
  %8979 = vmatmul.bf16.gmra.mxu0 %v8812
  %v8980 = vpop.f32.mrf.mxu0
  %v8981 = vadd.f32 %v8962, %v8980
  %v8982 = vpop.f32.mrf.mxu0
  %v8983 = vadd.f32 %v8964, %v8982
  %8984 = vdwg.mxu0
  %v8985 = vpack.c.bf16 %v8864, %v8862
  %v8986 = vpack.c.bf16 %v8921, %v8919
  %v8987 = vpack.c.bf16 %v8978, %v8976
  %v8988 = vpack.c.bf16 %v8869, %v8867
  %v8989 = vpack.c.bf16 %v8926, %v8924
  %v8990 = vpack.c.bf16 %v8983, %v8981
  %v8991 = vld [vmem:[%s10] sm:$0xf]
  %v8992 = vld [vmem:[%s10 + $0x4] sm:$0xf]
  %8993 = vmatpush.bf16.msra.mxu0 %v1631
  %8994 = vmatpush.bf16.msra.mxu0 %v1628
  %8995 = vmatpush.bf16.msra.mxu0 %v1625
  %8996 = vmatpush.bf16.msra.mxu0 %v1622
  %8997 = vmatpush.bf16.msra.mxu0 %v1619
  %8998 = vmatpush.bf16.msra.mxu0 %v1616
  %8999 = vmatpush.bf16.msra.mxu0 %v1613
  %9000 = vmatpush.bf16.msra.mxu0 %v1610
  %9001 = vmatmul.bf16.gmra.mxu0 %v8802
  %v9002 = vpop.f32.mrf.mxu0
  %v9003 = vadd.f32 0.0, %v9002
  %v9004 = vpop.f32.mrf.mxu0
  %v9005 = vadd.f32 0.0, %v9004
  %9006 = vmatmul.bf16.gmra.mxu0 %v8805
  %v9007 = vpop.f32.mrf.mxu0
  %v9008 = vadd.f32 0.0, %v9007
  %v9009 = vpop.f32.mrf.mxu0
  %v9010 = vadd.f32 0.0, %v9009
  %9011 = vdwg.mxu0
  %9012 = vmatpush.bf16.msra.mxu0 %v1655
  %9013 = vmatpush.bf16.msra.mxu0 %v1652
  %9014 = vmatpush.bf16.msra.mxu0 %v1649
  %9015 = vmatpush.bf16.msra.mxu0 %v1646
  %9016 = vmatpush.bf16.msra.mxu0 %v1643
  %9017 = vmatpush.bf16.msra.mxu0 %v1640
  %9018 = vmatpush.bf16.msra.mxu0 %v1637
  %9019 = vmatpush.bf16.msra.mxu0 %v1634
  %9020 = vmatmul.bf16.gmra.mxu0 %v8803
  %v9021 = vpop.f32.mrf.mxu0
  %v9022 = vadd.f32 %v9003, %v9021
  %v9023 = vpop.f32.mrf.mxu0
  %v9024 = vadd.f32 %v9005, %v9023
  %9025 = vmatmul.bf16.gmra.mxu0 %v8806
  %v9026 = vpop.f32.mrf.mxu0
  %v9027 = vadd.f32 %v9008, %v9026
  %v9028 = vpop.f32.mrf.mxu0
  %v9029 = vadd.f32 %v9010, %v9028
  %9030 = vdwg.mxu0
  %9031 = vmatpush.bf16.msra.mxu0 0
  %9032 = vmatpush.bf16.msra.mxu0 0
  %9033 = vmatpush.bf16.msra.mxu0 0
  %9034 = vmatpush.bf16.msra.mxu0 0
  %9035 = vmatpush.bf16.msra.mxu0 0
  %9036 = vmatpush.bf16.msra.mxu0 0
  %9037 = vmatpush.bf16.msra.mxu0 %v1661
  %9038 = vmatpush.bf16.msra.mxu0 %v1658
  %9039 = vmatmul.bf16.gmra.mxu0 %v8809
  %v9040 = vpop.f32.mrf.mxu0
  %v9041 = vadd.f32 %v9022, %v9040
  %v9042 = vpop.f32.mrf.mxu0
  %v9043 = vadd.f32 %v9024, %v9042
  %9044 = vmatmul.bf16.gmra.mxu0 %v8812
  %v9045 = vpop.f32.mrf.mxu0
  %v9046 = vadd.f32 %v9027, %v9045
  %v9047 = vpop.f32.mrf.mxu0
  %v9048 = vadd.f32 %v9029, %v9047
  %9049 = vdwg.mxu0
  %9050 = vmatpush.bf16.msra.mxu0 %v1632
  %9051 = vmatpush.bf16.msra.mxu0 %v1629
  %9052 = vmatpush.bf16.msra.mxu0 %v1626
  %9053 = vmatpush.bf16.msra.mxu0 %v1623
  %9054 = vmatpush.bf16.msra.mxu0 %v1620
  %9055 = vmatpush.bf16.msra.mxu0 %v1617
  %9056 = vmatpush.bf16.msra.mxu0 %v1614
  %9057 = vmatpush.bf16.msra.mxu0 %v1611
  %9058 = vmatmul.bf16.gmra.mxu0 %v8802
  %v9059 = vpop.f32.mrf.mxu0
  %v9060 = vadd.f32 0.0, %v9059
  %v9061 = vpop.f32.mrf.mxu0
  %v9062 = vadd.f32 0.0, %v9061
  %9063 = vmatmul.bf16.gmra.mxu0 %v8805
  %v9064 = vpop.f32.mrf.mxu0
  %v9065 = vadd.f32 0.0, %v9064
  %v9066 = vpop.f32.mrf.mxu0
  %v9067 = vadd.f32 0.0, %v9066
  %9068 = vdwg.mxu0
  %9069 = vmatpush.bf16.msra.mxu0 %v1656
  %9070 = vmatpush.bf16.msra.mxu0 %v1653
  %9071 = vmatpush.bf16.msra.mxu0 %v1650
  %9072 = vmatpush.bf16.msra.mxu0 %v1647
  %9073 = vmatpush.bf16.msra.mxu0 %v1644
  %9074 = vmatpush.bf16.msra.mxu0 %v1641
  %9075 = vmatpush.bf16.msra.mxu0 %v1638
  %9076 = vmatpush.bf16.msra.mxu0 %v1635
  %9077 = vmatmul.bf16.gmra.mxu0 %v8803
  %v9078 = vpop.f32.mrf.mxu0
  %v9079 = vadd.f32 %v9060, %v9078
  %v9080 = vpop.f32.mrf.mxu0
  %v9081 = vadd.f32 %v9062, %v9080
  %9082 = vmatmul.bf16.gmra.mxu0 %v8806
  %v9083 = vpop.f32.mrf.mxu0
  %v9084 = vadd.f32 %v9065, %v9083
  %v9085 = vpop.f32.mrf.mxu0
  %v9086 = vadd.f32 %v9067, %v9085
  %9087 = vdwg.mxu0
  %9088 = vmatpush.bf16.msra.mxu0 0
  %9089 = vmatpush.bf16.msra.mxu0 0
  %9090 = vmatpush.bf16.msra.mxu0 0
  %9091 = vmatpush.bf16.msra.mxu0 0
  %9092 = vmatpush.bf16.msra.mxu0 0
  %9093 = vmatpush.bf16.msra.mxu0 0
  %9094 = vmatpush.bf16.msra.mxu0 %v1662
  %9095 = vmatpush.bf16.msra.mxu0 %v1659
  %9096 = vmatmul.bf16.gmra.mxu0 %v8809
  %v9097 = vpop.f32.mrf.mxu0
  %v9098 = vadd.f32 %v9079, %v9097
  %v9099 = vpop.f32.mrf.mxu0
  %v9100 = vadd.f32 %v9081, %v9099
  %9101 = vmatmul.bf16.gmra.mxu0 %v8812
  %v9102 = vpop.f32.mrf.mxu0
  %v9103 = vadd.f32 %v9084, %v9102
  %v9104 = vpop.f32.mrf.mxu0
  %v9105 = vadd.f32 %v9086, %v9104
  %9106 = vdwg.mxu0
  %9107 = vmatpush.bf16.msra.mxu0 %v1633
  %9108 = vmatpush.bf16.msra.mxu0 %v1630
  %9109 = vmatpush.bf16.msra.mxu0 %v1627
  %9110 = vmatpush.bf16.msra.mxu0 %v1624
  %9111 = vmatpush.bf16.msra.mxu0 %v1621
  %9112 = vmatpush.bf16.msra.mxu0 %v1618
  %9113 = vmatpush.bf16.msra.mxu0 %v1615
  %9114 = vmatpush.bf16.msra.mxu0 %v1612
  %9115 = vmatmul.bf16.gmra.mxu0 %v8802
  %v9116 = vpop.f32.mrf.mxu0
  %v9117 = vadd.f32 0.0, %v9116
  %v9118 = vpop.f32.mrf.mxu0
  %v9119 = vadd.f32 0.0, %v9118
  %9120 = vmatmul.bf16.gmra.mxu0 %v8805
  %v9121 = vpop.f32.mrf.mxu0
  %v9122 = vadd.f32 0.0, %v9121
  %v9123 = vpop.f32.mrf.mxu0
  %v9124 = vadd.f32 0.0, %v9123
  %9125 = vdwg.mxu0
  %9126 = vmatpush.bf16.msra.mxu0 %v1657
  %9127 = vmatpush.bf16.msra.mxu0 %v1654
  %9128 = vmatpush.bf16.msra.mxu0 %v1651
  %9129 = vmatpush.bf16.msra.mxu0 %v1648
  %9130 = vmatpush.bf16.msra.mxu0 %v1645
  %9131 = vmatpush.bf16.msra.mxu0 %v1642
  %9132 = vmatpush.bf16.msra.mxu0 %v1639
  %9133 = vmatpush.bf16.msra.mxu0 %v1636
  %9134 = vmatmul.bf16.gmra.mxu0 %v8803
  %v9135 = vpop.f32.mrf.mxu0
  %v9136 = vadd.f32 %v9117, %v9135
  %v9137 = vpop.f32.mrf.mxu0
  %v9138 = vadd.f32 %v9119, %v9137
  %9139 = vmatmul.bf16.gmra.mxu0 %v8806
  %v9140 = vpop.f32.mrf.mxu0
  %v9141 = vadd.f32 %v9122, %v9140
  %v9142 = vpop.f32.mrf.mxu0
  %v9143 = vadd.f32 %v9124, %v9142
  %9144 = vdwg.mxu0
  %9145 = vmatpush.bf16.msra.mxu0 0
  %9146 = vmatpush.bf16.msra.mxu0 0
  %9147 = vmatpush.bf16.msra.mxu0 0
  %9148 = vmatpush.bf16.msra.mxu0 0
  %9149 = vmatpush.bf16.msra.mxu0 0
  %9150 = vmatpush.bf16.msra.mxu0 0
  %9151 = vmatpush.bf16.msra.mxu0 %v1663
  %9152 = vmatpush.bf16.msra.mxu0 %v1660
  %9153 = vmatmul.bf16.gmra.mxu0 %v8809
  %v9154 = vpop.f32.mrf.mxu0
  %v9155 = vadd.f32 %v9136, %v9154
  %v9156 = vpop.f32.mrf.mxu0
  %v9157 = vadd.f32 %v9138, %v9156
  %9158 = vmatmul.bf16.gmra.mxu0 %v8812
  %v9159 = vpop.f32.mrf.mxu0
  %v9160 = vadd.f32 %v9141, %v9159
  %v9161 = vpop.f32.mrf.mxu0
  %v9162 = vadd.f32 %v9143, %v9161
  %9163 = vdwg.mxu0
  %v9164 = vpack.c.bf16 %v9043, %v9041
  %v9165 = vpack.c.bf16 %v9100, %v9098
  %v9166 = vpack.c.bf16 %v9157, %v9155
  %v9167 = vpack.c.bf16 %v9048, %v9046
  %v9168 = vpack.c.bf16 %v9105, %v9103
  %v9169 = vpack.c.bf16 %v9162, %v9160
  %s9170 = scalar_lea.vmem %s10, 8
  %v9171 = vld [vmem:[%s9170] sm:$0xf]
  %v9172 = vld [vmem:[%s9170 + $0x4] sm:$0xf]
  %v9175 = vunpack.c.l.b16 %v9171
  %v9176 = vunpack.c.l.b16 %v9172
  %v9177 = vpack.c.b16 %v9176, %v9175
  %v9179 = vsel %vm1305, %v9177, 0
  %9181 = vmatpush.bf16.msra.mxu0 0
  %9182 = vmatpush.bf16.msra.mxu0 0
  %9183 = vmatpush.bf16.msra.mxu0 0
  %9184 = vmatpush.bf16.msra.mxu0 0
  %9185 = vmatpush.bf16.msra.mxu0 0
  %9186 = vmatpush.bf16.msra.mxu0 0
  %9187 = vmatpush.bf16.msra.mxu0 %v9167
  %9188 = vmatpush.bf16.msra.mxu0 %v9164
  %9189 = vmatmul.bf16.gmra.mxu0 %v9179
  %v9190 = vpop.f32.mrf.mxu0
  %v9191 = vadd.f32 0.0, %v9190
  %v9192 = vpop.f32.mrf.mxu0
  %v9193 = vadd.f32 0.0, %v9192
  %9194 = vdwg.mxu0
  %9195 = vmatpush.bf16.msra.mxu0 0
  %9196 = vmatpush.bf16.msra.mxu0 0
  %9197 = vmatpush.bf16.msra.mxu0 0
  %9198 = vmatpush.bf16.msra.mxu0 0
  %9199 = vmatpush.bf16.msra.mxu0 0
  %9200 = vmatpush.bf16.msra.mxu0 0
  %9201 = vmatpush.bf16.msra.mxu0 %v9168
  %9202 = vmatpush.bf16.msra.mxu0 %v9165
  %9203 = vmatmul.bf16.gmra.mxu0 %v9179
  %v9204 = vpop.f32.mrf.mxu0
  %v9205 = vadd.f32 0.0, %v9204
  %v9206 = vpop.f32.mrf.mxu0
  %v9207 = vadd.f32 0.0, %v9206
  %9208 = vdwg.mxu0
  %9209 = vmatpush.bf16.msra.mxu0 0
  %9210 = vmatpush.bf16.msra.mxu0 0
  %9211 = vmatpush.bf16.msra.mxu0 0
  %9212 = vmatpush.bf16.msra.mxu0 0
  %9213 = vmatpush.bf16.msra.mxu0 0
  %9214 = vmatpush.bf16.msra.mxu0 0
  %9215 = vmatpush.bf16.msra.mxu0 %v9169
  %9216 = vmatpush.bf16.msra.mxu0 %v9166
  %9217 = vmatmul.bf16.gmra.mxu0 %v9179
  %v9218 = vpop.f32.mrf.mxu0
  %v9219 = vadd.f32 0.0, %v9218
  %v9220 = vpop.f32.mrf.mxu0
  %v9221 = vadd.f32 0.0, %v9220
  %9222 = vdwg.mxu0
  %v9225 = vunpack.c.l.b16 %v8991
  %v9226 = vunpack.c.l.b16 %v8992
  %v9227 = vpack.c.b16 %v9226, %v9225
  %v9229 = vsel %vm1305, %v9227, 0
  %9231 = vmatpush.bf16.msra.mxu0 0
  %9232 = vmatpush.bf16.msra.mxu0 0
  %9233 = vmatpush.bf16.msra.mxu0 0
  %9234 = vmatpush.bf16.msra.mxu0 0
  %9235 = vmatpush.bf16.msra.mxu0 0
  %9236 = vmatpush.bf16.msra.mxu0 0
  %9237 = vmatpush.bf16.msra.mxu0 %v8988
  %9238 = vmatpush.bf16.msra.mxu0 %v8985
  %9239 = vmatmul.bf16.gmra.mxu0 %v9229
  %v9240 = vpop.f32.mrf.mxu0
  %v9241 = vadd.f32 %v9191, %v9240
  %v9242 = vpop.f32.mrf.mxu0
  %v9243 = vadd.f32 %v9193, %v9242
  %9244 = vdwg.mxu0
  %9245 = vmatpush.bf16.msra.mxu0 0
  %9246 = vmatpush.bf16.msra.mxu0 0
  %9247 = vmatpush.bf16.msra.mxu0 0
  %9248 = vmatpush.bf16.msra.mxu0 0
  %9249 = vmatpush.bf16.msra.mxu0 0
  %9250 = vmatpush.bf16.msra.mxu0 0
  %9251 = vmatpush.bf16.msra.mxu0 %v8989
  %9252 = vmatpush.bf16.msra.mxu0 %v8986
  %9253 = vmatmul.bf16.gmra.mxu0 %v9229
  %v9254 = vpop.f32.mrf.mxu0
  %v9255 = vadd.f32 %v9205, %v9254
  %v9256 = vpop.f32.mrf.mxu0
  %v9257 = vadd.f32 %v9207, %v9256
  %9258 = vdwg.mxu0
  %9259 = vmatpush.bf16.msra.mxu0 0
  %9260 = vmatpush.bf16.msra.mxu0 0
  %9261 = vmatpush.bf16.msra.mxu0 0
  %9262 = vmatpush.bf16.msra.mxu0 0
  %9263 = vmatpush.bf16.msra.mxu0 0
  %9264 = vmatpush.bf16.msra.mxu0 0
  %9265 = vmatpush.bf16.msra.mxu0 %v8990
  %9266 = vmatpush.bf16.msra.mxu0 %v8987
  %9267 = vmatmul.bf16.gmra.mxu0 %v9229
  %v9268 = vpop.f32.mrf.mxu0
  %v9269 = vadd.f32 %v9219, %v9268
  %v9270 = vpop.f32.mrf.mxu0
  %v9271 = vadd.f32 %v9221, %v9270
  %9272 = vdwg.mxu0
  %9273 = vmatpush.bf16.msra.mxu0 %v2145
  %9274 = vmatpush.bf16.msra.mxu0 %v2142
  %9275 = vmatpush.bf16.msra.mxu0 %v2139
  %9276 = vmatpush.bf16.msra.mxu0 %v2136
  %9277 = vmatpush.bf16.msra.mxu0 %v2133
  %9278 = vmatpush.bf16.msra.mxu0 %v2130
  %9279 = vmatpush.bf16.msra.mxu0 %v2127
  %9280 = vmatpush.bf16.msra.mxu0 %v2124
  %9281 = vmatmul.bf16.gmra.mxu0 %v8802
  %v9282 = vpop.f32.mrf.mxu0
  %v9283 = vadd.f32 0.0, %v9282
  %v9284 = vpop.f32.mrf.mxu0
  %v9285 = vadd.f32 0.0, %v9284
  %9286 = vmatmul.bf16.gmra.mxu0 %v8805
  %v9287 = vpop.f32.mrf.mxu0
  %v9288 = vadd.f32 0.0, %v9287
  %v9289 = vpop.f32.mrf.mxu0
  %v9290 = vadd.f32 0.0, %v9289
  %9291 = vdwg.mxu0
  %9292 = vmatpush.bf16.msra.mxu0 %v2169
  %9293 = vmatpush.bf16.msra.mxu0 %v2166
  %9294 = vmatpush.bf16.msra.mxu0 %v2163
  %9295 = vmatpush.bf16.msra.mxu0 %v2160
  %9296 = vmatpush.bf16.msra.mxu0 %v2157
  %9297 = vmatpush.bf16.msra.mxu0 %v2154
  %9298 = vmatpush.bf16.msra.mxu0 %v2151
  %9299 = vmatpush.bf16.msra.mxu0 %v2148
  %9300 = vmatmul.bf16.gmra.mxu0 %v8803
  %v9301 = vpop.f32.mrf.mxu0
  %v9302 = vadd.f32 %v9283, %v9301
  %v9303 = vpop.f32.mrf.mxu0
  %v9304 = vadd.f32 %v9285, %v9303
  %9305 = vmatmul.bf16.gmra.mxu0 %v8806
  %v9306 = vpop.f32.mrf.mxu0
  %v9307 = vadd.f32 %v9288, %v9306
  %v9308 = vpop.f32.mrf.mxu0
  %v9309 = vadd.f32 %v9290, %v9308
  %9310 = vdwg.mxu0
  %9311 = vmatpush.bf16.msra.mxu0 0
  %9312 = vmatpush.bf16.msra.mxu0 0
  %9313 = vmatpush.bf16.msra.mxu0 0
  %9314 = vmatpush.bf16.msra.mxu0 0
  %9315 = vmatpush.bf16.msra.mxu0 0
  %9316 = vmatpush.bf16.msra.mxu0 0
  %9317 = vmatpush.bf16.msra.mxu0 %v2175
  %9318 = vmatpush.bf16.msra.mxu0 %v2172
  %9319 = vmatmul.bf16.gmra.mxu0 %v8809
  %v9320 = vpop.f32.mrf.mxu0
  %v9321 = vadd.f32 %v9302, %v9320
  %v9322 = vpop.f32.mrf.mxu0
  %v9323 = vadd.f32 %v9304, %v9322
  %9324 = vmatmul.bf16.gmra.mxu0 %v8812
  %v9325 = vpop.f32.mrf.mxu0
  %v9326 = vadd.f32 %v9307, %v9325
  %v9327 = vpop.f32.mrf.mxu0
  %v9328 = vadd.f32 %v9309, %v9327
  %9329 = vdwg.mxu0
  %9330 = vmatpush.bf16.msra.mxu0 %v2146
  %9331 = vmatpush.bf16.msra.mxu0 %v2143
  %9332 = vmatpush.bf16.msra.mxu0 %v2140
  %9333 = vmatpush.bf16.msra.mxu0 %v2137
  %9334 = vmatpush.bf16.msra.mxu0 %v2134
  %9335 = vmatpush.bf16.msra.mxu0 %v2131
  %9336 = vmatpush.bf16.msra.mxu0 %v2128
  %9337 = vmatpush.bf16.msra.mxu0 %v2125
  %9338 = vmatmul.bf16.gmra.mxu0 %v8802
  %v9339 = vpop.f32.mrf.mxu0
  %v9340 = vadd.f32 0.0, %v9339
  %v9341 = vpop.f32.mrf.mxu0
  %v9342 = vadd.f32 0.0, %v9341
  %9343 = vmatmul.bf16.gmra.mxu0 %v8805
  %v9344 = vpop.f32.mrf.mxu0
  %v9345 = vadd.f32 0.0, %v9344
  %v9346 = vpop.f32.mrf.mxu0
  %v9347 = vadd.f32 0.0, %v9346
  %9348 = vdwg.mxu0
  %9349 = vmatpush.bf16.msra.mxu0 %v2170
  %9350 = vmatpush.bf16.msra.mxu0 %v2167
  %9351 = vmatpush.bf16.msra.mxu0 %v2164
  %9352 = vmatpush.bf16.msra.mxu0 %v2161
  %9353 = vmatpush.bf16.msra.mxu0 %v2158
  %9354 = vmatpush.bf16.msra.mxu0 %v2155
  %9355 = vmatpush.bf16.msra.mxu0 %v2152
  %9356 = vmatpush.bf16.msra.mxu0 %v2149
  %9357 = vmatmul.bf16.gmra.mxu0 %v8803
  %v9358 = vpop.f32.mrf.mxu0
  %v9359 = vadd.f32 %v9340, %v9358
  %v9360 = vpop.f32.mrf.mxu0
  %v9361 = vadd.f32 %v9342, %v9360
  %9362 = vmatmul.bf16.gmra.mxu0 %v8806
  %v9363 = vpop.f32.mrf.mxu0
  %v9364 = vadd.f32 %v9345, %v9363
  %v9365 = vpop.f32.mrf.mxu0
  %v9366 = vadd.f32 %v9347, %v9365
  %9367 = vdwg.mxu0
  %9368 = vmatpush.bf16.msra.mxu0 0
  %9369 = vmatpush.bf16.msra.mxu0 0
  %9370 = vmatpush.bf16.msra.mxu0 0
  %9371 = vmatpush.bf16.msra.mxu0 0
  %9372 = vmatpush.bf16.msra.mxu0 0
  %9373 = vmatpush.bf16.msra.mxu0 0
  %9374 = vmatpush.bf16.msra.mxu0 %v2176
  %9375 = vmatpush.bf16.msra.mxu0 %v2173
  %9376 = vmatmul.bf16.gmra.mxu0 %v8809
  %v9377 = vpop.f32.mrf.mxu0
  %v9378 = vadd.f32 %v9359, %v9377
  %v9379 = vpop.f32.mrf.mxu0
  %v9380 = vadd.f32 %v9361, %v9379
  %9381 = vmatmul.bf16.gmra.mxu0 %v8812
  %v9382 = vpop.f32.mrf.mxu0
  %v9383 = vadd.f32 %v9364, %v9382
  %v9384 = vpop.f32.mrf.mxu0
  %v9385 = vadd.f32 %v9366, %v9384
  %9386 = vdwg.mxu0
  %9387 = vmatpush.bf16.msra.mxu0 %v2147
  %9388 = vmatpush.bf16.msra.mxu0 %v2144
  %9389 = vmatpush.bf16.msra.mxu0 %v2141
  %9390 = vmatpush.bf16.msra.mxu0 %v2138
  %9391 = vmatpush.bf16.msra.mxu0 %v2135
  %9392 = vmatpush.bf16.msra.mxu0 %v2132
  %9393 = vmatpush.bf16.msra.mxu0 %v2129
  %9394 = vmatpush.bf16.msra.mxu0 %v2126
  %9395 = vmatmul.bf16.gmra.mxu0 %v8802
  %v9396 = vpop.f32.mrf.mxu0
  %v9397 = vadd.f32 0.0, %v9396
  %v9398 = vpop.f32.mrf.mxu0
  %v9399 = vadd.f32 0.0, %v9398
  %9400 = vmatmul.bf16.gmra.mxu0 %v8805
  %v9401 = vpop.f32.mrf.mxu0
  %v9402 = vadd.f32 0.0, %v9401
  %v9403 = vpop.f32.mrf.mxu0
  %v9404 = vadd.f32 0.0, %v9403
  %9405 = vdwg.mxu0
  %9406 = vmatpush.bf16.msra.mxu0 %v2171
  %9407 = vmatpush.bf16.msra.mxu0 %v2168
  %9408 = vmatpush.bf16.msra.mxu0 %v2165
  %9409 = vmatpush.bf16.msra.mxu0 %v2162
  %9410 = vmatpush.bf16.msra.mxu0 %v2159
  %9411 = vmatpush.bf16.msra.mxu0 %v2156
  %9412 = vmatpush.bf16.msra.mxu0 %v2153
  %9413 = vmatpush.bf16.msra.mxu0 %v2150
  %9414 = vmatmul.bf16.gmra.mxu0 %v8803
  %v9415 = vpop.f32.mrf.mxu0
  %v9416 = vadd.f32 %v9397, %v9415
  %v9417 = vpop.f32.mrf.mxu0
  %v9418 = vadd.f32 %v9399, %v9417
  %9419 = vmatmul.bf16.gmra.mxu0 %v8806
  %v9420 = vpop.f32.mrf.mxu0
  %v9421 = vadd.f32 %v9402, %v9420
  %v9422 = vpop.f32.mrf.mxu0
  %v9423 = vadd.f32 %v9404, %v9422
  %9424 = vdwg.mxu0
  %9425 = vmatpush.bf16.msra.mxu0 0
  %9426 = vmatpush.bf16.msra.mxu0 0
  %9427 = vmatpush.bf16.msra.mxu0 0
  %9428 = vmatpush.bf16.msra.mxu0 0
  %9429 = vmatpush.bf16.msra.mxu0 0
  %9430 = vmatpush.bf16.msra.mxu0 0
  %9431 = vmatpush.bf16.msra.mxu0 %v2177
  %9432 = vmatpush.bf16.msra.mxu0 %v2174
  %9433 = vmatmul.bf16.gmra.mxu0 %v8809
  %v9434 = vpop.f32.mrf.mxu0
  %v9435 = vadd.f32 %v9416, %v9434
  %v9436 = vpop.f32.mrf.mxu0
  %v9437 = vadd.f32 %v9418, %v9436
  %9438 = vmatmul.bf16.gmra.mxu0 %v8812
  %v9439 = vpop.f32.mrf.mxu0
  %v9440 = vadd.f32 %v9421, %v9439
  %v9441 = vpop.f32.mrf.mxu0
  %v9442 = vadd.f32 %v9423, %v9441
  %9443 = vdwg.mxu0
  %v9444 = vpack.c.bf16 %v9323, %v9321
  %v9445 = vpack.c.bf16 %v9380, %v9378
  %v9446 = vpack.c.bf16 %v9437, %v9435
  %v9447 = vpack.c.bf16 %v9328, %v9326
  %v9448 = vpack.c.bf16 %v9385, %v9383
  %v9449 = vpack.c.bf16 %v9442, %v9440
  %s9450 = scalar_lea.vmem %s10, 16
  %v9451 = vld [vmem:[%s9450] sm:$0xf]
  %v9452 = vld [vmem:[%s9450 + $0x4] sm:$0xf]
  %v9455 = vunpack.c.l.b16 %v9451
  %v9456 = vunpack.c.l.b16 %v9452
  %v9457 = vpack.c.b16 %v9456, %v9455
  %v9459 = vsel %vm1305, %v9457, 0
  %9461 = vmatpush.bf16.msra.mxu0 0
  %9462 = vmatpush.bf16.msra.mxu0 0
  %9463 = vmatpush.bf16.msra.mxu0 0
  %9464 = vmatpush.bf16.msra.mxu0 0
  %9465 = vmatpush.bf16.msra.mxu0 0
  %9466 = vmatpush.bf16.msra.mxu0 0
  %9467 = vmatpush.bf16.msra.mxu0 %v9447
  %9468 = vmatpush.bf16.msra.mxu0 %v9444
  %9469 = vmatmul.bf16.gmra.mxu0 %v9459
  %v9470 = vpop.f32.mrf.mxu0
  %v9471 = vadd.f32 0.0, %v9470
  %v9472 = vpop.f32.mrf.mxu0
  %v9473 = vadd.f32 0.0, %v9472
  %9474 = vdwg.mxu0
  %9475 = vmatpush.bf16.msra.mxu0 0
  %9476 = vmatpush.bf16.msra.mxu0 0
  %9477 = vmatpush.bf16.msra.mxu0 0
  %9478 = vmatpush.bf16.msra.mxu0 0
  %9479 = vmatpush.bf16.msra.mxu0 0
  %9480 = vmatpush.bf16.msra.mxu0 0
  %9481 = vmatpush.bf16.msra.mxu0 %v9448
  %9482 = vmatpush.bf16.msra.mxu0 %v9445
  %9483 = vmatmul.bf16.gmra.mxu0 %v9459
  %v9484 = vpop.f32.mrf.mxu0
  %v9485 = vadd.f32 0.0, %v9484
  %v9486 = vpop.f32.mrf.mxu0
  %v9487 = vadd.f32 0.0, %v9486
  %9488 = vdwg.mxu0
  %9489 = vmatpush.bf16.msra.mxu0 0
  %9490 = vmatpush.bf16.msra.mxu0 0
  %9491 = vmatpush.bf16.msra.mxu0 0
  %9492 = vmatpush.bf16.msra.mxu0 0
  %9493 = vmatpush.bf16.msra.mxu0 0
  %9494 = vmatpush.bf16.msra.mxu0 0
  %9495 = vmatpush.bf16.msra.mxu0 %v9449
  %9496 = vmatpush.bf16.msra.mxu0 %v9446
  %9497 = vmatmul.bf16.gmra.mxu0 %v9459
  %v9498 = vpop.f32.mrf.mxu0
  %v9499 = vadd.f32 0.0, %v9498
  %v9500 = vpop.f32.mrf.mxu0
  %v9501 = vadd.f32 0.0, %v9500
  %9502 = vdwg.mxu0
  %v9503 = vadd.f32 %v9241, %v9471
  %v9504 = vadd.f32 %v9255, %v9485
  %v9505 = vadd.f32 %v9269, %v9499
  %v9506 = vadd.f32 %v9243, %v9473
  %v9507 = vadd.f32 %v9257, %v9487
  %v9508 = vadd.f32 %v9271, %v9501
  %9509 = vmatpush.bf16.msra.mxu0 %v2609
  %9510 = vmatpush.bf16.msra.mxu0 %v2606
  %9511 = vmatpush.bf16.msra.mxu0 %v2603
  %9512 = vmatpush.bf16.msra.mxu0 %v2600
  %9513 = vmatpush.bf16.msra.mxu0 %v2597
  %9514 = vmatpush.bf16.msra.mxu0 %v2594
  %9515 = vmatpush.bf16.msra.mxu0 %v2591
  %9516 = vmatpush.bf16.msra.mxu0 %v2588
  %9517 = vmatmul.bf16.gmra.mxu0 %v8802
  %v9518 = vpop.f32.mrf.mxu0
  %v9519 = vadd.f32 0.0, %v9518
  %v9520 = vpop.f32.mrf.mxu0
  %v9521 = vadd.f32 0.0, %v9520
  %9522 = vmatmul.bf16.gmra.mxu0 %v8805
  %v9523 = vpop.f32.mrf.mxu0
  %v9524 = vadd.f32 0.0, %v9523
  %v9525 = vpop.f32.mrf.mxu0
  %v9526 = vadd.f32 0.0, %v9525
  %9527 = vdwg.mxu0
  %9528 = vmatpush.bf16.msra.mxu0 %v2633
  %9529 = vmatpush.bf16.msra.mxu0 %v2630
  %9530 = vmatpush.bf16.msra.mxu0 %v2627
  %9531 = vmatpush.bf16.msra.mxu0 %v2624
  %9532 = vmatpush.bf16.msra.mxu0 %v2621
  %9533 = vmatpush.bf16.msra.mxu0 %v2618
  %9534 = vmatpush.bf16.msra.mxu0 %v2615
  %9535 = vmatpush.bf16.msra.mxu0 %v2612
  %9536 = vmatmul.bf16.gmra.mxu0 %v8803
  %v9537 = vpop.f32.mrf.mxu0
  %v9538 = vadd.f32 %v9519, %v9537
  %v9539 = vpop.f32.mrf.mxu0
  %v9540 = vadd.f32 %v9521, %v9539
  %9541 = vmatmul.bf16.gmra.mxu0 %v8806
  %v9542 = vpop.f32.mrf.mxu0
  %v9543 = vadd.f32 %v9524, %v9542
  %v9544 = vpop.f32.mrf.mxu0
  %v9545 = vadd.f32 %v9526, %v9544
  %9546 = vdwg.mxu0
  %9547 = vmatpush.bf16.msra.mxu0 0
  %9548 = vmatpush.bf16.msra.mxu0 0
  %9549 = vmatpush.bf16.msra.mxu0 0
  %9550 = vmatpush.bf16.msra.mxu0 0
  %9551 = vmatpush.bf16.msra.mxu0 0
  %9552 = vmatpush.bf16.msra.mxu0 0
  %9553 = vmatpush.bf16.msra.mxu0 %v2639
  %9554 = vmatpush.bf16.msra.mxu0 %v2636
  %9555 = vmatmul.bf16.gmra.mxu0 %v8809
  %v9556 = vpop.f32.mrf.mxu0
  %v9557 = vadd.f32 %v9538, %v9556
  %v9558 = vpop.f32.mrf.mxu0
  %v9559 = vadd.f32 %v9540, %v9558
  %9560 = vmatmul.bf16.gmra.mxu0 %v8812
  %v9561 = vpop.f32.mrf.mxu0
  %v9562 = vadd.f32 %v9543, %v9561
  %v9563 = vpop.f32.mrf.mxu0
  %v9564 = vadd.f32 %v9545, %v9563
  %9565 = vdwg.mxu0
  %9566 = vmatpush.bf16.msra.mxu0 %v2610
  %9567 = vmatpush.bf16.msra.mxu0 %v2607
  %9568 = vmatpush.bf16.msra.mxu0 %v2604
  %9569 = vmatpush.bf16.msra.mxu0 %v2601
  %9570 = vmatpush.bf16.msra.mxu0 %v2598
  %9571 = vmatpush.bf16.msra.mxu0 %v2595
  %9572 = vmatpush.bf16.msra.mxu0 %v2592
  %9573 = vmatpush.bf16.msra.mxu0 %v2589
  %9574 = vmatmul.bf16.gmra.mxu0 %v8802
  %v9575 = vpop.f32.mrf.mxu0
  %v9576 = vadd.f32 0.0, %v9575
  %v9577 = vpop.f32.mrf.mxu0
  %v9578 = vadd.f32 0.0, %v9577
  %9579 = vmatmul.bf16.gmra.mxu0 %v8805
  %v9580 = vpop.f32.mrf.mxu0
  %v9581 = vadd.f32 0.0, %v9580
  %v9582 = vpop.f32.mrf.mxu0
  %v9583 = vadd.f32 0.0, %v9582
  %9584 = vdwg.mxu0
  %9585 = vmatpush.bf16.msra.mxu0 %v2634
  %9586 = vmatpush.bf16.msra.mxu0 %v2631
  %9587 = vmatpush.bf16.msra.mxu0 %v2628
  %9588 = vmatpush.bf16.msra.mxu0 %v2625
  %9589 = vmatpush.bf16.msra.mxu0 %v2622
  %9590 = vmatpush.bf16.msra.mxu0 %v2619
  %9591 = vmatpush.bf16.msra.mxu0 %v2616
  %9592 = vmatpush.bf16.msra.mxu0 %v2613
  %9593 = vmatmul.bf16.gmra.mxu0 %v8803
  %v9594 = vpop.f32.mrf.mxu0
  %v9595 = vadd.f32 %v9576, %v9594
  %v9596 = vpop.f32.mrf.mxu0
  %v9597 = vadd.f32 %v9578, %v9596
  %9598 = vmatmul.bf16.gmra.mxu0 %v8806
  %v9599 = vpop.f32.mrf.mxu0
  %v9600 = vadd.f32 %v9581, %v9599
  %v9601 = vpop.f32.mrf.mxu0
  %v9602 = vadd.f32 %v9583, %v9601
  %9603 = vdwg.mxu0
  %9604 = vmatpush.bf16.msra.mxu0 0
  %9605 = vmatpush.bf16.msra.mxu0 0
  %9606 = vmatpush.bf16.msra.mxu0 0
  %9607 = vmatpush.bf16.msra.mxu0 0
  %9608 = vmatpush.bf16.msra.mxu0 0
  %9609 = vmatpush.bf16.msra.mxu0 0
  %9610 = vmatpush.bf16.msra.mxu0 %v2640
  %9611 = vmatpush.bf16.msra.mxu0 %v2637
  %9612 = vmatmul.bf16.gmra.mxu0 %v8809
  %v9613 = vpop.f32.mrf.mxu0
  %v9614 = vadd.f32 %v9595, %v9613
  %v9615 = vpop.f32.mrf.mxu0
  %v9616 = vadd.f32 %v9597, %v9615
  %9617 = vmatmul.bf16.gmra.mxu0 %v8812
  %v9618 = vpop.f32.mrf.mxu0
  %v9619 = vadd.f32 %v9600, %v9618
  %v9620 = vpop.f32.mrf.mxu0
  %v9621 = vadd.f32 %v9602, %v9620
  %9622 = vdwg.mxu0
  %9623 = vmatpush.bf16.msra.mxu0 %v2611
  %9624 = vmatpush.bf16.msra.mxu0 %v2608
  %9625 = vmatpush.bf16.msra.mxu0 %v2605
  %9626 = vmatpush.bf16.msra.mxu0 %v2602
  %9627 = vmatpush.bf16.msra.mxu0 %v2599
  %9628 = vmatpush.bf16.msra.mxu0 %v2596
  %9629 = vmatpush.bf16.msra.mxu0 %v2593
  %9630 = vmatpush.bf16.msra.mxu0 %v2590
  %9631 = vmatmul.bf16.gmra.mxu0 %v8802
  %v9632 = vpop.f32.mrf.mxu0
  %v9633 = vadd.f32 0.0, %v9632
  %v9634 = vpop.f32.mrf.mxu0
  %v9635 = vadd.f32 0.0, %v9634
  %9636 = vmatmul.bf16.gmra.mxu0 %v8805
  %v9637 = vpop.f32.mrf.mxu0
  %v9638 = vadd.f32 0.0, %v9637
  %v9639 = vpop.f32.mrf.mxu0
  %v9640 = vadd.f32 0.0, %v9639
  %9641 = vdwg.mxu0
  %9642 = vmatpush.bf16.msra.mxu0 %v2635
  %9643 = vmatpush.bf16.msra.mxu0 %v2632
  %9644 = vmatpush.bf16.msra.mxu0 %v2629
  %9645 = vmatpush.bf16.msra.mxu0 %v2626
  %9646 = vmatpush.bf16.msra.mxu0 %v2623
  %9647 = vmatpush.bf16.msra.mxu0 %v2620
  %9648 = vmatpush.bf16.msra.mxu0 %v2617
  %9649 = vmatpush.bf16.msra.mxu0 %v2614
  %9650 = vmatmul.bf16.gmra.mxu0 %v8803
  %v9651 = vpop.f32.mrf.mxu0
  %v9652 = vadd.f32 %v9633, %v9651
  %v9653 = vpop.f32.mrf.mxu0
  %v9654 = vadd.f32 %v9635, %v9653
  %9655 = vmatmul.bf16.gmra.mxu0 %v8806
  %v9656 = vpop.f32.mrf.mxu0
  %v9657 = vadd.f32 %v9638, %v9656
  %v9658 = vpop.f32.mrf.mxu0
  %v9659 = vadd.f32 %v9640, %v9658
  %9660 = vdwg.mxu0
  %9661 = vmatpush.bf16.msra.mxu0 0
  %9662 = vmatpush.bf16.msra.mxu0 0
  %9663 = vmatpush.bf16.msra.mxu0 0
  %9664 = vmatpush.bf16.msra.mxu0 0
  %9665 = vmatpush.bf16.msra.mxu0 0
  %9666 = vmatpush.bf16.msra.mxu0 0
  %9667 = vmatpush.bf16.msra.mxu0 %v2641
  %9668 = vmatpush.bf16.msra.mxu0 %v2638
  %9669 = vmatmul.bf16.gmra.mxu0 %v8809
  %v9670 = vpop.f32.mrf.mxu0
  %v9671 = vadd.f32 %v9652, %v9670
  %v9672 = vpop.f32.mrf.mxu0
  %v9673 = vadd.f32 %v9654, %v9672
  %9674 = vmatmul.bf16.gmra.mxu0 %v8812
  %v9675 = vpop.f32.mrf.mxu0
  %v9676 = vadd.f32 %v9657, %v9675
  %v9677 = vpop.f32.mrf.mxu0
  %v9678 = vadd.f32 %v9659, %v9677
  %9679 = vdwg.mxu0
  %v9680 = vpack.c.bf16 %v9559, %v9557
  %v9681 = vpack.c.bf16 %v9616, %v9614
  %v9682 = vpack.c.bf16 %v9673, %v9671
  %v9683 = vpack.c.bf16 %v9564, %v9562
  %v9684 = vpack.c.bf16 %v9621, %v9619
  %v9685 = vpack.c.bf16 %v9678, %v9676
  %s9686 = scalar_lea.vmem %s10, 24
  %v9687 = vld [vmem:[%s9686] sm:$0xf]
  %v9688 = vld [vmem:[%s9686 + $0x4] sm:$0xf]
  %v9691 = vunpack.c.l.b16 %v9687
  %v9692 = vunpack.c.l.b16 %v9688
  %v9693 = vpack.c.b16 %v9692, %v9691
  %v9695 = vsel %vm1305, %v9693, 0
  %9697 = vmatpush.bf16.msra.mxu0 0
  %9698 = vmatpush.bf16.msra.mxu0 0
  %9699 = vmatpush.bf16.msra.mxu0 0
  %9700 = vmatpush.bf16.msra.mxu0 0
  %9701 = vmatpush.bf16.msra.mxu0 0
  %9702 = vmatpush.bf16.msra.mxu0 0
  %9703 = vmatpush.bf16.msra.mxu0 %v9683
  %9704 = vmatpush.bf16.msra.mxu0 %v9680
  %9705 = vmatmul.bf16.gmra.mxu0 %v9695
  %v9706 = vpop.f32.mrf.mxu0
  %v9707 = vadd.f32 0.0, %v9706
  %v9708 = vpop.f32.mrf.mxu0
  %v9709 = vadd.f32 0.0, %v9708
  %9710 = vdwg.mxu0
  %9711 = vmatpush.bf16.msra.mxu0 0
  %9712 = vmatpush.bf16.msra.mxu0 0
  %9713 = vmatpush.bf16.msra.mxu0 0
  %9714 = vmatpush.bf16.msra.mxu0 0
  %9715 = vmatpush.bf16.msra.mxu0 0
  %9716 = vmatpush.bf16.msra.mxu0 0
  %9717 = vmatpush.bf16.msra.mxu0 %v9684
  %9718 = vmatpush.bf16.msra.mxu0 %v9681
  %9719 = vmatmul.bf16.gmra.mxu0 %v9695
  %v9720 = vpop.f32.mrf.mxu0
  %v9721 = vadd.f32 0.0, %v9720
  %v9722 = vpop.f32.mrf.mxu0
  %v9723 = vadd.f32 0.0, %v9722
  %9724 = vdwg.mxu0
  %9725 = vmatpush.bf16.msra.mxu0 0
  %9726 = vmatpush.bf16.msra.mxu0 0
  %9727 = vmatpush.bf16.msra.mxu0 0
  %9728 = vmatpush.bf16.msra.mxu0 0
  %9729 = vmatpush.bf16.msra.mxu0 0
  %9730 = vmatpush.bf16.msra.mxu0 0
  %9731 = vmatpush.bf16.msra.mxu0 %v9685
  %9732 = vmatpush.bf16.msra.mxu0 %v9682
  %9733 = vmatmul.bf16.gmra.mxu0 %v9695
  %v9734 = vpop.f32.mrf.mxu0
  %v9735 = vadd.f32 0.0, %v9734
  %v9736 = vpop.f32.mrf.mxu0
  %v9737 = vadd.f32 0.0, %v9736
  %9738 = vdwg.mxu0
  %v9739 = vadd.f32 %v9503, %v9707
  %v9740 = vadd.f32 %v9504, %v9721
  %v9741 = vadd.f32 %v9505, %v9735
  %v9742 = vadd.f32 %v9506, %v9709
  %v9743 = vadd.f32 %v9507, %v9723
  %v9744 = vadd.f32 %v9508, %v9737
  %9745 = vmatpush.bf16.msra.mxu0 %v3073
  %9746 = vmatpush.bf16.msra.mxu0 %v3070
  %9747 = vmatpush.bf16.msra.mxu0 %v3067
  %9748 = vmatpush.bf16.msra.mxu0 %v3064
  %9749 = vmatpush.bf16.msra.mxu0 %v3061
  %9750 = vmatpush.bf16.msra.mxu0 %v3058
  %9751 = vmatpush.bf16.msra.mxu0 %v3055
  %9752 = vmatpush.bf16.msra.mxu0 %v3052
  %9753 = vmatmul.bf16.gmra.mxu0 %v8802
  %v9754 = vpop.f32.mrf.mxu0
  %v9755 = vadd.f32 0.0, %v9754
  %v9756 = vpop.f32.mrf.mxu0
  %v9757 = vadd.f32 0.0, %v9756
  %9758 = vmatmul.bf16.gmra.mxu0 %v8805
  %v9759 = vpop.f32.mrf.mxu0
  %v9760 = vadd.f32 0.0, %v9759
  %v9761 = vpop.f32.mrf.mxu0
  %v9762 = vadd.f32 0.0, %v9761
  %9763 = vdwg.mxu0
  %9764 = vmatpush.bf16.msra.mxu0 %v3097
  %9765 = vmatpush.bf16.msra.mxu0 %v3094
  %9766 = vmatpush.bf16.msra.mxu0 %v3091
  %9767 = vmatpush.bf16.msra.mxu0 %v3088
  %9768 = vmatpush.bf16.msra.mxu0 %v3085
  %9769 = vmatpush.bf16.msra.mxu0 %v3082
  %9770 = vmatpush.bf16.msra.mxu0 %v3079
  %9771 = vmatpush.bf16.msra.mxu0 %v3076
  %9772 = vmatmul.bf16.gmra.mxu0 %v8803
  %v9773 = vpop.f32.mrf.mxu0
  %v9774 = vadd.f32 %v9755, %v9773
  %v9775 = vpop.f32.mrf.mxu0
  %v9776 = vadd.f32 %v9757, %v9775
  %9777 = vmatmul.bf16.gmra.mxu0 %v8806
  %v9778 = vpop.f32.mrf.mxu0
  %v9779 = vadd.f32 %v9760, %v9778
  %v9780 = vpop.f32.mrf.mxu0
  %v9781 = vadd.f32 %v9762, %v9780
  %9782 = vdwg.mxu0
  %9783 = vmatpush.bf16.msra.mxu0 0
  %9784 = vmatpush.bf16.msra.mxu0 0
  %9785 = vmatpush.bf16.msra.mxu0 0
  %9786 = vmatpush.bf16.msra.mxu0 0
  %9787 = vmatpush.bf16.msra.mxu0 0
  %9788 = vmatpush.bf16.msra.mxu0 0
  %9789 = vmatpush.bf16.msra.mxu0 %v3103
  %9790 = vmatpush.bf16.msra.mxu0 %v3100
  %9791 = vmatmul.bf16.gmra.mxu0 %v8809
  %v9792 = vpop.f32.mrf.mxu0
  %v9793 = vadd.f32 %v9774, %v9792
  %v9794 = vpop.f32.mrf.mxu0
  %v9795 = vadd.f32 %v9776, %v9794
  %9796 = vmatmul.bf16.gmra.mxu0 %v8812
  %v9797 = vpop.f32.mrf.mxu0
  %v9798 = vadd.f32 %v9779, %v9797
  %v9799 = vpop.f32.mrf.mxu0
  %v9800 = vadd.f32 %v9781, %v9799
  %9801 = vdwg.mxu0
  %9802 = vmatpush.bf16.msra.mxu0 %v3074
  %9803 = vmatpush.bf16.msra.mxu0 %v3071
  %9804 = vmatpush.bf16.msra.mxu0 %v3068
  %9805 = vmatpush.bf16.msra.mxu0 %v3065
  %9806 = vmatpush.bf16.msra.mxu0 %v3062
  %9807 = vmatpush.bf16.msra.mxu0 %v3059
  %9808 = vmatpush.bf16.msra.mxu0 %v3056
  %9809 = vmatpush.bf16.msra.mxu0 %v3053
  %9810 = vmatmul.bf16.gmra.mxu0 %v8802
  %v9811 = vpop.f32.mrf.mxu0
  %v9812 = vadd.f32 0.0, %v9811
  %v9813 = vpop.f32.mrf.mxu0
  %v9814 = vadd.f32 0.0, %v9813
  %9815 = vmatmul.bf16.gmra.mxu0 %v8805
  %v9816 = vpop.f32.mrf.mxu0
  %v9817 = vadd.f32 0.0, %v9816
  %v9818 = vpop.f32.mrf.mxu0
  %v9819 = vadd.f32 0.0, %v9818
  %9820 = vdwg.mxu0
  %9821 = vmatpush.bf16.msra.mxu0 %v3098
  %9822 = vmatpush.bf16.msra.mxu0 %v3095
  %9823 = vmatpush.bf16.msra.mxu0 %v3092
  %9824 = vmatpush.bf16.msra.mxu0 %v3089
  %9825 = vmatpush.bf16.msra.mxu0 %v3086
  %9826 = vmatpush.bf16.msra.mxu0 %v3083
  %9827 = vmatpush.bf16.msra.mxu0 %v3080
  %9828 = vmatpush.bf16.msra.mxu0 %v3077
  %9829 = vmatmul.bf16.gmra.mxu0 %v8803
  %v9830 = vpop.f32.mrf.mxu0
  %v9831 = vadd.f32 %v9812, %v9830
  %v9832 = vpop.f32.mrf.mxu0
  %v9833 = vadd.f32 %v9814, %v9832
  %9834 = vmatmul.bf16.gmra.mxu0 %v8806
  %v9835 = vpop.f32.mrf.mxu0
  %v9836 = vadd.f32 %v9817, %v9835
  %v9837 = vpop.f32.mrf.mxu0
  %v9838 = vadd.f32 %v9819, %v9837
  %9839 = vdwg.mxu0
  %9840 = vmatpush.bf16.msra.mxu0 0
  %9841 = vmatpush.bf16.msra.mxu0 0
  %9842 = vmatpush.bf16.msra.mxu0 0
  %9843 = vmatpush.bf16.msra.mxu0 0
  %9844 = vmatpush.bf16.msra.mxu0 0
  %9845 = vmatpush.bf16.msra.mxu0 0
  %9846 = vmatpush.bf16.msra.mxu0 %v3104
  %9847 = vmatpush.bf16.msra.mxu0 %v3101
  %9848 = vmatmul.bf16.gmra.mxu0 %v8809
  %v9849 = vpop.f32.mrf.mxu0
  %v9850 = vadd.f32 %v9831, %v9849
  %v9851 = vpop.f32.mrf.mxu0
  %v9852 = vadd.f32 %v9833, %v9851
  %9853 = vmatmul.bf16.gmra.mxu0 %v8812
  %v9854 = vpop.f32.mrf.mxu0
  %v9855 = vadd.f32 %v9836, %v9854
  %v9856 = vpop.f32.mrf.mxu0
  %v9857 = vadd.f32 %v9838, %v9856
  %9858 = vdwg.mxu0
  %9859 = vmatpush.bf16.msra.mxu0 %v3075
  %9860 = vmatpush.bf16.msra.mxu0 %v3072
  %9861 = vmatpush.bf16.msra.mxu0 %v3069
  %9862 = vmatpush.bf16.msra.mxu0 %v3066
  %9863 = vmatpush.bf16.msra.mxu0 %v3063
  %9864 = vmatpush.bf16.msra.mxu0 %v3060
  %9865 = vmatpush.bf16.msra.mxu0 %v3057
  %9866 = vmatpush.bf16.msra.mxu0 %v3054
  %9867 = vmatmul.bf16.gmra.mxu0 %v8802
  %v9868 = vpop.f32.mrf.mxu0
  %v9869 = vadd.f32 0.0, %v9868
  %v9870 = vpop.f32.mrf.mxu0
  %v9871 = vadd.f32 0.0, %v9870
  %9872 = vmatmul.bf16.gmra.mxu0 %v8805
  %v9873 = vpop.f32.mrf.mxu0
  %v9874 = vadd.f32 0.0, %v9873
  %v9875 = vpop.f32.mrf.mxu0
  %v9876 = vadd.f32 0.0, %v9875
  %9877 = vdwg.mxu0
  %9878 = vmatpush.bf16.msra.mxu0 %v3099
  %9879 = vmatpush.bf16.msra.mxu0 %v3096
  %9880 = vmatpush.bf16.msra.mxu0 %v3093
  %9881 = vmatpush.bf16.msra.mxu0 %v3090
  %9882 = vmatpush.bf16.msra.mxu0 %v3087
  %9883 = vmatpush.bf16.msra.mxu0 %v3084
  %9884 = vmatpush.bf16.msra.mxu0 %v3081
  %9885 = vmatpush.bf16.msra.mxu0 %v3078
  %9886 = vmatmul.bf16.gmra.mxu0 %v8803
  %v9887 = vpop.f32.mrf.mxu0
  %v9888 = vadd.f32 %v9869, %v9887
  %v9889 = vpop.f32.mrf.mxu0
  %v9890 = vadd.f32 %v9871, %v9889
  %9891 = vmatmul.bf16.gmra.mxu0 %v8806
  %v9892 = vpop.f32.mrf.mxu0
  %v9893 = vadd.f32 %v9874, %v9892
  %v9894 = vpop.f32.mrf.mxu0
  %v9895 = vadd.f32 %v9876, %v9894
  %9896 = vdwg.mxu0
  %9897 = vmatpush.bf16.msra.mxu0 0
  %9898 = vmatpush.bf16.msra.mxu0 0
  %9899 = vmatpush.bf16.msra.mxu0 0
  %9900 = vmatpush.bf16.msra.mxu0 0
  %9901 = vmatpush.bf16.msra.mxu0 0
  %9902 = vmatpush.bf16.msra.mxu0 0
  %9903 = vmatpush.bf16.msra.mxu0 %v3105
  %9904 = vmatpush.bf16.msra.mxu0 %v3102
  %9905 = vmatmul.bf16.gmra.mxu0 %v8809
  %v9906 = vpop.f32.mrf.mxu0
  %v9907 = vadd.f32 %v9888, %v9906
  %v9908 = vpop.f32.mrf.mxu0
  %v9909 = vadd.f32 %v9890, %v9908
  %9910 = vmatmul.bf16.gmra.mxu0 %v8812
  %v9911 = vpop.f32.mrf.mxu0
  %v9912 = vadd.f32 %v9893, %v9911
  %v9913 = vpop.f32.mrf.mxu0
  %v9914 = vadd.f32 %v9895, %v9913
  %9915 = vdwg.mxu0
  %v9916 = vpack.c.bf16 %v9795, %v9793
  %v9917 = vpack.c.bf16 %v9852, %v9850
  %v9918 = vpack.c.bf16 %v9909, %v9907
  %v9919 = vpack.c.bf16 %v9800, %v9798
  %v9920 = vpack.c.bf16 %v9857, %v9855
  %v9921 = vpack.c.bf16 %v9914, %v9912
  %s9922 = scalar_lea.vmem %s10, 32
  %v9923 = vld [vmem:[%s9922] sm:$0xf]
  %v9924 = vld [vmem:[%s9922 + $0x4] sm:$0xf]
  %v9927 = vunpack.c.l.b16 %v9923
  %v9928 = vunpack.c.l.b16 %v9924
  %v9929 = vpack.c.b16 %v9928, %v9927
  %v9931 = vsel %vm1305, %v9929, 0
  %9933 = vmatpush.bf16.msra.mxu0 0
  %9934 = vmatpush.bf16.msra.mxu0 0
  %9935 = vmatpush.bf16.msra.mxu0 0
  %9936 = vmatpush.bf16.msra.mxu0 0
  %9937 = vmatpush.bf16.msra.mxu0 0
  %9938 = vmatpush.bf16.msra.mxu0 0
  %9939 = vmatpush.bf16.msra.mxu0 %v9919
  %9940 = vmatpush.bf16.msra.mxu0 %v9916
  %9941 = vmatmul.bf16.gmra.mxu0 %v9931
  %v9942 = vpop.f32.mrf.mxu0
  %v9943 = vadd.f32 0.0, %v9942
  %v9944 = vpop.f32.mrf.mxu0
  %v9945 = vadd.f32 0.0, %v9944
  %9946 = vdwg.mxu0
  %9947 = vmatpush.bf16.msra.mxu0 0
  %9948 = vmatpush.bf16.msra.mxu0 0
  %9949 = vmatpush.bf16.msra.mxu0 0
  %9950 = vmatpush.bf16.msra.mxu0 0
  %9951 = vmatpush.bf16.msra.mxu0 0
  %9952 = vmatpush.bf16.msra.mxu0 0
  %9953 = vmatpush.bf16.msra.mxu0 %v9920
  %9954 = vmatpush.bf16.msra.mxu0 %v9917
  %9955 = vmatmul.bf16.gmra.mxu0 %v9931
  %v9956 = vpop.f32.mrf.mxu0
  %v9957 = vadd.f32 0.0, %v9956
  %v9958 = vpop.f32.mrf.mxu0
  %v9959 = vadd.f32 0.0, %v9958
  %9960 = vdwg.mxu0
  %9961 = vmatpush.bf16.msra.mxu0 0
  %9962 = vmatpush.bf16.msra.mxu0 0
  %9963 = vmatpush.bf16.msra.mxu0 0
  %9964 = vmatpush.bf16.msra.mxu0 0
  %9965 = vmatpush.bf16.msra.mxu0 0
  %9966 = vmatpush.bf16.msra.mxu0 0
  %9967 = vmatpush.bf16.msra.mxu0 %v9921
  %9968 = vmatpush.bf16.msra.mxu0 %v9918
  %9969 = vmatmul.bf16.gmra.mxu0 %v9931
  %v9970 = vpop.f32.mrf.mxu0
  %v9971 = vadd.f32 0.0, %v9970
  %v9972 = vpop.f32.mrf.mxu0
  %v9973 = vadd.f32 0.0, %v9972
  %9974 = vdwg.mxu0
  %v9975 = vadd.f32 %v9739, %v9943
  %v9976 = vadd.f32 %v9740, %v9957
  %v9977 = vadd.f32 %v9741, %v9971
  %v9978 = vadd.f32 %v9742, %v9945
  %v9979 = vadd.f32 %v9743, %v9959
  %v9980 = vadd.f32 %v9744, %v9973
  %9981 = vmatpush.bf16.msra.mxu0 %v3537
  %9982 = vmatpush.bf16.msra.mxu0 %v3534
  %9983 = vmatpush.bf16.msra.mxu0 %v3531
  %9984 = vmatpush.bf16.msra.mxu0 %v3528
  %9985 = vmatpush.bf16.msra.mxu0 %v3525
  %9986 = vmatpush.bf16.msra.mxu0 %v3522
  %9987 = vmatpush.bf16.msra.mxu0 %v3519
  %9988 = vmatpush.bf16.msra.mxu0 %v3516
  %9989 = vmatmul.bf16.gmra.mxu0 %v8802
  %v9990 = vpop.f32.mrf.mxu0
  %v9991 = vadd.f32 0.0, %v9990
  %v9992 = vpop.f32.mrf.mxu0
  %v9993 = vadd.f32 0.0, %v9992
  %9994 = vmatmul.bf16.gmra.mxu0 %v8805
  %v9995 = vpop.f32.mrf.mxu0
  %v9996 = vadd.f32 0.0, %v9995
  %v9997 = vpop.f32.mrf.mxu0
  %v9998 = vadd.f32 0.0, %v9997
  %9999 = vdwg.mxu0
  %10000 = vmatpush.bf16.msra.mxu0 %v3561
  %10001 = vmatpush.bf16.msra.mxu0 %v3558
  %10002 = vmatpush.bf16.msra.mxu0 %v3555
  %10003 = vmatpush.bf16.msra.mxu0 %v3552
  %10004 = vmatpush.bf16.msra.mxu0 %v3549
  %10005 = vmatpush.bf16.msra.mxu0 %v3546
  %10006 = vmatpush.bf16.msra.mxu0 %v3543
  %10007 = vmatpush.bf16.msra.mxu0 %v3540
  %10008 = vmatmul.bf16.gmra.mxu0 %v8803
  %v10009 = vpop.f32.mrf.mxu0
  %v10010 = vadd.f32 %v9991, %v10009
  %v10011 = vpop.f32.mrf.mxu0
  %v10012 = vadd.f32 %v9993, %v10011
  %10013 = vmatmul.bf16.gmra.mxu0 %v8806
  %v10014 = vpop.f32.mrf.mxu0
  %v10015 = vadd.f32 %v9996, %v10014
  %v10016 = vpop.f32.mrf.mxu0
  %v10017 = vadd.f32 %v9998, %v10016
  %10018 = vdwg.mxu0
  %10019 = vmatpush.bf16.msra.mxu0 0
  %10020 = vmatpush.bf16.msra.mxu0 0
  %10021 = vmatpush.bf16.msra.mxu0 0
  %10022 = vmatpush.bf16.msra.mxu0 0
  %10023 = vmatpush.bf16.msra.mxu0 0
  %10024 = vmatpush.bf16.msra.mxu0 0
  %10025 = vmatpush.bf16.msra.mxu0 %v3567
  %10026 = vmatpush.bf16.msra.mxu0 %v3564
  %10027 = vmatmul.bf16.gmra.mxu0 %v8809
  %v10028 = vpop.f32.mrf.mxu0
  %v10029 = vadd.f32 %v10010, %v10028
  %v10030 = vpop.f32.mrf.mxu0
  %v10031 = vadd.f32 %v10012, %v10030
  %10032 = vmatmul.bf16.gmra.mxu0 %v8812
  %v10033 = vpop.f32.mrf.mxu0
  %v10034 = vadd.f32 %v10015, %v10033
  %v10035 = vpop.f32.mrf.mxu0
  %v10036 = vadd.f32 %v10017, %v10035
  %10037 = vdwg.mxu0
  %10038 = vmatpush.bf16.msra.mxu0 %v3538
  %10039 = vmatpush.bf16.msra.mxu0 %v3535
  %10040 = vmatpush.bf16.msra.mxu0 %v3532
  %10041 = vmatpush.bf16.msra.mxu0 %v3529
  %10042 = vmatpush.bf16.msra.mxu0 %v3526
  %10043 = vmatpush.bf16.msra.mxu0 %v3523
  %10044 = vmatpush.bf16.msra.mxu0 %v3520
  %10045 = vmatpush.bf16.msra.mxu0 %v3517
  %10046 = vmatmul.bf16.gmra.mxu0 %v8802
  %v10047 = vpop.f32.mrf.mxu0
  %v10048 = vadd.f32 0.0, %v10047
  %v10049 = vpop.f32.mrf.mxu0
  %v10050 = vadd.f32 0.0, %v10049
  %10051 = vmatmul.bf16.gmra.mxu0 %v8805
  %v10052 = vpop.f32.mrf.mxu0
  %v10053 = vadd.f32 0.0, %v10052
  %v10054 = vpop.f32.mrf.mxu0
  %v10055 = vadd.f32 0.0, %v10054
  %10056 = vdwg.mxu0
  %10057 = vmatpush.bf16.msra.mxu0 %v3562
  %10058 = vmatpush.bf16.msra.mxu0 %v3559
  %10059 = vmatpush.bf16.msra.mxu0 %v3556
  %10060 = vmatpush.bf16.msra.mxu0 %v3553
  %10061 = vmatpush.bf16.msra.mxu0 %v3550
  %10062 = vmatpush.bf16.msra.mxu0 %v3547
  %10063 = vmatpush.bf16.msra.mxu0 %v3544
  %10064 = vmatpush.bf16.msra.mxu0 %v3541
  %10065 = vmatmul.bf16.gmra.mxu0 %v8803
  %v10066 = vpop.f32.mrf.mxu0
  %v10067 = vadd.f32 %v10048, %v10066
  %v10068 = vpop.f32.mrf.mxu0
  %v10069 = vadd.f32 %v10050, %v10068
  %10070 = vmatmul.bf16.gmra.mxu0 %v8806
  %v10071 = vpop.f32.mrf.mxu0
  %v10072 = vadd.f32 %v10053, %v10071
  %v10073 = vpop.f32.mrf.mxu0
  %v10074 = vadd.f32 %v10055, %v10073
  %10075 = vdwg.mxu0
  %10076 = vmatpush.bf16.msra.mxu0 0
  %10077 = vmatpush.bf16.msra.mxu0 0
  %10078 = vmatpush.bf16.msra.mxu0 0
  %10079 = vmatpush.bf16.msra.mxu0 0
  %10080 = vmatpush.bf16.msra.mxu0 0
  %10081 = vmatpush.bf16.msra.mxu0 0
  %10082 = vmatpush.bf16.msra.mxu0 %v3568
  %10083 = vmatpush.bf16.msra.mxu0 %v3565
  %10084 = vmatmul.bf16.gmra.mxu0 %v8809
  %v10085 = vpop.f32.mrf.mxu0
  %v10086 = vadd.f32 %v10067, %v10085
  %v10087 = vpop.f32.mrf.mxu0
  %v10088 = vadd.f32 %v10069, %v10087
  %10089 = vmatmul.bf16.gmra.mxu0 %v8812
  %v10090 = vpop.f32.mrf.mxu0
  %v10091 = vadd.f32 %v10072, %v10090
  %v10092 = vpop.f32.mrf.mxu0
  %v10093 = vadd.f32 %v10074, %v10092
  %10094 = vdwg.mxu0
  %10095 = vmatpush.bf16.msra.mxu0 %v3539
  %10096 = vmatpush.bf16.msra.mxu0 %v3536
  %10097 = vmatpush.bf16.msra.mxu0 %v3533
  %10098 = vmatpush.bf16.msra.mxu0 %v3530
  %10099 = vmatpush.bf16.msra.mxu0 %v3527
  %10100 = vmatpush.bf16.msra.mxu0 %v3524
  %10101 = vmatpush.bf16.msra.mxu0 %v3521
  %10102 = vmatpush.bf16.msra.mxu0 %v3518
  %10103 = vmatmul.bf16.gmra.mxu0 %v8802
  %v10104 = vpop.f32.mrf.mxu0
  %v10105 = vadd.f32 0.0, %v10104
  %v10106 = vpop.f32.mrf.mxu0
  %v10107 = vadd.f32 0.0, %v10106
  %10108 = vmatmul.bf16.gmra.mxu0 %v8805
  %v10109 = vpop.f32.mrf.mxu0
  %v10110 = vadd.f32 0.0, %v10109
  %v10111 = vpop.f32.mrf.mxu0
  %v10112 = vadd.f32 0.0, %v10111
  %10113 = vdwg.mxu0
  %10114 = vmatpush.bf16.msra.mxu0 %v3563
  %10115 = vmatpush.bf16.msra.mxu0 %v3560
  %10116 = vmatpush.bf16.msra.mxu0 %v3557
  %10117 = vmatpush.bf16.msra.mxu0 %v3554
  %10118 = vmatpush.bf16.msra.mxu0 %v3551
  %10119 = vmatpush.bf16.msra.mxu0 %v3548
  %10120 = vmatpush.bf16.msra.mxu0 %v3545
  %10121 = vmatpush.bf16.msra.mxu0 %v3542
  %10122 = vmatmul.bf16.gmra.mxu0 %v8803
  %v10123 = vpop.f32.mrf.mxu0
  %v10124 = vadd.f32 %v10105, %v10123
  %v10125 = vpop.f32.mrf.mxu0
  %v10126 = vadd.f32 %v10107, %v10125
  %10127 = vmatmul.bf16.gmra.mxu0 %v8806
  %v10128 = vpop.f32.mrf.mxu0
  %v10129 = vadd.f32 %v10110, %v10128
  %v10130 = vpop.f32.mrf.mxu0
  %v10131 = vadd.f32 %v10112, %v10130
  %10132 = vdwg.mxu0
  %10133 = vmatpush.bf16.msra.mxu0 0
  %10134 = vmatpush.bf16.msra.mxu0 0
  %10135 = vmatpush.bf16.msra.mxu0 0
  %10136 = vmatpush.bf16.msra.mxu0 0
  %10137 = vmatpush.bf16.msra.mxu0 0
  %10138 = vmatpush.bf16.msra.mxu0 0
  %10139 = vmatpush.bf16.msra.mxu0 %v3569
  %10140 = vmatpush.bf16.msra.mxu0 %v3566
  %10141 = vmatmul.bf16.gmra.mxu0 %v8809
  %v10142 = vpop.f32.mrf.mxu0
  %v10143 = vadd.f32 %v10124, %v10142
  %v10144 = vpop.f32.mrf.mxu0
  %v10145 = vadd.f32 %v10126, %v10144
  %10146 = vmatmul.bf16.gmra.mxu0 %v8812
  %v10147 = vpop.f32.mrf.mxu0
  %v10148 = vadd.f32 %v10129, %v10147
  %v10149 = vpop.f32.mrf.mxu0
  %v10150 = vadd.f32 %v10131, %v10149
  %10151 = vdwg.mxu0
  %v10152 = vpack.c.bf16 %v10031, %v10029
  %v10153 = vpack.c.bf16 %v10088, %v10086
  %v10154 = vpack.c.bf16 %v10145, %v10143
  %v10155 = vpack.c.bf16 %v10036, %v10034
  %v10156 = vpack.c.bf16 %v10093, %v10091
  %v10157 = vpack.c.bf16 %v10150, %v10148
  %s10158 = scalar_lea.vmem %s10, 40
  %v10159 = vld [vmem:[%s10158] sm:$0xf]
  %v10160 = vld [vmem:[%s10158 + $0x4] sm:$0xf]
  %v10163 = vunpack.c.l.b16 %v10159
  %v10164 = vunpack.c.l.b16 %v10160
  %v10165 = vpack.c.b16 %v10164, %v10163
  %v10167 = vsel %vm1305, %v10165, 0
  %10169 = vmatpush.bf16.msra.mxu0 0
  %10170 = vmatpush.bf16.msra.mxu0 0
  %10171 = vmatpush.bf16.msra.mxu0 0
  %10172 = vmatpush.bf16.msra.mxu0 0
  %10173 = vmatpush.bf16.msra.mxu0 0
  %10174 = vmatpush.bf16.msra.mxu0 0
  %10175 = vmatpush.bf16.msra.mxu0 %v10155
  %10176 = vmatpush.bf16.msra.mxu0 %v10152
  %10177 = vmatmul.bf16.gmra.mxu0 %v10167
  %v10178 = vpop.f32.mrf.mxu0
  %v10179 = vadd.f32 0.0, %v10178
  %v10180 = vpop.f32.mrf.mxu0
  %v10181 = vadd.f32 0.0, %v10180
  %10182 = vdwg.mxu0
  %10183 = vmatpush.bf16.msra.mxu0 0
  %10184 = vmatpush.bf16.msra.mxu0 0
  %10185 = vmatpush.bf16.msra.mxu0 0
  %10186 = vmatpush.bf16.msra.mxu0 0
  %10187 = vmatpush.bf16.msra.mxu0 0
  %10188 = vmatpush.bf16.msra.mxu0 0
  %10189 = vmatpush.bf16.msra.mxu0 %v10156
  %10190 = vmatpush.bf16.msra.mxu0 %v10153
  %10191 = vmatmul.bf16.gmra.mxu0 %v10167
  %v10192 = vpop.f32.mrf.mxu0
  %v10193 = vadd.f32 0.0, %v10192
  %v10194 = vpop.f32.mrf.mxu0
  %v10195 = vadd.f32 0.0, %v10194
  %10196 = vdwg.mxu0
  %10197 = vmatpush.bf16.msra.mxu0 0
  %10198 = vmatpush.bf16.msra.mxu0 0
  %10199 = vmatpush.bf16.msra.mxu0 0
  %10200 = vmatpush.bf16.msra.mxu0 0
  %10201 = vmatpush.bf16.msra.mxu0 0
  %10202 = vmatpush.bf16.msra.mxu0 0
  %10203 = vmatpush.bf16.msra.mxu0 %v10157
  %10204 = vmatpush.bf16.msra.mxu0 %v10154
  %10205 = vmatmul.bf16.gmra.mxu0 %v10167
  %v10206 = vpop.f32.mrf.mxu0
  %v10207 = vadd.f32 0.0, %v10206
  %v10208 = vpop.f32.mrf.mxu0
  %v10209 = vadd.f32 0.0, %v10208
  %10210 = vdwg.mxu0
  %v10211 = vadd.f32 %v9975, %v10179
  %v10212 = vadd.f32 %v9976, %v10193
  %v10213 = vadd.f32 %v9977, %v10207
  %v10214 = vadd.f32 %v9978, %v10181
  %v10215 = vadd.f32 %v9979, %v10195
  %v10216 = vadd.f32 %v9980, %v10209
  %10217 = vmatpush.bf16.msra.mxu0 %v4001
  %10218 = vmatpush.bf16.msra.mxu0 %v3998
  %10219 = vmatpush.bf16.msra.mxu0 %v3995
  %10220 = vmatpush.bf16.msra.mxu0 %v3992
  %10221 = vmatpush.bf16.msra.mxu0 %v3989
  %10222 = vmatpush.bf16.msra.mxu0 %v3986
  %10223 = vmatpush.bf16.msra.mxu0 %v3983
  %10224 = vmatpush.bf16.msra.mxu0 %v3980
  %10225 = vmatmul.bf16.gmra.mxu0 %v8802
  %v10226 = vpop.f32.mrf.mxu0
  %v10227 = vadd.f32 0.0, %v10226
  %v10228 = vpop.f32.mrf.mxu0
  %v10229 = vadd.f32 0.0, %v10228
  %10230 = vmatmul.bf16.gmra.mxu0 %v8805
  %v10231 = vpop.f32.mrf.mxu0
  %v10232 = vadd.f32 0.0, %v10231
  %v10233 = vpop.f32.mrf.mxu0
  %v10234 = vadd.f32 0.0, %v10233
  %10235 = vdwg.mxu0
  %10236 = vmatpush.bf16.msra.mxu0 %v4025
  %10237 = vmatpush.bf16.msra.mxu0 %v4022
  %10238 = vmatpush.bf16.msra.mxu0 %v4019
  %10239 = vmatpush.bf16.msra.mxu0 %v4016
  %10240 = vmatpush.bf16.msra.mxu0 %v4013
  %10241 = vmatpush.bf16.msra.mxu0 %v4010
  %10242 = vmatpush.bf16.msra.mxu0 %v4007
  %10243 = vmatpush.bf16.msra.mxu0 %v4004
  %10244 = vmatmul.bf16.gmra.mxu0 %v8803
  %v10245 = vpop.f32.mrf.mxu0
  %v10246 = vadd.f32 %v10227, %v10245
  %v10247 = vpop.f32.mrf.mxu0
  %v10248 = vadd.f32 %v10229, %v10247
  %10249 = vmatmul.bf16.gmra.mxu0 %v8806
  %v10250 = vpop.f32.mrf.mxu0
  %v10251 = vadd.f32 %v10232, %v10250
  %v10252 = vpop.f32.mrf.mxu0
  %v10253 = vadd.f32 %v10234, %v10252
  %10254 = vdwg.mxu0
  %10255 = vmatpush.bf16.msra.mxu0 0
  %10256 = vmatpush.bf16.msra.mxu0 0
  %10257 = vmatpush.bf16.msra.mxu0 0
  %10258 = vmatpush.bf16.msra.mxu0 0
  %10259 = vmatpush.bf16.msra.mxu0 0
  %10260 = vmatpush.bf16.msra.mxu0 0
  %10261 = vmatpush.bf16.msra.mxu0 %v4031
  %10262 = vmatpush.bf16.msra.mxu0 %v4028
  %10263 = vmatmul.bf16.gmra.mxu0 %v8809
  %v10264 = vpop.f32.mrf.mxu0
  %v10265 = vadd.f32 %v10246, %v10264
  %v10266 = vpop.f32.mrf.mxu0
  %v10267 = vadd.f32 %v10248, %v10266
  %10268 = vmatmul.bf16.gmra.mxu0 %v8812
  %v10269 = vpop.f32.mrf.mxu0
  %v10270 = vadd.f32 %v10251, %v10269
  %v10271 = vpop.f32.mrf.mxu0
  %v10272 = vadd.f32 %v10253, %v10271
  %10273 = vdwg.mxu0
  %10274 = vmatpush.bf16.msra.mxu0 %v4002
  %10275 = vmatpush.bf16.msra.mxu0 %v3999
  %10276 = vmatpush.bf16.msra.mxu0 %v3996
  %10277 = vmatpush.bf16.msra.mxu0 %v3993
  %10278 = vmatpush.bf16.msra.mxu0 %v3990
  %10279 = vmatpush.bf16.msra.mxu0 %v3987
  %10280 = vmatpush.bf16.msra.mxu0 %v3984
  %10281 = vmatpush.bf16.msra.mxu0 %v3981
  %10282 = vmatmul.bf16.gmra.mxu0 %v8802
  %v10283 = vpop.f32.mrf.mxu0
  %v10284 = vadd.f32 0.0, %v10283
  %v10285 = vpop.f32.mrf.mxu0
  %v10286 = vadd.f32 0.0, %v10285
  %10287 = vmatmul.bf16.gmra.mxu0 %v8805
  %v10288 = vpop.f32.mrf.mxu0
  %v10289 = vadd.f32 0.0, %v10288
  %v10290 = vpop.f32.mrf.mxu0
  %v10291 = vadd.f32 0.0, %v10290
  %10292 = vdwg.mxu0
  %10293 = vmatpush.bf16.msra.mxu0 %v4026
  %10294 = vmatpush.bf16.msra.mxu0 %v4023
  %10295 = vmatpush.bf16.msra.mxu0 %v4020
  %10296 = vmatpush.bf16.msra.mxu0 %v4017
  %10297 = vmatpush.bf16.msra.mxu0 %v4014
  %10298 = vmatpush.bf16.msra.mxu0 %v4011
  %10299 = vmatpush.bf16.msra.mxu0 %v4008
  %10300 = vmatpush.bf16.msra.mxu0 %v4005
  %10301 = vmatmul.bf16.gmra.mxu0 %v8803
  %v10302 = vpop.f32.mrf.mxu0
  %v10303 = vadd.f32 %v10284, %v10302
  %v10304 = vpop.f32.mrf.mxu0
  %v10305 = vadd.f32 %v10286, %v10304
  %10306 = vmatmul.bf16.gmra.mxu0 %v8806
  %v10307 = vpop.f32.mrf.mxu0
  %v10308 = vadd.f32 %v10289, %v10307
  %v10309 = vpop.f32.mrf.mxu0
  %v10310 = vadd.f32 %v10291, %v10309
  %10311 = vdwg.mxu0
  %10312 = vmatpush.bf16.msra.mxu0 0
  %10313 = vmatpush.bf16.msra.mxu0 0
  %10314 = vmatpush.bf16.msra.mxu0 0
  %10315 = vmatpush.bf16.msra.mxu0 0
  %10316 = vmatpush.bf16.msra.mxu0 0
  %10317 = vmatpush.bf16.msra.mxu0 0
  %10318 = vmatpush.bf16.msra.mxu0 %v4032
  %10319 = vmatpush.bf16.msra.mxu0 %v4029
  %10320 = vmatmul.bf16.gmra.mxu0 %v8809
  %v10321 = vpop.f32.mrf.mxu0
  %v10322 = vadd.f32 %v10303, %v10321
  %v10323 = vpop.f32.mrf.mxu0
  %v10324 = vadd.f32 %v10305, %v10323
  %10325 = vmatmul.bf16.gmra.mxu0 %v8812
  %v10326 = vpop.f32.mrf.mxu0
  %v10327 = vadd.f32 %v10308, %v10326
  %v10328 = vpop.f32.mrf.mxu0
  %v10329 = vadd.f32 %v10310, %v10328
  %10330 = vdwg.mxu0
  %10331 = vmatpush.bf16.msra.mxu0 %v4003
  %10332 = vmatpush.bf16.msra.mxu0 %v4000
  %10333 = vmatpush.bf16.msra.mxu0 %v3997
  %10334 = vmatpush.bf16.msra.mxu0 %v3994
  %10335 = vmatpush.bf16.msra.mxu0 %v3991
  %10336 = vmatpush.bf16.msra.mxu0 %v3988
  %10337 = vmatpush.bf16.msra.mxu0 %v3985
  %10338 = vmatpush.bf16.msra.mxu0 %v3982
  %10339 = vmatmul.bf16.gmra.mxu0 %v8802
  %v10340 = vpop.f32.mrf.mxu0
  %v10341 = vadd.f32 0.0, %v10340
  %v10342 = vpop.f32.mrf.mxu0
  %v10343 = vadd.f32 0.0, %v10342
  %10344 = vmatmul.bf16.gmra.mxu0 %v8805
  %v10345 = vpop.f32.mrf.mxu0
  %v10346 = vadd.f32 0.0, %v10345
  %v10347 = vpop.f32.mrf.mxu0
  %v10348 = vadd.f32 0.0, %v10347
  %10349 = vdwg.mxu0
  %10350 = vmatpush.bf16.msra.mxu0 %v4027
  %10351 = vmatpush.bf16.msra.mxu0 %v4024
  %10352 = vmatpush.bf16.msra.mxu0 %v4021
  %10353 = vmatpush.bf16.msra.mxu0 %v4018
  %10354 = vmatpush.bf16.msra.mxu0 %v4015
  %10355 = vmatpush.bf16.msra.mxu0 %v4012
  %10356 = vmatpush.bf16.msra.mxu0 %v4009
  %10357 = vmatpush.bf16.msra.mxu0 %v4006
  %10358 = vmatmul.bf16.gmra.mxu0 %v8803
  %v10359 = vpop.f32.mrf.mxu0
  %v10360 = vadd.f32 %v10341, %v10359
  %v10361 = vpop.f32.mrf.mxu0
  %v10362 = vadd.f32 %v10343, %v10361
  %10363 = vmatmul.bf16.gmra.mxu0 %v8806
  %v10364 = vpop.f32.mrf.mxu0
  %v10365 = vadd.f32 %v10346, %v10364
  %v10366 = vpop.f32.mrf.mxu0
  %v10367 = vadd.f32 %v10348, %v10366
  %10368 = vdwg.mxu0
  %10369 = vmatpush.bf16.msra.mxu0 0
  %10370 = vmatpush.bf16.msra.mxu0 0
  %10371 = vmatpush.bf16.msra.mxu0 0
  %10372 = vmatpush.bf16.msra.mxu0 0
  %10373 = vmatpush.bf16.msra.mxu0 0
  %10374 = vmatpush.bf16.msra.mxu0 0
  %10375 = vmatpush.bf16.msra.mxu0 %v4033
  %10376 = vmatpush.bf16.msra.mxu0 %v4030
  %10377 = vmatmul.bf16.gmra.mxu0 %v8809
  %v10378 = vpop.f32.mrf.mxu0
  %v10379 = vadd.f32 %v10360, %v10378
  %v10380 = vpop.f32.mrf.mxu0
  %v10381 = vadd.f32 %v10362, %v10380
  %10382 = vmatmul.bf16.gmra.mxu0 %v8812
  %v10383 = vpop.f32.mrf.mxu0
  %v10384 = vadd.f32 %v10365, %v10383
  %v10385 = vpop.f32.mrf.mxu0
  %v10386 = vadd.f32 %v10367, %v10385
  %10387 = vdwg.mxu0
  %v10388 = vpack.c.bf16 %v10267, %v10265
  %v10389 = vpack.c.bf16 %v10324, %v10322
  %v10390 = vpack.c.bf16 %v10381, %v10379
  %v10391 = vpack.c.bf16 %v10272, %v10270
  %v10392 = vpack.c.bf16 %v10329, %v10327
  %v10393 = vpack.c.bf16 %v10386, %v10384
  %s10394 = scalar_lea.vmem %s10, 48
  %v10395 = vld [vmem:[%s10394] sm:$0xf]
  %v10396 = vld [vmem:[%s10394 + $0x4] sm:$0xf]
  %v10399 = vunpack.c.l.b16 %v10395
  %v10400 = vunpack.c.l.b16 %v10396
  %v10401 = vpack.c.b16 %v10400, %v10399
  %v10403 = vsel %vm1305, %v10401, 0
  %10405 = vmatpush.bf16.msra.mxu0 0
  %10406 = vmatpush.bf16.msra.mxu0 0
  %10407 = vmatpush.bf16.msra.mxu0 0
  %10408 = vmatpush.bf16.msra.mxu0 0
  %10409 = vmatpush.bf16.msra.mxu0 0
  %10410 = vmatpush.bf16.msra.mxu0 0
  %10411 = vmatpush.bf16.msra.mxu0 %v10391
  %10412 = vmatpush.bf16.msra.mxu0 %v10388
  %10413 = vmatmul.bf16.gmra.mxu0 %v10403
  %v10414 = vpop.f32.mrf.mxu0
  %v10415 = vadd.f32 0.0, %v10414
  %v10416 = vpop.f32.mrf.mxu0
  %v10417 = vadd.f32 0.0, %v10416
  %10418 = vdwg.mxu0
  %10419 = vmatpush.bf16.msra.mxu0 0
  %10420 = vmatpush.bf16.msra.mxu0 0
  %10421 = vmatpush.bf16.msra.mxu0 0
  %10422 = vmatpush.bf16.msra.mxu0 0
  %10423 = vmatpush.bf16.msra.mxu0 0
  %10424 = vmatpush.bf16.msra.mxu0 0
  %10425 = vmatpush.bf16.msra.mxu0 %v10392
  %10426 = vmatpush.bf16.msra.mxu0 %v10389
  %10427 = vmatmul.bf16.gmra.mxu0 %v10403
  %v10428 = vpop.f32.mrf.mxu0
  %v10429 = vadd.f32 0.0, %v10428
  %v10430 = vpop.f32.mrf.mxu0
  %v10431 = vadd.f32 0.0, %v10430
  %10432 = vdwg.mxu0
  %10433 = vmatpush.bf16.msra.mxu0 0
  %10434 = vmatpush.bf16.msra.mxu0 0
  %10435 = vmatpush.bf16.msra.mxu0 0
  %10436 = vmatpush.bf16.msra.mxu0 0
  %10437 = vmatpush.bf16.msra.mxu0 0
  %10438 = vmatpush.bf16.msra.mxu0 0
  %10439 = vmatpush.bf16.msra.mxu0 %v10393
  %10440 = vmatpush.bf16.msra.mxu0 %v10390
  %10441 = vmatmul.bf16.gmra.mxu0 %v10403
  %v10442 = vpop.f32.mrf.mxu0
  %v10443 = vadd.f32 0.0, %v10442
  %v10444 = vpop.f32.mrf.mxu0
  %v10445 = vadd.f32 0.0, %v10444
  %10446 = vdwg.mxu0
  %v10447 = vadd.f32 %v10211, %v10415
  %v10448 = vadd.f32 %v10212, %v10429
  %v10449 = vadd.f32 %v10213, %v10443
  %v10450 = vadd.f32 %v10214, %v10417
  %v10451 = vadd.f32 %v10215, %v10431
  %v10452 = vadd.f32 %v10216, %v10445
  %10453 = vmatpush.bf16.msra.mxu0 %v4465
  %10454 = vmatpush.bf16.msra.mxu0 %v4462
  %10455 = vmatpush.bf16.msra.mxu0 %v4459
  %10456 = vmatpush.bf16.msra.mxu0 %v4456
  %10457 = vmatpush.bf16.msra.mxu0 %v4453
  %10458 = vmatpush.bf16.msra.mxu0 %v4450
  %10459 = vmatpush.bf16.msra.mxu0 %v4447
  %10460 = vmatpush.bf16.msra.mxu0 %v4444
  %10461 = vmatmul.bf16.gmra.mxu0 %v8802
  %v10462 = vpop.f32.mrf.mxu0
  %v10463 = vadd.f32 0.0, %v10462
  %v10464 = vpop.f32.mrf.mxu0
  %v10465 = vadd.f32 0.0, %v10464
  %10466 = vmatmul.bf16.gmra.mxu0 %v8805
  %v10467 = vpop.f32.mrf.mxu0
  %v10468 = vadd.f32 0.0, %v10467
  %v10469 = vpop.f32.mrf.mxu0
  %v10470 = vadd.f32 0.0, %v10469
  %10471 = vdwg.mxu0
  %10472 = vmatpush.bf16.msra.mxu0 %v4489
  %10473 = vmatpush.bf16.msra.mxu0 %v4486
  %10474 = vmatpush.bf16.msra.mxu0 %v4483
  %10475 = vmatpush.bf16.msra.mxu0 %v4480
  %10476 = vmatpush.bf16.msra.mxu0 %v4477
  %10477 = vmatpush.bf16.msra.mxu0 %v4474
  %10478 = vmatpush.bf16.msra.mxu0 %v4471
  %10479 = vmatpush.bf16.msra.mxu0 %v4468
  %10480 = vmatmul.bf16.gmra.mxu0 %v8803
  %v10481 = vpop.f32.mrf.mxu0
  %v10482 = vadd.f32 %v10463, %v10481
  %v10483 = vpop.f32.mrf.mxu0
  %v10484 = vadd.f32 %v10465, %v10483
  %10485 = vmatmul.bf16.gmra.mxu0 %v8806
  %v10486 = vpop.f32.mrf.mxu0
  %v10487 = vadd.f32 %v10468, %v10486
  %v10488 = vpop.f32.mrf.mxu0
  %v10489 = vadd.f32 %v10470, %v10488
  %10490 = vdwg.mxu0
  %10491 = vmatpush.bf16.msra.mxu0 0
  %10492 = vmatpush.bf16.msra.mxu0 0
  %10493 = vmatpush.bf16.msra.mxu0 0
  %10494 = vmatpush.bf16.msra.mxu0 0
  %10495 = vmatpush.bf16.msra.mxu0 0
  %10496 = vmatpush.bf16.msra.mxu0 0
  %10497 = vmatpush.bf16.msra.mxu0 %v4495
  %10498 = vmatpush.bf16.msra.mxu0 %v4492
  %10499 = vmatmul.bf16.gmra.mxu0 %v8809
  %v10500 = vpop.f32.mrf.mxu0
  %v10501 = vadd.f32 %v10482, %v10500
  %v10502 = vpop.f32.mrf.mxu0
  %v10503 = vadd.f32 %v10484, %v10502
  %10504 = vmatmul.bf16.gmra.mxu0 %v8812
  %v10505 = vpop.f32.mrf.mxu0
  %v10506 = vadd.f32 %v10487, %v10505
  %v10507 = vpop.f32.mrf.mxu0
  %v10508 = vadd.f32 %v10489, %v10507
  %10509 = vdwg.mxu0
  %10510 = vmatpush.bf16.msra.mxu0 %v4466
  %10511 = vmatpush.bf16.msra.mxu0 %v4463
  %10512 = vmatpush.bf16.msra.mxu0 %v4460
  %10513 = vmatpush.bf16.msra.mxu0 %v4457
  %10514 = vmatpush.bf16.msra.mxu0 %v4454
  %10515 = vmatpush.bf16.msra.mxu0 %v4451
  %10516 = vmatpush.bf16.msra.mxu0 %v4448
  %10517 = vmatpush.bf16.msra.mxu0 %v4445
  %10518 = vmatmul.bf16.gmra.mxu0 %v8802
  %v10519 = vpop.f32.mrf.mxu0
  %v10520 = vadd.f32 0.0, %v10519
  %v10521 = vpop.f32.mrf.mxu0
  %v10522 = vadd.f32 0.0, %v10521
  %10523 = vmatmul.bf16.gmra.mxu0 %v8805
  %v10524 = vpop.f32.mrf.mxu0
  %v10525 = vadd.f32 0.0, %v10524
  %v10526 = vpop.f32.mrf.mxu0
  %v10527 = vadd.f32 0.0, %v10526
  %10528 = vdwg.mxu0
  %10529 = vmatpush.bf16.msra.mxu0 %v4490
  %10530 = vmatpush.bf16.msra.mxu0 %v4487
  %10531 = vmatpush.bf16.msra.mxu0 %v4484
  %10532 = vmatpush.bf16.msra.mxu0 %v4481
  %10533 = vmatpush.bf16.msra.mxu0 %v4478
  %10534 = vmatpush.bf16.msra.mxu0 %v4475
  %10535 = vmatpush.bf16.msra.mxu0 %v4472
  %10536 = vmatpush.bf16.msra.mxu0 %v4469
  %10537 = vmatmul.bf16.gmra.mxu0 %v8803
  %v10538 = vpop.f32.mrf.mxu0
  %v10539 = vadd.f32 %v10520, %v10538
  %v10540 = vpop.f32.mrf.mxu0
  %v10541 = vadd.f32 %v10522, %v10540
  %10542 = vmatmul.bf16.gmra.mxu0 %v8806
  %v10543 = vpop.f32.mrf.mxu0
  %v10544 = vadd.f32 %v10525, %v10543
  %v10545 = vpop.f32.mrf.mxu0
  %v10546 = vadd.f32 %v10527, %v10545
  %10547 = vdwg.mxu0
  %10548 = vmatpush.bf16.msra.mxu0 0
  %10549 = vmatpush.bf16.msra.mxu0 0
  %10550 = vmatpush.bf16.msra.mxu0 0
  %10551 = vmatpush.bf16.msra.mxu0 0
  %10552 = vmatpush.bf16.msra.mxu0 0
  %10553 = vmatpush.bf16.msra.mxu0 0
  %10554 = vmatpush.bf16.msra.mxu0 %v4496
  %10555 = vmatpush.bf16.msra.mxu0 %v4493
  %10556 = vmatmul.bf16.gmra.mxu0 %v8809
  %v10557 = vpop.f32.mrf.mxu0
  %v10558 = vadd.f32 %v10539, %v10557
  %v10559 = vpop.f32.mrf.mxu0
  %v10560 = vadd.f32 %v10541, %v10559
  %10561 = vmatmul.bf16.gmra.mxu0 %v8812
  %v10562 = vpop.f32.mrf.mxu0
  %v10563 = vadd.f32 %v10544, %v10562
  %v10564 = vpop.f32.mrf.mxu0
  %v10565 = vadd.f32 %v10546, %v10564
  %10566 = vdwg.mxu0
  %10567 = vmatpush.bf16.msra.mxu0 %v4467
  %10568 = vmatpush.bf16.msra.mxu0 %v4464
  %10569 = vmatpush.bf16.msra.mxu0 %v4461
  %10570 = vmatpush.bf16.msra.mxu0 %v4458
  %10571 = vmatpush.bf16.msra.mxu0 %v4455
  %10572 = vmatpush.bf16.msra.mxu0 %v4452
  %10573 = vmatpush.bf16.msra.mxu0 %v4449
  %10574 = vmatpush.bf16.msra.mxu0 %v4446
  %10575 = vmatmul.bf16.gmra.mxu0 %v8802
  %v10576 = vpop.f32.mrf.mxu0
  %v10577 = vadd.f32 0.0, %v10576
  %v10578 = vpop.f32.mrf.mxu0
  %v10579 = vadd.f32 0.0, %v10578
  %10580 = vmatmul.bf16.gmra.mxu0 %v8805
  %v10581 = vpop.f32.mrf.mxu0
  %v10582 = vadd.f32 0.0, %v10581
  %v10583 = vpop.f32.mrf.mxu0
  %v10584 = vadd.f32 0.0, %v10583
  %10585 = vdwg.mxu0
  %10586 = vmatpush.bf16.msra.mxu0 %v4491
  %10587 = vmatpush.bf16.msra.mxu0 %v4488
  %10588 = vmatpush.bf16.msra.mxu0 %v4485
  %10589 = vmatpush.bf16.msra.mxu0 %v4482
  %10590 = vmatpush.bf16.msra.mxu0 %v4479
  %10591 = vmatpush.bf16.msra.mxu0 %v4476
  %10592 = vmatpush.bf16.msra.mxu0 %v4473
  %10593 = vmatpush.bf16.msra.mxu0 %v4470
  %10594 = vmatmul.bf16.gmra.mxu0 %v8803
  %v10595 = vpop.f32.mrf.mxu0
  %v10596 = vadd.f32 %v10577, %v10595
  %v10597 = vpop.f32.mrf.mxu0
  %v10598 = vadd.f32 %v10579, %v10597
  %10599 = vmatmul.bf16.gmra.mxu0 %v8806
  %v10600 = vpop.f32.mrf.mxu0
  %v10601 = vadd.f32 %v10582, %v10600
  %v10602 = vpop.f32.mrf.mxu0
  %v10603 = vadd.f32 %v10584, %v10602
  %10604 = vdwg.mxu0
  %10605 = vmatpush.bf16.msra.mxu0 0
  %10606 = vmatpush.bf16.msra.mxu0 0
  %10607 = vmatpush.bf16.msra.mxu0 0
  %10608 = vmatpush.bf16.msra.mxu0 0
  %10609 = vmatpush.bf16.msra.mxu0 0
  %10610 = vmatpush.bf16.msra.mxu0 0
  %10611 = vmatpush.bf16.msra.mxu0 %v4497
  %10612 = vmatpush.bf16.msra.mxu0 %v4494
  %10613 = vmatmul.bf16.gmra.mxu0 %v8809
  %v10614 = vpop.f32.mrf.mxu0
  %v10615 = vadd.f32 %v10596, %v10614
  %v10616 = vpop.f32.mrf.mxu0
  %v10617 = vadd.f32 %v10598, %v10616
  %10618 = vmatmul.bf16.gmra.mxu0 %v8812
  %v10619 = vpop.f32.mrf.mxu0
  %v10620 = vadd.f32 %v10601, %v10619
  %v10621 = vpop.f32.mrf.mxu0
  %v10622 = vadd.f32 %v10603, %v10621
  %10623 = vdwg.mxu0
  %v10624 = vpack.c.bf16 %v10503, %v10501
  %v10625 = vpack.c.bf16 %v10560, %v10558
  %v10626 = vpack.c.bf16 %v10617, %v10615
  %v10627 = vpack.c.bf16 %v10508, %v10506
  %v10628 = vpack.c.bf16 %v10565, %v10563
  %v10629 = vpack.c.bf16 %v10622, %v10620
  %s10630 = scalar_lea.vmem %s10, 56
  %v10631 = vld [vmem:[%s10630] sm:$0xf]
  %v10632 = vld [vmem:[%s10630 + $0x4] sm:$0xf]
  %v10635 = vunpack.c.l.b16 %v10631
  %v10636 = vunpack.c.l.b16 %v10632
  %v10637 = vpack.c.b16 %v10636, %v10635
  %v10639 = vsel %vm1305, %v10637, 0
  %10641 = vmatpush.bf16.msra.mxu0 0
  %10642 = vmatpush.bf16.msra.mxu0 0
  %10643 = vmatpush.bf16.msra.mxu0 0
  %10644 = vmatpush.bf16.msra.mxu0 0
  %10645 = vmatpush.bf16.msra.mxu0 0
  %10646 = vmatpush.bf16.msra.mxu0 0
  %10647 = vmatpush.bf16.msra.mxu0 %v10627
  %10648 = vmatpush.bf16.msra.mxu0 %v10624
  %10649 = vmatmul.bf16.gmra.mxu0 %v10639
  %v10650 = vpop.f32.mrf.mxu0
  %v10651 = vadd.f32 0.0, %v10650
  %v10652 = vpop.f32.mrf.mxu0
  %v10653 = vadd.f32 0.0, %v10652
  %10654 = vdwg.mxu0
  %10655 = vmatpush.bf16.msra.mxu0 0
  %10656 = vmatpush.bf16.msra.mxu0 0
  %10657 = vmatpush.bf16.msra.mxu0 0
  %10658 = vmatpush.bf16.msra.mxu0 0
  %10659 = vmatpush.bf16.msra.mxu0 0
  %10660 = vmatpush.bf16.msra.mxu0 0
  %10661 = vmatpush.bf16.msra.mxu0 %v10628
  %10662 = vmatpush.bf16.msra.mxu0 %v10625
  %10663 = vmatmul.bf16.gmra.mxu0 %v10639
  %v10664 = vpop.f32.mrf.mxu0
  %v10665 = vadd.f32 0.0, %v10664
  %v10666 = vpop.f32.mrf.mxu0
  %v10667 = vadd.f32 0.0, %v10666
  %10668 = vdwg.mxu0
  %10669 = vmatpush.bf16.msra.mxu0 0
  %10670 = vmatpush.bf16.msra.mxu0 0
  %10671 = vmatpush.bf16.msra.mxu0 0
  %10672 = vmatpush.bf16.msra.mxu0 0
  %10673 = vmatpush.bf16.msra.mxu0 0
  %10674 = vmatpush.bf16.msra.mxu0 0
  %10675 = vmatpush.bf16.msra.mxu0 %v10629
  %10676 = vmatpush.bf16.msra.mxu0 %v10626
  %10677 = vmatmul.bf16.gmra.mxu0 %v10639
  %v10678 = vpop.f32.mrf.mxu0
  %v10679 = vadd.f32 0.0, %v10678
  %v10680 = vpop.f32.mrf.mxu0
  %v10681 = vadd.f32 0.0, %v10680
  %10682 = vdwg.mxu0
  %v10683 = vadd.f32 %v10447, %v10651
  %v10684 = vadd.f32 %v10448, %v10665
  %v10685 = vadd.f32 %v10449, %v10679
  %v10686 = vadd.f32 %v10450, %v10653
  %v10687 = vadd.f32 %v10451, %v10667
  %v10688 = vadd.f32 %v10452, %v10681
  %10689 = vmatpush.bf16.msra.mxu0 %v4929
  %10690 = vmatpush.bf16.msra.mxu0 %v4926
  %10691 = vmatpush.bf16.msra.mxu0 %v4923
  %10692 = vmatpush.bf16.msra.mxu0 %v4920
  %10693 = vmatpush.bf16.msra.mxu0 %v4917
  %10694 = vmatpush.bf16.msra.mxu0 %v4914
  %10695 = vmatpush.bf16.msra.mxu0 %v4911
  %10696 = vmatpush.bf16.msra.mxu0 %v4908
  %10697 = vmatmul.bf16.gmra.mxu0 %v8802
  %v10698 = vpop.f32.mrf.mxu0
  %v10699 = vadd.f32 0.0, %v10698
  %v10700 = vpop.f32.mrf.mxu0
  %v10701 = vadd.f32 0.0, %v10700
  %10702 = vmatmul.bf16.gmra.mxu0 %v8805
  %v10703 = vpop.f32.mrf.mxu0
  %v10704 = vadd.f32 0.0, %v10703
  %v10705 = vpop.f32.mrf.mxu0
  %v10706 = vadd.f32 0.0, %v10705
  %10707 = vdwg.mxu0
  %10708 = vmatpush.bf16.msra.mxu0 %v4953
  %10709 = vmatpush.bf16.msra.mxu0 %v4950
  %10710 = vmatpush.bf16.msra.mxu0 %v4947
  %10711 = vmatpush.bf16.msra.mxu0 %v4944
  %10712 = vmatpush.bf16.msra.mxu0 %v4941
  %10713 = vmatpush.bf16.msra.mxu0 %v4938
  %10714 = vmatpush.bf16.msra.mxu0 %v4935
  %10715 = vmatpush.bf16.msra.mxu0 %v4932
  %10716 = vmatmul.bf16.gmra.mxu0 %v8803
  %v10717 = vpop.f32.mrf.mxu0
  %v10718 = vadd.f32 %v10699, %v10717
  %v10719 = vpop.f32.mrf.mxu0
  %v10720 = vadd.f32 %v10701, %v10719
  %10721 = vmatmul.bf16.gmra.mxu0 %v8806
  %v10722 = vpop.f32.mrf.mxu0
  %v10723 = vadd.f32 %v10704, %v10722
  %v10724 = vpop.f32.mrf.mxu0
  %v10725 = vadd.f32 %v10706, %v10724
  %10726 = vdwg.mxu0
  %10727 = vmatpush.bf16.msra.mxu0 0
  %10728 = vmatpush.bf16.msra.mxu0 0
  %10729 = vmatpush.bf16.msra.mxu0 0
  %10730 = vmatpush.bf16.msra.mxu0 0
  %10731 = vmatpush.bf16.msra.mxu0 0
  %10732 = vmatpush.bf16.msra.mxu0 0
  %10733 = vmatpush.bf16.msra.mxu0 %v4959
  %10734 = vmatpush.bf16.msra.mxu0 %v4956
  %10735 = vmatmul.bf16.gmra.mxu0 %v8809
  %v10736 = vpop.f32.mrf.mxu0
  %v10737 = vadd.f32 %v10718, %v10736
  %v10738 = vpop.f32.mrf.mxu0
  %v10739 = vadd.f32 %v10720, %v10738
  %10740 = vmatmul.bf16.gmra.mxu0 %v8812
  %v10741 = vpop.f32.mrf.mxu0
  %v10742 = vadd.f32 %v10723, %v10741
  %v10743 = vpop.f32.mrf.mxu0
  %v10744 = vadd.f32 %v10725, %v10743
  %10745 = vdwg.mxu0
  %10746 = vmatpush.bf16.msra.mxu0 %v4930
  %10747 = vmatpush.bf16.msra.mxu0 %v4927
  %10748 = vmatpush.bf16.msra.mxu0 %v4924
  %10749 = vmatpush.bf16.msra.mxu0 %v4921
  %10750 = vmatpush.bf16.msra.mxu0 %v4918
  %10751 = vmatpush.bf16.msra.mxu0 %v4915
  %10752 = vmatpush.bf16.msra.mxu0 %v4912
  %10753 = vmatpush.bf16.msra.mxu0 %v4909
  %10754 = vmatmul.bf16.gmra.mxu0 %v8802
  %v10755 = vpop.f32.mrf.mxu0
  %v10756 = vadd.f32 0.0, %v10755
  %v10757 = vpop.f32.mrf.mxu0
  %v10758 = vadd.f32 0.0, %v10757
  %10759 = vmatmul.bf16.gmra.mxu0 %v8805
  %v10760 = vpop.f32.mrf.mxu0
  %v10761 = vadd.f32 0.0, %v10760
  %v10762 = vpop.f32.mrf.mxu0
  %v10763 = vadd.f32 0.0, %v10762
  %10764 = vdwg.mxu0
  %10765 = vmatpush.bf16.msra.mxu0 %v4954
  %10766 = vmatpush.bf16.msra.mxu0 %v4951
  %10767 = vmatpush.bf16.msra.mxu0 %v4948
  %10768 = vmatpush.bf16.msra.mxu0 %v4945
  %10769 = vmatpush.bf16.msra.mxu0 %v4942
  %10770 = vmatpush.bf16.msra.mxu0 %v4939
  %10771 = vmatpush.bf16.msra.mxu0 %v4936
  %10772 = vmatpush.bf16.msra.mxu0 %v4933
  %10773 = vmatmul.bf16.gmra.mxu0 %v8803
  %v10774 = vpop.f32.mrf.mxu0
  %v10775 = vadd.f32 %v10756, %v10774
  %v10776 = vpop.f32.mrf.mxu0
  %v10777 = vadd.f32 %v10758, %v10776
  %10778 = vmatmul.bf16.gmra.mxu0 %v8806
  %v10779 = vpop.f32.mrf.mxu0
  %v10780 = vadd.f32 %v10761, %v10779
  %v10781 = vpop.f32.mrf.mxu0
  %v10782 = vadd.f32 %v10763, %v10781
  %10783 = vdwg.mxu0
  %10784 = vmatpush.bf16.msra.mxu0 0
  %10785 = vmatpush.bf16.msra.mxu0 0
  %10786 = vmatpush.bf16.msra.mxu0 0
  %10787 = vmatpush.bf16.msra.mxu0 0
  %10788 = vmatpush.bf16.msra.mxu0 0
  %10789 = vmatpush.bf16.msra.mxu0 0
  %10790 = vmatpush.bf16.msra.mxu0 %v4960
  %10791 = vmatpush.bf16.msra.mxu0 %v4957
  %10792 = vmatmul.bf16.gmra.mxu0 %v8809
  %v10793 = vpop.f32.mrf.mxu0
  %v10794 = vadd.f32 %v10775, %v10793
  %v10795 = vpop.f32.mrf.mxu0
  %v10796 = vadd.f32 %v10777, %v10795
  %10797 = vmatmul.bf16.gmra.mxu0 %v8812
  %v10798 = vpop.f32.mrf.mxu0
  %v10799 = vadd.f32 %v10780, %v10798
  %v10800 = vpop.f32.mrf.mxu0
  %v10801 = vadd.f32 %v10782, %v10800
  %10802 = vdwg.mxu0
  %10803 = vmatpush.bf16.msra.mxu0 %v4931
  %10804 = vmatpush.bf16.msra.mxu0 %v4928
  %10805 = vmatpush.bf16.msra.mxu0 %v4925
  %10806 = vmatpush.bf16.msra.mxu0 %v4922
  %10807 = vmatpush.bf16.msra.mxu0 %v4919
  %10808 = vmatpush.bf16.msra.mxu0 %v4916
  %10809 = vmatpush.bf16.msra.mxu0 %v4913
  %10810 = vmatpush.bf16.msra.mxu0 %v4910
  %10811 = vmatmul.bf16.gmra.mxu0 %v8802
  %v10812 = vpop.f32.mrf.mxu0
  %v10813 = vadd.f32 0.0, %v10812
  %v10814 = vpop.f32.mrf.mxu0
  %v10815 = vadd.f32 0.0, %v10814
  %10816 = vmatmul.bf16.gmra.mxu0 %v8805
  %v10817 = vpop.f32.mrf.mxu0
  %v10818 = vadd.f32 0.0, %v10817
  %v10819 = vpop.f32.mrf.mxu0
  %v10820 = vadd.f32 0.0, %v10819
  %10821 = vdwg.mxu0
  %10822 = vmatpush.bf16.msra.mxu0 %v4955
  %10823 = vmatpush.bf16.msra.mxu0 %v4952
  %10824 = vmatpush.bf16.msra.mxu0 %v4949
  %10825 = vmatpush.bf16.msra.mxu0 %v4946
  %10826 = vmatpush.bf16.msra.mxu0 %v4943
  %10827 = vmatpush.bf16.msra.mxu0 %v4940
  %10828 = vmatpush.bf16.msra.mxu0 %v4937
  %10829 = vmatpush.bf16.msra.mxu0 %v4934
  %10830 = vmatmul.bf16.gmra.mxu0 %v8803
  %v10831 = vpop.f32.mrf.mxu0
  %v10832 = vadd.f32 %v10813, %v10831
  %v10833 = vpop.f32.mrf.mxu0
  %v10834 = vadd.f32 %v10815, %v10833
  %10835 = vmatmul.bf16.gmra.mxu0 %v8806
  %v10836 = vpop.f32.mrf.mxu0
  %v10837 = vadd.f32 %v10818, %v10836
  %v10838 = vpop.f32.mrf.mxu0
  %v10839 = vadd.f32 %v10820, %v10838
  %10840 = vdwg.mxu0
  %10841 = vmatpush.bf16.msra.mxu0 0
  %10842 = vmatpush.bf16.msra.mxu0 0
  %10843 = vmatpush.bf16.msra.mxu0 0
  %10844 = vmatpush.bf16.msra.mxu0 0
  %10845 = vmatpush.bf16.msra.mxu0 0
  %10846 = vmatpush.bf16.msra.mxu0 0
  %10847 = vmatpush.bf16.msra.mxu0 %v4961
  %10848 = vmatpush.bf16.msra.mxu0 %v4958
  %10849 = vmatmul.bf16.gmra.mxu0 %v8809
  %v10850 = vpop.f32.mrf.mxu0
  %v10851 = vadd.f32 %v10832, %v10850
  %v10852 = vpop.f32.mrf.mxu0
  %v10853 = vadd.f32 %v10834, %v10852
  %10854 = vmatmul.bf16.gmra.mxu0 %v8812
  %v10855 = vpop.f32.mrf.mxu0
  %v10856 = vadd.f32 %v10837, %v10855
  %v10857 = vpop.f32.mrf.mxu0
  %v10858 = vadd.f32 %v10839, %v10857
  %10859 = vdwg.mxu0
  %v10860 = vpack.c.bf16 %v10739, %v10737
  %v10861 = vpack.c.bf16 %v10796, %v10794
  %v10862 = vpack.c.bf16 %v10853, %v10851
  %v10863 = vpack.c.bf16 %v10744, %v10742
  %v10864 = vpack.c.bf16 %v10801, %v10799
  %v10865 = vpack.c.bf16 %v10858, %v10856
  %s10866 = scalar_lea.vmem %s10, 64
  %v10867 = vld [vmem:[%s10866] sm:$0xf]
  %v10868 = vld [vmem:[%s10866 + $0x4] sm:$0xf]
  %v10871 = vunpack.c.l.b16 %v10867
  %v10872 = vunpack.c.l.b16 %v10868
  %v10873 = vpack.c.b16 %v10872, %v10871
  %v10875 = vsel %vm1305, %v10873, 0
  %10877 = vmatpush.bf16.msra.mxu0 0
  %10878 = vmatpush.bf16.msra.mxu0 0
  %10879 = vmatpush.bf16.msra.mxu0 0
  %10880 = vmatpush.bf16.msra.mxu0 0
  %10881 = vmatpush.bf16.msra.mxu0 0
  %10882 = vmatpush.bf16.msra.mxu0 0
  %10883 = vmatpush.bf16.msra.mxu0 %v10863
  %10884 = vmatpush.bf16.msra.mxu0 %v10860
  %10885 = vmatmul.bf16.gmra.mxu0 %v10875
  %v10886 = vpop.f32.mrf.mxu0
  %v10887 = vadd.f32 0.0, %v10886
  %v10888 = vpop.f32.mrf.mxu0
  %v10889 = vadd.f32 0.0, %v10888
  %10890 = vdwg.mxu0
  %10891 = vmatpush.bf16.msra.mxu0 0
  %10892 = vmatpush.bf16.msra.mxu0 0
  %10893 = vmatpush.bf16.msra.mxu0 0
  %10894 = vmatpush.bf16.msra.mxu0 0
  %10895 = vmatpush.bf16.msra.mxu0 0
  %10896 = vmatpush.bf16.msra.mxu0 0
  %10897 = vmatpush.bf16.msra.mxu0 %v10864
  %10898 = vmatpush.bf16.msra.mxu0 %v10861
  %10899 = vmatmul.bf16.gmra.mxu0 %v10875
  %v10900 = vpop.f32.mrf.mxu0
  %v10901 = vadd.f32 0.0, %v10900
  %v10902 = vpop.f32.mrf.mxu0
  %v10903 = vadd.f32 0.0, %v10902
  %10904 = vdwg.mxu0
  %10905 = vmatpush.bf16.msra.mxu0 0
  %10906 = vmatpush.bf16.msra.mxu0 0
  %10907 = vmatpush.bf16.msra.mxu0 0
  %10908 = vmatpush.bf16.msra.mxu0 0
  %10909 = vmatpush.bf16.msra.mxu0 0
  %10910 = vmatpush.bf16.msra.mxu0 0
  %10911 = vmatpush.bf16.msra.mxu0 %v10865
  %10912 = vmatpush.bf16.msra.mxu0 %v10862
  %10913 = vmatmul.bf16.gmra.mxu0 %v10875
  %v10914 = vpop.f32.mrf.mxu0
  %v10915 = vadd.f32 0.0, %v10914
  %v10916 = vpop.f32.mrf.mxu0
  %v10917 = vadd.f32 0.0, %v10916
  %10918 = vdwg.mxu0
  %v10919 = vadd.f32 %v10683, %v10887
  %v10920 = vadd.f32 %v10684, %v10901
  %v10921 = vadd.f32 %v10685, %v10915
  %v10922 = vadd.f32 %v10686, %v10889
  %v10923 = vadd.f32 %v10687, %v10903
  %v10924 = vadd.f32 %v10688, %v10917
  %v10925 = vld [vmem:[%s11] sm:$0xff]
  %v10926 = vld [vmem:[%s11 + $0x8] sm:$0xff]
  %10928 = vset.pattern.permute.xlu0 0
  %10929 = vperm.xlu0 %10928, %v10925
  %v10930 = vpop.permute.xlu0 %10929
  %10933 = vset.pattern.permute.xlu0 0
  %10934 = vperm.xlu0 %10933, %v10926
  %v10935 = vpop.permute.xlu0 %10934
  %v10937 = vadd.f32 %v10919, %v10930
  %v10938 = vadd.f32 %v10920, %v10930
  %v10939 = vadd.f32 %v10921, %v10930
  %v10940 = vadd.f32 %v10922, %v10935
  %v10941 = vadd.f32 %v10923, %v10935
  %v10942 = vadd.f32 %v10924, %v10935
  %v10943 = vpack.c.bf16 %v6796, %v6796
  %v10944 = vpack.c.bf16 %v6797, %v6797
  %v10945 = vpack.c.bf16 %v6798, %v6798
  %v10947 = vsel %vm1305, %v10945, 0
  %10949 = vmatpush.bf16.msra.mxu0 %v4929
  %10950 = vmatpush.bf16.msra.mxu0 %v4926
  %10951 = vmatpush.bf16.msra.mxu0 %v4923
  %10952 = vmatpush.bf16.msra.mxu0 %v4920
  %10953 = vmatpush.bf16.msra.mxu0 %v4917
  %10954 = vmatpush.bf16.msra.mxu0 %v4914
  %10955 = vmatpush.bf16.msra.mxu0 %v4911
  %10956 = vmatpush.bf16.msra.mxu0 %v4908
  %10957 = vmatmul.bf16.gmra.mxu0 %v10943
  %v10958 = vpop.f32.mrf.mxu0
  %v10959 = vadd.f32 0.0, %v10958
  %v10960 = vpop.f32.mrf.mxu0
  %10961 = vdwg.mxu0
  %10962 = vmatpush.bf16.msra.mxu0 %v4953
  %10963 = vmatpush.bf16.msra.mxu0 %v4950
  %10964 = vmatpush.bf16.msra.mxu0 %v4947
  %10965 = vmatpush.bf16.msra.mxu0 %v4944
  %10966 = vmatpush.bf16.msra.mxu0 %v4941
  %10967 = vmatpush.bf16.msra.mxu0 %v4938
  %10968 = vmatpush.bf16.msra.mxu0 %v4935
  %10969 = vmatpush.bf16.msra.mxu0 %v4932
  %10970 = vmatmul.bf16.gmra.mxu0 %v10944
  %v10971 = vpop.f32.mrf.mxu0
  %v10972 = vadd.f32 %v10959, %v10971
  %v10973 = vpop.f32.mrf.mxu0
  %10974 = vdwg.mxu0
  %10975 = vmatpush.bf16.msra.mxu0 0
  %10976 = vmatpush.bf16.msra.mxu0 0
  %10977 = vmatpush.bf16.msra.mxu0 0
  %10978 = vmatpush.bf16.msra.mxu0 0
  %10979 = vmatpush.bf16.msra.mxu0 0
  %10980 = vmatpush.bf16.msra.mxu0 0
  %10981 = vmatpush.bf16.msra.mxu0 %v4959
  %10982 = vmatpush.bf16.msra.mxu0 %v4956
  %10983 = vmatmul.bf16.gmra.mxu0 %v10947
  %v10984 = vpop.f32.mrf.mxu0
  %v10985 = vadd.f32 %v10972, %v10984
  %v10986 = vpop.f32.mrf.mxu0
  %10987 = vdwg.mxu0
  %10988 = vmatpush.bf16.msra.mxu0 %v4930
  %10989 = vmatpush.bf16.msra.mxu0 %v4927
  %10990 = vmatpush.bf16.msra.mxu0 %v4924
  %10991 = vmatpush.bf16.msra.mxu0 %v4921
  %10992 = vmatpush.bf16.msra.mxu0 %v4918
  %10993 = vmatpush.bf16.msra.mxu0 %v4915
  %10994 = vmatpush.bf16.msra.mxu0 %v4912
  %10995 = vmatpush.bf16.msra.mxu0 %v4909
  %10996 = vmatmul.bf16.gmra.mxu0 %v10943
  %v10997 = vpop.f32.mrf.mxu0
  %v10998 = vadd.f32 0.0, %v10997
  %v10999 = vpop.f32.mrf.mxu0
  %11000 = vdwg.mxu0
  %11001 = vmatpush.bf16.msra.mxu0 %v4954
  %11002 = vmatpush.bf16.msra.mxu0 %v4951
  %11003 = vmatpush.bf16.msra.mxu0 %v4948
  %11004 = vmatpush.bf16.msra.mxu0 %v4945
  %11005 = vmatpush.bf16.msra.mxu0 %v4942
  %11006 = vmatpush.bf16.msra.mxu0 %v4939
  %11007 = vmatpush.bf16.msra.mxu0 %v4936
  %11008 = vmatpush.bf16.msra.mxu0 %v4933
  %11009 = vmatmul.bf16.gmra.mxu0 %v10944
  %v11010 = vpop.f32.mrf.mxu0
  %v11011 = vadd.f32 %v10998, %v11010
  %v11012 = vpop.f32.mrf.mxu0
  %11013 = vdwg.mxu0
  %11014 = vmatpush.bf16.msra.mxu0 0
  %11015 = vmatpush.bf16.msra.mxu0 0
  %11016 = vmatpush.bf16.msra.mxu0 0
  %11017 = vmatpush.bf16.msra.mxu0 0
  %11018 = vmatpush.bf16.msra.mxu0 0
  %11019 = vmatpush.bf16.msra.mxu0 0
  %11020 = vmatpush.bf16.msra.mxu0 %v4960
  %11021 = vmatpush.bf16.msra.mxu0 %v4957
  %11022 = vmatmul.bf16.gmra.mxu0 %v10947
  %v11023 = vpop.f32.mrf.mxu0
  %v11024 = vadd.f32 %v11011, %v11023
  %v11025 = vpop.f32.mrf.mxu0
  %11026 = vdwg.mxu0
  %11027 = vmatpush.bf16.msra.mxu0 %v4931
  %11028 = vmatpush.bf16.msra.mxu0 %v4928
  %11029 = vmatpush.bf16.msra.mxu0 %v4925
  %11030 = vmatpush.bf16.msra.mxu0 %v4922
  %11031 = vmatpush.bf16.msra.mxu0 %v4919
  %11032 = vmatpush.bf16.msra.mxu0 %v4916
  %11033 = vmatpush.bf16.msra.mxu0 %v4913
  %11034 = vmatpush.bf16.msra.mxu0 %v4910
  %11035 = vmatmul.bf16.gmra.mxu0 %v10943
  %v11036 = vpop.f32.mrf.mxu0
  %v11037 = vadd.f32 0.0, %v11036
  %v11038 = vpop.f32.mrf.mxu0
  %11039 = vdwg.mxu0
  %11040 = vmatpush.bf16.msra.mxu0 %v4955
  %11041 = vmatpush.bf16.msra.mxu0 %v4952
  %11042 = vmatpush.bf16.msra.mxu0 %v4949
  %11043 = vmatpush.bf16.msra.mxu0 %v4946
  %11044 = vmatpush.bf16.msra.mxu0 %v4943
  %11045 = vmatpush.bf16.msra.mxu0 %v4940
  %11046 = vmatpush.bf16.msra.mxu0 %v4937
  %11047 = vmatpush.bf16.msra.mxu0 %v4934
  %11048 = vmatmul.bf16.gmra.mxu0 %v10944
  %v11049 = vpop.f32.mrf.mxu0
  %v11050 = vadd.f32 %v11037, %v11049
  %v11051 = vpop.f32.mrf.mxu0
  %11052 = vdwg.mxu0
  %11053 = vmatpush.bf16.msra.mxu0 0
  %11054 = vmatpush.bf16.msra.mxu0 0
  %11055 = vmatpush.bf16.msra.mxu0 0
  %11056 = vmatpush.bf16.msra.mxu0 0
  %11057 = vmatpush.bf16.msra.mxu0 0
  %11058 = vmatpush.bf16.msra.mxu0 0
  %11059 = vmatpush.bf16.msra.mxu0 %v4961
  %11060 = vmatpush.bf16.msra.mxu0 %v4958
  %11061 = vmatmul.bf16.gmra.mxu0 %v10947
  %v11062 = vpop.f32.mrf.mxu0
  %v11063 = vadd.f32 %v11050, %v11062
  %v11064 = vpop.f32.mrf.mxu0
  %11065 = vdwg.mxu0
  %v11066 = vpack.c.bf16 %v10985, %v10985
  %v11067 = vpack.c.bf16 %v11024, %v11024
  %v11068 = vpack.c.bf16 %v11063, %v11063
  %v11069 = vld [vmem:[%s12] sm:$0xf]
  %v11070 = vld [vmem:[%s12 + $0x4] sm:$0xf]
  %v11071 = vld [vmem:[%s13] sm:$0xf]
  %v11072 = vld [vmem:[%s13 + $0x4] sm:$0xf]
  %v11075 = vunpack.c.l.b16 %v11071
  %v11076 = vunpack.c.l.b16 %v11072
  %v11077 = vpack.c.b16 %v11076, %v11075
  %v11079 = vsel %vm1840, %v11077, 0
  %v11082 = vsel %vm1844, %v11066, 0
  %v11085 = vsel %vm1844, %v11067, 0
  %v11088 = vsel %vm1844, %v11068, 0
  %11090 = vmatpush.bf16.msra.mxu0 0
  %11091 = vmatpush.bf16.msra.mxu0 0
  %11092 = vmatpush.bf16.msra.mxu0 0
  %11093 = vmatpush.bf16.msra.mxu0 0
  %11094 = vmatpush.bf16.msra.mxu0 0
  %11095 = vmatpush.bf16.msra.mxu0 0
  %11096 = vmatpush.bf16.msra.mxu0 0
  %11097 = vmatpush.bf16.msra.mxu0 %v11082
  %11098 = vmatmul.bf16.gmra.mxu0 %v11079
  %v11099 = vpop.f32.mrf.mxu0
  %v11100 = vadd.f32 0.0, %v11099
  %v11101 = vpop.f32.mrf.mxu0
  %v11102 = vadd.f32 0.0, %v11101
  %11103 = vdwg.mxu0
  %11104 = vmatpush.bf16.msra.mxu0 0
  %11105 = vmatpush.bf16.msra.mxu0 0
  %11106 = vmatpush.bf16.msra.mxu0 0
  %11107 = vmatpush.bf16.msra.mxu0 0
  %11108 = vmatpush.bf16.msra.mxu0 0
  %11109 = vmatpush.bf16.msra.mxu0 0
  %11110 = vmatpush.bf16.msra.mxu0 0
  %11111 = vmatpush.bf16.msra.mxu0 %v11085
  %11112 = vmatmul.bf16.gmra.mxu0 %v11079
  %v11113 = vpop.f32.mrf.mxu0
  %v11114 = vadd.f32 0.0, %v11113
  %v11115 = vpop.f32.mrf.mxu0
  %v11116 = vadd.f32 0.0, %v11115
  %11117 = vdwg.mxu0
  %11118 = vmatpush.bf16.msra.mxu0 0
  %11119 = vmatpush.bf16.msra.mxu0 0
  %11120 = vmatpush.bf16.msra.mxu0 0
  %11121 = vmatpush.bf16.msra.mxu0 0
  %11122 = vmatpush.bf16.msra.mxu0 0
  %11123 = vmatpush.bf16.msra.mxu0 0
  %11124 = vmatpush.bf16.msra.mxu0 0
  %11125 = vmatpush.bf16.msra.mxu0 %v11088
  %11126 = vmatmul.bf16.gmra.mxu0 %v11079
  %v11127 = vpop.f32.mrf.mxu0
  %v11128 = vadd.f32 0.0, %v11127
  %v11129 = vpop.f32.mrf.mxu0
  %v11130 = vadd.f32 0.0, %v11129
  %11131 = vdwg.mxu0
  %v11134 = vunpack.c.l.b16 %v11069
  %v11135 = vunpack.c.l.b16 %v11070
  %v11136 = vpack.c.b16 %v11135, %v11134
  %v11138 = vsel %vm1840, %v11136, 0
  %v11141 = vsel %vm1844, %v6802, 0
  %v11144 = vsel %vm1844, %v6803, 0
  %v11146 = vsel %vm1844, %v6804, 0
  %11148 = vmatpush.bf16.msra.mxu0 0
  %11149 = vmatpush.bf16.msra.mxu0 0
  %11150 = vmatpush.bf16.msra.mxu0 0
  %11151 = vmatpush.bf16.msra.mxu0 0
  %11152 = vmatpush.bf16.msra.mxu0 0
  %11153 = vmatpush.bf16.msra.mxu0 0
  %11154 = vmatpush.bf16.msra.mxu0 0
  %11155 = vmatpush.bf16.msra.mxu0 %v11141
  %11156 = vmatmul.bf16.gmra.mxu0 %v11138
  %v11157 = vpop.f32.mrf.mxu0
  %v11158 = vadd.f32 %v11100, %v11157
  %v11159 = vpop.f32.mrf.mxu0
  %v11160 = vadd.f32 %v11102, %v11159
  %11161 = vdwg.mxu0
  %11162 = vmatpush.bf16.msra.mxu0 0
  %11163 = vmatpush.bf16.msra.mxu0 0
  %11164 = vmatpush.bf16.msra.mxu0 0
  %11165 = vmatpush.bf16.msra.mxu0 0
  %11166 = vmatpush.bf16.msra.mxu0 0
  %11167 = vmatpush.bf16.msra.mxu0 0
  %11168 = vmatpush.bf16.msra.mxu0 0
  %11169 = vmatpush.bf16.msra.mxu0 %v11144
  %11170 = vmatmul.bf16.gmra.mxu0 %v11138
  %v11171 = vpop.f32.mrf.mxu0
  %v11172 = vadd.f32 %v11114, %v11171
  %v11173 = vpop.f32.mrf.mxu0
  %v11174 = vadd.f32 %v11116, %v11173
  %11175 = vdwg.mxu0
  %11176 = vmatpush.bf16.msra.mxu0 0
  %11177 = vmatpush.bf16.msra.mxu0 0
  %11178 = vmatpush.bf16.msra.mxu0 0
  %11179 = vmatpush.bf16.msra.mxu0 0
  %11180 = vmatpush.bf16.msra.mxu0 0
  %11181 = vmatpush.bf16.msra.mxu0 0
  %11182 = vmatpush.bf16.msra.mxu0 0
  %11183 = vmatpush.bf16.msra.mxu0 %v11146
  %11184 = vmatmul.bf16.gmra.mxu0 %v11138
  %v11185 = vpop.f32.mrf.mxu0
  %v11186 = vadd.f32 %v11128, %v11185
  %v11187 = vpop.f32.mrf.mxu0
  %v11188 = vadd.f32 %v11130, %v11187
  %11189 = vdwg.mxu0
  %v11190 = vld [vmem:[%s14] sm:$0xff]
  %v11191 = vld [vmem:[%s14 + $0x8] sm:$0xff]
  %11193 = vset.pattern.permute.xlu0 0
  %11194 = vperm.xlu0 %11193, %v11190
  %v11195 = vpop.permute.xlu0 %11194
  %11198 = vset.pattern.permute.xlu0 0
  %11199 = vperm.xlu0 %11198, %v11191
  %v11200 = vpop.permute.xlu0 %11199
  %v11202 = vadd.f32 %v11158, %v11195
  %v11203 = vadd.f32 %v11172, %v11195
  %v11204 = vadd.f32 %v11186, %v11195
  %v11205 = vadd.f32 %v11160, %v11200
  %v11206 = vadd.f32 %v11174, %v11200
  %v11207 = vadd.f32 %v11188, %v11200
  %v11208 = vadd.f32 %v10937, %v11202
  %v11209 = vadd.f32 %v10938, %v11203
  %v11210 = vadd.f32 %v10939, %v11204
  %v11211 = vadd.f32 %v10940, %v11205
  %v11212 = vadd.f32 %v10941, %v11206
  %v11213 = vadd.f32 %v10942, %v11207
  %v11214 = vmax.f32 %v11208, 0.0
  %v11215 = vmax.f32 %v11209, 0.0
  %v11216 = vmax.f32 %v11210, 0.0
  %v11217 = vmax.f32 %v11211, 0.0
  %v11218 = vmax.f32 %v11212, 0.0
  %v11219 = vmax.f32 %v11213, 0.0
  %v11220 = vld [vmem:[%s15] sm:$0xff]
  %v11221 = vld [vmem:[%s15 + $0x8] sm:$0xff]
  %v11222 = vld [vmem:[%s15 + $0x10] sm:$0xff]
  %v11223 = vld [vmem:[%s15 + $0x18] sm:$0xff]
  %v11224 = vld [vmem:[%s15 + $0x20] sm:$0xff]
  %v11225 = vld [vmem:[%s15 + $0x28] sm:$0xff]
  %v11226 = vld [vmem:[%s15 + $0x30] sm:$0xff]
  %v11227 = vld [vmem:[%s15 + $0x38] sm:$0xff]
  %v11228 = vld [vmem:[%s15 + $0x40] sm:$0xff]
  %v11229 = vld [vmem:[%s15 + $0x48] sm:$0xff]
  %v11230 = vld [vmem:[%s15 + $0x50] sm:$0xff]
  %v11231 = vld [vmem:[%s15 + $0x58] sm:$0xff]
  %v11232 = vld [vmem:[%s15 + $0x60] sm:$0xff]
  %v11233 = vld [vmem:[%s15 + $0x68] sm:$0xff]
  %v11234 = vld [vmem:[%s15 + $0x70] sm:$0xff]
  %v11235 = vld [vmem:[%s15 + $0x78] sm:$0xff]
  %v11236 = vld [vmem:[%s15 + $0x80] sm:$0xff]
  %v11237 = vld [vmem:[%s15 + $0x88] sm:$0xff]
  %v11238 = vld [vmem:[%s15 + $0x90] sm:$0xff]
  %v11239 = vld [vmem:[%s15 + $0x98] sm:$0xff]
  %v11240 = vld [vmem:[%s15 + $0xa0] sm:$0xff]
  %v11241 = vld [vmem:[%s15 + $0xa8] sm:$0xff]
  %v11242 = vld [vmem:[%s15 + $0xb0] sm:$0xff]
  %v11243 = vld [vmem:[%s15 + $0xb8] sm:$0xff]
  %v11244 = vld [vmem:[%s15 + $0xc0] sm:$0xff]
  %v11245 = vld [vmem:[%s15 + $0xc8] sm:$0xff]
  %v11246 = vld [vmem:[%s15 + $0xd0] sm:$0xff]
  %v11247 = vld [vmem:[%s15 + $0xd8] sm:$0xff]
  %v11248 = vld [vmem:[%s15 + $0xe0] sm:$0xff]
  %v11249 = vld [vmem:[%s15 + $0xe8] sm:$0xff]
  %v11250 = vld [vmem:[%s15 + $0xf0] sm:$0xff]
  %v11251 = vld [vmem:[%s15 + $0xf8] sm:$0xff]
  %v11252 = vld [vmem:[%s15 + $0x100] sm:$0xff]
  %v11253 = vld [vmem:[%s15 + $0x108] sm:$0xff]
  %v11254 = vld [vmem:[%s15 + $0x110] sm:$0xff]
  %v11255 = vld [vmem:[%s15 + $0x118] sm:$0xff]
  %v11256 = vld [vmem:[%s15 + $0x120] sm:$0xff]
  %v11257 = vld [vmem:[%s15 + $0x128] sm:$0xff]
  %v11258 = vld [vmem:[%s15 + $0x130] sm:$0xff]
  %v11259 = vld [vmem:[%s15 + $0x138] sm:$0xff]
  %v11260 = vld [vmem:[%s15 + $0x140] sm:$0xff]
  %v11261 = vld [vmem:[%s15 + $0x148] sm:$0xff]
  %v11262 = vld [vmem:[%s15 + $0x150] sm:$0xff]
  %v11263 = vld [vmem:[%s15 + $0x158] sm:$0xff]
  %v11264 = vld [vmem:[%s15 + $0x160] sm:$0xff]
  %v11265 = vld [vmem:[%s15 + $0x168] sm:$0xff]
  %v11266 = vld [vmem:[%s15 + $0x170] sm:$0xff]
  %v11267 = vld [vmem:[%s15 + $0x178] sm:$0xff]
  %v11268 = vld [vmem:[%s15 + $0x180] sm:$0xff]
  %v11269 = vld [vmem:[%s15 + $0x188] sm:$0xff]
  %v11270 = vld [vmem:[%s15 + $0x190] sm:$0xff]
  %v11271 = vld [vmem:[%s15 + $0x198] sm:$0xff]
  %v11272 = vld [vmem:[%s15 + $0x1a0] sm:$0xff]
  %v11273 = vld [vmem:[%s15 + $0x1a8] sm:$0xff]
  %v11274 = vld [vmem:[%s15 + $0x1b0] sm:$0xff]
  %v11275 = vld [vmem:[%s15 + $0x1b8] sm:$0xff]
  %v11276 = vld [vmem:[%s15 + $0x1c0] sm:$0xff]
  %v11277 = vld [vmem:[%s15 + $0x1c8] sm:$0xff]
  %v11278 = vld [vmem:[%s15 + $0x1d0] sm:$0xff]
  %v11279 = vld [vmem:[%s15 + $0x1d8] sm:$0xff]
  %v11280 = vld [vmem:[%s15 + $0x1e0] sm:$0xff]
  %v11281 = vld [vmem:[%s15 + $0x1e8] sm:$0xff]
  %v11282 = vld [vmem:[%s15 + $0x1f0] sm:$0xff]
  %v11283 = vld [vmem:[%s15 + $0x1f8] sm:$0xff]
  %v11284 = vld [vmem:[%s15 + $0x200] sm:$0xff]
  %v11285 = vld [vmem:[%s15 + $0x208] sm:$0xff]
  %v11286 = vld [vmem:[%s15 + $0x210] sm:$0xff]
  %v11287 = vld [vmem:[%s15 + $0x218] sm:$0xff]
  %v11288 = vld [vmem:[%s15 + $0x220] sm:$0xff]
  %v11289 = vld [vmem:[%s15 + $0x228] sm:$0xff]
  %v11290 = vld [vmem:[%s15 + $0x230] sm:$0xff]
  %v11291 = vld [vmem:[%s15 + $0x238] sm:$0xff]
  %v11292 = vld [vmem:[%s15 + $0x240] sm:$0xff]
  %v11293 = vld [vmem:[%s15 + $0x248] sm:$0xff]
  %v11294 = vld [vmem:[%s15 + $0x250] sm:$0xff]
  %v11295 = vld [vmem:[%s15 + $0x258] sm:$0xff]
  %v11296 = vld [vmem:[%s15 + $0x260] sm:$0xff]
  %v11297 = vld [vmem:[%s15 + $0x268] sm:$0xff]
  %v11298 = vld [vmem:[%s15 + $0x270] sm:$0xff]
  %v11299 = vld [vmem:[%s15 + $0x278] sm:$0xff]
  %v11300 = vld [vmem:[%s15 + $0x280] sm:$0xff]
  %v11301 = vld [vmem:[%s15 + $0x288] sm:$0xff]
  %v11302 = vld [vmem:[%s15 + $0x290] sm:$0xff]
  %v11303 = vld [vmem:[%s15 + $0x298] sm:$0xff]
  %v11304 = vld [vmem:[%s15 + $0x2a0] sm:$0xff]
  %v11305 = vld [vmem:[%s15 + $0x2a8] sm:$0xff]
  %v11306 = vld [vmem:[%s15 + $0x2b0] sm:$0xff]
  %v11307 = vld [vmem:[%s15 + $0x2b8] sm:$0xff]
  %v11308 = vld [vmem:[%s15 + $0x2c0] sm:$0xff]
  %v11309 = vld [vmem:[%s15 + $0x2c8] sm:$0xff]
  %v11310 = vld [vmem:[%s15 + $0x2d0] sm:$0xff]
  %v11311 = vld [vmem:[%s15 + $0x2d8] sm:$0xff]
  %v11312 = vld [vmem:[%s15 + $0x2e0] sm:$0xff]
  %v11313 = vld [vmem:[%s15 + $0x2e8] sm:$0xff]
  %v11314 = vld [vmem:[%s15 + $0x2f0] sm:$0xff]
  %v11315 = vld [vmem:[%s15 + $0x2f8] sm:$0xff]
  %v11316 = vld [vmem:[%s15 + $0x300] sm:$0xff]
  %v11317 = vld [vmem:[%s15 + $0x308] sm:$0xff]
  %v11318 = vld [vmem:[%s15 + $0x310] sm:$0xff]
  %v11319 = vld [vmem:[%s15 + $0x318] sm:$0xff]
  %v11320 = vld [vmem:[%s15 + $0x320] sm:$0xff]
  %v11321 = vld [vmem:[%s15 + $0x328] sm:$0xff]
  %v11322 = vld [vmem:[%s15 + $0x330] sm:$0xff]
  %v11323 = vld [vmem:[%s15 + $0x338] sm:$0xff]
  %v11324 = vld [vmem:[%s15 + $0x340] sm:$0xff]
  %v11325 = vld [vmem:[%s15 + $0x348] sm:$0xff]
  %v11326 = vld [vmem:[%s15 + $0x350] sm:$0xff]
  %v11327 = vld [vmem:[%s15 + $0x358] sm:$0xff]
  %v11329 = vsel %vm1305, %v11216, 0
  %v11332 = vsel %vm1305, %v11219, 0
  %11334 = vmatpush.msra.mxu0 %v11265
  %11335 = vmatpush.msra.mxu0 %v11262
  %11336 = vmatpush.msra.mxu0 %v11259
  %11337 = vmatpush.msra.mxu0 %v11256
  %11338 = vmatpush.msra.mxu0 %v11253
  %11339 = vmatpush.msra.mxu0 %v11250
  %11340 = vmatpush.msra.mxu0 %v11247
  %11341 = vmatpush.msra.mxu0 %v11244
  %11342 = vmatpush.msra.mxu0 %v11241
  %11343 = vmatpush.msra.mxu0 %v11238
  %11344 = vmatpush.msra.mxu0 %v11235
  %11345 = vmatpush.msra.mxu0 %v11232
  %11346 = vmatpush.msra.mxu0 %v11229
  %11347 = vmatpush.msra.mxu0 %v11226
  %11348 = vmatpush.msra.mxu0 %v11223
  %11349 = vmatpush.msra.mxu0 %v11220
  %11350 = vmatmul.f32.gmra.mxu0 %v11214
  %v11351 = vpop.f32.mrf.mxu0
  %v11352 = vadd.f32 0.0, %v11351
  %11353 = vmatmul.f32.gmra.mxu0 %v11217
  %v11354 = vpop.f32.mrf.mxu0
  %11355 = vdwg.mxu0
  %11356 = vmatpush.msra.mxu0 %v11313
  %11357 = vmatpush.msra.mxu0 %v11310
  %11358 = vmatpush.msra.mxu0 %v11307
  %11359 = vmatpush.msra.mxu0 %v11304
  %11360 = vmatpush.msra.mxu0 %v11301
  %11361 = vmatpush.msra.mxu0 %v11298
  %11362 = vmatpush.msra.mxu0 %v11295
  %11363 = vmatpush.msra.mxu0 %v11292
  %11364 = vmatpush.msra.mxu0 %v11289
  %11365 = vmatpush.msra.mxu0 %v11286
  %11366 = vmatpush.msra.mxu0 %v11283
  %11367 = vmatpush.msra.mxu0 %v11280
  %11368 = vmatpush.msra.mxu0 %v11277
  %11369 = vmatpush.msra.mxu0 %v11274
  %11370 = vmatpush.msra.mxu0 %v11271
  %11371 = vmatpush.msra.mxu0 %v11268
  %11372 = vmatmul.f32.gmra.mxu0 %v11215
  %v11373 = vpop.f32.mrf.mxu0
  %v11374 = vadd.f32 %v11352, %v11373
  %11375 = vmatmul.f32.gmra.mxu0 %v11218
  %v11376 = vpop.f32.mrf.mxu0
  %11377 = vdwg.mxu0
  %11378 = vmatpush.msra.mxu0 0.0
  %11379 = vmatpush.msra.mxu0 0.0
  %11380 = vmatpush.msra.mxu0 0.0
  %11381 = vmatpush.msra.mxu0 0.0
  %11382 = vmatpush.msra.mxu0 0.0
  %11383 = vmatpush.msra.mxu0 0.0
  %11384 = vmatpush.msra.mxu0 0.0
  %11385 = vmatpush.msra.mxu0 0.0
  %11386 = vmatpush.msra.mxu0 0.0
  %11387 = vmatpush.msra.mxu0 0.0
  %11388 = vmatpush.msra.mxu0 0.0
  %11389 = vmatpush.msra.mxu0 0.0
  %11390 = vmatpush.msra.mxu0 %v11325
  %11391 = vmatpush.msra.mxu0 %v11322
  %11392 = vmatpush.msra.mxu0 %v11319
  %11393 = vmatpush.msra.mxu0 %v11316
  %11394 = vmatmul.f32.gmra.mxu0 %v11329
  %v11395 = vpop.f32.mrf.mxu0
  %v11396 = vadd.f32 %v11374, %v11395
  %11397 = vmatmul.f32.gmra.mxu0 %v11332
  %v11398 = vpop.f32.mrf.mxu0
  %11399 = vdwg.mxu0
  %11400 = vmatpush.msra.mxu0 %v11266
  %11401 = vmatpush.msra.mxu0 %v11263
  %11402 = vmatpush.msra.mxu0 %v11260
  %11403 = vmatpush.msra.mxu0 %v11257
  %11404 = vmatpush.msra.mxu0 %v11254
  %11405 = vmatpush.msra.mxu0 %v11251
  %11406 = vmatpush.msra.mxu0 %v11248
  %11407 = vmatpush.msra.mxu0 %v11245
  %11408 = vmatpush.msra.mxu0 %v11242
  %11409 = vmatpush.msra.mxu0 %v11239
  %11410 = vmatpush.msra.mxu0 %v11236
  %11411 = vmatpush.msra.mxu0 %v11233
  %11412 = vmatpush.msra.mxu0 %v11230
  %11413 = vmatpush.msra.mxu0 %v11227
  %11414 = vmatpush.msra.mxu0 %v11224
  %11415 = vmatpush.msra.mxu0 %v11221
  %11416 = vmatmul.f32.gmra.mxu0 %v11214
  %v11417 = vpop.f32.mrf.mxu0
  %v11418 = vadd.f32 0.0, %v11417
  %11419 = vmatmul.f32.gmra.mxu0 %v11217
  %v11420 = vpop.f32.mrf.mxu0
  %v11421 = vadd.f32 0.0, %v11420
  %11422 = vdwg.mxu0
  %11423 = vmatpush.msra.mxu0 %v11314
  %11424 = vmatpush.msra.mxu0 %v11311
  %11425 = vmatpush.msra.mxu0 %v11308
  %11426 = vmatpush.msra.mxu0 %v11305
  %11427 = vmatpush.msra.mxu0 %v11302
  %11428 = vmatpush.msra.mxu0 %v11299
  %11429 = vmatpush.msra.mxu0 %v11296
  %11430 = vmatpush.msra.mxu0 %v11293
  %11431 = vmatpush.msra.mxu0 %v11290
  %11432 = vmatpush.msra.mxu0 %v11287
  %11433 = vmatpush.msra.mxu0 %v11284
  %11434 = vmatpush.msra.mxu0 %v11281
  %11435 = vmatpush.msra.mxu0 %v11278
  %11436 = vmatpush.msra.mxu0 %v11275
  %11437 = vmatpush.msra.mxu0 %v11272
  %11438 = vmatpush.msra.mxu0 %v11269
  %11439 = vmatmul.f32.gmra.mxu0 %v11215
  %v11440 = vpop.f32.mrf.mxu0
  %v11441 = vadd.f32 %v11418, %v11440
  %11442 = vmatmul.f32.gmra.mxu0 %v11218
  %v11443 = vpop.f32.mrf.mxu0
  %v11444 = vadd.f32 %v11421, %v11443
  %11445 = vdwg.mxu0
  %11446 = vmatpush.msra.mxu0 0.0
  %11447 = vmatpush.msra.mxu0 0.0
  %11448 = vmatpush.msra.mxu0 0.0
  %11449 = vmatpush.msra.mxu0 0.0
  %11450 = vmatpush.msra.mxu0 0.0
  %11451 = vmatpush.msra.mxu0 0.0
  %11452 = vmatpush.msra.mxu0 0.0
  %11453 = vmatpush.msra.mxu0 0.0
  %11454 = vmatpush.msra.mxu0 0.0
  %11455 = vmatpush.msra.mxu0 0.0
  %11456 = vmatpush.msra.mxu0 0.0
  %11457 = vmatpush.msra.mxu0 0.0
  %11458 = vmatpush.msra.mxu0 %v11326
  %11459 = vmatpush.msra.mxu0 %v11323
  %11460 = vmatpush.msra.mxu0 %v11320
  %11461 = vmatpush.msra.mxu0 %v11317
  %11462 = vmatmul.f32.gmra.mxu0 %v11329
  %v11463 = vpop.f32.mrf.mxu0
  %v11464 = vadd.f32 %v11441, %v11463
  %11465 = vmatmul.f32.gmra.mxu0 %v11332
  %v11466 = vpop.f32.mrf.mxu0
  %v11467 = vadd.f32 %v11444, %v11466
  %11468 = vdwg.mxu0
  %11469 = vmatpush.msra.mxu0 %v11267
  %11470 = vmatpush.msra.mxu0 %v11264
  %11471 = vmatpush.msra.mxu0 %v11261
  %11472 = vmatpush.msra.mxu0 %v11258
  %11473 = vmatpush.msra.mxu0 %v11255
  %11474 = vmatpush.msra.mxu0 %v11252
  %11475 = vmatpush.msra.mxu0 %v11249
  %11476 = vmatpush.msra.mxu0 %v11246
  %11477 = vmatpush.msra.mxu0 %v11243
  %11478 = vmatpush.msra.mxu0 %v11240
  %11479 = vmatpush.msra.mxu0 %v11237
  %11480 = vmatpush.msra.mxu0 %v11234
  %11481 = vmatpush.msra.mxu0 %v11231
  %11482 = vmatpush.msra.mxu0 %v11228
  %11483 = vmatpush.msra.mxu0 %v11225
  %11484 = vmatpush.msra.mxu0 %v11222
  %11485 = vmatmul.f32.gmra.mxu0 %v11214
  %v11486 = vpop.f32.mrf.mxu0
  %11487 = vmatmul.f32.gmra.mxu0 %v11217
  %v11488 = vpop.f32.mrf.mxu0
  %v11489 = vadd.f32 0.0, %v11488
  %11490 = vdwg.mxu0
  %11491 = vmatpush.msra.mxu0 %v11315
  %11492 = vmatpush.msra.mxu0 %v11312
  %11493 = vmatpush.msra.mxu0 %v11309
  %11494 = vmatpush.msra.mxu0 %v11306
  %11495 = vmatpush.msra.mxu0 %v11303
  %11496 = vmatpush.msra.mxu0 %v11300
  %11497 = vmatpush.msra.mxu0 %v11297
  %11498 = vmatpush.msra.mxu0 %v11294
  %11499 = vmatpush.msra.mxu0 %v11291
  %11500 = vmatpush.msra.mxu0 %v11288
  %11501 = vmatpush.msra.mxu0 %v11285
  %11502 = vmatpush.msra.mxu0 %v11282
  %11503 = vmatpush.msra.mxu0 %v11279
  %11504 = vmatpush.msra.mxu0 %v11276
  %11505 = vmatpush.msra.mxu0 %v11273
  %11506 = vmatpush.msra.mxu0 %v11270
  %11507 = vmatmul.f32.gmra.mxu0 %v11215
  %v11508 = vpop.f32.mrf.mxu0
  %11509 = vmatmul.f32.gmra.mxu0 %v11218
  %v11510 = vpop.f32.mrf.mxu0
  %v11511 = vadd.f32 %v11489, %v11510
  %11512 = vdwg.mxu0
  %11513 = vmatpush.msra.mxu0 0.0
  %11514 = vmatpush.msra.mxu0 0.0
  %11515 = vmatpush.msra.mxu0 0.0
  %11516 = vmatpush.msra.mxu0 0.0
  %11517 = vmatpush.msra.mxu0 0.0
  %11518 = vmatpush.msra.mxu0 0.0
  %11519 = vmatpush.msra.mxu0 0.0
  %11520 = vmatpush.msra.mxu0 0.0
  %11521 = vmatpush.msra.mxu0 0.0
  %11522 = vmatpush.msra.mxu0 0.0
  %11523 = vmatpush.msra.mxu0 0.0
  %11524 = vmatpush.msra.mxu0 0.0
  %11525 = vmatpush.msra.mxu0 %v11327
  %11526 = vmatpush.msra.mxu0 %v11324
  %11527 = vmatpush.msra.mxu0 %v11321
  %11528 = vmatpush.msra.mxu0 %v11318
  %11529 = vmatmul.f32.gmra.mxu0 %v11329
  %v11530 = vpop.f32.mrf.mxu0
  %11531 = vmatmul.f32.gmra.mxu0 %v11332
  %v11532 = vpop.f32.mrf.mxu0
  %v11533 = vadd.f32 %v11511, %v11532
  %11534 = vdwg.mxu0
  %v11535 = vld [vmem:[%s16] sm:$0x1]
  %v11536 = vadd.f32 %v11535, %v11396
  %11538 = vst [vmem:[#allocation1] sm:$0xff] %v11396
  %s11539 = scalar_lea.vmem [#allocation1], 1
  %v11540 = vld [vmem:[%s11539] ss:$9 sm:$0xff]
  %11541 = vrot.lane.b32.xlu0 %v11540, 108
  %v11542 = vpop.permute.xlu0 %11541
  %v11544 = vadd.f32 %v11536, %v11542
  %11545 = vst [vmem:[#allocation1] sm:$0xff] %v11396
  %s11546 = scalar_lea.vmem [#allocation1], 2
  %v11547 = vld [vmem:[%s11546] ss:$9 sm:$0xff]
  %11548 = vrot.lane.b32.xlu0 %v11547, 88
  %v11549 = vpop.permute.xlu0 %11548
  %v11551 = vadd.f32 %v11544, %v11549
  %11552 = vst [vmem:[#allocation1] sm:$0xff] %v11396
  %s11553 = scalar_lea.vmem [#allocation1], 3
  %v11554 = vld [vmem:[%s11553] ss:$9 sm:$0xff]
  %11555 = vrot.lane.b32.xlu0 %v11554, 68
  %v11556 = vpop.permute.xlu0 %11555
  %v11558 = vadd.f32 %v11551, %v11556
  %11559 = vst [vmem:[#allocation1] sm:$0xff] %v11396
  %s11560 = scalar_lea.vmem [#allocation1], 4
  %v11561 = vld [vmem:[%s11560] ss:$9 sm:$0xff]
  %11562 = vrot.lane.b32.xlu0 %v11561, 48
  %v11563 = vpop.permute.xlu0 %11562
  %v11565 = vadd.f32 %v11558, %v11563
  %11566 = vst [vmem:[#allocation1] sm:$0xff] %v11396
  %s11567 = scalar_lea.vmem [#allocation1], 5
  %v11568 = vld [vmem:[%s11567] ss:$9 sm:$0xff]
  %11569 = vrot.lane.b32.xlu0 %v11568, 28
  %v11570 = vpop.permute.xlu0 %11569
  %v11572 = vadd.f32 %v11565, %v11570
  %11574 = vst [vmem:[#allocation1] sm:$0xff] %v11396
  %11575 = vst [vmem:[#allocation1 + $0x9] sm:$0xff] %v11464
  %s11576 = scalar_lea.vmem [#allocation1], 6
  %v11577 = vld [vmem:[%s11576] ss:$9 sm:$0xff]
  %11578 = vrot.lane.b32.xlu0 %v11577, 8
  %v11579 = vpop.permute.xlu0 %11578
  %v11580 = vrot.slane %v11579, 1
  %v11581 = vsel %vm1840, %v11579, %v11580
  %v11583 = vadd.f32 %v11572, %v11581
  %11584 = vst [vmem:[#allocation1] sm:$0xff] %v11464
  %s11585 = scalar_lea.vmem [#allocation1], 7
  %v11586 = vld [vmem:[%s11585] ss:$9 sm:$0xff]
  %11587 = vrot.lane.b32.xlu0 %v11586, 116
  %v11588 = vpop.permute.xlu0 %11587
  %v11590 = vadd.f32 %v11583, %v11588
  %11592 = vrot.lane.b32.xlu0 %v11467, 96
  %v11593 = vpop.permute.xlu0 %11592
  %v11595 = vadd.f32 %v11590, %v11593
  %11596 = vst [vmem:[#allocation1] sm:$0xff] %v11467
  %s11597 = scalar_lea.vmem [#allocation1], 1
  %v11598 = vld [vmem:[%s11597] ss:$9 sm:$0xff]
  %11599 = vrot.lane.b32.xlu0 %v11598, 76
  %v11600 = vpop.permute.xlu0 %11599
  %v11602 = vadd.f32 %v11595, %v11600
  %11603 = vst [vmem:[#allocation1] sm:$0xff] %v11467
  %s11604 = scalar_lea.vmem [#allocation1], 2
  %v11605 = vld [vmem:[%s11604] ss:$9 sm:$0xff]
  %11606 = vrot.lane.b32.xlu0 %v11605, 56
  %v11607 = vpop.permute.xlu0 %11606
  %v11609 = vadd.f32 %v11602, %v11607
  %11610 = vst [vmem:[#allocation1] sm:$0xff] %v11467
  %s11611 = scalar_lea.vmem [#allocation1], 3
  %v11612 = vld [vmem:[%s11611] ss:$9 sm:$0xff]
  %11613 = vrot.lane.b32.xlu0 %v11612, 36
  %v11614 = vpop.permute.xlu0 %11613
  %v11616 = vadd.f32 %v11609, %v11614
  %11618 = vst [vmem:[#allocation1] sm:$0xff] %v11467
  %11619 = vst [vmem:[#allocation1 + $0x9] sm:$0xff] %v11533
  %s11620 = scalar_lea.vmem [#allocation1], 4
  %v11621 = vld [vmem:[%s11620] ss:$9 sm:$0xff]
  %11622 = vrot.lane.b32.xlu0 %v11621, 16
  %v11623 = vpop.permute.xlu0 %11622
  %v11624 = vrot.slane %v11623, 1
  %vm11625 = vcmask 130048
  %v11626 = vsel %vm11625, %v11623, %v11624
  %v11628 = vadd.f32 %v11616, %v11626
  %11629 = vst [vmem:[#allocation1] sm:$0xff] %v11533
  %s11630 = scalar_lea.vmem [#allocation1], 5
  %v11631 = vld [vmem:[%s11630] ss:$9 sm:$0xff]
  %11632 = vrot.lane.b32.xlu0 %v11631, 124
  %v11633 = vpop.permute.xlu0 %11632
  %v11635 = vadd.f32 %v11628, %v11633
  %11636 = vst [vmem:[#allocation1] sm:$0xff] %v11533
  %s11637 = scalar_lea.vmem [#allocation1], 6
  %v11638 = vld [vmem:[%s11637] ss:$9 sm:$0xff]
  %11639 = vrot.lane.b32.xlu0 %v11638, 104
  %v11640 = vpop.permute.xlu0 %11639
  %v11642 = vadd.f32 %v11635, %v11640
  %11643 = vst [vmem:[#allocation1] sm:$0xff] %v11533
  %s11644 = scalar_lea.vmem [#allocation1], 7
  %v11645 = vld [vmem:[%s11644] ss:$9 sm:$0xff]
  %11646 = vrot.lane.b32.xlu0 %v11645, 84
  %v11647 = vpop.permute.xlu0 %11646
  %v11649 = vadd.f32 %v11642, %v11647
  %vm11650 = vcmask 155648
  %11651 = vst.msk [vmem:[%s17] sm:$0x1] %vm11650, %v11649
  // Predicated region
  $region70: #{network_fwd.1} parent=0 // pred_check
    _
  $region71: #{network_fwd.1} parent=0 // pred_check_branch
    %11653 = sbr.rel (0) target = $region73
  $region72: #{network_fwd.1} parent=0 // pred_region
    _
  $region73: #{network_fwd.1} parent=0 // pred_fallthru
    _
  // Predicated region
  $region74: #{network_fwd.1} parent=0 // pred_check
    _
  $region75: #{network_fwd.1} parent=0 // pred_check_branch
    %11655 = sbr.rel (0) target = $region77
  $region76: #{network_fwd.1} parent=0 // pred_region
    _
  $region77: #{network_fwd.1} parent=0 // pred_fallthru
    _

</llo_original>
